<compile_context>
chip_gen: v7x
topology: tpu7x:2x2x1
jax: 0.10.0
libtpu: 0.0.40
codegen_flags: <defaults>
</compile_context>

<pallas_src>
import math
import numpy as np

import jax
import jax.numpy as jnp
from jax import lax
from jax.experimental import pallas as pl
from jax.experimental.pallas import tpu as pltpu


def _round_up(x, m):
    return ((x + m - 1) // m) * m


# -----------------------------------------------------------------------------
# Kernel 1: seq_encoder = Conv2d(C, C, 3, pad=1) + ReLU + MaxPool2d(2)
#           fused with the positional one-hot channels, one batch element per grid step.
#           Conv out-channels are zero-padded to the encoder feature width (CP) in the
#           weight, so pos channels are added (no lane concat) and the store is lane-dense.
# -----------------------------------------------------------------------------
def seq_encoder_kernel(xpad_ref, w_ref, b_ref, pos_ref, out_ref):
    # xpad_ref: (1, H+2, W+2, C)  zero-padded, upsampled input (one batch element)
    # w_ref   : (9, C, CP)        per-offset conv weights, (dy*3+dx, c_in, c_out), padded cols
    # b_ref   : (1, CP)
    # pos_ref : (L, CP)           positional one-hot channels at cols [C : C+xo+yo], else 0
    # out_ref : (1, L, CP)
    _, Hp, Wp, C = xpad_ref.shape
    H, W = Hp - 2, Wp - 2                       # RESIZE_HEIGHT, RESIZE_WIDTH (even)
    CP = w_ref.shape[2]
    L = (H // 2) * (W // 2)

    x = xpad_ref[0]                             # (H+2, W+2, C)

    # 3x3 conv as 9 accumulated MXU matmuls (no lane-axis im2col concat).
    acc = jnp.dot(x[0:H, 0:W, :].reshape(H * W, C), w_ref[0],
                  preferred_element_type=jnp.float32)
    for k in range(1, 9):
        dy, dx = k // 3, k % 3
        patch = x[dy:dy + H, dx:dx + W, :].reshape(H * W, C)
        acc = acc + jnp.dot(patch, w_ref[k], preferred_element_type=jnp.float32)
    acc = jnp.maximum(acc + b_ref[...], 0.0)    # bias + ReLU (padded cols stay exactly 0)

    # MaxPool2d(2, stride=2) — H, W are even so ceil_mode is a no-op here.
    # TODO(synk): odd production resolutions need an explicit ceil_mode edge column/row.
    a = acc.reshape(H // 2, 2, W, CP)
    hpool = jnp.maximum(a[:, 0], a[:, 1])       # (H//2, W, CP)
    b2 = hpool.reshape(L, 2, CP)
    pooled = jnp.maximum(b2[:, 0, :], b2[:, 1, :])   # (L, CP)

    # positional one-hot channels live in disjoint (zero) columns -> plain add, lane-dense store
    out_ref[0] = pooled + pos_ref[...]


def seq_encoder(x_up_nhwc, conv_w, conv_b, pos_full):
    """x_up_nhwc: (B, H, W, C) upsampled features. Returns (B, L, CP) encoder outputs."""
    B, H, W, C = x_up_nhwc.shape
    L = (H // 2) * (W // 2)
    CP = conv_w.shape[2]
    # TODO(synk): fold the bilinear upsample + zero-pad into this kernel at production
    # resolutions (C=256) to avoid the HBM round-trip of the upsampled tensor.
    xpad = jnp.pad(x_up_nhwc, ((0, 0), (1, 1), (1, 1), (0, 0)))
    Hp, Wp = H + 2, W + 2
    return pl.pallas_call(
        seq_encoder_kernel,
        out_shape=jax.ShapeDtypeStruct((B, L, CP), jnp.float32),
        grid=(B,),
        in_specs=[
            pl.BlockSpec((1, Hp, Wp, C), lambda b: (b, 0, 0, 0)),
            pl.BlockSpec(conv_w.shape, lambda b: (0, 0, 0)),
            pl.BlockSpec(conv_b.shape, lambda b: (0, 0)),
            pl.BlockSpec(pos_full.shape, lambda b: (0, 0)),
        ],
        out_specs=pl.BlockSpec((1, L, CP), lambda b: (b, 0, 0)),
        compiler_params=pltpu.CompilerParams(
            dimension_semantics=("parallel",),          # B-parallel: uses both v7x TCs
            vmem_limit_bytes=32 * 1024 * 1024),
    )(xpad, conv_w, conv_b, pos_full)


# -----------------------------------------------------------------------------
# Kernel 2: fused, batched greedy decode — the entire BahdanauAttnDecoderRNN loop.
#   (embedding->word_linear) -> concat attention -> context -> GRUCell ->
#   out Linear -> softmax top-1, with the batch chunk riding the matmul M dimension.
# One grid step == one chunk of batch rows (independent sequences, "parallel").
# -----------------------------------------------------------------------------
def _stable_sigmoid(x):
    # sigma(x) == 0.5 * (1 + tanh(x/2)); tanh maps to the EUP and is numerically stable.
    return 0.5 * (jnp.tanh(0.5 * x) + 1.0)


def fused_decoder_kernel(enc_ref, t2w_ref, word_b_ref,
                         attn_wh_ref, attn_we_ref, attn_b_ref, v_ref,
                         ihw_w_ref, ihw_c_ref, ih_b_ref, hh_w_ref, hh_b_ref,
                         out_w_ref, out_b_ref,
                         topi_ref, topv_ref):
    enc = enc_ref[...]                                   # (BB, L, CP)
    BB, L, CP = enc.shape
    HIDP = hh_w_ref.shape[0]
    NCP = out_w_ref.shape[1]
    T = topi_ref.shape[1]

    enc2d = enc.reshape(BB * L, CP)

    # Hoisted out of the decode loop: encoder-side attention projection (+ bias).
    e_proj = (jnp.dot(enc2d, attn_we_ref[...], preferred_element_type=jnp.float32)
              .reshape(BB, L, HIDP) + attn_b_ref[...])   # (BB, L, HIDP)

    t2w = t2w_ref[...]           # (NCP, HIDP)   embed @ word_linear, lane-padded
    word_b = word_b_ref[...]
    attn_wh = attn_wh_ref[...]
    v_b = jnp.broadcast_to(v_ref[...][None, :, :], (BB, 1, HIDP))   # hoisted broadcast
    ihw_w = ihw_w_ref[...]       # (HIDP, 3*HIDP)  GRU input projection, word half
    ihw_c = ihw_c_ref[...]       # (CP,   3*HIDP)  GRU input projection, context half
    ih_b = ih_b_ref[...]
    hh_w = hh_w_ref[...]
    hh_b = hh_b_ref[...]
    out_w = out_w_ref[...]
    out_b = out_b_ref[...]       # padded class lanes carry -1e30 -> never win top-1

    class_iota = lax.broadcasted_iota(jnp.int32, (1, NCP), 1)

    def step(t, carry):
        h, tok = carry                                   # (BB, HIDP), (BB, NCP) one-hot

        # embedding folded into word_linear: word = onehot(tok) @ (embed @ W_word) + b
        word = jnp.dot(tok, t2w, preferred_element_type=jnp.float32) + word_b

        # Attn('concat'), batched: energy = tanh(W_e*enc + W_h*h + b); score = v . energy
        h_proj = jnp.dot(h, attn_wh, preferred_element_type=jnp.float32)       # (BB, HIDP)
        energy = jnp.tanh(e_proj + h_proj[:, None, :])                         # (BB, L, HIDP)
        # TODO(synk): for HID<128 a (HID, L)-transposed energy would cut the per-step EUP
        # tanh work ~4x; kept in (L, HIDP) layout here for robust batched lowering
        # (production hidden=256 gets no benefit from the transpose).
        score = jnp.einsum('bqh,blh->bql', v_b, energy,
                           preferred_element_type=jnp.float32)                 # (BB, 1, L) on MXU
        score = score - jnp.max(score, axis=-1, keepdims=True)
        pe = jnp.exp(score)
        attn = pe / jnp.sum(pe, axis=-1, keepdims=True)                        # exact softmax

        # context = attn_weights @ encoder_outputs (batched MXU matmul)
        ctx = jnp.einsum('bql,blc->bqc', attn, enc,
                         preferred_element_type=jnp.float32)[:, 0, :]          # (BB, CP)

        # GRUCell on [word ; ctx] (PyTorch gate order r, z, n); split input projection
        # (two accumulated matmuls) avoids a per-step lane concat.
        gi = (jnp.dot(word, ihw_w, preferred_element_type=jnp.float32)
              + jnp.dot(ctx, ihw_c, preferred_element_type=jnp.float32) + ih_b)
        gh = jnp.dot(h, hh_w, preferred_element_type=jnp.float32) + hh_b
        r = _stable_sigmoid(gi[:, :HIDP] + gh[:, :HIDP])
        z = _stable_sigmoid(gi[:, HIDP:2 * HIDP] + gh[:, HIDP:2 * HIDP])
        n = jnp.tanh(gi[:, 2 * HIDP:] + r * gh[:, 2 * HIDP:])
        h_new = (1.0 - z) * n + z * h

        # out Linear + softmax top-1 (eval mode). topv = exp(max-max)/denom = 1/denom.
        logits = jnp.dot(h_new, out_w, preferred_element_type=jnp.float32) + out_b
        m = jnp.max(logits, axis=-1, keepdims=True)
        denom = jnp.sum(jnp.exp(logits - m), axis=-1, keepdims=True)
        topv = 1.0 / denom                                                     # (BB, 1)
        topi = jnp.min(jnp.where(logits == m, class_iota, NCP),
                       axis=-1, keepdims=True)                                 # (BB, 1) int32

        topi_ref[:, pl.ds(t, 1), :] = topi[:, :, None]
        topv_ref[:, pl.ds(t, 1), :] = topv[:, :, None]

        # greedy argmax feeds the next decoder input (one-hot), lowest index on ties.
        tok_next = (class_iota == topi).astype(jnp.float32)                    # (BB, NCP)
        return h_new, tok_next

    h0 = jnp.zeros((BB, HIDP), jnp.float32)                         # decoder_hidden = zeros
    tok0 = jnp.broadcast_to((class_iota == 0).astype(jnp.float32), (BB, NCP))  # BOS token = 0
    lax.fori_loop(0, T, step, (h0, tok0))


def greedy_decode(enc, dec, max_len):
    """enc: (B, L, CP).  Returns per-step (topi, topv) each of shape (B, max_len)."""
    B, L, CP = enc.shape
    chunk = B if B <= 8 else 8              # batch rows ride the matmul M dim per grid step
    Bp = _round_up(B, chunk)
    if Bp != B:
        enc = jnp.pad(enc, ((0, Bp - B), (0, 0), (0, 0)))
    nchunks = Bp // chunk

    names = ['t2w', 'word_b', 'attn_wh', 'attn_we', 'attn_b', 'v',
             'ih_w_word', 'ih_w_ctx', 'ih_b', 'hh_w', 'hh_b', 'out_w', 'out_b']
    ws = [dec[n] for n in names]

    def wspec(a):
        nd = a.ndim
        return pl.BlockSpec(a.shape, lambda b: (0,) * nd)   # constant block -> loaded once

    # TODO(synk): at production sizes (hidden=256, MAX_LEN=100) re-audit VMEM: constant
    # weight blocks are still double-buffered; pipeline_mode=pl.Buffered(1) or a manual
    # copy would halve their footprint on v7x's 64 MiB.
    topi, topv = pl.pallas_call(
        fused_decoder_kernel,
        out_shape=(jax.ShapeDtypeStruct((Bp, max_len, 1), jnp.int32),
                   jax.ShapeDtypeStruct((Bp, max_len, 1), jnp.float32)),
        grid=(nchunks,),
        in_specs=[pl.BlockSpec((chunk, L, CP), lambda b: (b, 0, 0))]
                 + [wspec(a) for a in ws],
        out_specs=(pl.BlockSpec((chunk, max_len, 1), lambda b: (b, 0, 0)),
                   pl.BlockSpec((chunk, max_len, 1), lambda b: (b, 0, 0))),
        compiler_params=pltpu.CompilerParams(
            dimension_semantics=("parallel",),
            vmem_limit_bytes=32 * 1024 * 1024),
    )(enc, *ws)
    return topi[:B, :, 0], topv[:B, :, 0]


# -----------------------------------------------------------------------------
# Glue: bilinear upsample (PyTorch align_corners=False) as interpolation matrices
# -----------------------------------------------------------------------------
def bilinear_matrix(in_size, out_size):
    src = (jnp.arange(out_size, dtype=jnp.float32) + 0.5) * (in_size / out_size) - 0.5
    src = jnp.maximum(src, 0.0)
    i0 = jnp.minimum(jnp.floor(src).astype(jnp.int32), in_size - 1)
    i1 = jnp.minimum(i0 + 1, in_size - 1)
    w1 = src - i0.astype(jnp.float32)
    w0 = 1.0 - w1
    m = jnp.zeros((out_size, in_size), jnp.float32)
    m = m.at[jnp.arange(out_size), i0].add(w0)
    m = m.at[jnp.arange(out_size), i1].add(w1)
    return m


# -----------------------------------------------------------------------------
# Parameters (deterministic, synthetic; biases zero like the module's init loop)
# -----------------------------------------------------------------------------
def make_params(key, c_in, hid, nc, cenc, xo, yo):
    ks = jax.random.split(key, 9)
    nrm = lambda k, shape, s=0.1: (s * jax.random.normal(k, shape)).astype(jnp.float32)
    return dict(
        conv_w=nrm(ks[0], (9, c_in, c_in)),                 # Conv2d(dim_in, dim_in, 3)
        conv_b=jnp.zeros((1, c_in), jnp.float32),
        # TODO(synk): the original __init__ sets these embeddings to eye() and then its
        # kaiming init loop overwrites every 'weight' param; values are synthetic anyway,
        # we keep the identity (one-hot) semantics.
        embed=jnp.eye(nc, dtype=jnp.float32),               # nn.Embedding(num_class, num_class)
        x_onehot=jnp.eye(xo, dtype=jnp.float32),
        y_onehot=jnp.eye(yo, dtype=jnp.float32),
        word_w=nrm(ks[1], (nc, hid)),                       # word_linear (pre-transposed)
        word_b=jnp.zeros((1, hid), jnp.float32),
        attn_wh=nrm(ks[2], (hid, hid)),                     # Attn.attn split: hidden part
        attn_we=nrm(ks[3], (cenc, hid)),                    # Attn.attn split: encoder part
        attn_b=jnp.zeros((1, hid), jnp.float32),
        v=nrm(ks[4], (1, hid), s=1.0 / math.sqrt(hid)),     # Attn.v
        ih_ww=nrm(ks[5], (hid, 3 * hid)),                   # GRU W_ih split: word part
        ih_wc=nrm(ks[6], (cenc, 3 * hid)),                  # GRU W_ih split: context part
        ih_b=jnp.zeros((1, 3 * hid), jnp.float32),
        hh_w=nrm(ks[7], (hid, 3 * hid)),
        hh_b=jnp.zeros((1, 3 * hid), jnp.float32),
        out_w=nrm(ks[8], (hid, nc)),                        # out Linear
        out_b=jnp.zeros((1, nc), jnp.float32),
    )


def prepare_params(p, c_in, hid, nc, xo, yo):
    """Fold / zero-pad the logical weights into lane-dense (multiple-of-128) kernel params.
    Padded lanes are exact zeros (or -1e30 for padded class logits) so results are exact."""
    LANE = 128
    hidp = _round_up(hid, LANE)
    ncp = _round_up(nc, LANE)
    cenc = c_in + xo + yo
    cencp = _round_up(cenc, LANE)
    L = yo * xo

    def pad2(a, shape):
        return jnp.zeros(shape, jnp.float32).at[:a.shape[0], :a.shape[1]].set(a)

    # --- encoder: conv out-channels padded to the full encoder feature width (cencp) ---
    conv_w = jnp.zeros((9, c_in, cencp), jnp.float32).at[:, :, :c_in].set(p['conv_w'])
    conv_b = jnp.zeros((1, cencp), jnp.float32).at[:, :c_in].set(p['conv_b'])
    # positional one-hot channels at columns [c_in : c_in+xo+yo], zero elsewhere
    x_pos = jnp.broadcast_to(p['x_onehot'][None, :, :], (yo, xo, xo)).reshape(L, xo)
    y_pos = jnp.broadcast_to(p['y_onehot'][:, None, :], (yo, xo, yo)).reshape(L, yo)
    pos_full = jnp.zeros((L, cencp), jnp.float32)
    pos_full = pos_full.at[:, c_in:c_in + xo].set(x_pos)
    pos_full = pos_full.at[:, c_in + xo:c_in + xo + yo].set(y_pos)

    # --- decoder: fold embedding into word_linear ---
    t2w = jnp.dot(p['embed'], p['word_w'])                  # (nc, hid)

    # GRU input projection split into word / context halves; gate blocks (r, z, n)
    # aligned to 128-lane boundaries.
    ih_w_word = jnp.zeros((hidp, 3 * hidp), jnp.float32)
    ih_w_ctx = jnp.zeros((cencp, 3 * hidp), jnp.float32)
    hh_w = jnp.zeros((hidp, 3 * hidp), jnp.float32)
    ih_b = jnp.zeros((1, 3 * hidp), jnp.float32)
    hh_b = jnp.zeros((1, 3 * hidp), jnp.float32)
    for g in range(3):
        src = slice(g * hid, (g + 1) * hid)
        dst = slice(g * hidp, g * hidp + hid)
        ih_w_word = ih_w_word.at[:hid, dst].set(p['ih_ww'][:, src])
        ih_w_ctx = ih_w_ctx.at[:cenc, dst].set(p['ih_wc'][:, src])
        hh_w = hh_w.at[:hid, dst].set(p['hh_w'][:, src])
        ih_b = ih_b.at[:, dst].set(p['ih_b'][:, src])
        hh_b = hh_b.at[:, dst].set(p['hh_b'][:, src])

    out_b = jnp.full((1, ncp), -1e30, jnp.float32).at[:, :nc].set(p['out_b'])

    dec = dict(
        t2w=pad2(t2w, (ncp, hidp)),
        word_b=pad2(p['word_b'], (1, hidp)),
        attn_wh=pad2(p['attn_wh'], (hidp, hidp)),
        attn_we=pad2(p['attn_we'], (cencp, hidp)),
        attn_b=pad2(p['attn_b'], (1, hidp)),
        v=pad2(p['v'], (1, hidp)),
        ih_w_word=ih_w_word, ih_w_ctx=ih_w_ctx, ih_b=ih_b, hh_w=hh_w, hh_b=hh_b,
        out_w=pad2(p['out_w'], (hidp, ncp)),
        out_b=out_b,
    )
    # TODO(synk): bf16 MXU-operand cast for v6e/v7x left disabled until greedy-token
    # parity against the PyTorch reference is verified (f32 preserves module semantics).
    return dict(conv_w=conv_w, conv_b=conv_b, pos_full=pos_full, dec=dec, num_class=nc)


# -----------------------------------------------------------------------------
# Forward (inference path, greedy decoding, no beam search)
# -----------------------------------------------------------------------------
def sequence_predictor_forward(x_nchw, params, resize_h, resize_w, max_len):
    B, C, Hin, Win = x_nchw.shape
    x_nhwc = jnp.transpose(x_nchw, (0, 2, 3, 1)).astype(jnp.float32)

    # 1) rescale (bilinear, align_corners=False) — XLA glue, expressed as two matmuls
    Ry = bilinear_matrix(Hin, resize_h)
    Rx = bilinear_matrix(Win, resize_w)
    up = jnp.einsum('oh,bhwc->bowc', Ry, x_nhwc)
    up = jnp.einsum('pw,bowc->bopc', Rx, up)                # (B, RH, RW, C)

    # 2) seq_encoder + positional channels — Pallas kernel, grid over B ("parallel")
    enc = seq_encoder(up, params['conv_w'], params['conv_b'], params['pos_full'])

    # 3) fused, batched greedy decode — single Pallas kernel (whole MAX_LEN loop in-kernel)
    topi, topv = greedy_decode(enc, params['dec'], max_len)   # (B, T) each

    # TODO(synk): the original breaks per-sample at topi == num_class; since the out
    # Linear only produces indices 0..num_class-1 that branch never fires, so a
    # fixed-length decode reproduces it exactly.
    return jnp.transpose(topi), jnp.transpose(topv)           # each (T, B)


# -----------------------------------------------------------------------------
if __name__ == "__main__":
    key = jax.random.PRNGKey(0)
    B, C_IN, H_IN, W_IN = 2, 32, 8, 8          # x: NCHW, like the PyTorch module
    RESIZE_H, RESIZE_W = 16, 32                # cfg.MODEL.REC_HEAD.RESOLUTION (small)
    HID = C_IN                                  # module implicitly requires dim_in == hidden
    NUM_CLASS = 16                              # small num_class (= embed_size)
    MAX_LEN = 8                                 # module's MAX_LENGTH=100; small for demo
    xo, yo = RESIZE_W // 2, RESIZE_H // 2
    CENC = C_IN + xo + yo

    kx, kp = jax.random.split(key)
    x = jax.random.normal(kx, (B, C_IN, H_IN, W_IN), dtype=jnp.float32)
    logical = make_params(kp, C_IN, HID, NUM_CLASS, CENC, xo, yo)
    params = prepare_params(logical, C_IN, HID, NUM_CLASS, xo, yo)

    topis, topvs = sequence_predictor_forward(x, params, RESIZE_H, RESIZE_W, MAX_LEN)
    jax.block_until_ready((topis, topvs))

    # host-side glue mirroring the eval output dict (num2char / score collection)
    CTLABELS = [' ', '!', '"', '#', '$', '%', '&', "'", '(', ')', '*', '+', ',', '-', '.', '/']
    topis_np = np.asarray(topis)
    topvs_np = np.asarray(topvs)
    words, scores = [], []
    for b in range(B):
        words.append(''.join(CTLABELS[int(i)] for i in topis_np[:, b]))
        scores.append([float(v) for v in topvs_np[:, b]])
    result = {'pred_texts': words, 'scores': scores, 'detailed_scores': []}

    print("KERNEL_OK")
</pallas_src>

<mosaic_0001>
module attributes {stable_mosaic.version = 11 : i64} {
  func.func @seq_encoder_kernel(%arg0: i32, %arg1: memref<1x18x34x32xf32, #tpu.memory_space<vmem>>, %arg2: memref<9x32x128xf32, #tpu.memory_space<vmem>>, %arg3: memref<1x128xf32, #tpu.memory_space<vmem>>, %arg4: memref<128x128xf32, #tpu.memory_space<vmem>>, %arg5: memref<1x128x128xf32, #tpu.memory_space<vmem>>) attributes {dimension_semantics = [#tpu.dimension_semantics<parallel>], iteration_bounds = array<i64: 2>, scalar_prefetch = 0 : i64, scratch_operands = 0 : i64, tpu.core_type = #tpu.core_type<tc>, window_params = [{transform_indices = @transform_0, window_bounds = array<i64: 1, 18, 34, 32>}, {pipeline_mode = #tpu.pipeline_mode<synchronous>, transform_indices = @transform_1, window_bounds = array<i64: 9, 32, 128>}, {pipeline_mode = #tpu.pipeline_mode<synchronous>, transform_indices = @transform_2, window_bounds = array<i64: 1, 128>}, {pipeline_mode = #tpu.pipeline_mode<synchronous>, transform_indices = @transform_3, window_bounds = array<i64: 128, 128>}, {transform_indices = @transform_4, window_bounds = array<i64: 1, 128, 128>}]} {
    %c0 = arith.constant 0 : index
    %c0_0 = arith.constant 0 : index
    %c0_1 = arith.constant 0 : index
    %c0_2 = arith.constant 0 : index
    %0 = vector.load %arg1[%c0, %c0_0, %c0_1, %c0_2] : memref<1x18x34x32xf32, #tpu.memory_space<vmem>>, vector<1x18x34x32xf32>
    %1 = vector.shape_cast %0 : vector<1x18x34x32xf32> to vector<18x34x32xf32>
    %2 = vector.extract_strided_slice %1 {offsets = [0, 0, 0], sizes = [16, 32, 32], strides = [1, 1, 1]} : vector<18x34x32xf32> to vector<16x32x32xf32>
    %3 = vector.shape_cast %2 : vector<16x32x32xf32> to vector<512x32xf32>
    %c0_3 = arith.constant 0 : index
    %c0_4 = arith.constant 0 : index
    %c0_5 = arith.constant 0 : index
    %4 = vector.load %arg2[%c0_3, %c0_4, %c0_5] : memref<9x32x128xf32, #tpu.memory_space<vmem>>, vector<1x32x128xf32>
    %5 = vector.shape_cast %4 : vector<1x32x128xf32> to vector<32x128xf32>
    %cst = arith.constant dense<0.000000e+00> : vector<512x128xf32>
    %6 = tpu.matmul %3, %5, %cst {dimension_numbers = #tpu.dot_dimension_numbers<[1], [0], [0], [1], [0, 0, 1, 1], [], []>} : vector<512x32xf32>, vector<32x128xf32>, vector<512x128xf32> -> vector<512x128xf32>
    %7 = vector.extract_strided_slice %1 {offsets = [0, 1, 0], sizes = [16, 32, 32], strides = [1, 1, 1]} : vector<18x34x32xf32> to vector<16x32x32xf32>
    %8 = vector.shape_cast %7 : vector<16x32x32xf32> to vector<512x32xf32>
    %c1 = arith.constant 1 : index
    %c0_6 = arith.constant 0 : index
    %c0_7 = arith.constant 0 : index
    %9 = vector.load %arg2[%c1, %c0_6, %c0_7] : memref<9x32x128xf32, #tpu.memory_space<vmem>>, vector<1x32x128xf32>
    %10 = vector.shape_cast %9 : vector<1x32x128xf32> to vector<32x128xf32>
    %cst_8 = arith.constant dense<0.000000e+00> : vector<512x128xf32>
    %11 = tpu.matmul %8, %10, %cst_8 {dimension_numbers = #tpu.dot_dimension_numbers<[1], [0], [0], [1], [0, 0, 1, 1], [], []>} : vector<512x32xf32>, vector<32x128xf32>, vector<512x128xf32> -> vector<512x128xf32>
    %12 = arith.addf %6, %11 : vector<512x128xf32>
    %13 = vector.extract_strided_slice %1 {offsets = [0, 2, 0], sizes = [16, 32, 32], strides = [1, 1, 1]} : vector<18x34x32xf32> to vector<16x32x32xf32>
    %14 = vector.shape_cast %13 : vector<16x32x32xf32> to vector<512x32xf32>
    %c2 = arith.constant 2 : index
    %c0_9 = arith.constant 0 : index
    %c0_10 = arith.constant 0 : index
    %15 = vector.load %arg2[%c2, %c0_9, %c0_10] : memref<9x32x128xf32, #tpu.memory_space<vmem>>, vector<1x32x128xf32>
    %16 = vector.shape_cast %15 : vector<1x32x128xf32> to vector<32x128xf32>
    %cst_11 = arith.constant dense<0.000000e+00> : vector<512x128xf32>
    %17 = tpu.matmul %14, %16, %cst_11 {dimension_numbers = #tpu.dot_dimension_numbers<[1], [0], [0], [1], [0, 0, 1, 1], [], []>} : vector<512x32xf32>, vector<32x128xf32>, vector<512x128xf32> -> vector<512x128xf32>
    %18 = arith.addf %12, %17 : vector<512x128xf32>
    %19 = vector.extract_strided_slice %1 {offsets = [1, 0, 0], sizes = [16, 32, 32], strides = [1, 1, 1]} : vector<18x34x32xf32> to vector<16x32x32xf32>
    %20 = vector.shape_cast %19 : vector<16x32x32xf32> to vector<512x32xf32>
    %c3 = arith.constant 3 : index
    %c0_12 = arith.constant 0 : index
    %c0_13 = arith.constant 0 : index
    %21 = vector.load %arg2[%c3, %c0_12, %c0_13] : memref<9x32x128xf32, #tpu.memory_space<vmem>>, vector<1x32x128xf32>
    %22 = vector.shape_cast %21 : vector<1x32x128xf32> to vector<32x128xf32>
    %cst_14 = arith.constant dense<0.000000e+00> : vector<512x128xf32>
    %23 = tpu.matmul %20, %22, %cst_14 {dimension_numbers = #tpu.dot_dimension_numbers<[1], [0], [0], [1], [0, 0, 1, 1], [], []>} : vector<512x32xf32>, vector<32x128xf32>, vector<512x128xf32> -> vector<512x128xf32>
    %24 = arith.addf %18, %23 : vector<512x128xf32>
    %25 = vector.extract_strided_slice %1 {offsets = [1, 1, 0], sizes = [16, 32, 32], strides = [1, 1, 1]} : vector<18x34x32xf32> to vector<16x32x32xf32>
    %26 = vector.shape_cast %25 : vector<16x32x32xf32> to vector<512x32xf32>
    %c4 = arith.constant 4 : index
    %c0_15 = arith.constant 0 : index
    %c0_16 = arith.constant 0 : index
    %27 = vector.load %arg2[%c4, %c0_15, %c0_16] : memref<9x32x128xf32, #tpu.memory_space<vmem>>, vector<1x32x128xf32>
    %28 = vector.shape_cast %27 : vector<1x32x128xf32> to vector<32x128xf32>
    %cst_17 = arith.constant dense<0.000000e+00> : vector<512x128xf32>
    %29 = tpu.matmul %26, %28, %cst_17 {dimension_numbers = #tpu.dot_dimension_numbers<[1], [0], [0], [1], [0, 0, 1, 1], [], []>} : vector<512x32xf32>, vector<32x128xf32>, vector<512x128xf32> -> vector<512x128xf32>
    %30 = arith.addf %24, %29 : vector<512x128xf32>
    %31 = vector.extract_strided_slice %1 {offsets = [1, 2, 0], sizes = [16, 32, 32], strides = [1, 1, 1]} : vector<18x34x32xf32> to vector<16x32x32xf32>
    %32 = vector.shape_cast %31 : vector<16x32x32xf32> to vector<512x32xf32>
    %c5 = arith.constant 5 : index
    %c0_18 = arith.constant 0 : index
    %c0_19 = arith.constant 0 : index
    %33 = vector.load %arg2[%c5, %c0_18, %c0_19] : memref<9x32x128xf32, #tpu.memory_space<vmem>>, vector<1x32x128xf32>
    %34 = vector.shape_cast %33 : vector<1x32x128xf32> to vector<32x128xf32>
    %cst_20 = arith.constant dense<0.000000e+00> : vector<512x128xf32>
    %35 = tpu.matmul %32, %34, %cst_20 {dimension_numbers = #tpu.dot_dimension_numbers<[1], [0], [0], [1], [0, 0, 1, 1], [], []>} : vector<512x32xf32>, vector<32x128xf32>, vector<512x128xf32> -> vector<512x128xf32>
    %36 = arith.addf %30, %35 : vector<512x128xf32>
    %37 = vector.extract_strided_slice %1 {offsets = [2, 0, 0], sizes = [16, 32, 32], strides = [1, 1, 1]} : vector<18x34x32xf32> to vector<16x32x32xf32>
    %38 = vector.shape_cast %37 : vector<16x32x32xf32> to vector<512x32xf32>
    %c6 = arith.constant 6 : index
    %c0_21 = arith.constant 0 : index
    %c0_22 = arith.constant 0 : index
    %39 = vector.load %arg2[%c6, %c0_21, %c0_22] : memref<9x32x128xf32, #tpu.memory_space<vmem>>, vector<1x32x128xf32>
    %40 = vector.shape_cast %39 : vector<1x32x128xf32> to vector<32x128xf32>
    %cst_23 = arith.constant dense<0.000000e+00> : vector<512x128xf32>
    %41 = tpu.matmul %38, %40, %cst_23 {dimension_numbers = #tpu.dot_dimension_numbers<[1], [0], [0], [1], [0, 0, 1, 1], [], []>} : vector<512x32xf32>, vector<32x128xf32>, vector<512x128xf32> -> vector<512x128xf32>
    %42 = arith.addf %36, %41 : vector<512x128xf32>
    %43 = vector.extract_strided_slice %1 {offsets = [2, 1, 0], sizes = [16, 32, 32], strides = [1, 1, 1]} : vector<18x34x32xf32> to vector<16x32x32xf32>
    %44 = vector.shape_cast %43 : vector<16x32x32xf32> to vector<512x32xf32>
    %c7 = arith.constant 7 : index
    %c0_24 = arith.constant 0 : index
    %c0_25 = arith.constant 0 : index
    %45 = vector.load %arg2[%c7, %c0_24, %c0_25] : memref<9x32x128xf32, #tpu.memory_space<vmem>>, vector<1x32x128xf32>
    %46 = vector.shape_cast %45 : vector<1x32x128xf32> to vector<32x128xf32>
    %cst_26 = arith.constant dense<0.000000e+00> : vector<512x128xf32>
    %47 = tpu.matmul %44, %46, %cst_26 {dimension_numbers = #tpu.dot_dimension_numbers<[1], [0], [0], [1], [0, 0, 1, 1], [], []>} : vector<512x32xf32>, vector<32x128xf32>, vector<512x128xf32> -> vector<512x128xf32>
    %48 = arith.addf %42, %47 : vector<512x128xf32>
    %49 = vector.extract_strided_slice %1 {offsets = [2, 2, 0], sizes = [16, 32, 32], strides = [1, 1, 1]} : vector<18x34x32xf32> to vector<16x32x32xf32>
    %50 = vector.shape_cast %49 : vector<16x32x32xf32> to vector<512x32xf32>
    %c8 = arith.constant 8 : index
    %c0_27 = arith.constant 0 : index
    %c0_28 = arith.constant 0 : index
    %51 = vector.load %arg2[%c8, %c0_27, %c0_28] : memref<9x32x128xf32, #tpu.memory_space<vmem>>, vector<1x32x128xf32>
    %52 = vector.shape_cast %51 : vector<1x32x128xf32> to vector<32x128xf32>
    %cst_29 = arith.constant dense<0.000000e+00> : vector<512x128xf32>
    %53 = tpu.matmul %50, %52, %cst_29 {dimension_numbers = #tpu.dot_dimension_numbers<[1], [0], [0], [1], [0, 0, 1, 1], [], []>} : vector<512x32xf32>, vector<32x128xf32>, vector<512x128xf32> -> vector<512x128xf32>
    %54 = arith.addf %48, %53 : vector<512x128xf32>
    %c0_30 = arith.constant 0 : index
    %c0_31 = arith.constant 0 : index
    %55 = vector.load %arg3[%c0_30, %c0_31] : memref<1x128xf32, #tpu.memory_space<vmem>>, vector<1x128xf32>
    %56 = vector.broadcast %55 : vector<1x128xf32> to vector<512x128xf32>
    %57 = arith.addf %54, %56 : vector<512x128xf32>
    %cst_32 = arith.constant 0.000000e+00 : f32
    %58 = vector.broadcast %cst_32 : f32 to vector<512x128xf32>
    %59 = arith.maximumf %57, %58 : vector<512x128xf32>
    %60 = vector.shape_cast %59 : vector<512x128xf32> to vector<8x2x32x128xf32>
    %61 = vector.extract_strided_slice %60 {offsets = [0, 0, 0, 0], sizes = [8, 1, 32, 128], strides = [1, 1, 1, 1]} : vector<8x2x32x128xf32> to vector<8x1x32x128xf32>
    %62 = vector.shape_cast %61 : vector<8x1x32x128xf32> to vector<8x32x128xf32>
    %63 = vector.extract_strided_slice %60 {offsets = [0, 1, 0, 0], sizes = [8, 1, 32, 128], strides = [1, 1, 1, 1]} : vector<8x2x32x128xf32> to vector<8x1x32x128xf32>
    %64 = vector.shape_cast %63 : vector<8x1x32x128xf32> to vector<8x32x128xf32>
    %65 = arith.maximumf %62, %64 : vector<8x32x128xf32>
    %66 = vector.shape_cast %65 : vector<8x32x128xf32> to vector<128x2x128xf32>
    %67 = vector.extract_strided_slice %66 {offsets = [0, 0, 0], sizes = [128, 1, 128], strides = [1, 1, 1]} : vector<128x2x128xf32> to vector<128x1x128xf32>
    %68 = vector.shape_cast %67 : vector<128x1x128xf32> to vector<128x128xf32>
    %69 = vector.extract_strided_slice %66 {offsets = [0, 1, 0], sizes = [128, 1, 128], strides = [1, 1, 1]} : vector<128x2x128xf32> to vector<128x1x128xf32>
    %70 = vector.shape_cast %69 : vector<128x1x128xf32> to vector<128x128xf32>
    %71 = arith.maximumf %68, %70 : vector<128x128xf32>
    %c0_33 = arith.constant 0 : index
    %c0_34 = arith.constant 0 : index
    %72 = vector.load %arg4[%c0_33, %c0_34] : memref<128x128xf32, #tpu.memory_space<vmem>>, vector<128x128xf32>
    %73 = arith.addf %71, %72 : vector<128x128xf32>
    %c0_35 = arith.constant 0 : index
    %c0_36 = arith.constant 0 : index
    %c0_37 = arith.constant 0 : index
    %74 = vector.load %arg5[%c0_35, %c0_36, %c0_37] : memref<1x128x128xf32, #tpu.memory_space<vmem>>, vector<1x128x128xf32>
    %75 = vector.shape_cast %74 : vector<1x128x128xf32> to vector<128x128xf32>
    %76 = vector.shape_cast %73 : vector<128x128xf32> to vector<1x128x128xf32>
    tpu.vector_store %arg5[%c0_35, %c0_36, %c0_37], %76 {strides = array<i32>} : memref<1x128x128xf32, #tpu.memory_space<vmem>>, vector<1x128x128xf32>,
    return
  }
  func.func @transform_0(%arg0: i32) -> (i32, i32, i32, i32) {
    %c0_i32 = arith.constant 0 : i32
    %c0_i32_0 = arith.constant 0 : i32
    %c0_i32_1 = arith.constant 0 : i32
    %c0_i32_2 = arith.constant 0 : i32
    return %arg0, %c0_i32, %c0_i32_0, %c0_i32_1 : i32, i32, i32, i32
  }
  func.func @transform_1(%arg0: i32) -> (i32, i32, i32) {
    %c0_i32 = arith.constant 0 : i32
    %c0_i32_0 = arith.constant 0 : i32
    %c0_i32_1 = arith.constant 0 : i32
    %c0_i32_2 = arith.constant 0 : i32
    return %c0_i32, %c0_i32_0, %c0_i32_1 : i32, i32, i32
  }
  func.func @transform_2(%arg0: i32) -> (i32, i32) {
    %c0_i32 = arith.constant 0 : i32
    %c0_i32_0 = arith.constant 0 : i32
    %c0_i32_1 = arith.constant 0 : i32
    return %c0_i32, %c0_i32_0 : i32, i32
  }
  func.func @transform_3(%arg0: i32) -> (i32, i32) {
    %c0_i32 = arith.constant 0 : i32
    %c0_i32_0 = arith.constant 0 : i32
    %c0_i32_1 = arith.constant 0 : i32
    return %c0_i32, %c0_i32_0 : i32, i32
  }
  func.func @transform_4(%arg0: i32) -> (i32, i32, i32) {
    %c0_i32 = arith.constant 0 : i32
    %c0_i32_0 = arith.constant 0 : i32
    %c0_i32_1 = arith.constant 0 : i32
    return %arg0, %c0_i32, %c0_i32_0 : i32, i32, i32
  }
}

</mosaic_0001>

<llo_original>
// kernel: tpu_custom_call.1
$region0: #{tpu_custom_call.1}
  #allocation0 [shape = 'u32[]', space=smem, size = 0x4, offset = 0x4, fixed_abs, tag = 'smem constant byte address 0x4 - core index']
  #allocation1 [shape = 'u32[144,128]{1,0:T(1,128)}', space=vmem, size = 0x12000, scoped, tag = 'internal scratch']
  %s0 = inlined_call_operand.vmem [shape: f32[2,18,34,32], index: 0, kind: input, shape index: {}]
  %s1 = inlined_call_operand.vmem [shape: f32[9,32,128], index: 1, kind: input, shape index: {}]
  %s2 = inlined_call_operand.vmem [shape: f32[1,128], index: 2, kind: input, shape index: {}]
  %s3 = inlined_call_operand.vmem [shape: f32[128,128], index: 3, kind: input, shape index: {}]
  %s4 = inlined_call_operand.hbm [shape: f32[2,128,128], index: 4, kind: output, shape index: {}]
  %s5 = sld [smem:[#allocation0]]
  $region49: #{tpu_custom_call.1} parent=0
    _
  %s7 = ssub.s32 1, %s5
  %s8 = scalar_select 0, %s7, %s5
  $region1: #{tpu_custom_call.1} parent=0
    #allocation2 [shape = 'u8[131072]{0}', space=vmem, size = 0x20000, scoped, tag = 'output window, operand 0']
    #allocation3 [shape = 's32[2]{0}', space=sflag, size = 0x8, scoped, tag = 'scoped memory for tpu_custom_call.1']
    %9 = vsyncpa [#allocation3], 0
    %s10 = scalar_lea.sflag [#allocation3], 1
    %11 = vsyncpa %s10, 0
    loop: start=0, step=1, limit=4
    $region2: #{tpu_custom_call.1} parent=1 // loop_pre_header
      _
    $region3: #{tpu_custom_call.1} parent=1 // loop_header
      %s13 = sphi 0, %s17
      %p14 = scmp.ge.s32.totalorder %s13, 4
      %s23 = sphi 0, %s25
      %s26 = sphi 0, %s23
      %s27 = sphi 0, %s26
      %s43 = sphi 0, %s27
      %s47 = sphi 0, %s47
      %s49 = sphi 0, %s47
      %s50 = sphi 0, %s49
      %s64 = sphi 0, %s50
      %s68 = sphi 0, %s68
      %s70 = sphi 0, %s68
      %s71 = sphi 0, %s70
      %s85 = sphi 0, %s71
      %s89 = sphi 0, %s89
      %s91 = sphi 0, %s89
      %s92 = sphi 0, %s91
      %s106 = sphi 0, %s92
      %s112 = sphi 0, %s114
      %s115 = sphi 0, %s112
      %s116 = sphi 0, %s115
      %s132 = sphi 0, %s116
    $region4: #{tpu_custom_call.1} parent=1 // loop_header_branch
      %16 = sbr.rel (%p14) target = $region8
    $region5: #{tpu_custom_call.1} parent=1 // loop_body
      %s18 = ssub.s32 %s13, 1
      %s19 = ssub.s32 %s13, 2
      %s20 = sadd.s32 %s13, 1
      %s21 = ssub.s32 %s13, %s20
      %p22 = scmp.eq.s32.totalorder %s21, 0
      %s24 = sadd.s32 %s23, 1
      %s25 = scalar_select %p22, %s23, %s24
      %p28 = pneg %p22
      %p29 = scmp.eq.s32.totalorder %s13, 1
      %p30 = por %p28, %p29
      %p31 = scmp.ne.s32.totalorder %s23, %s26
      %p32 = scmp.eq.s32.totalorder %s13, 0
      %p33 = por %p31, %p32
      %p34 = scmp.ne.s32.totalorder %s23, %s26
      %p35 = scmp.eq.s32.totalorder %s18, 1
      %p36 = por %p34, %p35
      %p37 = scmp.ne.s32.totalorder %s26, %s27
      %p38 = scmp.eq.s32.totalorder %s18, 0
      %p39 = por %p37, %p38
      %p40 = scmp.ne.s32.totalorder %s26, %s27
      %p41 = scmp.eq.s32.totalorder %s19, 1
      %p42 = por %p40, %p41
      %p44 = scmp.ne.s32.totalorder %s27, %s43
      %p45 = scmp.eq.s32.totalorder %s19, 0
      %p46 = por %p44, %p45
      %s48 = sadd.s32 %s47, 1
      %p51 = scmp.eq.s32.totalorder %s13, 1
      %p52 = scmp.ne.s32.totalorder %s47, %s49
      %p53 = scmp.eq.s32.totalorder %s13, 0
      %p54 = por %p52, %p53
      %p55 = scmp.ne.s32.totalorder %s47, %s49
      %p56 = scmp.eq.s32.totalorder %s18, 1
      %p57 = por %p55, %p56
      %p58 = scmp.ne.s32.totalorder %s49, %s50
      %p59 = scmp.eq.s32.totalorder %s18, 0
      %p60 = por %p58, %p59
      %p61 = scmp.ne.s32.totalorder %s49, %s50
      %p62 = scmp.eq.s32.totalorder %s19, 1
      %p63 = por %p61, %p62
      %p65 = scmp.ne.s32.totalorder %s50, %s64
      %p66 = scmp.eq.s32.totalorder %s19, 0
      %p67 = por %p65, %p66
      %s69 = sadd.s32 %s68, 1
      %p72 = scmp.eq.s32.totalorder %s13, 1
      %p73 = scmp.ne.s32.totalorder %s68, %s70
      %p74 = scmp.eq.s32.totalorder %s13, 0
      %p75 = por %p73, %p74
      %p76 = scmp.ne.s32.totalorder %s68, %s70
      %p77 = scmp.eq.s32.totalorder %s18, 1
      %p78 = por %p76, %p77
      %p79 = scmp.ne.s32.totalorder %s70, %s71
      %p80 = scmp.eq.s32.totalorder %s18, 0
      %p81 = por %p79, %p80
      %p82 = scmp.ne.s32.totalorder %s70, %s71
      %p83 = scmp.eq.s32.totalorder %s19, 1
      %p84 = por %p82, %p83
      %p86 = scmp.ne.s32.totalorder %s71, %s85
      %p87 = scmp.eq.s32.totalorder %s19, 0
      %p88 = por %p86, %p87
      %s90 = sadd.s32 %s89, 1
      %p93 = scmp.eq.s32.totalorder %s13, 1
      %p94 = scmp.ne.s32.totalorder %s89, %s91
      %p95 = scmp.eq.s32.totalorder %s13, 0
      %p96 = por %p94, %p95
      %p97 = scmp.ne.s32.totalorder %s89, %s91
      %p98 = scmp.eq.s32.totalorder %s18, 1
      %p99 = por %p97, %p98
      %p100 = scmp.ne.s32.totalorder %s91, %s92
      %p101 = scmp.eq.s32.totalorder %s18, 0
      %p102 = por %p100, %p101
      %p103 = scmp.ne.s32.totalorder %s91, %s92
      %p104 = scmp.eq.s32.totalorder %s19, 1
      %p105 = por %p103, %p104
      %p107 = scmp.ne.s32.totalorder %s92, %s106
      %p108 = scmp.eq.s32.totalorder %s19, 0
      %p109 = por %p107, %p108
      %s110 = ssub.s32 %s13, %s20
      %p111 = scmp.eq.s32.totalorder %s110, 0
      %s113 = sadd.s32 %s112, 1
      %s114 = scalar_select %p111, %s112, %s113
      %p117 = pneg %p111
      %p118 = scmp.eq.s32.totalorder %s13, 1
      %p119 = por %p117, %p118
      %p120 = scmp.ne.s32.totalorder %s112, %s115
      %p121 = scmp.eq.s32.totalorder %s13, 0
      %p122 = por %p120, %p121
      %p123 = scmp.ne.s32.totalorder %s112, %s115
      %p124 = scmp.eq.s32.totalorder %s18, 1
      %p125 = por %p123, %p124
      %p126 = scmp.ne.s32.totalorder %s115, %s116
      %p127 = scmp.eq.s32.totalorder %s18, 0
      %p128 = por %p126, %p127
      %p129 = scmp.ne.s32.totalorder %s115, %s116
      %p130 = scmp.eq.s32.totalorder %s19, 1
      %p131 = por %p129, %p130
      %p133 = scmp.ne.s32.totalorder %s116, %s132
      %p134 = scmp.eq.s32.totalorder %s19, 0
      %p135 = por %p133, %p134
      %p136 = scmp.le.s32.totalorder 1, %s13
      %p137 = scmp.lt.s32.totalorder %s13, 3
      %p138 = pnand %p136, %p137
      %p139 = pneg %p138
      // Predicated region
      $region9: #{tpu_custom_call.1} parent=5 // pred_check
        _
      $region10: #{tpu_custom_call.1} parent=5 // pred_check_branch
        %141 = sbr.rel (%p138) target = $region12
      $region11: #{tpu_custom_call.1} parent=5 // pred_region
        %s142 = ssub.s32 %s13, 1
        // Predicated region
        $region13: #{tpu_custom_call.1} parent=11 // pred_check
          %p143 = pneg %p60
        $region14: #{tpu_custom_call.1} parent=11 // pred_check_branch
          %145 = sbr.rel (%p143) target = $region16
        $region15: #{tpu_custom_call.1} parent=11 // pred_region
          _
        $region16: #{tpu_custom_call.1} parent=11 // pred_fallthru
          _
        // Predicated region
        $region17: #{tpu_custom_call.1} parent=11 // pred_check
          %p146 = pneg %p81
        $region18: #{tpu_custom_call.1} parent=11 // pred_check_branch
          %148 = sbr.rel (%p146) target = $region20
        $region19: #{tpu_custom_call.1} parent=11 // pred_region
          _
        $region20: #{tpu_custom_call.1} parent=11 // pred_fallthru
          _
        // Predicated region
        $region21: #{tpu_custom_call.1} parent=11 // pred_check
          %p149 = pneg %p102
        $region22: #{tpu_custom_call.1} parent=11 // pred_check_branch
          %151 = sbr.rel (%p149) target = $region24
        $region23: #{tpu_custom_call.1} parent=11 // pred_region
          _
        $region24: #{tpu_custom_call.1} parent=11 // pred_fallthru
          _
      $region12: #{tpu_custom_call.1} parent=5 // pred_fallthru
        _
      %p152 = scmp.lt.s32.totalorder %s13, 2
      // Predicated region
      $region25: #{tpu_custom_call.1} parent=5 // pred_check
        %p153 = pneg %p152
      $region26: #{tpu_custom_call.1} parent=5 // pred_check_branch
        %155 = sbr.rel (%p153) target = $region28
      $region27: #{tpu_custom_call.1} parent=5 // pred_region
        // Predicated region
        $region29: #{tpu_custom_call.1} parent=27 // pred_check
          %p156 = pneg %p33
        $region30: #{tpu_custom_call.1} parent=27 // pred_check_branch
          %158 = sbr.rel (%p156) target = $region32
        $region31: #{tpu_custom_call.1} parent=27 // pred_region
          %p159 = scmp.lt.s32.totalorder %s13, 1
          %s160 = scalar_select %p159, %s13, 1
          %s161 = smul.addr %s160, 90
          %s162 = smul.addr %s161, 8
          %s163 = scalar_lea.vmem %s0, %s162
        $region32: #{tpu_custom_call.1} parent=27 // pred_fallthru
          _
      $region28: #{tpu_custom_call.1} parent=5 // pred_fallthru
        _
      %p164 = scmp.le.s32.totalorder 1, %s13
      %p165 = scmp.lt.s32.totalorder %s13, 3
      %p166 = pnand %p164, %p165
      %p167 = pneg %p166
      // Predicated region
      $region33: #{tpu_custom_call.1} parent=5 // pred_check
        _
      $region34: #{tpu_custom_call.1} parent=5 // pred_check_branch
        %169 = sbr.rel (%p166) target = $region36
      $region35: #{tpu_custom_call.1} parent=5 // pred_region
        %s170 = ssub.s32 %s13, 1
        %p171 = scmp.lt.s32.totalorder %s18, 1
        %s172 = scalar_select %p171, %s18, 1
        %s173 = smul.addr %s172, 90
        %s174 = smul.addr %s173, 8
        %s175 = scalar_lea.vmem %s0, %s174
        %p176 = pneg %p39
        %p177 = pneg %p36
        %p178 = pneg %p60
        %p179 = pneg %p57
        %p180 = pneg %p81
        %p181 = pneg %p78
        %p182 = pneg %p102
        %p183 = pneg %p99
        %p184 = pneg %p128
        %p185 = pneg %p125
        %s186 = sand.u32 %s115, 1
        %s187 = scalar_lea.sflag [#allocation3], %s186
        %s188 = sand.u32 %s115, 1
        %s189 = smul.addr %s188, 128
        %s190 = scalar_lea.vmem [#allocation2], %s189
        %p191 = scmp.lt.s32.totalorder %s18, 1
        %s192 = scalar_select %p191, %s18, 1
        %s193 = smul.addr %s192, 90
        %s194 = smul.addr %s193, 8
        %s195 = scalar_lea.vmem %s0, %s194
        %v196 = vld [vmem:[%s195] sm:$0xff]
        %v197 = vld [vmem:[%s195 + $0x8] sm:$0xff]
        %v198 = vld [vmem:[%s195 + $0x10] sm:$0xff]
        %v199 = vld [vmem:[%s195 + $0x18] sm:$0xff]
        %v200 = vld [vmem:[%s195 + $0x20] sm:$0x3]
        %v201 = vld [vmem:[%s195 + $0x28] sm:$0xff]
        %v202 = vld [vmem:[%s195 + $0x30] sm:$0xff]
        %v203 = vld [vmem:[%s195 + $0x38] sm:$0xff]
        %v204 = vld [vmem:[%s195 + $0x40] sm:$0xff]
        %v205 = vld [vmem:[%s195 + $0x48] sm:$0x3]
        %v206 = vld [vmem:[%s195 + $0x50] sm:$0xff]
        %v207 = vld [vmem:[%s195 + $0x58] sm:$0xff]
        %v208 = vld [vmem:[%s195 + $0x60] sm:$0xff]
        %v209 = vld [vmem:[%s195 + $0x68] sm:$0xff]
        %v210 = vld [vmem:[%s195 + $0x70] sm:$0x3]
        %v211 = vld [vmem:[%s195 + $0x78] sm:$0xff]
        %v212 = vld [vmem:[%s195 + $0x80] sm:$0xff]
        %v213 = vld [vmem:[%s195 + $0x88] sm:$0xff]
        %v214 = vld [vmem:[%s195 + $0x90] sm:$0xff]
        %v215 = vld [vmem:[%s195 + $0x98] sm:$0x3]
        %v216 = vld [vmem:[%s195 + $0xa0] sm:$0xff]
        %v217 = vld [vmem:[%s195 + $0xa8] sm:$0xff]
        %v218 = vld [vmem:[%s195 + $0xb0] sm:$0xff]
        %v219 = vld [vmem:[%s195 + $0xb8] sm:$0xff]
        %v220 = vld [vmem:[%s195 + $0xc0] sm:$0x3]
        %v221 = vld [vmem:[%s195 + $0xc8] sm:$0xff]
        %v222 = vld [vmem:[%s195 + $0xd0] sm:$0xff]
        %v223 = vld [vmem:[%s195 + $0xd8] sm:$0xff]
        %v224 = vld [vmem:[%s195 + $0xe0] sm:$0xff]
        %v225 = vld [vmem:[%s195 + $0xe8] sm:$0x3]
        %v226 = vld [vmem:[%s195 + $0xf0] sm:$0xff]
        %v227 = vld [vmem:[%s195 + $0xf8] sm:$0xff]
        %v228 = vld [vmem:[%s195 + $0x100] sm:$0xff]
        %v229 = vld [vmem:[%s195 + $0x108] sm:$0xff]
        %v230 = vld [vmem:[%s195 + $0x110] sm:$0x3]
        %v231 = vld [vmem:[%s195 + $0x118] sm:$0xff]
        %v232 = vld [vmem:[%s195 + $0x120] sm:$0xff]
        %v233 = vld [vmem:[%s195 + $0x128] sm:$0xff]
        %v234 = vld [vmem:[%s195 + $0x130] sm:$0xff]
        %v235 = vld [vmem:[%s195 + $0x138] sm:$0x3]
        %v236 = vld [vmem:[%s195 + $0x140] sm:$0xff]
        %v237 = vld [vmem:[%s195 + $0x148] sm:$0xff]
        %v238 = vld [vmem:[%s195 + $0x150] sm:$0xff]
        %v239 = vld [vmem:[%s195 + $0x158] sm:$0xff]
        %v240 = vld [vmem:[%s195 + $0x160] sm:$0x3]
        %v241 = vld [vmem:[%s195 + $0x168] sm:$0xff]
        %v242 = vld [vmem:[%s195 + $0x170] sm:$0xff]
        %v243 = vld [vmem:[%s195 + $0x178] sm:$0xff]
        %v244 = vld [vmem:[%s195 + $0x180] sm:$0xff]
        %v245 = vld [vmem:[%s195 + $0x188] sm:$0x3]
        %v246 = vld [vmem:[%s195 + $0x190] sm:$0xff]
        %v247 = vld [vmem:[%s195 + $0x198] sm:$0xff]
        %v248 = vld [vmem:[%s195 + $0x1a0] sm:$0xff]
        %v249 = vld [vmem:[%s195 + $0x1a8] sm:$0xff]
        %v250 = vld [vmem:[%s195 + $0x1b0] sm:$0x3]
        %v251 = vld [vmem:[%s195 + $0x1b8] sm:$0xff]
        %v252 = vld [vmem:[%s195 + $0x1c0] sm:$0xff]
        %v253 = vld [vmem:[%s195 + $0x1c8] sm:$0xff]
        %v254 = vld [vmem:[%s195 + $0x1d0] sm:$0xff]
        %v255 = vld [vmem:[%s195 + $0x1d8] sm:$0x3]
        %v256 = vld [vmem:[%s195 + $0x1e0] sm:$0xff]
        %v257 = vld [vmem:[%s195 + $0x1e8] sm:$0xff]
        %v258 = vld [vmem:[%s195 + $0x1f0] sm:$0xff]
        %v259 = vld [vmem:[%s195 + $0x1f8] sm:$0xff]
        %v260 = vld [vmem:[%s195 + $0x200] sm:$0x3]
        %v261 = vld [vmem:[%s195 + $0x208] sm:$0xff]
        %v262 = vld [vmem:[%s195 + $0x210] sm:$0xff]
        %v263 = vld [vmem:[%s195 + $0x218] sm:$0xff]
        %v264 = vld [vmem:[%s195 + $0x220] sm:$0xff]
        %v265 = vld [vmem:[%s195 + $0x228] sm:$0x3]
        %v266 = vld [vmem:[%s195 + $0x230] sm:$0xff]
        %v267 = vld [vmem:[%s195 + $0x238] sm:$0xff]
        %v268 = vld [vmem:[%s195 + $0x240] sm:$0xff]
        %v269 = vld [vmem:[%s195 + $0x248] sm:$0xff]
        %v270 = vld [vmem:[%s195 + $0x250] sm:$0x3]
        %v271 = vld [vmem:[%s195 + $0x258] sm:$0xff]
        %v272 = vld [vmem:[%s195 + $0x260] sm:$0xff]
        %v273 = vld [vmem:[%s195 + $0x268] sm:$0xff]
        %v274 = vld [vmem:[%s195 + $0x270] sm:$0xff]
        %v275 = vld [vmem:[%s195 + $0x278] sm:$0x3]
        %v276 = vld [vmem:[%s195 + $0x280] sm:$0xff]
        %v277 = vld [vmem:[%s195 + $0x288] sm:$0xff]
        %v278 = vld [vmem:[%s195 + $0x290] sm:$0xff]
        %v279 = vld [vmem:[%s195 + $0x298] sm:$0xff]
        %v280 = vld [vmem:[%s195 + $0x2a0] sm:$0x3]
        %v281 = vld [vmem:[%s195 + $0x2a8] sm:$0xff]
        %v282 = vld [vmem:[%s195 + $0x2b0] sm:$0xff]
        %v283 = vld [vmem:[%s195 + $0x2b8] sm:$0xff]
        %v284 = vld [vmem:[%s195 + $0x2c0] sm:$0xff]
        %v285 = vld [vmem:[%s195 + $0x2c8] sm:$0x3]
        %v286 = vld [vmem:[%s1] sm:$0xff]
        %v287 = vld [vmem:[%s1 + $0x8] sm:$0xff]
        %v288 = vld [vmem:[%s1 + $0x10] sm:$0xff]
        %v289 = vld [vmem:[%s1 + $0x18] sm:$0xff]
        %vm370 = vcmask 1046528
        %v371 = vrot.slane %v196, 1
        %v372 = vrot.slane %v197, 1
        %v373 = vsel %vm370, %v371, %v372
        %v374 = vrot.slane %v198, 1
        %v375 = vsel %vm370, %v372, %v374
        %v376 = vrot.slane %v199, 1
        %v377 = vsel %vm370, %v374, %v376
        %v378 = vrot.slane %v200, 1
        %v379 = vsel %vm370, %v376, %v378
        %v380 = vrot.slane %v201, 1
        %v381 = vrot.slane %v202, 1
        %v382 = vsel %vm370, %v380, %v381
        %v383 = vrot.slane %v203, 1
        %v384 = vsel %vm370, %v381, %v383
        %v385 = vrot.slane %v204, 1
        %v386 = vsel %vm370, %v383, %v385
        %v387 = vrot.slane %v205, 1
        %v388 = vsel %vm370, %v385, %v387
        %v389 = vrot.slane %v206, 1
        %v390 = vrot.slane %v207, 1
        %v391 = vsel %vm370, %v389, %v390
        %v392 = vrot.slane %v208, 1
        %v393 = vsel %vm370, %v390, %v392
        %v394 = vrot.slane %v209, 1
        %v395 = vsel %vm370, %v392, %v394
        %v396 = vrot.slane %v210, 1
        %v397 = vsel %vm370, %v394, %v396
        %v398 = vrot.slane %v211, 1
        %v399 = vrot.slane %v212, 1
        %v400 = vsel %vm370, %v398, %v399
        %v401 = vrot.slane %v213, 1
        %v402 = vsel %vm370, %v399, %v401
        %v403 = vrot.slane %v214, 1
        %v404 = vsel %vm370, %v401, %v403
        %v405 = vrot.slane %v215, 1
        %v406 = vsel %vm370, %v403, %v405
        %v407 = vrot.slane %v216, 1
        %v408 = vrot.slane %v217, 1
        %v409 = vsel %vm370, %v407, %v408
        %v410 = vrot.slane %v218, 1
        %v411 = vsel %vm370, %v408, %v410
        %v412 = vrot.slane %v219, 1
        %v413 = vsel %vm370, %v410, %v412
        %v414 = vrot.slane %v220, 1
        %v415 = vsel %vm370, %v412, %v414
        %v416 = vrot.slane %v221, 1
        %v417 = vrot.slane %v222, 1
        %v418 = vsel %vm370, %v416, %v417
        %v419 = vrot.slane %v223, 1
        %v420 = vsel %vm370, %v417, %v419
        %v421 = vrot.slane %v224, 1
        %v422 = vsel %vm370, %v419, %v421
        %v423 = vrot.slane %v225, 1
        %v424 = vsel %vm370, %v421, %v423
        %v425 = vrot.slane %v226, 1
        %v426 = vrot.slane %v227, 1
        %v427 = vsel %vm370, %v425, %v426
        %v428 = vrot.slane %v228, 1
        %v429 = vsel %vm370, %v426, %v428
        %v430 = vrot.slane %v229, 1
        %v431 = vsel %vm370, %v428, %v430
        %v432 = vrot.slane %v230, 1
        %v433 = vsel %vm370, %v430, %v432
        %v434 = vrot.slane %v231, 1
        %v435 = vrot.slane %v232, 1
        %v436 = vsel %vm370, %v434, %v435
        %v437 = vrot.slane %v233, 1
        %v438 = vsel %vm370, %v435, %v437
        %v439 = vrot.slane %v234, 1
        %v440 = vsel %vm370, %v437, %v439
        %v441 = vrot.slane %v235, 1
        %v442 = vsel %vm370, %v439, %v441
        %v443 = vrot.slane %v236, 1
        %v444 = vrot.slane %v237, 1
        %v445 = vsel %vm370, %v443, %v444
        %v446 = vrot.slane %v238, 1
        %v447 = vsel %vm370, %v444, %v446
        %v448 = vrot.slane %v239, 1
        %v449 = vsel %vm370, %v446, %v448
        %v450 = vrot.slane %v240, 1
        %v451 = vsel %vm370, %v448, %v450
        %v452 = vrot.slane %v241, 1
        %v453 = vrot.slane %v242, 1
        %v454 = vsel %vm370, %v452, %v453
        %v455 = vrot.slane %v243, 1
        %v456 = vsel %vm370, %v453, %v455
        %v457 = vrot.slane %v244, 1
        %v458 = vsel %vm370, %v455, %v457
        %v459 = vrot.slane %v245, 1
        %v460 = vsel %vm370, %v457, %v459
        %v461 = vrot.slane %v246, 1
        %v462 = vrot.slane %v247, 1
        %v463 = vsel %vm370, %v461, %v462
        %v464 = vrot.slane %v248, 1
        %v465 = vsel %vm370, %v462, %v464
        %v466 = vrot.slane %v249, 1
        %v467 = vsel %vm370, %v464, %v466
        %v468 = vrot.slane %v250, 1
        %v469 = vsel %vm370, %v466, %v468
        %v470 = vrot.slane %v251, 1
        %v471 = vrot.slane %v252, 1
        %v472 = vsel %vm370, %v470, %v471
        %v473 = vrot.slane %v253, 1
        %v474 = vsel %vm370, %v471, %v473
        %v475 = vrot.slane %v254, 1
        %v476 = vsel %vm370, %v473, %v475
        %v477 = vrot.slane %v255, 1
        %v478 = vsel %vm370, %v475, %v477
        %v479 = vrot.slane %v256, 1
        %v480 = vrot.slane %v257, 1
        %v481 = vsel %vm370, %v479, %v480
        %v482 = vrot.slane %v258, 1
        %v483 = vsel %vm370, %v480, %v482
        %v484 = vrot.slane %v259, 1
        %v485 = vsel %vm370, %v482, %v484
        %v486 = vrot.slane %v260, 1
        %v487 = vsel %vm370, %v484, %v486
        %v488 = vrot.slane %v261, 1
        %v489 = vrot.slane %v262, 1
        %v490 = vsel %vm370, %v488, %v489
        %v491 = vrot.slane %v263, 1
        %v492 = vsel %vm370, %v489, %v491
        %v493 = vrot.slane %v264, 1
        %v494 = vsel %vm370, %v491, %v493
        %v495 = vrot.slane %v265, 1
        %v496 = vsel %vm370, %v493, %v495
        %v497 = vrot.slane %v266, 1
        %v498 = vrot.slane %v267, 1
        %v499 = vsel %vm370, %v497, %v498
        %v500 = vrot.slane %v268, 1
        %v501 = vsel %vm370, %v498, %v500
        %v502 = vrot.slane %v269, 1
        %v503 = vsel %vm370, %v500, %v502
        %v504 = vrot.slane %v270, 1
        %v505 = vsel %vm370, %v502, %v504
        %v506 = vrot.slane %v271, 1
        %v507 = vrot.slane %v272, 1
        %v508 = vsel %vm370, %v506, %v507
        %v509 = vrot.slane %v273, 1
        %v510 = vsel %vm370, %v507, %v509
        %v511 = vrot.slane %v274, 1
        %v512 = vsel %vm370, %v509, %v511
        %v513 = vrot.slane %v275, 1
        %v514 = vsel %vm370, %v511, %v513
        %s515 = scalar_lea.vmem %s1, 32
        %v516 = vld [vmem:[%s515] sm:$0xff]
        %v517 = vld [vmem:[%s515 + $0x8] sm:$0xff]
        %v518 = vld [vmem:[%s515 + $0x10] sm:$0xff]
        %v519 = vld [vmem:[%s515 + $0x18] sm:$0xff]
        %vm520 = vcmask 261120
        %v521 = vsel %vm520, %v373, 0
        %v523 = vsel %vm520, %v375, 0
        %v525 = vsel %vm520, %v377, 0
        %v527 = vsel %vm520, %v379, 0
        %v529 = vsel %vm520, %v382, 0
        %v531 = vsel %vm520, %v384, 0
        %v533 = vsel %vm520, %v386, 0
        %v535 = vsel %vm520, %v388, 0
        %v537 = vsel %vm520, %v391, 0
        %v539 = vsel %vm520, %v393, 0
        %v541 = vsel %vm520, %v395, 0
        %v543 = vsel %vm520, %v397, 0
        %v545 = vsel %vm520, %v400, 0
        %v547 = vsel %vm520, %v402, 0
        %v549 = vsel %vm520, %v404, 0
        %v551 = vsel %vm520, %v406, 0
        %v553 = vsel %vm520, %v409, 0
        %v555 = vsel %vm520, %v411, 0
        %v557 = vsel %vm520, %v413, 0
        %v559 = vsel %vm520, %v415, 0
        %v561 = vsel %vm520, %v418, 0
        %v563 = vsel %vm520, %v420, 0
        %v565 = vsel %vm520, %v422, 0
        %v567 = vsel %vm520, %v424, 0
        %v569 = vsel %vm520, %v427, 0
        %v571 = vsel %vm520, %v429, 0
        %v573 = vsel %vm520, %v431, 0
        %v575 = vsel %vm520, %v433, 0
        %v577 = vsel %vm520, %v436, 0
        %v579 = vsel %vm520, %v438, 0
        %v581 = vsel %vm520, %v440, 0
        %v583 = vsel %vm520, %v442, 0
        %v585 = vsel %vm520, %v445, 0
        %v587 = vsel %vm520, %v447, 0
        %v589 = vsel %vm520, %v449, 0
        %v591 = vsel %vm520, %v451, 0
        %v593 = vsel %vm520, %v454, 0
        %v595 = vsel %vm520, %v456, 0
        %v597 = vsel %vm520, %v458, 0
        %v599 = vsel %vm520, %v460, 0
        %v601 = vsel %vm520, %v463, 0
        %v603 = vsel %vm520, %v465, 0
        %v605 = vsel %vm520, %v467, 0
        %v607 = vsel %vm520, %v469, 0
        %v609 = vsel %vm520, %v472, 0
        %v611 = vsel %vm520, %v474, 0
        %v613 = vsel %vm520, %v476, 0
        %v615 = vsel %vm520, %v478, 0
        %v617 = vsel %vm520, %v481, 0
        %v619 = vsel %vm520, %v483, 0
        %v621 = vsel %vm520, %v485, 0
        %v623 = vsel %vm520, %v487, 0
        %v625 = vsel %vm520, %v490, 0
        %v627 = vsel %vm520, %v492, 0
        %v629 = vsel %vm520, %v494, 0
        %v631 = vsel %vm520, %v496, 0
        %v633 = vsel %vm520, %v499, 0
        %v635 = vsel %vm520, %v501, 0
        %v637 = vsel %vm520, %v503, 0
        %v639 = vsel %vm520, %v505, 0
        %v641 = vsel %vm520, %v508, 0
        %v643 = vsel %vm520, %v510, 0
        %v645 = vsel %vm520, %v512, 0
        %v647 = vsel %vm520, %v514, 0
        %649 = vmatprep.subr.mxu0 0.0
        %650 = vmatpush1.msra.mxu0 %v516
        %651 = vmatprep.subr.mxu0 0.0
        %652 = vmatpush1.msra.mxu0 %v517
        %653 = vmatprep.subr.mxu0 0.0
        %654 = vmatpush1.msra.mxu0 %v518
        %655 = vmatprep.subr.mxu0 0.0
        %656 = vmatpush1.msra.mxu0 %v519
        %657 = vmatprep.subr.mxu0 0.0
        %658 = vmatpush1.msra.mxu0 0.0
        %659 = vmatprep.subr.mxu0 0.0
        %660 = vmatpush1.msra.mxu0 0.0
        %661 = vmatprep.subr.mxu0 0.0
        %662 = vmatpush1.msra.mxu0 0.0
        %663 = vmatprep.subr.mxu0 0.0
        %664 = vmatpush1.msra.mxu0 0.0
        %665 = vmatprep.subr.mxu0 0.0
        %666 = vmatpush1.msra.mxu0 0.0
        %667 = vmatprep.subr.mxu0 0.0
        %668 = vmatpush1.msra.mxu0 0.0
        %669 = vmatprep.subr.mxu0 0.0
        %670 = vmatpush1.msra.mxu0 0.0
        %671 = vmatprep.subr.mxu0 0.0
        %672 = vmatpush1.msra.mxu0 0.0
        %673 = vmatprep.subr.mxu0 0.0
        %674 = vmatpush1.msra.mxu0 0.0
        %675 = vmatprep.subr.mxu0 0.0
        %676 = vmatpush1.msra.mxu0 0.0
        %677 = vmatprep.subr.mxu0 0.0
        %678 = vmatpush1.msra.mxu0 0.0
        %679 = vmatprep.subr.mxu0 0.0
        %680 = vmatpush1.msra.mxu0 0.0
        %681 = vmatprep.subr.mxu0 0.0
        %682 = vmatpush1.msra.mxu0 0.0
        %683 = vmatprep.subr.mxu0 0.0
        %684 = vmatpush1.msra.mxu0 0.0
        %685 = vmatprep.subr.mxu0 0.0
        %686 = vmatpush1.msra.mxu0 0.0
        %687 = vmatprep.subr.mxu0 0.0
        %688 = vmatpush1.msra.mxu0 0.0
        %689 = vmatprep.subr.mxu0 0.0
        %690 = vmatpush1.msra.mxu0 0.0
        %691 = vmatprep.subr.mxu0 0.0
        %692 = vmatpush1.msra.mxu0 0.0
        %693 = vmatprep.subr.mxu0 0.0
        %694 = vmatpush1.msra.mxu0 0.0
        %695 = vmatprep.subr.mxu0 0.0
        %696 = vmatpush1.msra.mxu0 0.0
        %697 = vmatprep.subr.mxu0 0.0
        %698 = vmatpush1.msra.mxu0 0.0
        %699 = vmatprep.subr.mxu0 0.0
        %700 = vmatpush1.msra.mxu0 0.0
        %701 = vmatprep.subr.mxu0 0.0
        %702 = vmatpush1.msra.mxu0 0.0
        %703 = vmatprep.subr.mxu0 0.0
        %704 = vmatpush1.msra.mxu0 0.0
        %705 = vmatprep.subr.mxu0 0.0
        %706 = vmatpush1.msra.mxu0 0.0
        %707 = vmatprep.subr.mxu0 0.0
        %708 = vmatpush1.msra.mxu0 0.0
        %709 = vmatprep.subr.mxu0 0.0
        %710 = vmatpush1.msra.mxu0 0.0
        %711 = vmatprep.subr.mxu0 0.0
        %712 = vmatpush1.msra.mxu0 0.0
        %713 = vmatprep.mubr.f32.mxu0 0.0
        %714 = vmatmul.mubr.f32.gmra.mrb[0].mxu0 %v521
        %v715 = vpop.f32.mrb[0].mxu0
        %v716 = vadd.f32 0.0, %v715
        %v717 = vpop.f32.mrb[0].mxu0
        %718 = vmatprep.mubr.f32.mxu0 0.0
        %719 = vmatmul.mubr.f32.gmra.mrb[0].mxu0 %v523
        %v720 = vpop.f32.mrb[0].mxu0
        %v721 = vadd.f32 0.0, %v720
        %v722 = vpop.f32.mrb[0].mxu0
        %723 = vmatprep.mubr.f32.mxu0 0.0
        %724 = vmatmul.mubr.f32.gmra.mrb[0].mxu0 %v525
        %v725 = vpop.f32.mrb[0].mxu0
        %v726 = vadd.f32 0.0, %v725
        %v727 = vpop.f32.mrb[0].mxu0
        %728 = vmatprep.mubr.f32.mxu0 0.0
        %729 = vmatmul.mubr.f32.gmra.mrb[0].mxu0 %v527
        %v730 = vpop.f32.mrb[0].mxu0
        %v731 = vadd.f32 0.0, %v730
        %v732 = vpop.f32.mrb[0].mxu0
        %733 = vmatprep.mubr.f32.mxu0 0.0
        %734 = vmatmul.mubr.f32.gmra.mrb[0].mxu0 %v529
        %v735 = vpop.f32.mrb[0].mxu0
        %v736 = vadd.f32 0.0, %v735
        %v737 = vpop.f32.mrb[0].mxu0
        %738 = vmatprep.mubr.f32.mxu0 0.0
        %739 = vmatmul.mubr.f32.gmra.mrb[0].mxu0 %v531
        %v740 = vpop.f32.mrb[0].mxu0
        %v741 = vadd.f32 0.0, %v740
        %v742 = vpop.f32.mrb[0].mxu0
        %743 = vmatprep.mubr.f32.mxu0 0.0
        %744 = vmatmul.mubr.f32.gmra.mrb[0].mxu0 %v533
        %v745 = vpop.f32.mrb[0].mxu0
        %v746 = vadd.f32 0.0, %v745
        %v747 = vpop.f32.mrb[0].mxu0
        %748 = vmatprep.mubr.f32.mxu0 0.0
        %749 = vmatmul.mubr.f32.gmra.mrb[0].mxu0 %v535
        %v750 = vpop.f32.mrb[0].mxu0
        %v751 = vadd.f32 0.0, %v750
        %v752 = vpop.f32.mrb[0].mxu0
        %753 = vmatprep.mubr.f32.mxu0 0.0
        %754 = vmatmul.mubr.f32.gmra.mrb[0].mxu0 %v537
        %v755 = vpop.f32.mrb[0].mxu0
        %v756 = vadd.f32 0.0, %v755
        %v757 = vpop.f32.mrb[0].mxu0
        %758 = vmatprep.mubr.f32.mxu0 0.0
        %759 = vmatmul.mubr.f32.gmra.mrb[0].mxu0 %v539
        %v760 = vpop.f32.mrb[0].mxu0
        %v761 = vadd.f32 0.0, %v760
        %v762 = vpop.f32.mrb[0].mxu0
        %763 = vmatprep.mubr.f32.mxu0 0.0
        %764 = vmatmul.mubr.f32.gmra.mrb[0].mxu0 %v541
        %v765 = vpop.f32.mrb[0].mxu0
        %v766 = vadd.f32 0.0, %v765
        %v767 = vpop.f32.mrb[0].mxu0
        %768 = vmatprep.mubr.f32.mxu0 0.0
        %769 = vmatmul.mubr.f32.gmra.mrb[0].mxu0 %v543
        %v770 = vpop.f32.mrb[0].mxu0
        %v771 = vadd.f32 0.0, %v770
        %v772 = vpop.f32.mrb[0].mxu0
        %773 = vmatprep.mubr.f32.mxu0 0.0
        %774 = vmatmul.mubr.f32.gmra.mrb[0].mxu0 %v545
        %v775 = vpop.f32.mrb[0].mxu0
        %v776 = vadd.f32 0.0, %v775
        %v777 = vpop.f32.mrb[0].mxu0
        %778 = vmatprep.mubr.f32.mxu0 0.0
        %779 = vmatmul.mubr.f32.gmra.mrb[0].mxu0 %v547
        %v780 = vpop.f32.mrb[0].mxu0
        %v781 = vadd.f32 0.0, %v780
        %v782 = vpop.f32.mrb[0].mxu0
        %783 = vmatprep.mubr.f32.mxu0 0.0
        %784 = vmatmul.mubr.f32.gmra.mrb[0].mxu0 %v549
        %v785 = vpop.f32.mrb[0].mxu0
        %v786 = vadd.f32 0.0, %v785
        %v787 = vpop.f32.mrb[0].mxu0
        %788 = vmatprep.mubr.f32.mxu0 0.0
        %789 = vmatmul.mubr.f32.gmra.mrb[0].mxu0 %v551
        %v790 = vpop.f32.mrb[0].mxu0
        %v791 = vadd.f32 0.0, %v790
        %v792 = vpop.f32.mrb[0].mxu0
        %793 = vmatprep.mubr.f32.mxu0 0.0
        %794 = vmatmul.mubr.f32.gmra.mrb[0].mxu0 %v553
        %v795 = vpop.f32.mrb[0].mxu0
        %v796 = vadd.f32 0.0, %v795
        %v797 = vpop.f32.mrb[0].mxu0
        %798 = vmatprep.mubr.f32.mxu0 0.0
        %799 = vmatmul.mubr.f32.gmra.mrb[0].mxu0 %v555
        %v800 = vpop.f32.mrb[0].mxu0
        %v801 = vadd.f32 0.0, %v800
        %v802 = vpop.f32.mrb[0].mxu0
        %803 = vmatprep.mubr.f32.mxu0 0.0
        %804 = vmatmul.mubr.f32.gmra.mrb[0].mxu0 %v557
        %v805 = vpop.f32.mrb[0].mxu0
        %v806 = vadd.f32 0.0, %v805
        %v807 = vpop.f32.mrb[0].mxu0
        %808 = vmatprep.mubr.f32.mxu0 0.0
        %809 = vmatmul.mubr.f32.gmra.mrb[0].mxu0 %v559
        %v810 = vpop.f32.mrb[0].mxu0
        %v811 = vadd.f32 0.0, %v810
        %v812 = vpop.f32.mrb[0].mxu0
        %813 = vmatprep.mubr.f32.mxu0 0.0
        %814 = vmatmul.mubr.f32.gmra.mrb[0].mxu0 %v561
        %v815 = vpop.f32.mrb[0].mxu0
        %v816 = vadd.f32 0.0, %v815
        %v817 = vpop.f32.mrb[0].mxu0
        %818 = vmatprep.mubr.f32.mxu0 0.0
        %819 = vmatmul.mubr.f32.gmra.mrb[0].mxu0 %v563
        %v820 = vpop.f32.mrb[0].mxu0
        %v821 = vadd.f32 0.0, %v820
        %v822 = vpop.f32.mrb[0].mxu0
        %823 = vmatprep.mubr.f32.mxu0 0.0
        %824 = vmatmul.mubr.f32.gmra.mrb[0].mxu0 %v565
        %v825 = vpop.f32.mrb[0].mxu0
        %v826 = vadd.f32 0.0, %v825
        %v827 = vpop.f32.mrb[0].mxu0
        %828 = vmatprep.mubr.f32.mxu0 0.0
        %829 = vmatmul.mubr.f32.gmra.mrb[0].mxu0 %v567
        %v830 = vpop.f32.mrb[0].mxu0
        %v831 = vadd.f32 0.0, %v830
        %v832 = vpop.f32.mrb[0].mxu0
        %833 = vmatprep.mubr.f32.mxu0 0.0
        %834 = vmatmul.mubr.f32.gmra.mrb[0].mxu0 %v569
        %v835 = vpop.f32.mrb[0].mxu0
        %v836 = vadd.f32 0.0, %v835
        %v837 = vpop.f32.mrb[0].mxu0
        %838 = vmatprep.mubr.f32.mxu0 0.0
        %839 = vmatmul.mubr.f32.gmra.mrb[0].mxu0 %v571
        %v840 = vpop.f32.mrb[0].mxu0
        %v841 = vadd.f32 0.0, %v840
        %v842 = vpop.f32.mrb[0].mxu0
        %843 = vmatprep.mubr.f32.mxu0 0.0
        %844 = vmatmul.mubr.f32.gmra.mrb[0].mxu0 %v573
        %v845 = vpop.f32.mrb[0].mxu0
        %v846 = vadd.f32 0.0, %v845
        %v847 = vpop.f32.mrb[0].mxu0
        %848 = vmatprep.mubr.f32.mxu0 0.0
        %849 = vmatmul.mubr.f32.gmra.mrb[0].mxu0 %v575
        %v850 = vpop.f32.mrb[0].mxu0
        %v851 = vadd.f32 0.0, %v850
        %v852 = vpop.f32.mrb[0].mxu0
        %853 = vmatprep.mubr.f32.mxu0 0.0
        %854 = vmatmul.mubr.f32.gmra.mrb[0].mxu0 %v577
        %v855 = vpop.f32.mrb[0].mxu0
        %v856 = vadd.f32 0.0, %v855
        %v857 = vpop.f32.mrb[0].mxu0
        %858 = vmatprep.mubr.f32.mxu0 0.0
        %859 = vmatmul.mubr.f32.gmra.mrb[0].mxu0 %v579
        %v860 = vpop.f32.mrb[0].mxu0
        %v861 = vadd.f32 0.0, %v860
        %v862 = vpop.f32.mrb[0].mxu0
        %863 = vmatprep.mubr.f32.mxu0 0.0
        %864 = vmatmul.mubr.f32.gmra.mrb[0].mxu0 %v581
        %v865 = vpop.f32.mrb[0].mxu0
        %v866 = vadd.f32 0.0, %v865
        %v867 = vpop.f32.mrb[0].mxu0
        %868 = vmatprep.mubr.f32.mxu0 0.0
        %869 = vmatmul.mubr.f32.gmra.mrb[0].mxu0 %v583
        %v870 = vpop.f32.mrb[0].mxu0
        %v871 = vadd.f32 0.0, %v870
        %v872 = vpop.f32.mrb[0].mxu0
        %873 = vmatprep.mubr.f32.mxu0 0.0
        %874 = vmatmul.mubr.f32.gmra.mrb[0].mxu0 %v585
        %v875 = vpop.f32.mrb[0].mxu0
        %v876 = vadd.f32 0.0, %v875
        %v877 = vpop.f32.mrb[0].mxu0
        %878 = vmatprep.mubr.f32.mxu0 0.0
        %879 = vmatmul.mubr.f32.gmra.mrb[0].mxu0 %v587
        %v880 = vpop.f32.mrb[0].mxu0
        %v881 = vadd.f32 0.0, %v880
        %v882 = vpop.f32.mrb[0].mxu0
        %883 = vmatprep.mubr.f32.mxu0 0.0
        %884 = vmatmul.mubr.f32.gmra.mrb[0].mxu0 %v589
        %v885 = vpop.f32.mrb[0].mxu0
        %v886 = vadd.f32 0.0, %v885
        %v887 = vpop.f32.mrb[0].mxu0
        %888 = vmatprep.mubr.f32.mxu0 0.0
        %889 = vmatmul.mubr.f32.gmra.mrb[0].mxu0 %v591
        %v890 = vpop.f32.mrb[0].mxu0
        %v891 = vadd.f32 0.0, %v890
        %v892 = vpop.f32.mrb[0].mxu0
        %893 = vmatprep.mubr.f32.mxu0 0.0
        %894 = vmatmul.mubr.f32.gmra.mrb[0].mxu0 %v593
        %v895 = vpop.f32.mrb[0].mxu0
        %v896 = vadd.f32 0.0, %v895
        %v897 = vpop.f32.mrb[0].mxu0
        %898 = vmatprep.mubr.f32.mxu0 0.0
        %899 = vmatmul.mubr.f32.gmra.mrb[0].mxu0 %v595
        %v900 = vpop.f32.mrb[0].mxu0
        %v901 = vadd.f32 0.0, %v900
        %v902 = vpop.f32.mrb[0].mxu0
        %903 = vmatprep.mubr.f32.mxu0 0.0
        %904 = vmatmul.mubr.f32.gmra.mrb[0].mxu0 %v597
        %v905 = vpop.f32.mrb[0].mxu0
        %v906 = vadd.f32 0.0, %v905
        %v907 = vpop.f32.mrb[0].mxu0
        %908 = vmatprep.mubr.f32.mxu0 0.0
        %909 = vmatmul.mubr.f32.gmra.mrb[0].mxu0 %v599
        %v910 = vpop.f32.mrb[0].mxu0
        %v911 = vadd.f32 0.0, %v910
        %v912 = vpop.f32.mrb[0].mxu0
        %913 = vmatprep.mubr.f32.mxu0 0.0
        %914 = vmatmul.mubr.f32.gmra.mrb[0].mxu0 %v601
        %v915 = vpop.f32.mrb[0].mxu0
        %v916 = vadd.f32 0.0, %v915
        %v917 = vpop.f32.mrb[0].mxu0
        %918 = vmatprep.mubr.f32.mxu0 0.0
        %919 = vmatmul.mubr.f32.gmra.mrb[0].mxu0 %v603
        %v920 = vpop.f32.mrb[0].mxu0
        %v921 = vadd.f32 0.0, %v920
        %v922 = vpop.f32.mrb[0].mxu0
        %923 = vmatprep.mubr.f32.mxu0 0.0
        %924 = vmatmul.mubr.f32.gmra.mrb[0].mxu0 %v605
        %v925 = vpop.f32.mrb[0].mxu0
        %v926 = vadd.f32 0.0, %v925
        %v927 = vpop.f32.mrb[0].mxu0
        %928 = vmatprep.mubr.f32.mxu0 0.0
        %929 = vmatmul.mubr.f32.gmra.mrb[0].mxu0 %v607
        %v930 = vpop.f32.mrb[0].mxu0
        %v931 = vadd.f32 0.0, %v930
        %v932 = vpop.f32.mrb[0].mxu0
        %933 = vmatprep.mubr.f32.mxu0 0.0
        %934 = vmatmul.mubr.f32.gmra.mrb[0].mxu0 %v609
        %v935 = vpop.f32.mrb[0].mxu0
        %v936 = vadd.f32 0.0, %v935
        %v937 = vpop.f32.mrb[0].mxu0
        %938 = vmatprep.mubr.f32.mxu0 0.0
        %939 = vmatmul.mubr.f32.gmra.mrb[0].mxu0 %v611
        %v940 = vpop.f32.mrb[0].mxu0
        %v941 = vadd.f32 0.0, %v940
        %v942 = vpop.f32.mrb[0].mxu0
        %943 = vmatprep.mubr.f32.mxu0 0.0
        %944 = vmatmul.mubr.f32.gmra.mrb[0].mxu0 %v613
        %v945 = vpop.f32.mrb[0].mxu0
        %v946 = vadd.f32 0.0, %v945
        %v947 = vpop.f32.mrb[0].mxu0
        %948 = vmatprep.mubr.f32.mxu0 0.0
        %949 = vmatmul.mubr.f32.gmra.mrb[0].mxu0 %v615
        %v950 = vpop.f32.mrb[0].mxu0
        %v951 = vadd.f32 0.0, %v950
        %v952 = vpop.f32.mrb[0].mxu0
        %953 = vmatprep.mubr.f32.mxu0 0.0
        %954 = vmatmul.mubr.f32.gmra.mrb[0].mxu0 %v617
        %v955 = vpop.f32.mrb[0].mxu0
        %v956 = vadd.f32 0.0, %v955
        %v957 = vpop.f32.mrb[0].mxu0
        %958 = vmatprep.mubr.f32.mxu0 0.0
        %959 = vmatmul.mubr.f32.gmra.mrb[0].mxu0 %v619
        %v960 = vpop.f32.mrb[0].mxu0
        %v961 = vadd.f32 0.0, %v960
        %v962 = vpop.f32.mrb[0].mxu0
        %963 = vmatprep.mubr.f32.mxu0 0.0
        %964 = vmatmul.mubr.f32.gmra.mrb[0].mxu0 %v621
        %v965 = vpop.f32.mrb[0].mxu0
        %v966 = vadd.f32 0.0, %v965
        %v967 = vpop.f32.mrb[0].mxu0
        %968 = vmatprep.mubr.f32.mxu0 0.0
        %969 = vmatmul.mubr.f32.gmra.mrb[0].mxu0 %v623
        %v970 = vpop.f32.mrb[0].mxu0
        %v971 = vadd.f32 0.0, %v970
        %v972 = vpop.f32.mrb[0].mxu0
        %973 = vmatprep.mubr.f32.mxu0 0.0
        %974 = vmatmul.mubr.f32.gmra.mrb[0].mxu0 %v625
        %v975 = vpop.f32.mrb[0].mxu0
        %v976 = vadd.f32 0.0, %v975
        %v977 = vpop.f32.mrb[0].mxu0
        %978 = vmatprep.mubr.f32.mxu0 0.0
        %979 = vmatmul.mubr.f32.gmra.mrb[0].mxu0 %v627
        %v980 = vpop.f32.mrb[0].mxu0
        %v981 = vadd.f32 0.0, %v980
        %v982 = vpop.f32.mrb[0].mxu0
        %983 = vmatprep.mubr.f32.mxu0 0.0
        %984 = vmatmul.mubr.f32.gmra.mrb[0].mxu0 %v629
        %v985 = vpop.f32.mrb[0].mxu0
        %v986 = vadd.f32 0.0, %v985
        %v987 = vpop.f32.mrb[0].mxu0
        %988 = vmatprep.mubr.f32.mxu0 0.0
        %989 = vmatmul.mubr.f32.gmra.mrb[0].mxu0 %v631
        %v990 = vpop.f32.mrb[0].mxu0
        %v991 = vadd.f32 0.0, %v990
        %v992 = vpop.f32.mrb[0].mxu0
        %993 = vmatprep.mubr.f32.mxu0 0.0
        %994 = vmatmul.mubr.f32.gmra.mrb[0].mxu0 %v633
        %v995 = vpop.f32.mrb[0].mxu0
        %v996 = vadd.f32 0.0, %v995
        %v997 = vpop.f32.mrb[0].mxu0
        %998 = vmatprep.mubr.f32.mxu0 0.0
        %999 = vmatmul.mubr.f32.gmra.mrb[0].mxu0 %v635
        %v1000 = vpop.f32.mrb[0].mxu0
        %v1001 = vadd.f32 0.0, %v1000
        %v1002 = vpop.f32.mrb[0].mxu0
        %1003 = vmatprep.mubr.f32.mxu0 0.0
        %1004 = vmatmul.mubr.f32.gmra.mrb[0].mxu0 %v637
        %v1005 = vpop.f32.mrb[0].mxu0
        %v1006 = vadd.f32 0.0, %v1005
        %v1007 = vpop.f32.mrb[0].mxu0
        %1008 = vmatprep.mubr.f32.mxu0 0.0
        %1009 = vmatmul.mubr.f32.gmra.mrb[0].mxu0 %v639
        %v1010 = vpop.f32.mrb[0].mxu0
        %v1011 = vadd.f32 0.0, %v1010
        %v1012 = vpop.f32.mrb[0].mxu0
        %1013 = vmatprep.mubr.f32.mxu0 0.0
        %1014 = vmatmul.mubr.f32.gmra.mrb[0].mxu0 %v641
        %v1015 = vpop.f32.mrb[0].mxu0
        %v1016 = vadd.f32 0.0, %v1015
        %v1017 = vpop.f32.mrb[0].mxu0
        %1018 = vmatprep.mubr.f32.mxu0 0.0
        %1019 = vmatmul.mubr.f32.gmra.mrb[0].mxu0 %v643
        %v1020 = vpop.f32.mrb[0].mxu0
        %v1021 = vadd.f32 0.0, %v1020
        %v1022 = vpop.f32.mrb[0].mxu0
        %1023 = vmatprep.mubr.f32.mxu0 0.0
        %1024 = vmatmul.mubr.f32.gmra.mrb[0].mxu0 %v645
        %v1025 = vpop.f32.mrb[0].mxu0
        %v1026 = vadd.f32 0.0, %v1025
        %v1027 = vpop.f32.mrb[0].mxu0
        %1028 = vmatprep.mubr.f32.mxu0 0.0
        %1029 = vmatmul.mubr.f32.gmra.mrb[0].mxu0 %v647
        %v1030 = vpop.f32.mrb[0].mxu0
        %v1031 = vadd.f32 0.0, %v1030
        %v1032 = vpop.f32.mrb[0].mxu0
        %1033 = vdwg.mxu0
        %v1034 = vsel %vm520, %v196, 0
        %v1036 = vsel %vm520, %v197, 0
        %v1038 = vsel %vm520, %v198, 0
        %v1040 = vsel %vm520, %v199, 0
        %v1042 = vsel %vm520, %v201, 0
        %v1044 = vsel %vm520, %v202, 0
        %v1046 = vsel %vm520, %v203, 0
        %v1048 = vsel %vm520, %v204, 0
        %v1050 = vsel %vm520, %v206, 0
        %v1052 = vsel %vm520, %v207, 0
        %v1054 = vsel %vm520, %v208, 0
        %v1056 = vsel %vm520, %v209, 0
        %v1058 = vsel %vm520, %v211, 0
        %v1060 = vsel %vm520, %v212, 0
        %v1062 = vsel %vm520, %v213, 0
        %v1064 = vsel %vm520, %v214, 0
        %v1066 = vsel %vm520, %v216, 0
        %v1068 = vsel %vm520, %v217, 0
        %v1070 = vsel %vm520, %v218, 0
        %v1072 = vsel %vm520, %v219, 0
        %v1074 = vsel %vm520, %v221, 0
        %v1076 = vsel %vm520, %v222, 0
        %v1078 = vsel %vm520, %v223, 0
        %v1080 = vsel %vm520, %v224, 0
        %v1082 = vsel %vm520, %v226, 0
        %v1084 = vsel %vm520, %v227, 0
        %v1086 = vsel %vm520, %v228, 0
        %v1088 = vsel %vm520, %v229, 0
        %v1090 = vsel %vm520, %v231, 0
        %v1092 = vsel %vm520, %v232, 0
        %v1094 = vsel %vm520, %v233, 0
        %v1096 = vsel %vm520, %v234, 0
        %v1098 = vsel %vm520, %v236, 0
        %v1100 = vsel %vm520, %v237, 0
        %v1102 = vsel %vm520, %v238, 0
        %v1104 = vsel %vm520, %v239, 0
        %v1106 = vsel %vm520, %v241, 0
        %v1108 = vsel %vm520, %v242, 0
        %v1110 = vsel %vm520, %v243, 0
        %v1112 = vsel %vm520, %v244, 0
        %v1114 = vsel %vm520, %v246, 0
        %v1116 = vsel %vm520, %v247, 0
        %v1118 = vsel %vm520, %v248, 0
        %v1120 = vsel %vm520, %v249, 0
        %v1122 = vsel %vm520, %v251, 0
        %v1124 = vsel %vm520, %v252, 0
        %v1126 = vsel %vm520, %v253, 0
        %v1128 = vsel %vm520, %v254, 0
        %v1130 = vsel %vm520, %v256, 0
        %v1132 = vsel %vm520, %v257, 0
        %v1134 = vsel %vm520, %v258, 0
        %v1136 = vsel %vm520, %v259, 0
        %v1138 = vsel %vm520, %v261, 0
        %v1140 = vsel %vm520, %v262, 0
        %v1142 = vsel %vm520, %v263, 0
        %v1144 = vsel %vm520, %v264, 0
        %v1146 = vsel %vm520, %v266, 0
        %v1148 = vsel %vm520, %v267, 0
        %v1150 = vsel %vm520, %v268, 0
        %v1152 = vsel %vm520, %v269, 0
        %v1154 = vsel %vm520, %v271, 0
        %v1156 = vsel %vm520, %v272, 0
        %v1158 = vsel %vm520, %v273, 0
        %v1160 = vsel %vm520, %v274, 0
        %1162 = vmatprep.subr.mxu0 0.0
        %1163 = vmatpush1.msra.mxu0 %v286
        %1164 = vmatprep.subr.mxu0 0.0
        %1165 = vmatpush1.msra.mxu0 %v287
        %1166 = vmatprep.subr.mxu0 0.0
        %1167 = vmatpush1.msra.mxu0 %v288
        %1168 = vmatprep.subr.mxu0 0.0
        %1169 = vmatpush1.msra.mxu0 %v289
        %1170 = vmatprep.subr.mxu0 0.0
        %1171 = vmatpush1.msra.mxu0 0.0
        %1172 = vmatprep.subr.mxu0 0.0
        %1173 = vmatpush1.msra.mxu0 0.0
        %1174 = vmatprep.subr.mxu0 0.0
        %1175 = vmatpush1.msra.mxu0 0.0
        %1176 = vmatprep.subr.mxu0 0.0
        %1177 = vmatpush1.msra.mxu0 0.0
        %1178 = vmatprep.subr.mxu0 0.0
        %1179 = vmatpush1.msra.mxu0 0.0
        %1180 = vmatprep.subr.mxu0 0.0
        %1181 = vmatpush1.msra.mxu0 0.0
        %1182 = vmatprep.subr.mxu0 0.0
        %1183 = vmatpush1.msra.mxu0 0.0
        %1184 = vmatprep.subr.mxu0 0.0
        %1185 = vmatpush1.msra.mxu0 0.0
        %1186 = vmatprep.subr.mxu0 0.0
        %1187 = vmatpush1.msra.mxu0 0.0
        %1188 = vmatprep.subr.mxu0 0.0
        %1189 = vmatpush1.msra.mxu0 0.0
        %1190 = vmatprep.subr.mxu0 0.0
        %1191 = vmatpush1.msra.mxu0 0.0
        %1192 = vmatprep.subr.mxu0 0.0
        %1193 = vmatpush1.msra.mxu0 0.0
        %1194 = vmatprep.subr.mxu0 0.0
        %1195 = vmatpush1.msra.mxu0 0.0
        %1196 = vmatprep.subr.mxu0 0.0
        %1197 = vmatpush1.msra.mxu0 0.0
        %1198 = vmatprep.subr.mxu0 0.0
        %1199 = vmatpush1.msra.mxu0 0.0
        %1200 = vmatprep.subr.mxu0 0.0
        %1201 = vmatpush1.msra.mxu0 0.0
        %1202 = vmatprep.subr.mxu0 0.0
        %1203 = vmatpush1.msra.mxu0 0.0
        %1204 = vmatprep.subr.mxu0 0.0
        %1205 = vmatpush1.msra.mxu0 0.0
        %1206 = vmatprep.subr.mxu0 0.0
        %1207 = vmatpush1.msra.mxu0 0.0
        %1208 = vmatprep.subr.mxu0 0.0
        %1209 = vmatpush1.msra.mxu0 0.0
        %1210 = vmatprep.subr.mxu0 0.0
        %1211 = vmatpush1.msra.mxu0 0.0
        %1212 = vmatprep.subr.mxu0 0.0
        %1213 = vmatpush1.msra.mxu0 0.0
        %1214 = vmatprep.subr.mxu0 0.0
        %1215 = vmatpush1.msra.mxu0 0.0
        %1216 = vmatprep.subr.mxu0 0.0
        %1217 = vmatpush1.msra.mxu0 0.0
        %1218 = vmatprep.subr.mxu0 0.0
        %1219 = vmatpush1.msra.mxu0 0.0
        %1220 = vmatprep.subr.mxu0 0.0
        %1221 = vmatpush1.msra.mxu0 0.0
        %1222 = vmatprep.subr.mxu0 0.0
        %1223 = vmatpush1.msra.mxu0 0.0
        %1224 = vmatprep.subr.mxu0 0.0
        %1225 = vmatpush1.msra.mxu0 0.0
        %1226 = vmatprep.mubr.f32.mxu0 0.0
        %1227 = vmatmul.mubr.f32.gmra.mrb[0].mxu0 %v1034
        %v1228 = vpop.f32.mrb[0].mxu0
        %v1229 = vadd.f32 %v716, %v1228
        %v1230 = vpop.f32.mrb[0].mxu0
        %1231 = vmatprep.mubr.f32.mxu0 0.0
        %1232 = vmatmul.mubr.f32.gmra.mrb[0].mxu0 %v1036
        %v1233 = vpop.f32.mrb[0].mxu0
        %v1234 = vadd.f32 %v721, %v1233
        %v1235 = vpop.f32.mrb[0].mxu0
        %1236 = vmatprep.mubr.f32.mxu0 0.0
        %1237 = vmatmul.mubr.f32.gmra.mrb[0].mxu0 %v1038
        %v1238 = vpop.f32.mrb[0].mxu0
        %v1239 = vadd.f32 %v726, %v1238
        %v1240 = vpop.f32.mrb[0].mxu0
        %1241 = vmatprep.mubr.f32.mxu0 0.0
        %1242 = vmatmul.mubr.f32.gmra.mrb[0].mxu0 %v1040
        %v1243 = vpop.f32.mrb[0].mxu0
        %v1244 = vadd.f32 %v731, %v1243
        %v1245 = vpop.f32.mrb[0].mxu0
        %1246 = vmatprep.mubr.f32.mxu0 0.0
        %1247 = vmatmul.mubr.f32.gmra.mrb[0].mxu0 %v1042
        %v1248 = vpop.f32.mrb[0].mxu0
        %v1249 = vadd.f32 %v736, %v1248
        %v1250 = vpop.f32.mrb[0].mxu0
        %1251 = vmatprep.mubr.f32.mxu0 0.0
        %1252 = vmatmul.mubr.f32.gmra.mrb[0].mxu0 %v1044
        %v1253 = vpop.f32.mrb[0].mxu0
        %v1254 = vadd.f32 %v741, %v1253
        %v1255 = vpop.f32.mrb[0].mxu0
        %1256 = vmatprep.mubr.f32.mxu0 0.0
        %1257 = vmatmul.mubr.f32.gmra.mrb[0].mxu0 %v1046
        %v1258 = vpop.f32.mrb[0].mxu0
        %v1259 = vadd.f32 %v746, %v1258
        %v1260 = vpop.f32.mrb[0].mxu0
        %1261 = vmatprep.mubr.f32.mxu0 0.0
        %1262 = vmatmul.mubr.f32.gmra.mrb[0].mxu0 %v1048
        %v1263 = vpop.f32.mrb[0].mxu0
        %v1264 = vadd.f32 %v751, %v1263
        %v1265 = vpop.f32.mrb[0].mxu0
        %1266 = vmatprep.mubr.f32.mxu0 0.0
        %1267 = vmatmul.mubr.f32.gmra.mrb[0].mxu0 %v1050
        %v1268 = vpop.f32.mrb[0].mxu0
        %v1269 = vadd.f32 %v756, %v1268
        %v1270 = vpop.f32.mrb[0].mxu0
        %1271 = vmatprep.mubr.f32.mxu0 0.0
        %1272 = vmatmul.mubr.f32.gmra.mrb[0].mxu0 %v1052
        %v1273 = vpop.f32.mrb[0].mxu0
        %v1274 = vadd.f32 %v761, %v1273
        %v1275 = vpop.f32.mrb[0].mxu0
        %1276 = vmatprep.mubr.f32.mxu0 0.0
        %1277 = vmatmul.mubr.f32.gmra.mrb[0].mxu0 %v1054
        %v1278 = vpop.f32.mrb[0].mxu0
        %v1279 = vadd.f32 %v766, %v1278
        %v1280 = vpop.f32.mrb[0].mxu0
        %1281 = vmatprep.mubr.f32.mxu0 0.0
        %1282 = vmatmul.mubr.f32.gmra.mrb[0].mxu0 %v1056
        %v1283 = vpop.f32.mrb[0].mxu0
        %v1284 = vadd.f32 %v771, %v1283
        %v1285 = vpop.f32.mrb[0].mxu0
        %1286 = vmatprep.mubr.f32.mxu0 0.0
        %1287 = vmatmul.mubr.f32.gmra.mrb[0].mxu0 %v1058
        %v1288 = vpop.f32.mrb[0].mxu0
        %v1289 = vadd.f32 %v776, %v1288
        %v1290 = vpop.f32.mrb[0].mxu0
        %1291 = vmatprep.mubr.f32.mxu0 0.0
        %1292 = vmatmul.mubr.f32.gmra.mrb[0].mxu0 %v1060
        %v1293 = vpop.f32.mrb[0].mxu0
        %v1294 = vadd.f32 %v781, %v1293
        %v1295 = vpop.f32.mrb[0].mxu0
        %1296 = vmatprep.mubr.f32.mxu0 0.0
        %1297 = vmatmul.mubr.f32.gmra.mrb[0].mxu0 %v1062
        %v1298 = vpop.f32.mrb[0].mxu0
        %v1299 = vadd.f32 %v786, %v1298
        %v1300 = vpop.f32.mrb[0].mxu0
        %1301 = vmatprep.mubr.f32.mxu0 0.0
        %1302 = vmatmul.mubr.f32.gmra.mrb[0].mxu0 %v1064
        %v1303 = vpop.f32.mrb[0].mxu0
        %v1304 = vadd.f32 %v791, %v1303
        %v1305 = vpop.f32.mrb[0].mxu0
        %1306 = vmatprep.mubr.f32.mxu0 0.0
        %1307 = vmatmul.mubr.f32.gmra.mrb[0].mxu0 %v1066
        %v1308 = vpop.f32.mrb[0].mxu0
        %v1309 = vadd.f32 %v796, %v1308
        %v1310 = vpop.f32.mrb[0].mxu0
        %1311 = vmatprep.mubr.f32.mxu0 0.0
        %1312 = vmatmul.mubr.f32.gmra.mrb[0].mxu0 %v1068
        %v1313 = vpop.f32.mrb[0].mxu0
        %v1314 = vadd.f32 %v801, %v1313
        %v1315 = vpop.f32.mrb[0].mxu0
        %1316 = vmatprep.mubr.f32.mxu0 0.0
        %1317 = vmatmul.mubr.f32.gmra.mrb[0].mxu0 %v1070
        %v1318 = vpop.f32.mrb[0].mxu0
        %v1319 = vadd.f32 %v806, %v1318
        %v1320 = vpop.f32.mrb[0].mxu0
        %1321 = vmatprep.mubr.f32.mxu0 0.0
        %1322 = vmatmul.mubr.f32.gmra.mrb[0].mxu0 %v1072
        %v1323 = vpop.f32.mrb[0].mxu0
        %v1324 = vadd.f32 %v811, %v1323
        %v1325 = vpop.f32.mrb[0].mxu0
        %1326 = vmatprep.mubr.f32.mxu0 0.0
        %1327 = vmatmul.mubr.f32.gmra.mrb[0].mxu0 %v1074
        %v1328 = vpop.f32.mrb[0].mxu0
        %v1329 = vadd.f32 %v816, %v1328
        %v1330 = vpop.f32.mrb[0].mxu0
        %1331 = vmatprep.mubr.f32.mxu0 0.0
        %1332 = vmatmul.mubr.f32.gmra.mrb[0].mxu0 %v1076
        %v1333 = vpop.f32.mrb[0].mxu0
        %v1334 = vadd.f32 %v821, %v1333
        %v1335 = vpop.f32.mrb[0].mxu0
        %1336 = vmatprep.mubr.f32.mxu0 0.0
        %1337 = vmatmul.mubr.f32.gmra.mrb[0].mxu0 %v1078
        %v1338 = vpop.f32.mrb[0].mxu0
        %v1339 = vadd.f32 %v826, %v1338
        %v1340 = vpop.f32.mrb[0].mxu0
        %1341 = vmatprep.mubr.f32.mxu0 0.0
        %1342 = vmatmul.mubr.f32.gmra.mrb[0].mxu0 %v1080
        %v1343 = vpop.f32.mrb[0].mxu0
        %v1344 = vadd.f32 %v831, %v1343
        %v1345 = vpop.f32.mrb[0].mxu0
        %1346 = vmatprep.mubr.f32.mxu0 0.0
        %1347 = vmatmul.mubr.f32.gmra.mrb[0].mxu0 %v1082
        %v1348 = vpop.f32.mrb[0].mxu0
        %v1349 = vadd.f32 %v836, %v1348
        %v1350 = vpop.f32.mrb[0].mxu0
        %1351 = vmatprep.mubr.f32.mxu0 0.0
        %1352 = vmatmul.mubr.f32.gmra.mrb[0].mxu0 %v1084
        %v1353 = vpop.f32.mrb[0].mxu0
        %v1354 = vadd.f32 %v841, %v1353
        %v1355 = vpop.f32.mrb[0].mxu0
        %1356 = vmatprep.mubr.f32.mxu0 0.0
        %1357 = vmatmul.mubr.f32.gmra.mrb[0].mxu0 %v1086
        %v1358 = vpop.f32.mrb[0].mxu0
        %v1359 = vadd.f32 %v846, %v1358
        %v1360 = vpop.f32.mrb[0].mxu0
        %1361 = vmatprep.mubr.f32.mxu0 0.0
        %1362 = vmatmul.mubr.f32.gmra.mrb[0].mxu0 %v1088
        %v1363 = vpop.f32.mrb[0].mxu0
        %v1364 = vadd.f32 %v851, %v1363
        %v1365 = vpop.f32.mrb[0].mxu0
        %1366 = vmatprep.mubr.f32.mxu0 0.0
        %1367 = vmatmul.mubr.f32.gmra.mrb[0].mxu0 %v1090
        %v1368 = vpop.f32.mrb[0].mxu0
        %v1369 = vadd.f32 %v856, %v1368
        %v1370 = vpop.f32.mrb[0].mxu0
        %1371 = vmatprep.mubr.f32.mxu0 0.0
        %1372 = vmatmul.mubr.f32.gmra.mrb[0].mxu0 %v1092
        %v1373 = vpop.f32.mrb[0].mxu0
        %v1374 = vadd.f32 %v861, %v1373
        %v1375 = vpop.f32.mrb[0].mxu0
        %1376 = vmatprep.mubr.f32.mxu0 0.0
        %1377 = vmatmul.mubr.f32.gmra.mrb[0].mxu0 %v1094
        %v1378 = vpop.f32.mrb[0].mxu0
        %v1379 = vadd.f32 %v866, %v1378
        %v1380 = vpop.f32.mrb[0].mxu0
        %1381 = vmatprep.mubr.f32.mxu0 0.0
        %1382 = vmatmul.mubr.f32.gmra.mrb[0].mxu0 %v1096
        %v1383 = vpop.f32.mrb[0].mxu0
        %v1384 = vadd.f32 %v871, %v1383
        %v1385 = vpop.f32.mrb[0].mxu0
        %1386 = vmatprep.mubr.f32.mxu0 0.0
        %1387 = vmatmul.mubr.f32.gmra.mrb[0].mxu0 %v1098
        %v1388 = vpop.f32.mrb[0].mxu0
        %v1389 = vadd.f32 %v876, %v1388
        %v1390 = vpop.f32.mrb[0].mxu0
        %1391 = vmatprep.mubr.f32.mxu0 0.0
        %1392 = vmatmul.mubr.f32.gmra.mrb[0].mxu0 %v1100
        %v1393 = vpop.f32.mrb[0].mxu0
        %v1394 = vadd.f32 %v881, %v1393
        %v1395 = vpop.f32.mrb[0].mxu0
        %1396 = vmatprep.mubr.f32.mxu0 0.0
        %1397 = vmatmul.mubr.f32.gmra.mrb[0].mxu0 %v1102
        %v1398 = vpop.f32.mrb[0].mxu0
        %v1399 = vadd.f32 %v886, %v1398
        %v1400 = vpop.f32.mrb[0].mxu0
        %1401 = vmatprep.mubr.f32.mxu0 0.0
        %1402 = vmatmul.mubr.f32.gmra.mrb[0].mxu0 %v1104
        %v1403 = vpop.f32.mrb[0].mxu0
        %v1404 = vadd.f32 %v891, %v1403
        %v1405 = vpop.f32.mrb[0].mxu0
        %1406 = vmatprep.mubr.f32.mxu0 0.0
        %1407 = vmatmul.mubr.f32.gmra.mrb[0].mxu0 %v1106
        %v1408 = vpop.f32.mrb[0].mxu0
        %v1409 = vadd.f32 %v896, %v1408
        %v1410 = vpop.f32.mrb[0].mxu0
        %1411 = vmatprep.mubr.f32.mxu0 0.0
        %1412 = vmatmul.mubr.f32.gmra.mrb[0].mxu0 %v1108
        %v1413 = vpop.f32.mrb[0].mxu0
        %v1414 = vadd.f32 %v901, %v1413
        %v1415 = vpop.f32.mrb[0].mxu0
        %1416 = vmatprep.mubr.f32.mxu0 0.0
        %1417 = vmatmul.mubr.f32.gmra.mrb[0].mxu0 %v1110
        %v1418 = vpop.f32.mrb[0].mxu0
        %v1419 = vadd.f32 %v906, %v1418
        %v1420 = vpop.f32.mrb[0].mxu0
        %1421 = vmatprep.mubr.f32.mxu0 0.0
        %1422 = vmatmul.mubr.f32.gmra.mrb[0].mxu0 %v1112
        %v1423 = vpop.f32.mrb[0].mxu0
        %v1424 = vadd.f32 %v911, %v1423
        %v1425 = vpop.f32.mrb[0].mxu0
        %1426 = vmatprep.mubr.f32.mxu0 0.0
        %1427 = vmatmul.mubr.f32.gmra.mrb[0].mxu0 %v1114
        %v1428 = vpop.f32.mrb[0].mxu0
        %v1429 = vadd.f32 %v916, %v1428
        %v1430 = vpop.f32.mrb[0].mxu0
        %1431 = vmatprep.mubr.f32.mxu0 0.0
        %1432 = vmatmul.mubr.f32.gmra.mrb[0].mxu0 %v1116
        %v1433 = vpop.f32.mrb[0].mxu0
        %v1434 = vadd.f32 %v921, %v1433
        %v1435 = vpop.f32.mrb[0].mxu0
        %1436 = vmatprep.mubr.f32.mxu0 0.0
        %1437 = vmatmul.mubr.f32.gmra.mrb[0].mxu0 %v1118
        %v1438 = vpop.f32.mrb[0].mxu0
        %v1439 = vadd.f32 %v926, %v1438
        %v1440 = vpop.f32.mrb[0].mxu0
        %1441 = vmatprep.mubr.f32.mxu0 0.0
        %1442 = vmatmul.mubr.f32.gmra.mrb[0].mxu0 %v1120
        %v1443 = vpop.f32.mrb[0].mxu0
        %v1444 = vadd.f32 %v931, %v1443
        %v1445 = vpop.f32.mrb[0].mxu0
        %1446 = vmatprep.mubr.f32.mxu0 0.0
        %1447 = vmatmul.mubr.f32.gmra.mrb[0].mxu0 %v1122
        %v1448 = vpop.f32.mrb[0].mxu0
        %v1449 = vadd.f32 %v936, %v1448
        %v1450 = vpop.f32.mrb[0].mxu0
        %1451 = vmatprep.mubr.f32.mxu0 0.0
        %1452 = vmatmul.mubr.f32.gmra.mrb[0].mxu0 %v1124
        %v1453 = vpop.f32.mrb[0].mxu0
        %v1454 = vadd.f32 %v941, %v1453
        %v1455 = vpop.f32.mrb[0].mxu0
        %1456 = vmatprep.mubr.f32.mxu0 0.0
        %1457 = vmatmul.mubr.f32.gmra.mrb[0].mxu0 %v1126
        %v1458 = vpop.f32.mrb[0].mxu0
        %v1459 = vadd.f32 %v946, %v1458
        %v1460 = vpop.f32.mrb[0].mxu0
        %1461 = vmatprep.mubr.f32.mxu0 0.0
        %1462 = vmatmul.mubr.f32.gmra.mrb[0].mxu0 %v1128
        %v1463 = vpop.f32.mrb[0].mxu0
        %v1464 = vadd.f32 %v951, %v1463
        %v1465 = vpop.f32.mrb[0].mxu0
        %1466 = vmatprep.mubr.f32.mxu0 0.0
        %1467 = vmatmul.mubr.f32.gmra.mrb[0].mxu0 %v1130
        %v1468 = vpop.f32.mrb[0].mxu0
        %v1469 = vadd.f32 %v956, %v1468
        %v1470 = vpop.f32.mrb[0].mxu0
        %1471 = vmatprep.mubr.f32.mxu0 0.0
        %1472 = vmatmul.mubr.f32.gmra.mrb[0].mxu0 %v1132
        %v1473 = vpop.f32.mrb[0].mxu0
        %v1474 = vadd.f32 %v961, %v1473
        %v1475 = vpop.f32.mrb[0].mxu0
        %1476 = vmatprep.mubr.f32.mxu0 0.0
        %1477 = vmatmul.mubr.f32.gmra.mrb[0].mxu0 %v1134
        %v1478 = vpop.f32.mrb[0].mxu0
        %v1479 = vadd.f32 %v966, %v1478
        %v1480 = vpop.f32.mrb[0].mxu0
        %1481 = vmatprep.mubr.f32.mxu0 0.0
        %1482 = vmatmul.mubr.f32.gmra.mrb[0].mxu0 %v1136
        %v1483 = vpop.f32.mrb[0].mxu0
        %v1484 = vadd.f32 %v971, %v1483
        %v1485 = vpop.f32.mrb[0].mxu0
        %1486 = vmatprep.mubr.f32.mxu0 0.0
        %1487 = vmatmul.mubr.f32.gmra.mrb[0].mxu0 %v1138
        %v1488 = vpop.f32.mrb[0].mxu0
        %v1489 = vadd.f32 %v976, %v1488
        %v1490 = vpop.f32.mrb[0].mxu0
        %1491 = vmatprep.mubr.f32.mxu0 0.0
        %1492 = vmatmul.mubr.f32.gmra.mrb[0].mxu0 %v1140
        %v1493 = vpop.f32.mrb[0].mxu0
        %v1494 = vadd.f32 %v981, %v1493
        %v1495 = vpop.f32.mrb[0].mxu0
        %1496 = vmatprep.mubr.f32.mxu0 0.0
        %1497 = vmatmul.mubr.f32.gmra.mrb[0].mxu0 %v1142
        %v1498 = vpop.f32.mrb[0].mxu0
        %v1499 = vadd.f32 %v986, %v1498
        %v1500 = vpop.f32.mrb[0].mxu0
        %1501 = vmatprep.mubr.f32.mxu0 0.0
        %1502 = vmatmul.mubr.f32.gmra.mrb[0].mxu0 %v1144
        %v1503 = vpop.f32.mrb[0].mxu0
        %v1504 = vadd.f32 %v991, %v1503
        %v1505 = vpop.f32.mrb[0].mxu0
        %1506 = vmatprep.mubr.f32.mxu0 0.0
        %1507 = vmatmul.mubr.f32.gmra.mrb[0].mxu0 %v1146
        %v1508 = vpop.f32.mrb[0].mxu0
        %v1509 = vadd.f32 %v996, %v1508
        %v1510 = vpop.f32.mrb[0].mxu0
        %1511 = vmatprep.mubr.f32.mxu0 0.0
        %1512 = vmatmul.mubr.f32.gmra.mrb[0].mxu0 %v1148
        %v1513 = vpop.f32.mrb[0].mxu0
        %v1514 = vadd.f32 %v1001, %v1513
        %v1515 = vpop.f32.mrb[0].mxu0
        %1516 = vmatprep.mubr.f32.mxu0 0.0
        %1517 = vmatmul.mubr.f32.gmra.mrb[0].mxu0 %v1150
        %v1518 = vpop.f32.mrb[0].mxu0
        %v1519 = vadd.f32 %v1006, %v1518
        %v1520 = vpop.f32.mrb[0].mxu0
        %1521 = vmatprep.mubr.f32.mxu0 0.0
        %1522 = vmatmul.mubr.f32.gmra.mrb[0].mxu0 %v1152
        %v1523 = vpop.f32.mrb[0].mxu0
        %v1524 = vadd.f32 %v1011, %v1523
        %v1525 = vpop.f32.mrb[0].mxu0
        %1526 = vmatprep.mubr.f32.mxu0 0.0
        %1527 = vmatmul.mubr.f32.gmra.mrb[0].mxu0 %v1154
        %v1528 = vpop.f32.mrb[0].mxu0
        %v1529 = vadd.f32 %v1016, %v1528
        %v1530 = vpop.f32.mrb[0].mxu0
        %1531 = vmatprep.mubr.f32.mxu0 0.0
        %1532 = vmatmul.mubr.f32.gmra.mrb[0].mxu0 %v1156
        %v1533 = vpop.f32.mrb[0].mxu0
        %v1534 = vadd.f32 %v1021, %v1533
        %v1535 = vpop.f32.mrb[0].mxu0
        %1536 = vmatprep.mubr.f32.mxu0 0.0
        %1537 = vmatmul.mubr.f32.gmra.mrb[0].mxu0 %v1158
        %v1538 = vpop.f32.mrb[0].mxu0
        %v1539 = vadd.f32 %v1026, %v1538
        %v1540 = vpop.f32.mrb[0].mxu0
        %1541 = vmatprep.mubr.f32.mxu0 0.0
        %1542 = vmatmul.mubr.f32.gmra.mrb[0].mxu0 %v1160
        %v1543 = vpop.f32.mrb[0].mxu0
        %v1544 = vadd.f32 %v1031, %v1543
        %v1545 = vpop.f32.mrb[0].mxu0
        %1546 = vdwg.mxu0
        %vm1547 = vcmask 1045504
        %v1548 = vrot.slane %v196, 2
        %v1549 = vrot.slane %v197, 2
        %v1550 = vsel %vm1547, %v1548, %v1549
        %v1551 = vrot.slane %v198, 2
        %v1552 = vsel %vm1547, %v1549, %v1551
        %v1553 = vrot.slane %v199, 2
        %v1554 = vsel %vm1547, %v1551, %v1553
        %v1555 = vrot.slane %v200, 2
        %v1556 = vsel %vm1547, %v1553, %v1555
        %v1557 = vrot.slane %v201, 2
        %v1558 = vrot.slane %v202, 2
        %v1559 = vsel %vm1547, %v1557, %v1558
        %v1560 = vrot.slane %v203, 2
        %v1561 = vsel %vm1547, %v1558, %v1560
        %v1562 = vrot.slane %v204, 2
        %v1563 = vsel %vm1547, %v1560, %v1562
        %v1564 = vrot.slane %v205, 2
        %v1565 = vsel %vm1547, %v1562, %v1564
        %v1566 = vrot.slane %v206, 2
        %v1567 = vrot.slane %v207, 2
        %v1568 = vsel %vm1547, %v1566, %v1567
        %v1569 = vrot.slane %v208, 2
        %v1570 = vsel %vm1547, %v1567, %v1569
        %v1571 = vrot.slane %v209, 2
        %v1572 = vsel %vm1547, %v1569, %v1571
        %v1573 = vrot.slane %v210, 2
        %v1574 = vsel %vm1547, %v1571, %v1573
        %v1575 = vrot.slane %v211, 2
        %v1576 = vrot.slane %v212, 2
        %v1577 = vsel %vm1547, %v1575, %v1576
        %v1578 = vrot.slane %v213, 2
        %v1579 = vsel %vm1547, %v1576, %v1578
        %v1580 = vrot.slane %v214, 2
        %v1581 = vsel %vm1547, %v1578, %v1580
        %v1582 = vrot.slane %v215, 2
        %v1583 = vsel %vm1547, %v1580, %v1582
        %v1584 = vrot.slane %v216, 2
        %v1585 = vrot.slane %v217, 2
        %v1586 = vsel %vm1547, %v1584, %v1585
        %v1587 = vrot.slane %v218, 2
        %v1588 = vsel %vm1547, %v1585, %v1587
        %v1589 = vrot.slane %v219, 2
        %v1590 = vsel %vm1547, %v1587, %v1589
        %v1591 = vrot.slane %v220, 2
        %v1592 = vsel %vm1547, %v1589, %v1591
        %v1593 = vrot.slane %v221, 2
        %v1594 = vrot.slane %v222, 2
        %v1595 = vsel %vm1547, %v1593, %v1594
        %v1596 = vrot.slane %v223, 2
        %v1597 = vsel %vm1547, %v1594, %v1596
        %v1598 = vrot.slane %v224, 2
        %v1599 = vsel %vm1547, %v1596, %v1598
        %v1600 = vrot.slane %v225, 2
        %v1601 = vsel %vm1547, %v1598, %v1600
        %v1602 = vrot.slane %v226, 2
        %v1603 = vrot.slane %v227, 2
        %v1604 = vsel %vm1547, %v1602, %v1603
        %v1605 = vrot.slane %v228, 2
        %v1606 = vsel %vm1547, %v1603, %v1605
        %v1607 = vrot.slane %v229, 2
        %v1608 = vsel %vm1547, %v1605, %v1607
        %v1609 = vrot.slane %v230, 2
        %v1610 = vsel %vm1547, %v1607, %v1609
        %v1611 = vrot.slane %v231, 2
        %v1612 = vrot.slane %v232, 2
        %v1613 = vsel %vm1547, %v1611, %v1612
        %v1614 = vrot.slane %v233, 2
        %v1615 = vsel %vm1547, %v1612, %v1614
        %v1616 = vrot.slane %v234, 2
        %v1617 = vsel %vm1547, %v1614, %v1616
        %v1618 = vrot.slane %v235, 2
        %v1619 = vsel %vm1547, %v1616, %v1618
        %v1620 = vrot.slane %v236, 2
        %v1621 = vrot.slane %v237, 2
        %v1622 = vsel %vm1547, %v1620, %v1621
        %v1623 = vrot.slane %v238, 2
        %v1624 = vsel %vm1547, %v1621, %v1623
        %v1625 = vrot.slane %v239, 2
        %v1626 = vsel %vm1547, %v1623, %v1625
        %v1627 = vrot.slane %v240, 2
        %v1628 = vsel %vm1547, %v1625, %v1627
        %v1629 = vrot.slane %v241, 2
        %v1630 = vrot.slane %v242, 2
        %v1631 = vsel %vm1547, %v1629, %v1630
        %v1632 = vrot.slane %v243, 2
        %v1633 = vsel %vm1547, %v1630, %v1632
        %v1634 = vrot.slane %v244, 2
        %v1635 = vsel %vm1547, %v1632, %v1634
        %v1636 = vrot.slane %v245, 2
        %v1637 = vsel %vm1547, %v1634, %v1636
        %v1638 = vrot.slane %v246, 2
        %v1639 = vrot.slane %v247, 2
        %v1640 = vsel %vm1547, %v1638, %v1639
        %v1641 = vrot.slane %v248, 2
        %v1642 = vsel %vm1547, %v1639, %v1641
        %v1643 = vrot.slane %v249, 2
        %v1644 = vsel %vm1547, %v1641, %v1643
        %v1645 = vrot.slane %v250, 2
        %v1646 = vsel %vm1547, %v1643, %v1645
        %v1647 = vrot.slane %v251, 2
        %v1648 = vrot.slane %v252, 2
        %v1649 = vsel %vm1547, %v1647, %v1648
        %v1650 = vrot.slane %v253, 2
        %v1651 = vsel %vm1547, %v1648, %v1650
        %v1652 = vrot.slane %v254, 2
        %v1653 = vsel %vm1547, %v1650, %v1652
        %v1654 = vrot.slane %v255, 2
        %v1655 = vsel %vm1547, %v1652, %v1654
        %v1656 = vrot.slane %v256, 2
        %v1657 = vrot.slane %v257, 2
        %v1658 = vsel %vm1547, %v1656, %v1657
        %v1659 = vrot.slane %v258, 2
        %v1660 = vsel %vm1547, %v1657, %v1659
        %v1661 = vrot.slane %v259, 2
        %v1662 = vsel %vm1547, %v1659, %v1661
        %v1663 = vrot.slane %v260, 2
        %v1664 = vsel %vm1547, %v1661, %v1663
        %v1665 = vrot.slane %v261, 2
        %v1666 = vrot.slane %v262, 2
        %v1667 = vsel %vm1547, %v1665, %v1666
        %v1668 = vrot.slane %v263, 2
        %v1669 = vsel %vm1547, %v1666, %v1668
        %v1670 = vrot.slane %v264, 2
        %v1671 = vsel %vm1547, %v1668, %v1670
        %v1672 = vrot.slane %v265, 2
        %v1673 = vsel %vm1547, %v1670, %v1672
        %v1674 = vrot.slane %v266, 2
        %v1675 = vrot.slane %v267, 2
        %v1676 = vsel %vm1547, %v1674, %v1675
        %v1677 = vrot.slane %v268, 2
        %v1678 = vsel %vm1547, %v1675, %v1677
        %v1679 = vrot.slane %v269, 2
        %v1680 = vsel %vm1547, %v1677, %v1679
        %v1681 = vrot.slane %v270, 2
        %v1682 = vsel %vm1547, %v1679, %v1681
        %v1683 = vrot.slane %v271, 2
        %v1684 = vrot.slane %v272, 2
        %v1685 = vsel %vm1547, %v1683, %v1684
        %v1686 = vrot.slane %v273, 2
        %v1687 = vsel %vm1547, %v1684, %v1686
        %v1688 = vrot.slane %v274, 2
        %v1689 = vsel %vm1547, %v1686, %v1688
        %v1690 = vrot.slane %v275, 2
        %v1691 = vsel %vm1547, %v1688, %v1690
        %s1692 = scalar_lea.vmem %s1, 64
        %v1693 = vld [vmem:[%s1692] sm:$0xff]
        %v1694 = vld [vmem:[%s1692 + $0x8] sm:$0xff]
        %v1695 = vld [vmem:[%s1692 + $0x10] sm:$0xff]
        %v1696 = vld [vmem:[%s1692 + $0x18] sm:$0xff]
        %v1697 = vsel %vm520, %v1550, 0
        %v1699 = vsel %vm520, %v1552, 0
        %v1701 = vsel %vm520, %v1554, 0
        %v1703 = vsel %vm520, %v1556, 0
        %v1705 = vsel %vm520, %v1559, 0
        %v1707 = vsel %vm520, %v1561, 0
        %v1709 = vsel %vm520, %v1563, 0
        %v1711 = vsel %vm520, %v1565, 0
        %v1713 = vsel %vm520, %v1568, 0
        %v1715 = vsel %vm520, %v1570, 0
        %v1717 = vsel %vm520, %v1572, 0
        %v1719 = vsel %vm520, %v1574, 0
        %v1721 = vsel %vm520, %v1577, 0
        %v1723 = vsel %vm520, %v1579, 0
        %v1725 = vsel %vm520, %v1581, 0
        %v1727 = vsel %vm520, %v1583, 0
        %v1729 = vsel %vm520, %v1586, 0
        %v1731 = vsel %vm520, %v1588, 0
        %v1733 = vsel %vm520, %v1590, 0
        %v1735 = vsel %vm520, %v1592, 0
        %v1737 = vsel %vm520, %v1595, 0
        %v1739 = vsel %vm520, %v1597, 0
        %v1741 = vsel %vm520, %v1599, 0
        %v1743 = vsel %vm520, %v1601, 0
        %v1745 = vsel %vm520, %v1604, 0
        %v1747 = vsel %vm520, %v1606, 0
        %v1749 = vsel %vm520, %v1608, 0
        %v1751 = vsel %vm520, %v1610, 0
        %v1753 = vsel %vm520, %v1613, 0
        %v1755 = vsel %vm520, %v1615, 0
        %v1757 = vsel %vm520, %v1617, 0
        %v1759 = vsel %vm520, %v1619, 0
        %v1761 = vsel %vm520, %v1622, 0
        %v1763 = vsel %vm520, %v1624, 0
        %v1765 = vsel %vm520, %v1626, 0
        %v1767 = vsel %vm520, %v1628, 0
        %v1769 = vsel %vm520, %v1631, 0
        %v1771 = vsel %vm520, %v1633, 0
        %v1773 = vsel %vm520, %v1635, 0
        %v1775 = vsel %vm520, %v1637, 0
        %v1777 = vsel %vm520, %v1640, 0
        %v1779 = vsel %vm520, %v1642, 0
        %v1781 = vsel %vm520, %v1644, 0
        %v1783 = vsel %vm520, %v1646, 0
        %v1785 = vsel %vm520, %v1649, 0
        %v1787 = vsel %vm520, %v1651, 0
        %v1789 = vsel %vm520, %v1653, 0
        %v1791 = vsel %vm520, %v1655, 0
        %v1793 = vsel %vm520, %v1658, 0
        %v1795 = vsel %vm520, %v1660, 0
        %v1797 = vsel %vm520, %v1662, 0
        %v1799 = vsel %vm520, %v1664, 0
        %v1801 = vsel %vm520, %v1667, 0
        %v1803 = vsel %vm520, %v1669, 0
        %v1805 = vsel %vm520, %v1671, 0
        %v1807 = vsel %vm520, %v1673, 0
        %v1809 = vsel %vm520, %v1676, 0
        %v1811 = vsel %vm520, %v1678, 0
        %v1813 = vsel %vm520, %v1680, 0
        %v1815 = vsel %vm520, %v1682, 0
        %v1817 = vsel %vm520, %v1685, 0
        %v1819 = vsel %vm520, %v1687, 0
        %v1821 = vsel %vm520, %v1689, 0
        %v1823 = vsel %vm520, %v1691, 0
        %1825 = vmatprep.subr.mxu0 0.0
        %1826 = vmatpush1.msra.mxu0 %v1693
        %1827 = vmatprep.subr.mxu0 0.0
        %1828 = vmatpush1.msra.mxu0 %v1694
        %1829 = vmatprep.subr.mxu0 0.0
        %1830 = vmatpush1.msra.mxu0 %v1695
        %1831 = vmatprep.subr.mxu0 0.0
        %1832 = vmatpush1.msra.mxu0 %v1696
        %1833 = vmatprep.subr.mxu0 0.0
        %1834 = vmatpush1.msra.mxu0 0.0
        %1835 = vmatprep.subr.mxu0 0.0
        %1836 = vmatpush1.msra.mxu0 0.0
        %1837 = vmatprep.subr.mxu0 0.0
        %1838 = vmatpush1.msra.mxu0 0.0
        %1839 = vmatprep.subr.mxu0 0.0
        %1840 = vmatpush1.msra.mxu0 0.0
        %1841 = vmatprep.subr.mxu0 0.0
        %1842 = vmatpush1.msra.mxu0 0.0
        %1843 = vmatprep.subr.mxu0 0.0
        %1844 = vmatpush1.msra.mxu0 0.0
        %1845 = vmatprep.subr.mxu0 0.0
        %1846 = vmatpush1.msra.mxu0 0.0
        %1847 = vmatprep.subr.mxu0 0.0
        %1848 = vmatpush1.msra.mxu0 0.0
        %1849 = vmatprep.subr.mxu0 0.0
        %1850 = vmatpush1.msra.mxu0 0.0
        %1851 = vmatprep.subr.mxu0 0.0
        %1852 = vmatpush1.msra.mxu0 0.0
        %1853 = vmatprep.subr.mxu0 0.0
        %1854 = vmatpush1.msra.mxu0 0.0
        %1855 = vmatprep.subr.mxu0 0.0
        %1856 = vmatpush1.msra.mxu0 0.0
        %1857 = vmatprep.subr.mxu0 0.0
        %1858 = vmatpush1.msra.mxu0 0.0
        %1859 = vmatprep.subr.mxu0 0.0
        %1860 = vmatpush1.msra.mxu0 0.0
        %1861 = vmatprep.subr.mxu0 0.0
        %1862 = vmatpush1.msra.mxu0 0.0
        %1863 = vmatprep.subr.mxu0 0.0
        %1864 = vmatpush1.msra.mxu0 0.0
        %1865 = vmatprep.subr.mxu0 0.0
        %1866 = vmatpush1.msra.mxu0 0.0
        %1867 = vmatprep.subr.mxu0 0.0
        %1868 = vmatpush1.msra.mxu0 0.0
        %1869 = vmatprep.subr.mxu0 0.0
        %1870 = vmatpush1.msra.mxu0 0.0
        %1871 = vmatprep.subr.mxu0 0.0
        %1872 = vmatpush1.msra.mxu0 0.0
        %1873 = vmatprep.subr.mxu0 0.0
        %1874 = vmatpush1.msra.mxu0 0.0
        %1875 = vmatprep.subr.mxu0 0.0
        %1876 = vmatpush1.msra.mxu0 0.0
        %1877 = vmatprep.subr.mxu0 0.0
        %1878 = vmatpush1.msra.mxu0 0.0
        %1879 = vmatprep.subr.mxu0 0.0
        %1880 = vmatpush1.msra.mxu0 0.0
        %1881 = vmatprep.subr.mxu0 0.0
        %1882 = vmatpush1.msra.mxu0 0.0
        %1883 = vmatprep.subr.mxu0 0.0
        %1884 = vmatpush1.msra.mxu0 0.0
        %1885 = vmatprep.subr.mxu0 0.0
        %1886 = vmatpush1.msra.mxu0 0.0
        %1887 = vmatprep.subr.mxu0 0.0
        %1888 = vmatpush1.msra.mxu0 0.0
        %1889 = vmatprep.mubr.f32.mxu0 0.0
        %1890 = vmatmul.mubr.f32.gmra.mrb[0].mxu0 %v1697
        %v1891 = vpop.f32.mrb[0].mxu0
        %v1892 = vadd.f32 0.0, %v1891
        %v1893 = vpop.f32.mrb[0].mxu0
        %1894 = vmatprep.mubr.f32.mxu0 0.0
        %1895 = vmatmul.mubr.f32.gmra.mrb[0].mxu0 %v1699
        %v1896 = vpop.f32.mrb[0].mxu0
        %v1897 = vadd.f32 0.0, %v1896
        %v1898 = vpop.f32.mrb[0].mxu0
        %1899 = vmatprep.mubr.f32.mxu0 0.0
        %1900 = vmatmul.mubr.f32.gmra.mrb[0].mxu0 %v1701
        %v1901 = vpop.f32.mrb[0].mxu0
        %v1902 = vadd.f32 0.0, %v1901
        %v1903 = vpop.f32.mrb[0].mxu0
        %1904 = vmatprep.mubr.f32.mxu0 0.0
        %1905 = vmatmul.mubr.f32.gmra.mrb[0].mxu0 %v1703
        %v1906 = vpop.f32.mrb[0].mxu0
        %v1907 = vadd.f32 0.0, %v1906
        %v1908 = vpop.f32.mrb[0].mxu0
        %1909 = vmatprep.mubr.f32.mxu0 0.0
        %1910 = vmatmul.mubr.f32.gmra.mrb[0].mxu0 %v1705
        %v1911 = vpop.f32.mrb[0].mxu0
        %v1912 = vadd.f32 0.0, %v1911
        %v1913 = vpop.f32.mrb[0].mxu0
        %1914 = vmatprep.mubr.f32.mxu0 0.0
        %1915 = vmatmul.mubr.f32.gmra.mrb[0].mxu0 %v1707
        %v1916 = vpop.f32.mrb[0].mxu0
        %v1917 = vadd.f32 0.0, %v1916
        %v1918 = vpop.f32.mrb[0].mxu0
        %1919 = vmatprep.mubr.f32.mxu0 0.0
        %1920 = vmatmul.mubr.f32.gmra.mrb[0].mxu0 %v1709
        %v1921 = vpop.f32.mrb[0].mxu0
        %v1922 = vadd.f32 0.0, %v1921
        %v1923 = vpop.f32.mrb[0].mxu0
        %1924 = vmatprep.mubr.f32.mxu0 0.0
        %1925 = vmatmul.mubr.f32.gmra.mrb[0].mxu0 %v1711
        %v1926 = vpop.f32.mrb[0].mxu0
        %v1927 = vadd.f32 0.0, %v1926
        %v1928 = vpop.f32.mrb[0].mxu0
        %1929 = vmatprep.mubr.f32.mxu0 0.0
        %1930 = vmatmul.mubr.f32.gmra.mrb[0].mxu0 %v1713
        %v1931 = vpop.f32.mrb[0].mxu0
        %v1932 = vadd.f32 0.0, %v1931
        %v1933 = vpop.f32.mrb[0].mxu0
        %1934 = vmatprep.mubr.f32.mxu0 0.0
        %1935 = vmatmul.mubr.f32.gmra.mrb[0].mxu0 %v1715
        %v1936 = vpop.f32.mrb[0].mxu0
        %v1937 = vadd.f32 0.0, %v1936
        %v1938 = vpop.f32.mrb[0].mxu0
        %1939 = vmatprep.mubr.f32.mxu0 0.0
        %1940 = vmatmul.mubr.f32.gmra.mrb[0].mxu0 %v1717
        %v1941 = vpop.f32.mrb[0].mxu0
        %v1942 = vadd.f32 0.0, %v1941
        %v1943 = vpop.f32.mrb[0].mxu0
        %1944 = vmatprep.mubr.f32.mxu0 0.0
        %1945 = vmatmul.mubr.f32.gmra.mrb[0].mxu0 %v1719
        %v1946 = vpop.f32.mrb[0].mxu0
        %v1947 = vadd.f32 0.0, %v1946
        %v1948 = vpop.f32.mrb[0].mxu0
        %1949 = vmatprep.mubr.f32.mxu0 0.0
        %1950 = vmatmul.mubr.f32.gmra.mrb[0].mxu0 %v1721
        %v1951 = vpop.f32.mrb[0].mxu0
        %v1952 = vadd.f32 0.0, %v1951
        %v1953 = vpop.f32.mrb[0].mxu0
        %1954 = vmatprep.mubr.f32.mxu0 0.0
        %1955 = vmatmul.mubr.f32.gmra.mrb[0].mxu0 %v1723
        %v1956 = vpop.f32.mrb[0].mxu0
        %v1957 = vadd.f32 0.0, %v1956
        %v1958 = vpop.f32.mrb[0].mxu0
        %1959 = vmatprep.mubr.f32.mxu0 0.0
        %1960 = vmatmul.mubr.f32.gmra.mrb[0].mxu0 %v1725
        %v1961 = vpop.f32.mrb[0].mxu0
        %v1962 = vadd.f32 0.0, %v1961
        %v1963 = vpop.f32.mrb[0].mxu0
        %1964 = vmatprep.mubr.f32.mxu0 0.0
        %1965 = vmatmul.mubr.f32.gmra.mrb[0].mxu0 %v1727
        %v1966 = vpop.f32.mrb[0].mxu0
        %v1967 = vadd.f32 0.0, %v1966
        %v1968 = vpop.f32.mrb[0].mxu0
        %1969 = vmatprep.mubr.f32.mxu0 0.0
        %1970 = vmatmul.mubr.f32.gmra.mrb[0].mxu0 %v1729
        %v1971 = vpop.f32.mrb[0].mxu0
        %v1972 = vadd.f32 0.0, %v1971
        %v1973 = vpop.f32.mrb[0].mxu0
        %1974 = vmatprep.mubr.f32.mxu0 0.0
        %1975 = vmatmul.mubr.f32.gmra.mrb[0].mxu0 %v1731
        %v1976 = vpop.f32.mrb[0].mxu0
        %v1977 = vadd.f32 0.0, %v1976
        %v1978 = vpop.f32.mrb[0].mxu0
        %1979 = vmatprep.mubr.f32.mxu0 0.0
        %1980 = vmatmul.mubr.f32.gmra.mrb[0].mxu0 %v1733
        %v1981 = vpop.f32.mrb[0].mxu0
        %v1982 = vadd.f32 0.0, %v1981
        %v1983 = vpop.f32.mrb[0].mxu0
        %1984 = vmatprep.mubr.f32.mxu0 0.0
        %1985 = vmatmul.mubr.f32.gmra.mrb[0].mxu0 %v1735
        %v1986 = vpop.f32.mrb[0].mxu0
        %v1987 = vadd.f32 0.0, %v1986
        %v1988 = vpop.f32.mrb[0].mxu0
        %1989 = vmatprep.mubr.f32.mxu0 0.0
        %1990 = vmatmul.mubr.f32.gmra.mrb[0].mxu0 %v1737
        %v1991 = vpop.f32.mrb[0].mxu0
        %v1992 = vadd.f32 0.0, %v1991
        %v1993 = vpop.f32.mrb[0].mxu0
        %1994 = vmatprep.mubr.f32.mxu0 0.0
        %1995 = vmatmul.mubr.f32.gmra.mrb[0].mxu0 %v1739
        %v1996 = vpop.f32.mrb[0].mxu0
        %v1997 = vadd.f32 0.0, %v1996
        %v1998 = vpop.f32.mrb[0].mxu0
        %1999 = vmatprep.mubr.f32.mxu0 0.0
        %2000 = vmatmul.mubr.f32.gmra.mrb[0].mxu0 %v1741
        %v2001 = vpop.f32.mrb[0].mxu0
        %v2002 = vadd.f32 0.0, %v2001
        %v2003 = vpop.f32.mrb[0].mxu0
        %2004 = vmatprep.mubr.f32.mxu0 0.0
        %2005 = vmatmul.mubr.f32.gmra.mrb[0].mxu0 %v1743
        %v2006 = vpop.f32.mrb[0].mxu0
        %v2007 = vadd.f32 0.0, %v2006
        %v2008 = vpop.f32.mrb[0].mxu0
        %2009 = vmatprep.mubr.f32.mxu0 0.0
        %2010 = vmatmul.mubr.f32.gmra.mrb[0].mxu0 %v1745
        %v2011 = vpop.f32.mrb[0].mxu0
        %v2012 = vadd.f32 0.0, %v2011
        %v2013 = vpop.f32.mrb[0].mxu0
        %2014 = vmatprep.mubr.f32.mxu0 0.0
        %2015 = vmatmul.mubr.f32.gmra.mrb[0].mxu0 %v1747
        %v2016 = vpop.f32.mrb[0].mxu0
        %v2017 = vadd.f32 0.0, %v2016
        %v2018 = vpop.f32.mrb[0].mxu0
        %2019 = vmatprep.mubr.f32.mxu0 0.0
        %2020 = vmatmul.mubr.f32.gmra.mrb[0].mxu0 %v1749
        %v2021 = vpop.f32.mrb[0].mxu0
        %v2022 = vadd.f32 0.0, %v2021
        %v2023 = vpop.f32.mrb[0].mxu0
        %2024 = vmatprep.mubr.f32.mxu0 0.0
        %2025 = vmatmul.mubr.f32.gmra.mrb[0].mxu0 %v1751
        %v2026 = vpop.f32.mrb[0].mxu0
        %v2027 = vadd.f32 0.0, %v2026
        %v2028 = vpop.f32.mrb[0].mxu0
        %2029 = vmatprep.mubr.f32.mxu0 0.0
        %2030 = vmatmul.mubr.f32.gmra.mrb[0].mxu0 %v1753
        %v2031 = vpop.f32.mrb[0].mxu0
        %v2032 = vadd.f32 0.0, %v2031
        %v2033 = vpop.f32.mrb[0].mxu0
        %2034 = vmatprep.mubr.f32.mxu0 0.0
        %2035 = vmatmul.mubr.f32.gmra.mrb[0].mxu0 %v1755
        %v2036 = vpop.f32.mrb[0].mxu0
        %v2037 = vadd.f32 0.0, %v2036
        %v2038 = vpop.f32.mrb[0].mxu0
        %2039 = vmatprep.mubr.f32.mxu0 0.0
        %2040 = vmatmul.mubr.f32.gmra.mrb[0].mxu0 %v1757
        %v2041 = vpop.f32.mrb[0].mxu0
        %v2042 = vadd.f32 0.0, %v2041
        %v2043 = vpop.f32.mrb[0].mxu0
        %2044 = vmatprep.mubr.f32.mxu0 0.0
        %2045 = vmatmul.mubr.f32.gmra.mrb[0].mxu0 %v1759
        %v2046 = vpop.f32.mrb[0].mxu0
        %v2047 = vadd.f32 0.0, %v2046
        %v2048 = vpop.f32.mrb[0].mxu0
        %2049 = vmatprep.mubr.f32.mxu0 0.0
        %2050 = vmatmul.mubr.f32.gmra.mrb[0].mxu0 %v1761
        %v2051 = vpop.f32.mrb[0].mxu0
        %v2052 = vadd.f32 0.0, %v2051
        %v2053 = vpop.f32.mrb[0].mxu0
        %2054 = vmatprep.mubr.f32.mxu0 0.0
        %2055 = vmatmul.mubr.f32.gmra.mrb[0].mxu0 %v1763
        %v2056 = vpop.f32.mrb[0].mxu0
        %v2057 = vadd.f32 0.0, %v2056
        %v2058 = vpop.f32.mrb[0].mxu0
        %2059 = vmatprep.mubr.f32.mxu0 0.0
        %2060 = vmatmul.mubr.f32.gmra.mrb[0].mxu0 %v1765
        %v2061 = vpop.f32.mrb[0].mxu0
        %v2062 = vadd.f32 0.0, %v2061
        %v2063 = vpop.f32.mrb[0].mxu0
        %2064 = vmatprep.mubr.f32.mxu0 0.0
        %2065 = vmatmul.mubr.f32.gmra.mrb[0].mxu0 %v1767
        %v2066 = vpop.f32.mrb[0].mxu0
        %v2067 = vadd.f32 0.0, %v2066
        %v2068 = vpop.f32.mrb[0].mxu0
        %2069 = vmatprep.mubr.f32.mxu0 0.0
        %2070 = vmatmul.mubr.f32.gmra.mrb[0].mxu0 %v1769
        %v2071 = vpop.f32.mrb[0].mxu0
        %v2072 = vadd.f32 0.0, %v2071
        %v2073 = vpop.f32.mrb[0].mxu0
        %2074 = vmatprep.mubr.f32.mxu0 0.0
        %2075 = vmatmul.mubr.f32.gmra.mrb[0].mxu0 %v1771
        %v2076 = vpop.f32.mrb[0].mxu0
        %v2077 = vadd.f32 0.0, %v2076
        %v2078 = vpop.f32.mrb[0].mxu0
        %2079 = vmatprep.mubr.f32.mxu0 0.0
        %2080 = vmatmul.mubr.f32.gmra.mrb[0].mxu0 %v1773
        %v2081 = vpop.f32.mrb[0].mxu0
        %v2082 = vadd.f32 0.0, %v2081
        %v2083 = vpop.f32.mrb[0].mxu0
        %2084 = vmatprep.mubr.f32.mxu0 0.0
        %2085 = vmatmul.mubr.f32.gmra.mrb[0].mxu0 %v1775
        %v2086 = vpop.f32.mrb[0].mxu0
        %v2087 = vadd.f32 0.0, %v2086
        %v2088 = vpop.f32.mrb[0].mxu0
        %2089 = vmatprep.mubr.f32.mxu0 0.0
        %2090 = vmatmul.mubr.f32.gmra.mrb[0].mxu0 %v1777
        %v2091 = vpop.f32.mrb[0].mxu0
        %v2092 = vadd.f32 0.0, %v2091
        %v2093 = vpop.f32.mrb[0].mxu0
        %2094 = vmatprep.mubr.f32.mxu0 0.0
        %2095 = vmatmul.mubr.f32.gmra.mrb[0].mxu0 %v1779
        %v2096 = vpop.f32.mrb[0].mxu0
        %v2097 = vadd.f32 0.0, %v2096
        %v2098 = vpop.f32.mrb[0].mxu0
        %2099 = vmatprep.mubr.f32.mxu0 0.0
        %2100 = vmatmul.mubr.f32.gmra.mrb[0].mxu0 %v1781
        %v2101 = vpop.f32.mrb[0].mxu0
        %v2102 = vadd.f32 0.0, %v2101
        %v2103 = vpop.f32.mrb[0].mxu0
        %2104 = vmatprep.mubr.f32.mxu0 0.0
        %2105 = vmatmul.mubr.f32.gmra.mrb[0].mxu0 %v1783
        %v2106 = vpop.f32.mrb[0].mxu0
        %v2107 = vadd.f32 0.0, %v2106
        %v2108 = vpop.f32.mrb[0].mxu0
        %2109 = vmatprep.mubr.f32.mxu0 0.0
        %2110 = vmatmul.mubr.f32.gmra.mrb[0].mxu0 %v1785
        %v2111 = vpop.f32.mrb[0].mxu0
        %v2112 = vadd.f32 0.0, %v2111
        %v2113 = vpop.f32.mrb[0].mxu0
        %2114 = vmatprep.mubr.f32.mxu0 0.0
        %2115 = vmatmul.mubr.f32.gmra.mrb[0].mxu0 %v1787
        %v2116 = vpop.f32.mrb[0].mxu0
        %v2117 = vadd.f32 0.0, %v2116
        %v2118 = vpop.f32.mrb[0].mxu0
        %2119 = vmatprep.mubr.f32.mxu0 0.0
        %2120 = vmatmul.mubr.f32.gmra.mrb[0].mxu0 %v1789
        %v2121 = vpop.f32.mrb[0].mxu0
        %v2122 = vadd.f32 0.0, %v2121
        %v2123 = vpop.f32.mrb[0].mxu0
        %2124 = vmatprep.mubr.f32.mxu0 0.0
        %2125 = vmatmul.mubr.f32.gmra.mrb[0].mxu0 %v1791
        %v2126 = vpop.f32.mrb[0].mxu0
        %v2127 = vadd.f32 0.0, %v2126
        %v2128 = vpop.f32.mrb[0].mxu0
        %2129 = vmatprep.mubr.f32.mxu0 0.0
        %2130 = vmatmul.mubr.f32.gmra.mrb[0].mxu0 %v1793
        %v2131 = vpop.f32.mrb[0].mxu0
        %v2132 = vadd.f32 0.0, %v2131
        %v2133 = vpop.f32.mrb[0].mxu0
        %2134 = vmatprep.mubr.f32.mxu0 0.0
        %2135 = vmatmul.mubr.f32.gmra.mrb[0].mxu0 %v1795
        %v2136 = vpop.f32.mrb[0].mxu0
        %v2137 = vadd.f32 0.0, %v2136
        %v2138 = vpop.f32.mrb[0].mxu0
        %2139 = vmatprep.mubr.f32.mxu0 0.0
        %2140 = vmatmul.mubr.f32.gmra.mrb[0].mxu0 %v1797
        %v2141 = vpop.f32.mrb[0].mxu0
        %v2142 = vadd.f32 0.0, %v2141
        %v2143 = vpop.f32.mrb[0].mxu0
        %2144 = vmatprep.mubr.f32.mxu0 0.0
        %2145 = vmatmul.mubr.f32.gmra.mrb[0].mxu0 %v1799
        %v2146 = vpop.f32.mrb[0].mxu0
        %v2147 = vadd.f32 0.0, %v2146
        %v2148 = vpop.f32.mrb[0].mxu0
        %2149 = vmatprep.mubr.f32.mxu0 0.0
        %2150 = vmatmul.mubr.f32.gmra.mrb[0].mxu0 %v1801
        %v2151 = vpop.f32.mrb[0].mxu0
        %v2152 = vadd.f32 0.0, %v2151
        %v2153 = vpop.f32.mrb[0].mxu0
        %2154 = vmatprep.mubr.f32.mxu0 0.0
        %2155 = vmatmul.mubr.f32.gmra.mrb[0].mxu0 %v1803
        %v2156 = vpop.f32.mrb[0].mxu0
        %v2157 = vadd.f32 0.0, %v2156
        %v2158 = vpop.f32.mrb[0].mxu0
        %2159 = vmatprep.mubr.f32.mxu0 0.0
        %2160 = vmatmul.mubr.f32.gmra.mrb[0].mxu0 %v1805
        %v2161 = vpop.f32.mrb[0].mxu0
        %v2162 = vadd.f32 0.0, %v2161
        %v2163 = vpop.f32.mrb[0].mxu0
        %2164 = vmatprep.mubr.f32.mxu0 0.0
        %2165 = vmatmul.mubr.f32.gmra.mrb[0].mxu0 %v1807
        %v2166 = vpop.f32.mrb[0].mxu0
        %v2167 = vadd.f32 0.0, %v2166
        %v2168 = vpop.f32.mrb[0].mxu0
        %2169 = vmatprep.mubr.f32.mxu0 0.0
        %2170 = vmatmul.mubr.f32.gmra.mrb[0].mxu0 %v1809
        %v2171 = vpop.f32.mrb[0].mxu0
        %v2172 = vadd.f32 0.0, %v2171
        %v2173 = vpop.f32.mrb[0].mxu0
        %2174 = vmatprep.mubr.f32.mxu0 0.0
        %2175 = vmatmul.mubr.f32.gmra.mrb[0].mxu0 %v1811
        %v2176 = vpop.f32.mrb[0].mxu0
        %v2177 = vadd.f32 0.0, %v2176
        %v2178 = vpop.f32.mrb[0].mxu0
        %2179 = vmatprep.mubr.f32.mxu0 0.0
        %2180 = vmatmul.mubr.f32.gmra.mrb[0].mxu0 %v1813
        %v2181 = vpop.f32.mrb[0].mxu0
        %v2182 = vadd.f32 0.0, %v2181
        %v2183 = vpop.f32.mrb[0].mxu0
        %2184 = vmatprep.mubr.f32.mxu0 0.0
        %2185 = vmatmul.mubr.f32.gmra.mrb[0].mxu0 %v1815
        %v2186 = vpop.f32.mrb[0].mxu0
        %v2187 = vadd.f32 0.0, %v2186
        %v2188 = vpop.f32.mrb[0].mxu0
        %2189 = vmatprep.mubr.f32.mxu0 0.0
        %2190 = vmatmul.mubr.f32.gmra.mrb[0].mxu0 %v1817
        %v2191 = vpop.f32.mrb[0].mxu0
        %v2192 = vadd.f32 0.0, %v2191
        %v2193 = vpop.f32.mrb[0].mxu0
        %2194 = vmatprep.mubr.f32.mxu0 0.0
        %2195 = vmatmul.mubr.f32.gmra.mrb[0].mxu0 %v1819
        %v2196 = vpop.f32.mrb[0].mxu0
        %v2197 = vadd.f32 0.0, %v2196
        %v2198 = vpop.f32.mrb[0].mxu0
        %2199 = vmatprep.mubr.f32.mxu0 0.0
        %2200 = vmatmul.mubr.f32.gmra.mrb[0].mxu0 %v1821
        %v2201 = vpop.f32.mrb[0].mxu0
        %v2202 = vadd.f32 0.0, %v2201
        %v2203 = vpop.f32.mrb[0].mxu0
        %2204 = vmatprep.mubr.f32.mxu0 0.0
        %2205 = vmatmul.mubr.f32.gmra.mrb[0].mxu0 %v1823
        %v2206 = vpop.f32.mrb[0].mxu0
        %v2207 = vadd.f32 0.0, %v2206
        %v2208 = vpop.f32.mrb[0].mxu0
        %2209 = vdwg.mxu0
        %v2210 = vadd.f32 %v1229, %v1892
        %v2211 = vadd.f32 %v1234, %v1897
        %v2212 = vadd.f32 %v1239, %v1902
        %v2213 = vadd.f32 %v1244, %v1907
        %v2214 = vadd.f32 %v1249, %v1912
        %v2215 = vadd.f32 %v1254, %v1917
        %v2216 = vadd.f32 %v1259, %v1922
        %v2217 = vadd.f32 %v1264, %v1927
        %v2218 = vadd.f32 %v1269, %v1932
        %v2219 = vadd.f32 %v1274, %v1937
        %v2220 = vadd.f32 %v1279, %v1942
        %v2221 = vadd.f32 %v1284, %v1947
        %v2222 = vadd.f32 %v1289, %v1952
        %v2223 = vadd.f32 %v1294, %v1957
        %v2224 = vadd.f32 %v1299, %v1962
        %v2225 = vadd.f32 %v1304, %v1967
        %v2226 = vadd.f32 %v1309, %v1972
        %v2227 = vadd.f32 %v1314, %v1977
        %v2228 = vadd.f32 %v1319, %v1982
        %v2229 = vadd.f32 %v1324, %v1987
        %v2230 = vadd.f32 %v1329, %v1992
        %v2231 = vadd.f32 %v1334, %v1997
        %v2232 = vadd.f32 %v1339, %v2002
        %v2233 = vadd.f32 %v1344, %v2007
        %v2234 = vadd.f32 %v1349, %v2012
        %v2235 = vadd.f32 %v1354, %v2017
        %v2236 = vadd.f32 %v1359, %v2022
        %v2237 = vadd.f32 %v1364, %v2027
        %v2238 = vadd.f32 %v1369, %v2032
        %v2239 = vadd.f32 %v1374, %v2037
        %v2240 = vadd.f32 %v1379, %v2042
        %v2241 = vadd.f32 %v1384, %v2047
        %v2242 = vadd.f32 %v1389, %v2052
        %v2243 = vadd.f32 %v1394, %v2057
        %v2244 = vadd.f32 %v1399, %v2062
        %v2245 = vadd.f32 %v1404, %v2067
        %v2246 = vadd.f32 %v1409, %v2072
        %v2247 = vadd.f32 %v1414, %v2077
        %v2248 = vadd.f32 %v1419, %v2082
        %v2249 = vadd.f32 %v1424, %v2087
        %v2250 = vadd.f32 %v1429, %v2092
        %v2251 = vadd.f32 %v1434, %v2097
        %v2252 = vadd.f32 %v1439, %v2102
        %v2253 = vadd.f32 %v1444, %v2107
        %v2254 = vadd.f32 %v1449, %v2112
        %v2255 = vadd.f32 %v1454, %v2117
        %v2256 = vadd.f32 %v1459, %v2122
        %v2257 = vadd.f32 %v1464, %v2127
        %v2258 = vadd.f32 %v1469, %v2132
        %v2259 = vadd.f32 %v1474, %v2137
        %v2260 = vadd.f32 %v1479, %v2142
        %v2261 = vadd.f32 %v1484, %v2147
        %v2262 = vadd.f32 %v1489, %v2152
        %v2263 = vadd.f32 %v1494, %v2157
        %v2264 = vadd.f32 %v1499, %v2162
        %v2265 = vadd.f32 %v1504, %v2167
        %v2266 = vadd.f32 %v1509, %v2172
        %v2267 = vadd.f32 %v1514, %v2177
        %v2268 = vadd.f32 %v1519, %v2182
        %v2269 = vadd.f32 %v1524, %v2187
        %v2270 = vadd.f32 %v1529, %v2192
        %v2271 = vadd.f32 %v1534, %v2197
        %v2272 = vadd.f32 %v1539, %v2202
        %v2273 = vadd.f32 %v1544, %v2207
        %s2274 = scalar_lea.vmem %s1, 96
        %v2275 = vld [vmem:[%s2274] sm:$0xff]
        %v2276 = vld [vmem:[%s2274 + $0x8] sm:$0xff]
        %v2277 = vld [vmem:[%s2274 + $0x10] sm:$0xff]
        %v2278 = vld [vmem:[%s2274 + $0x18] sm:$0xff]
        %v2280 = vsel %vm520, %v276, 0
        %v2283 = vsel %vm520, %v277, 0
        %v2286 = vsel %vm520, %v278, 0
        %v2289 = vsel %vm520, %v279, 0
        %2291 = vmatprep.subr.mxu0 0.0
        %2292 = vmatpush1.msra.mxu0 %v2275
        %2293 = vmatprep.subr.mxu0 0.0
        %2294 = vmatpush1.msra.mxu0 %v2276
        %2295 = vmatprep.subr.mxu0 0.0
        %2296 = vmatpush1.msra.mxu0 %v2277
        %2297 = vmatprep.subr.mxu0 0.0
        %2298 = vmatpush1.msra.mxu0 %v2278
        %2299 = vmatprep.subr.mxu0 0.0
        %2300 = vmatpush1.msra.mxu0 0.0
        %2301 = vmatprep.subr.mxu0 0.0
        %2302 = vmatpush1.msra.mxu0 0.0
        %2303 = vmatprep.subr.mxu0 0.0
        %2304 = vmatpush1.msra.mxu0 0.0
        %2305 = vmatprep.subr.mxu0 0.0
        %2306 = vmatpush1.msra.mxu0 0.0
        %2307 = vmatprep.subr.mxu0 0.0
        %2308 = vmatpush1.msra.mxu0 0.0
        %2309 = vmatprep.subr.mxu0 0.0
        %2310 = vmatpush1.msra.mxu0 0.0
        %2311 = vmatprep.subr.mxu0 0.0
        %2312 = vmatpush1.msra.mxu0 0.0
        %2313 = vmatprep.subr.mxu0 0.0
        %2314 = vmatpush1.msra.mxu0 0.0
        %2315 = vmatprep.subr.mxu0 0.0
        %2316 = vmatpush1.msra.mxu0 0.0
        %2317 = vmatprep.subr.mxu0 0.0
        %2318 = vmatpush1.msra.mxu0 0.0
        %2319 = vmatprep.subr.mxu0 0.0
        %2320 = vmatpush1.msra.mxu0 0.0
        %2321 = vmatprep.subr.mxu0 0.0
        %2322 = vmatpush1.msra.mxu0 0.0
        %2323 = vmatprep.subr.mxu0 0.0
        %2324 = vmatpush1.msra.mxu0 0.0
        %2325 = vmatprep.subr.mxu0 0.0
        %2326 = vmatpush1.msra.mxu0 0.0
        %2327 = vmatprep.subr.mxu0 0.0
        %2328 = vmatpush1.msra.mxu0 0.0
        %2329 = vmatprep.subr.mxu0 0.0
        %2330 = vmatpush1.msra.mxu0 0.0
        %2331 = vmatprep.subr.mxu0 0.0
        %2332 = vmatpush1.msra.mxu0 0.0
        %2333 = vmatprep.subr.mxu0 0.0
        %2334 = vmatpush1.msra.mxu0 0.0
        %2335 = vmatprep.subr.mxu0 0.0
        %2336 = vmatpush1.msra.mxu0 0.0
        %2337 = vmatprep.subr.mxu0 0.0
        %2338 = vmatpush1.msra.mxu0 0.0
        %2339 = vmatprep.subr.mxu0 0.0
        %2340 = vmatpush1.msra.mxu0 0.0
        %2341 = vmatprep.subr.mxu0 0.0
        %2342 = vmatpush1.msra.mxu0 0.0
        %2343 = vmatprep.subr.mxu0 0.0
        %2344 = vmatpush1.msra.mxu0 0.0
        %2345 = vmatprep.subr.mxu0 0.0
        %2346 = vmatpush1.msra.mxu0 0.0
        %2347 = vmatprep.subr.mxu0 0.0
        %2348 = vmatpush1.msra.mxu0 0.0
        %2349 = vmatprep.subr.mxu0 0.0
        %2350 = vmatpush1.msra.mxu0 0.0
        %2351 = vmatprep.subr.mxu0 0.0
        %2352 = vmatpush1.msra.mxu0 0.0
        %2353 = vmatprep.subr.mxu0 0.0
        %2354 = vmatpush1.msra.mxu0 0.0
        %2355 = vmatprep.mubr.f32.mxu0 0.0
        %2356 = vmatmul.mubr.f32.gmra.mrb[0].mxu0 %v1042
        %v2357 = vpop.f32.mrb[0].mxu0
        %v2358 = vadd.f32 0.0, %v2357
        %v2359 = vpop.f32.mrb[0].mxu0
        %2360 = vmatprep.mubr.f32.mxu0 0.0
        %2361 = vmatmul.mubr.f32.gmra.mrb[0].mxu0 %v1044
        %v2362 = vpop.f32.mrb[0].mxu0
        %v2363 = vadd.f32 0.0, %v2362
        %v2364 = vpop.f32.mrb[0].mxu0
        %2365 = vmatprep.mubr.f32.mxu0 0.0
        %2366 = vmatmul.mubr.f32.gmra.mrb[0].mxu0 %v1046
        %v2367 = vpop.f32.mrb[0].mxu0
        %v2368 = vadd.f32 0.0, %v2367
        %v2369 = vpop.f32.mrb[0].mxu0
        %2370 = vmatprep.mubr.f32.mxu0 0.0
        %2371 = vmatmul.mubr.f32.gmra.mrb[0].mxu0 %v1048
        %v2372 = vpop.f32.mrb[0].mxu0
        %v2373 = vadd.f32 0.0, %v2372
        %v2374 = vpop.f32.mrb[0].mxu0
        %2375 = vmatprep.mubr.f32.mxu0 0.0
        %2376 = vmatmul.mubr.f32.gmra.mrb[0].mxu0 %v1050
        %v2377 = vpop.f32.mrb[0].mxu0
        %v2378 = vadd.f32 0.0, %v2377
        %v2379 = vpop.f32.mrb[0].mxu0
        %2380 = vmatprep.mubr.f32.mxu0 0.0
        %2381 = vmatmul.mubr.f32.gmra.mrb[0].mxu0 %v1052
        %v2382 = vpop.f32.mrb[0].mxu0
        %v2383 = vadd.f32 0.0, %v2382
        %v2384 = vpop.f32.mrb[0].mxu0
        %2385 = vmatprep.mubr.f32.mxu0 0.0
        %2386 = vmatmul.mubr.f32.gmra.mrb[0].mxu0 %v1054
        %v2387 = vpop.f32.mrb[0].mxu0
        %v2388 = vadd.f32 0.0, %v2387
        %v2389 = vpop.f32.mrb[0].mxu0
        %2390 = vmatprep.mubr.f32.mxu0 0.0
        %2391 = vmatmul.mubr.f32.gmra.mrb[0].mxu0 %v1056
        %v2392 = vpop.f32.mrb[0].mxu0
        %v2393 = vadd.f32 0.0, %v2392
        %v2394 = vpop.f32.mrb[0].mxu0
        %2395 = vmatprep.mubr.f32.mxu0 0.0
        %2396 = vmatmul.mubr.f32.gmra.mrb[0].mxu0 %v1058
        %v2397 = vpop.f32.mrb[0].mxu0
        %v2398 = vadd.f32 0.0, %v2397
        %v2399 = vpop.f32.mrb[0].mxu0
        %2400 = vmatprep.mubr.f32.mxu0 0.0
        %2401 = vmatmul.mubr.f32.gmra.mrb[0].mxu0 %v1060
        %v2402 = vpop.f32.mrb[0].mxu0
        %v2403 = vadd.f32 0.0, %v2402
        %v2404 = vpop.f32.mrb[0].mxu0
        %2405 = vmatprep.mubr.f32.mxu0 0.0
        %2406 = vmatmul.mubr.f32.gmra.mrb[0].mxu0 %v1062
        %v2407 = vpop.f32.mrb[0].mxu0
        %v2408 = vadd.f32 0.0, %v2407
        %v2409 = vpop.f32.mrb[0].mxu0
        %2410 = vmatprep.mubr.f32.mxu0 0.0
        %2411 = vmatmul.mubr.f32.gmra.mrb[0].mxu0 %v1064
        %v2412 = vpop.f32.mrb[0].mxu0
        %v2413 = vadd.f32 0.0, %v2412
        %v2414 = vpop.f32.mrb[0].mxu0
        %2415 = vmatprep.mubr.f32.mxu0 0.0
        %2416 = vmatmul.mubr.f32.gmra.mrb[0].mxu0 %v1066
        %v2417 = vpop.f32.mrb[0].mxu0
        %v2418 = vadd.f32 0.0, %v2417
        %v2419 = vpop.f32.mrb[0].mxu0
        %2420 = vmatprep.mubr.f32.mxu0 0.0
        %2421 = vmatmul.mubr.f32.gmra.mrb[0].mxu0 %v1068
        %v2422 = vpop.f32.mrb[0].mxu0
        %v2423 = vadd.f32 0.0, %v2422
        %v2424 = vpop.f32.mrb[0].mxu0
        %2425 = vmatprep.mubr.f32.mxu0 0.0
        %2426 = vmatmul.mubr.f32.gmra.mrb[0].mxu0 %v1070
        %v2427 = vpop.f32.mrb[0].mxu0
        %v2428 = vadd.f32 0.0, %v2427
        %v2429 = vpop.f32.mrb[0].mxu0
        %2430 = vmatprep.mubr.f32.mxu0 0.0
        %2431 = vmatmul.mubr.f32.gmra.mrb[0].mxu0 %v1072
        %v2432 = vpop.f32.mrb[0].mxu0
        %v2433 = vadd.f32 0.0, %v2432
        %v2434 = vpop.f32.mrb[0].mxu0
        %2435 = vmatprep.mubr.f32.mxu0 0.0
        %2436 = vmatmul.mubr.f32.gmra.mrb[0].mxu0 %v1074
        %v2437 = vpop.f32.mrb[0].mxu0
        %v2438 = vadd.f32 0.0, %v2437
        %v2439 = vpop.f32.mrb[0].mxu0
        %2440 = vmatprep.mubr.f32.mxu0 0.0
        %2441 = vmatmul.mubr.f32.gmra.mrb[0].mxu0 %v1076
        %v2442 = vpop.f32.mrb[0].mxu0
        %v2443 = vadd.f32 0.0, %v2442
        %v2444 = vpop.f32.mrb[0].mxu0
        %2445 = vmatprep.mubr.f32.mxu0 0.0
        %2446 = vmatmul.mubr.f32.gmra.mrb[0].mxu0 %v1078
        %v2447 = vpop.f32.mrb[0].mxu0
        %v2448 = vadd.f32 0.0, %v2447
        %v2449 = vpop.f32.mrb[0].mxu0
        %2450 = vmatprep.mubr.f32.mxu0 0.0
        %2451 = vmatmul.mubr.f32.gmra.mrb[0].mxu0 %v1080
        %v2452 = vpop.f32.mrb[0].mxu0
        %v2453 = vadd.f32 0.0, %v2452
        %v2454 = vpop.f32.mrb[0].mxu0
        %2455 = vmatprep.mubr.f32.mxu0 0.0
        %2456 = vmatmul.mubr.f32.gmra.mrb[0].mxu0 %v1082
        %v2457 = vpop.f32.mrb[0].mxu0
        %v2458 = vadd.f32 0.0, %v2457
        %v2459 = vpop.f32.mrb[0].mxu0
        %2460 = vmatprep.mubr.f32.mxu0 0.0
        %2461 = vmatmul.mubr.f32.gmra.mrb[0].mxu0 %v1084
        %v2462 = vpop.f32.mrb[0].mxu0
        %v2463 = vadd.f32 0.0, %v2462
        %v2464 = vpop.f32.mrb[0].mxu0
        %2465 = vmatprep.mubr.f32.mxu0 0.0
        %2466 = vmatmul.mubr.f32.gmra.mrb[0].mxu0 %v1086
        %v2467 = vpop.f32.mrb[0].mxu0
        %v2468 = vadd.f32 0.0, %v2467
        %v2469 = vpop.f32.mrb[0].mxu0
        %2470 = vmatprep.mubr.f32.mxu0 0.0
        %2471 = vmatmul.mubr.f32.gmra.mrb[0].mxu0 %v1088
        %v2472 = vpop.f32.mrb[0].mxu0
        %v2473 = vadd.f32 0.0, %v2472
        %v2474 = vpop.f32.mrb[0].mxu0
        %2475 = vmatprep.mubr.f32.mxu0 0.0
        %2476 = vmatmul.mubr.f32.gmra.mrb[0].mxu0 %v1090
        %v2477 = vpop.f32.mrb[0].mxu0
        %v2478 = vadd.f32 0.0, %v2477
        %v2479 = vpop.f32.mrb[0].mxu0
        %2480 = vmatprep.mubr.f32.mxu0 0.0
        %2481 = vmatmul.mubr.f32.gmra.mrb[0].mxu0 %v1092
        %v2482 = vpop.f32.mrb[0].mxu0
        %v2483 = vadd.f32 0.0, %v2482
        %v2484 = vpop.f32.mrb[0].mxu0
        %2485 = vmatprep.mubr.f32.mxu0 0.0
        %2486 = vmatmul.mubr.f32.gmra.mrb[0].mxu0 %v1094
        %v2487 = vpop.f32.mrb[0].mxu0
        %v2488 = vadd.f32 0.0, %v2487
        %v2489 = vpop.f32.mrb[0].mxu0
        %2490 = vmatprep.mubr.f32.mxu0 0.0
        %2491 = vmatmul.mubr.f32.gmra.mrb[0].mxu0 %v1096
        %v2492 = vpop.f32.mrb[0].mxu0
        %v2493 = vadd.f32 0.0, %v2492
        %v2494 = vpop.f32.mrb[0].mxu0
        %2495 = vmatprep.mubr.f32.mxu0 0.0
        %2496 = vmatmul.mubr.f32.gmra.mrb[0].mxu0 %v1098
        %v2497 = vpop.f32.mrb[0].mxu0
        %v2498 = vadd.f32 0.0, %v2497
        %v2499 = vpop.f32.mrb[0].mxu0
        %2500 = vmatprep.mubr.f32.mxu0 0.0
        %2501 = vmatmul.mubr.f32.gmra.mrb[0].mxu0 %v1100
        %v2502 = vpop.f32.mrb[0].mxu0
        %v2503 = vadd.f32 0.0, %v2502
        %v2504 = vpop.f32.mrb[0].mxu0
        %2505 = vmatprep.mubr.f32.mxu0 0.0
        %2506 = vmatmul.mubr.f32.gmra.mrb[0].mxu0 %v1102
        %v2507 = vpop.f32.mrb[0].mxu0
        %v2508 = vadd.f32 0.0, %v2507
        %v2509 = vpop.f32.mrb[0].mxu0
        %2510 = vmatprep.mubr.f32.mxu0 0.0
        %2511 = vmatmul.mubr.f32.gmra.mrb[0].mxu0 %v1104
        %v2512 = vpop.f32.mrb[0].mxu0
        %v2513 = vadd.f32 0.0, %v2512
        %v2514 = vpop.f32.mrb[0].mxu0
        %2515 = vmatprep.mubr.f32.mxu0 0.0
        %2516 = vmatmul.mubr.f32.gmra.mrb[0].mxu0 %v1106
        %v2517 = vpop.f32.mrb[0].mxu0
        %v2518 = vadd.f32 0.0, %v2517
        %v2519 = vpop.f32.mrb[0].mxu0
        %2520 = vmatprep.mubr.f32.mxu0 0.0
        %2521 = vmatmul.mubr.f32.gmra.mrb[0].mxu0 %v1108
        %v2522 = vpop.f32.mrb[0].mxu0
        %v2523 = vadd.f32 0.0, %v2522
        %v2524 = vpop.f32.mrb[0].mxu0
        %2525 = vmatprep.mubr.f32.mxu0 0.0
        %2526 = vmatmul.mubr.f32.gmra.mrb[0].mxu0 %v1110
        %v2527 = vpop.f32.mrb[0].mxu0
        %v2528 = vadd.f32 0.0, %v2527
        %v2529 = vpop.f32.mrb[0].mxu0
        %2530 = vmatprep.mubr.f32.mxu0 0.0
        %2531 = vmatmul.mubr.f32.gmra.mrb[0].mxu0 %v1112
        %v2532 = vpop.f32.mrb[0].mxu0
        %v2533 = vadd.f32 0.0, %v2532
        %v2534 = vpop.f32.mrb[0].mxu0
        %2535 = vmatprep.mubr.f32.mxu0 0.0
        %2536 = vmatmul.mubr.f32.gmra.mrb[0].mxu0 %v1114
        %v2537 = vpop.f32.mrb[0].mxu0
        %v2538 = vadd.f32 0.0, %v2537
        %v2539 = vpop.f32.mrb[0].mxu0
        %2540 = vmatprep.mubr.f32.mxu0 0.0
        %2541 = vmatmul.mubr.f32.gmra.mrb[0].mxu0 %v1116
        %v2542 = vpop.f32.mrb[0].mxu0
        %v2543 = vadd.f32 0.0, %v2542
        %v2544 = vpop.f32.mrb[0].mxu0
        %2545 = vmatprep.mubr.f32.mxu0 0.0
        %2546 = vmatmul.mubr.f32.gmra.mrb[0].mxu0 %v1118
        %v2547 = vpop.f32.mrb[0].mxu0
        %v2548 = vadd.f32 0.0, %v2547
        %v2549 = vpop.f32.mrb[0].mxu0
        %2550 = vmatprep.mubr.f32.mxu0 0.0
        %2551 = vmatmul.mubr.f32.gmra.mrb[0].mxu0 %v1120
        %v2552 = vpop.f32.mrb[0].mxu0
        %v2553 = vadd.f32 0.0, %v2552
        %v2554 = vpop.f32.mrb[0].mxu0
        %2555 = vmatprep.mubr.f32.mxu0 0.0
        %2556 = vmatmul.mubr.f32.gmra.mrb[0].mxu0 %v1122
        %v2557 = vpop.f32.mrb[0].mxu0
        %v2558 = vadd.f32 0.0, %v2557
        %v2559 = vpop.f32.mrb[0].mxu0
        %2560 = vmatprep.mubr.f32.mxu0 0.0
        %2561 = vmatmul.mubr.f32.gmra.mrb[0].mxu0 %v1124
        %v2562 = vpop.f32.mrb[0].mxu0
        %v2563 = vadd.f32 0.0, %v2562
        %v2564 = vpop.f32.mrb[0].mxu0
        %2565 = vmatprep.mubr.f32.mxu0 0.0
        %2566 = vmatmul.mubr.f32.gmra.mrb[0].mxu0 %v1126
        %v2567 = vpop.f32.mrb[0].mxu0
        %v2568 = vadd.f32 0.0, %v2567
        %v2569 = vpop.f32.mrb[0].mxu0
        %2570 = vmatprep.mubr.f32.mxu0 0.0
        %2571 = vmatmul.mubr.f32.gmra.mrb[0].mxu0 %v1128
        %v2572 = vpop.f32.mrb[0].mxu0
        %v2573 = vadd.f32 0.0, %v2572
        %v2574 = vpop.f32.mrb[0].mxu0
        %2575 = vmatprep.mubr.f32.mxu0 0.0
        %2576 = vmatmul.mubr.f32.gmra.mrb[0].mxu0 %v1130
        %v2577 = vpop.f32.mrb[0].mxu0
        %v2578 = vadd.f32 0.0, %v2577
        %v2579 = vpop.f32.mrb[0].mxu0
        %2580 = vmatprep.mubr.f32.mxu0 0.0
        %2581 = vmatmul.mubr.f32.gmra.mrb[0].mxu0 %v1132
        %v2582 = vpop.f32.mrb[0].mxu0
        %v2583 = vadd.f32 0.0, %v2582
        %v2584 = vpop.f32.mrb[0].mxu0
        %2585 = vmatprep.mubr.f32.mxu0 0.0
        %2586 = vmatmul.mubr.f32.gmra.mrb[0].mxu0 %v1134
        %v2587 = vpop.f32.mrb[0].mxu0
        %v2588 = vadd.f32 0.0, %v2587
        %v2589 = vpop.f32.mrb[0].mxu0
        %2590 = vmatprep.mubr.f32.mxu0 0.0
        %2591 = vmatmul.mubr.f32.gmra.mrb[0].mxu0 %v1136
        %v2592 = vpop.f32.mrb[0].mxu0
        %v2593 = vadd.f32 0.0, %v2592
        %v2594 = vpop.f32.mrb[0].mxu0
        %2595 = vmatprep.mubr.f32.mxu0 0.0
        %2596 = vmatmul.mubr.f32.gmra.mrb[0].mxu0 %v1138
        %v2597 = vpop.f32.mrb[0].mxu0
        %v2598 = vadd.f32 0.0, %v2597
        %v2599 = vpop.f32.mrb[0].mxu0
        %2600 = vmatprep.mubr.f32.mxu0 0.0
        %2601 = vmatmul.mubr.f32.gmra.mrb[0].mxu0 %v1140
        %v2602 = vpop.f32.mrb[0].mxu0
        %v2603 = vadd.f32 0.0, %v2602
        %v2604 = vpop.f32.mrb[0].mxu0
        %2605 = vmatprep.mubr.f32.mxu0 0.0
        %2606 = vmatmul.mubr.f32.gmra.mrb[0].mxu0 %v1142
        %v2607 = vpop.f32.mrb[0].mxu0
        %v2608 = vadd.f32 0.0, %v2607
        %v2609 = vpop.f32.mrb[0].mxu0
        %2610 = vmatprep.mubr.f32.mxu0 0.0
        %2611 = vmatmul.mubr.f32.gmra.mrb[0].mxu0 %v1144
        %v2612 = vpop.f32.mrb[0].mxu0
        %v2613 = vadd.f32 0.0, %v2612
        %v2614 = vpop.f32.mrb[0].mxu0
        %2615 = vmatprep.mubr.f32.mxu0 0.0
        %2616 = vmatmul.mubr.f32.gmra.mrb[0].mxu0 %v1146
        %v2617 = vpop.f32.mrb[0].mxu0
        %v2618 = vadd.f32 0.0, %v2617
        %v2619 = vpop.f32.mrb[0].mxu0
        %2620 = vmatprep.mubr.f32.mxu0 0.0
        %2621 = vmatmul.mubr.f32.gmra.mrb[0].mxu0 %v1148
        %v2622 = vpop.f32.mrb[0].mxu0
        %v2623 = vadd.f32 0.0, %v2622
        %v2624 = vpop.f32.mrb[0].mxu0
        %2625 = vmatprep.mubr.f32.mxu0 0.0
        %2626 = vmatmul.mubr.f32.gmra.mrb[0].mxu0 %v1150
        %v2627 = vpop.f32.mrb[0].mxu0
        %v2628 = vadd.f32 0.0, %v2627
        %v2629 = vpop.f32.mrb[0].mxu0
        %2630 = vmatprep.mubr.f32.mxu0 0.0
        %2631 = vmatmul.mubr.f32.gmra.mrb[0].mxu0 %v1152
        %v2632 = vpop.f32.mrb[0].mxu0
        %v2633 = vadd.f32 0.0, %v2632
        %v2634 = vpop.f32.mrb[0].mxu0
        %2635 = vmatprep.mubr.f32.mxu0 0.0
        %2636 = vmatmul.mubr.f32.gmra.mrb[0].mxu0 %v1154
        %v2637 = vpop.f32.mrb[0].mxu0
        %v2638 = vadd.f32 0.0, %v2637
        %v2639 = vpop.f32.mrb[0].mxu0
        %2640 = vmatprep.mubr.f32.mxu0 0.0
        %2641 = vmatmul.mubr.f32.gmra.mrb[0].mxu0 %v1156
        %v2642 = vpop.f32.mrb[0].mxu0
        %v2643 = vadd.f32 0.0, %v2642
        %v2644 = vpop.f32.mrb[0].mxu0
        %2645 = vmatprep.mubr.f32.mxu0 0.0
        %2646 = vmatmul.mubr.f32.gmra.mrb[0].mxu0 %v1158
        %v2647 = vpop.f32.mrb[0].mxu0
        %v2648 = vadd.f32 0.0, %v2647
        %v2649 = vpop.f32.mrb[0].mxu0
        %2650 = vmatprep.mubr.f32.mxu0 0.0
        %2651 = vmatmul.mubr.f32.gmra.mrb[0].mxu0 %v1160
        %v2652 = vpop.f32.mrb[0].mxu0
        %v2653 = vadd.f32 0.0, %v2652
        %v2654 = vpop.f32.mrb[0].mxu0
        %2655 = vmatprep.mubr.f32.mxu0 0.0
        %2656 = vmatmul.mubr.f32.gmra.mrb[0].mxu0 %v2280
        %v2657 = vpop.f32.mrb[0].mxu0
        %v2658 = vadd.f32 0.0, %v2657
        %v2659 = vpop.f32.mrb[0].mxu0
        %2660 = vmatprep.mubr.f32.mxu0 0.0
        %2661 = vmatmul.mubr.f32.gmra.mrb[0].mxu0 %v2283
        %v2662 = vpop.f32.mrb[0].mxu0
        %v2663 = vadd.f32 0.0, %v2662
        %v2664 = vpop.f32.mrb[0].mxu0
        %2665 = vmatprep.mubr.f32.mxu0 0.0
        %2666 = vmatmul.mubr.f32.gmra.mrb[0].mxu0 %v2286
        %v2667 = vpop.f32.mrb[0].mxu0
        %v2668 = vadd.f32 0.0, %v2667
        %v2669 = vpop.f32.mrb[0].mxu0
        %2670 = vmatprep.mubr.f32.mxu0 0.0
        %2671 = vmatmul.mubr.f32.gmra.mrb[0].mxu0 %v2289
        %v2672 = vpop.f32.mrb[0].mxu0
        %v2673 = vadd.f32 0.0, %v2672
        %v2674 = vpop.f32.mrb[0].mxu0
        %2675 = vdwg.mxu0
        %v2676 = vadd.f32 %v2210, %v2358
        %v2677 = vadd.f32 %v2211, %v2363
        %v2678 = vadd.f32 %v2212, %v2368
        %v2679 = vadd.f32 %v2213, %v2373
        %v2680 = vadd.f32 %v2214, %v2378
        %v2681 = vadd.f32 %v2215, %v2383
        %v2682 = vadd.f32 %v2216, %v2388
        %v2683 = vadd.f32 %v2217, %v2393
        %v2684 = vadd.f32 %v2218, %v2398
        %v2685 = vadd.f32 %v2219, %v2403
        %v2686 = vadd.f32 %v2220, %v2408
        %v2687 = vadd.f32 %v2221, %v2413
        %v2688 = vadd.f32 %v2222, %v2418
        %v2689 = vadd.f32 %v2223, %v2423
        %v2690 = vadd.f32 %v2224, %v2428
        %v2691 = vadd.f32 %v2225, %v2433
        %v2692 = vadd.f32 %v2226, %v2438
        %v2693 = vadd.f32 %v2227, %v2443
        %v2694 = vadd.f32 %v2228, %v2448
        %v2695 = vadd.f32 %v2229, %v2453
        %v2696 = vadd.f32 %v2230, %v2458
        %v2697 = vadd.f32 %v2231, %v2463
        %v2698 = vadd.f32 %v2232, %v2468
        %v2699 = vadd.f32 %v2233, %v2473
        %v2700 = vadd.f32 %v2234, %v2478
        %v2701 = vadd.f32 %v2235, %v2483
        %v2702 = vadd.f32 %v2236, %v2488
        %v2703 = vadd.f32 %v2237, %v2493
        %v2704 = vadd.f32 %v2238, %v2498
        %v2705 = vadd.f32 %v2239, %v2503
        %v2706 = vadd.f32 %v2240, %v2508
        %v2707 = vadd.f32 %v2241, %v2513
        %v2708 = vadd.f32 %v2242, %v2518
        %v2709 = vadd.f32 %v2243, %v2523
        %v2710 = vadd.f32 %v2244, %v2528
        %v2711 = vadd.f32 %v2245, %v2533
        %v2712 = vadd.f32 %v2246, %v2538
        %v2713 = vadd.f32 %v2247, %v2543
        %v2714 = vadd.f32 %v2248, %v2548
        %v2715 = vadd.f32 %v2249, %v2553
        %v2716 = vadd.f32 %v2250, %v2558
        %v2717 = vadd.f32 %v2251, %v2563
        %v2718 = vadd.f32 %v2252, %v2568
        %v2719 = vadd.f32 %v2253, %v2573
        %v2720 = vadd.f32 %v2254, %v2578
        %v2721 = vadd.f32 %v2255, %v2583
        %v2722 = vadd.f32 %v2256, %v2588
        %v2723 = vadd.f32 %v2257, %v2593
        %v2724 = vadd.f32 %v2258, %v2598
        %v2725 = vadd.f32 %v2259, %v2603
        %v2726 = vadd.f32 %v2260, %v2608
        %v2727 = vadd.f32 %v2261, %v2613
        %v2728 = vadd.f32 %v2262, %v2618
        %v2729 = vadd.f32 %v2263, %v2623
        %v2730 = vadd.f32 %v2264, %v2628
        %v2731 = vadd.f32 %v2265, %v2633
        %v2732 = vadd.f32 %v2266, %v2638
        %v2733 = vadd.f32 %v2267, %v2643
        %v2734 = vadd.f32 %v2268, %v2648
        %v2735 = vadd.f32 %v2269, %v2653
        %v2736 = vadd.f32 %v2270, %v2658
        %v2737 = vadd.f32 %v2271, %v2663
        %v2738 = vadd.f32 %v2272, %v2668
        %v2739 = vadd.f32 %v2273, %v2673
        %v2741 = vrot.slane %v276, 1
        %v2742 = vrot.slane %v277, 1
        %v2743 = vsel %vm370, %v2741, %v2742
        %v2744 = vrot.slane %v278, 1
        %v2745 = vsel %vm370, %v2742, %v2744
        %v2746 = vrot.slane %v279, 1
        %v2747 = vsel %vm370, %v2744, %v2746
        %v2748 = vrot.slane %v280, 1
        %v2749 = vsel %vm370, %v2746, %v2748
        %s2750 = scalar_lea.vmem %s1, 128
        %v2751 = vld [vmem:[%s2750] sm:$0xff]
        %v2752 = vld [vmem:[%s2750 + $0x8] sm:$0xff]
        %v2753 = vld [vmem:[%s2750 + $0x10] sm:$0xff]
        %v2754 = vld [vmem:[%s2750 + $0x18] sm:$0xff]
        %v2755 = vsel %vm520, %v2743, 0
        %v2757 = vsel %vm520, %v2745, 0
        %v2759 = vsel %vm520, %v2747, 0
        %v2761 = vsel %vm520, %v2749, 0
        %2763 = vmatprep.subr.mxu0 0.0
        %2764 = vmatpush1.msra.mxu0 %v2751
        %2765 = vmatprep.subr.mxu0 0.0
        %2766 = vmatpush1.msra.mxu0 %v2752
        %2767 = vmatprep.subr.mxu0 0.0
        %2768 = vmatpush1.msra.mxu0 %v2753
        %2769 = vmatprep.subr.mxu0 0.0
        %2770 = vmatpush1.msra.mxu0 %v2754
        %2771 = vmatprep.subr.mxu0 0.0
        %2772 = vmatpush1.msra.mxu0 0.0
        %2773 = vmatprep.subr.mxu0 0.0
        %2774 = vmatpush1.msra.mxu0 0.0
        %2775 = vmatprep.subr.mxu0 0.0
        %2776 = vmatpush1.msra.mxu0 0.0
        %2777 = vmatprep.subr.mxu0 0.0
        %2778 = vmatpush1.msra.mxu0 0.0
        %2779 = vmatprep.subr.mxu0 0.0
        %2780 = vmatpush1.msra.mxu0 0.0
        %2781 = vmatprep.subr.mxu0 0.0
        %2782 = vmatpush1.msra.mxu0 0.0
        %2783 = vmatprep.subr.mxu0 0.0
        %2784 = vmatpush1.msra.mxu0 0.0
        %2785 = vmatprep.subr.mxu0 0.0
        %2786 = vmatpush1.msra.mxu0 0.0
        %2787 = vmatprep.subr.mxu0 0.0
        %2788 = vmatpush1.msra.mxu0 0.0
        %2789 = vmatprep.subr.mxu0 0.0
        %2790 = vmatpush1.msra.mxu0 0.0
        %2791 = vmatprep.subr.mxu0 0.0
        %2792 = vmatpush1.msra.mxu0 0.0
        %2793 = vmatprep.subr.mxu0 0.0
        %2794 = vmatpush1.msra.mxu0 0.0
        %2795 = vmatprep.subr.mxu0 0.0
        %2796 = vmatpush1.msra.mxu0 0.0
        %2797 = vmatprep.subr.mxu0 0.0
        %2798 = vmatpush1.msra.mxu0 0.0
        %2799 = vmatprep.subr.mxu0 0.0
        %2800 = vmatpush1.msra.mxu0 0.0
        %2801 = vmatprep.subr.mxu0 0.0
        %2802 = vmatpush1.msra.mxu0 0.0
        %2803 = vmatprep.subr.mxu0 0.0
        %2804 = vmatpush1.msra.mxu0 0.0
        %2805 = vmatprep.subr.mxu0 0.0
        %2806 = vmatpush1.msra.mxu0 0.0
        %2807 = vmatprep.subr.mxu0 0.0
        %2808 = vmatpush1.msra.mxu0 0.0
        %2809 = vmatprep.subr.mxu0 0.0
        %2810 = vmatpush1.msra.mxu0 0.0
        %2811 = vmatprep.subr.mxu0 0.0
        %2812 = vmatpush1.msra.mxu0 0.0
        %2813 = vmatprep.subr.mxu0 0.0
        %2814 = vmatpush1.msra.mxu0 0.0
        %2815 = vmatprep.subr.mxu0 0.0
        %2816 = vmatpush1.msra.mxu0 0.0
        %2817 = vmatprep.subr.mxu0 0.0
        %2818 = vmatpush1.msra.mxu0 0.0
        %2819 = vmatprep.subr.mxu0 0.0
        %2820 = vmatpush1.msra.mxu0 0.0
        %2821 = vmatprep.subr.mxu0 0.0
        %2822 = vmatpush1.msra.mxu0 0.0
        %2823 = vmatprep.subr.mxu0 0.0
        %2824 = vmatpush1.msra.mxu0 0.0
        %2825 = vmatprep.subr.mxu0 0.0
        %2826 = vmatpush1.msra.mxu0 0.0
        %2827 = vmatprep.mubr.f32.mxu0 0.0
        %2828 = vmatmul.mubr.f32.gmra.mrb[0].mxu0 %v529
        %v2829 = vpop.f32.mrb[0].mxu0
        %v2830 = vadd.f32 0.0, %v2829
        %v2831 = vpop.f32.mrb[0].mxu0
        %2832 = vmatprep.mubr.f32.mxu0 0.0
        %2833 = vmatmul.mubr.f32.gmra.mrb[0].mxu0 %v531
        %v2834 = vpop.f32.mrb[0].mxu0
        %v2835 = vadd.f32 0.0, %v2834
        %v2836 = vpop.f32.mrb[0].mxu0
        %2837 = vmatprep.mubr.f32.mxu0 0.0
        %2838 = vmatmul.mubr.f32.gmra.mrb[0].mxu0 %v533
        %v2839 = vpop.f32.mrb[0].mxu0
        %v2840 = vadd.f32 0.0, %v2839
        %v2841 = vpop.f32.mrb[0].mxu0
        %2842 = vmatprep.mubr.f32.mxu0 0.0
        %2843 = vmatmul.mubr.f32.gmra.mrb[0].mxu0 %v535
        %v2844 = vpop.f32.mrb[0].mxu0
        %v2845 = vadd.f32 0.0, %v2844
        %v2846 = vpop.f32.mrb[0].mxu0
        %2847 = vmatprep.mubr.f32.mxu0 0.0
        %2848 = vmatmul.mubr.f32.gmra.mrb[0].mxu0 %v537
        %v2849 = vpop.f32.mrb[0].mxu0
        %v2850 = vadd.f32 0.0, %v2849
        %v2851 = vpop.f32.mrb[0].mxu0
        %2852 = vmatprep.mubr.f32.mxu0 0.0
        %2853 = vmatmul.mubr.f32.gmra.mrb[0].mxu0 %v539
        %v2854 = vpop.f32.mrb[0].mxu0
        %v2855 = vadd.f32 0.0, %v2854
        %v2856 = vpop.f32.mrb[0].mxu0
        %2857 = vmatprep.mubr.f32.mxu0 0.0
        %2858 = vmatmul.mubr.f32.gmra.mrb[0].mxu0 %v541
        %v2859 = vpop.f32.mrb[0].mxu0
        %v2860 = vadd.f32 0.0, %v2859
        %v2861 = vpop.f32.mrb[0].mxu0
        %2862 = vmatprep.mubr.f32.mxu0 0.0
        %2863 = vmatmul.mubr.f32.gmra.mrb[0].mxu0 %v543
        %v2864 = vpop.f32.mrb[0].mxu0
        %v2865 = vadd.f32 0.0, %v2864
        %v2866 = vpop.f32.mrb[0].mxu0
        %2867 = vmatprep.mubr.f32.mxu0 0.0
        %2868 = vmatmul.mubr.f32.gmra.mrb[0].mxu0 %v545
        %v2869 = vpop.f32.mrb[0].mxu0
        %v2870 = vadd.f32 0.0, %v2869
        %v2871 = vpop.f32.mrb[0].mxu0
        %2872 = vmatprep.mubr.f32.mxu0 0.0
        %2873 = vmatmul.mubr.f32.gmra.mrb[0].mxu0 %v547
        %v2874 = vpop.f32.mrb[0].mxu0
        %v2875 = vadd.f32 0.0, %v2874
        %v2876 = vpop.f32.mrb[0].mxu0
        %2877 = vmatprep.mubr.f32.mxu0 0.0
        %2878 = vmatmul.mubr.f32.gmra.mrb[0].mxu0 %v549
        %v2879 = vpop.f32.mrb[0].mxu0
        %v2880 = vadd.f32 0.0, %v2879
        %v2881 = vpop.f32.mrb[0].mxu0
        %2882 = vmatprep.mubr.f32.mxu0 0.0
        %2883 = vmatmul.mubr.f32.gmra.mrb[0].mxu0 %v551
        %v2884 = vpop.f32.mrb[0].mxu0
        %v2885 = vadd.f32 0.0, %v2884
        %v2886 = vpop.f32.mrb[0].mxu0
        %2887 = vmatprep.mubr.f32.mxu0 0.0
        %2888 = vmatmul.mubr.f32.gmra.mrb[0].mxu0 %v553
        %v2889 = vpop.f32.mrb[0].mxu0
        %v2890 = vadd.f32 0.0, %v2889
        %v2891 = vpop.f32.mrb[0].mxu0
        %2892 = vmatprep.mubr.f32.mxu0 0.0
        %2893 = vmatmul.mubr.f32.gmra.mrb[0].mxu0 %v555
        %v2894 = vpop.f32.mrb[0].mxu0
        %v2895 = vadd.f32 0.0, %v2894
        %v2896 = vpop.f32.mrb[0].mxu0
        %2897 = vmatprep.mubr.f32.mxu0 0.0
        %2898 = vmatmul.mubr.f32.gmra.mrb[0].mxu0 %v557
        %v2899 = vpop.f32.mrb[0].mxu0
        %v2900 = vadd.f32 0.0, %v2899
        %v2901 = vpop.f32.mrb[0].mxu0
        %2902 = vmatprep.mubr.f32.mxu0 0.0
        %2903 = vmatmul.mubr.f32.gmra.mrb[0].mxu0 %v559
        %v2904 = vpop.f32.mrb[0].mxu0
        %v2905 = vadd.f32 0.0, %v2904
        %v2906 = vpop.f32.mrb[0].mxu0
        %2907 = vmatprep.mubr.f32.mxu0 0.0
        %2908 = vmatmul.mubr.f32.gmra.mrb[0].mxu0 %v561
        %v2909 = vpop.f32.mrb[0].mxu0
        %v2910 = vadd.f32 0.0, %v2909
        %v2911 = vpop.f32.mrb[0].mxu0
        %2912 = vmatprep.mubr.f32.mxu0 0.0
        %2913 = vmatmul.mubr.f32.gmra.mrb[0].mxu0 %v563
        %v2914 = vpop.f32.mrb[0].mxu0
        %v2915 = vadd.f32 0.0, %v2914
        %v2916 = vpop.f32.mrb[0].mxu0
        %2917 = vmatprep.mubr.f32.mxu0 0.0
        %2918 = vmatmul.mubr.f32.gmra.mrb[0].mxu0 %v565
        %v2919 = vpop.f32.mrb[0].mxu0
        %v2920 = vadd.f32 0.0, %v2919
        %v2921 = vpop.f32.mrb[0].mxu0
        %2922 = vmatprep.mubr.f32.mxu0 0.0
        %2923 = vmatmul.mubr.f32.gmra.mrb[0].mxu0 %v567
        %v2924 = vpop.f32.mrb[0].mxu0
        %v2925 = vadd.f32 0.0, %v2924
        %v2926 = vpop.f32.mrb[0].mxu0
        %2927 = vmatprep.mubr.f32.mxu0 0.0
        %2928 = vmatmul.mubr.f32.gmra.mrb[0].mxu0 %v569
        %v2929 = vpop.f32.mrb[0].mxu0
        %v2930 = vadd.f32 0.0, %v2929
        %v2931 = vpop.f32.mrb[0].mxu0
        %2932 = vmatprep.mubr.f32.mxu0 0.0
        %2933 = vmatmul.mubr.f32.gmra.mrb[0].mxu0 %v571
        %v2934 = vpop.f32.mrb[0].mxu0
        %v2935 = vadd.f32 0.0, %v2934
        %v2936 = vpop.f32.mrb[0].mxu0
        %2937 = vmatprep.mubr.f32.mxu0 0.0
        %2938 = vmatmul.mubr.f32.gmra.mrb[0].mxu0 %v573
        %v2939 = vpop.f32.mrb[0].mxu0
        %v2940 = vadd.f32 0.0, %v2939
        %v2941 = vpop.f32.mrb[0].mxu0
        %2942 = vmatprep.mubr.f32.mxu0 0.0
        %2943 = vmatmul.mubr.f32.gmra.mrb[0].mxu0 %v575
        %v2944 = vpop.f32.mrb[0].mxu0
        %v2945 = vadd.f32 0.0, %v2944
        %v2946 = vpop.f32.mrb[0].mxu0
        %2947 = vmatprep.mubr.f32.mxu0 0.0
        %2948 = vmatmul.mubr.f32.gmra.mrb[0].mxu0 %v577
        %v2949 = vpop.f32.mrb[0].mxu0
        %v2950 = vadd.f32 0.0, %v2949
        %v2951 = vpop.f32.mrb[0].mxu0
        %2952 = vmatprep.mubr.f32.mxu0 0.0
        %2953 = vmatmul.mubr.f32.gmra.mrb[0].mxu0 %v579
        %v2954 = vpop.f32.mrb[0].mxu0
        %v2955 = vadd.f32 0.0, %v2954
        %v2956 = vpop.f32.mrb[0].mxu0
        %2957 = vmatprep.mubr.f32.mxu0 0.0
        %2958 = vmatmul.mubr.f32.gmra.mrb[0].mxu0 %v581
        %v2959 = vpop.f32.mrb[0].mxu0
        %v2960 = vadd.f32 0.0, %v2959
        %v2961 = vpop.f32.mrb[0].mxu0
        %2962 = vmatprep.mubr.f32.mxu0 0.0
        %2963 = vmatmul.mubr.f32.gmra.mrb[0].mxu0 %v583
        %v2964 = vpop.f32.mrb[0].mxu0
        %v2965 = vadd.f32 0.0, %v2964
        %v2966 = vpop.f32.mrb[0].mxu0
        %2967 = vmatprep.mubr.f32.mxu0 0.0
        %2968 = vmatmul.mubr.f32.gmra.mrb[0].mxu0 %v585
        %v2969 = vpop.f32.mrb[0].mxu0
        %v2970 = vadd.f32 0.0, %v2969
        %v2971 = vpop.f32.mrb[0].mxu0
        %2972 = vmatprep.mubr.f32.mxu0 0.0
        %2973 = vmatmul.mubr.f32.gmra.mrb[0].mxu0 %v587
        %v2974 = vpop.f32.mrb[0].mxu0
        %v2975 = vadd.f32 0.0, %v2974
        %v2976 = vpop.f32.mrb[0].mxu0
        %2977 = vmatprep.mubr.f32.mxu0 0.0
        %2978 = vmatmul.mubr.f32.gmra.mrb[0].mxu0 %v589
        %v2979 = vpop.f32.mrb[0].mxu0
        %v2980 = vadd.f32 0.0, %v2979
        %v2981 = vpop.f32.mrb[0].mxu0
        %2982 = vmatprep.mubr.f32.mxu0 0.0
        %2983 = vmatmul.mubr.f32.gmra.mrb[0].mxu0 %v591
        %v2984 = vpop.f32.mrb[0].mxu0
        %v2985 = vadd.f32 0.0, %v2984
        %v2986 = vpop.f32.mrb[0].mxu0
        %2987 = vmatprep.mubr.f32.mxu0 0.0
        %2988 = vmatmul.mubr.f32.gmra.mrb[0].mxu0 %v593
        %v2989 = vpop.f32.mrb[0].mxu0
        %v2990 = vadd.f32 0.0, %v2989
        %v2991 = vpop.f32.mrb[0].mxu0
        %2992 = vmatprep.mubr.f32.mxu0 0.0
        %2993 = vmatmul.mubr.f32.gmra.mrb[0].mxu0 %v595
        %v2994 = vpop.f32.mrb[0].mxu0
        %v2995 = vadd.f32 0.0, %v2994
        %v2996 = vpop.f32.mrb[0].mxu0
        %2997 = vmatprep.mubr.f32.mxu0 0.0
        %2998 = vmatmul.mubr.f32.gmra.mrb[0].mxu0 %v597
        %v2999 = vpop.f32.mrb[0].mxu0
        %v3000 = vadd.f32 0.0, %v2999
        %v3001 = vpop.f32.mrb[0].mxu0
        %3002 = vmatprep.mubr.f32.mxu0 0.0
        %3003 = vmatmul.mubr.f32.gmra.mrb[0].mxu0 %v599
        %v3004 = vpop.f32.mrb[0].mxu0
        %v3005 = vadd.f32 0.0, %v3004
        %v3006 = vpop.f32.mrb[0].mxu0
        %3007 = vmatprep.mubr.f32.mxu0 0.0
        %3008 = vmatmul.mubr.f32.gmra.mrb[0].mxu0 %v601
        %v3009 = vpop.f32.mrb[0].mxu0
        %v3010 = vadd.f32 0.0, %v3009
        %v3011 = vpop.f32.mrb[0].mxu0
        %3012 = vmatprep.mubr.f32.mxu0 0.0
        %3013 = vmatmul.mubr.f32.gmra.mrb[0].mxu0 %v603
        %v3014 = vpop.f32.mrb[0].mxu0
        %v3015 = vadd.f32 0.0, %v3014
        %v3016 = vpop.f32.mrb[0].mxu0
        %3017 = vmatprep.mubr.f32.mxu0 0.0
        %3018 = vmatmul.mubr.f32.gmra.mrb[0].mxu0 %v605
        %v3019 = vpop.f32.mrb[0].mxu0
        %v3020 = vadd.f32 0.0, %v3019
        %v3021 = vpop.f32.mrb[0].mxu0
        %3022 = vmatprep.mubr.f32.mxu0 0.0
        %3023 = vmatmul.mubr.f32.gmra.mrb[0].mxu0 %v607
        %v3024 = vpop.f32.mrb[0].mxu0
        %v3025 = vadd.f32 0.0, %v3024
        %v3026 = vpop.f32.mrb[0].mxu0
        %3027 = vmatprep.mubr.f32.mxu0 0.0
        %3028 = vmatmul.mubr.f32.gmra.mrb[0].mxu0 %v609
        %v3029 = vpop.f32.mrb[0].mxu0
        %v3030 = vadd.f32 0.0, %v3029
        %v3031 = vpop.f32.mrb[0].mxu0
        %3032 = vmatprep.mubr.f32.mxu0 0.0
        %3033 = vmatmul.mubr.f32.gmra.mrb[0].mxu0 %v611
        %v3034 = vpop.f32.mrb[0].mxu0
        %v3035 = vadd.f32 0.0, %v3034
        %v3036 = vpop.f32.mrb[0].mxu0
        %3037 = vmatprep.mubr.f32.mxu0 0.0
        %3038 = vmatmul.mubr.f32.gmra.mrb[0].mxu0 %v613
        %v3039 = vpop.f32.mrb[0].mxu0
        %v3040 = vadd.f32 0.0, %v3039
        %v3041 = vpop.f32.mrb[0].mxu0
        %3042 = vmatprep.mubr.f32.mxu0 0.0
        %3043 = vmatmul.mubr.f32.gmra.mrb[0].mxu0 %v615
        %v3044 = vpop.f32.mrb[0].mxu0
        %v3045 = vadd.f32 0.0, %v3044
        %v3046 = vpop.f32.mrb[0].mxu0
        %3047 = vmatprep.mubr.f32.mxu0 0.0
        %3048 = vmatmul.mubr.f32.gmra.mrb[0].mxu0 %v617
        %v3049 = vpop.f32.mrb[0].mxu0
        %v3050 = vadd.f32 0.0, %v3049
        %v3051 = vpop.f32.mrb[0].mxu0
        %3052 = vmatprep.mubr.f32.mxu0 0.0
        %3053 = vmatmul.mubr.f32.gmra.mrb[0].mxu0 %v619
        %v3054 = vpop.f32.mrb[0].mxu0
        %v3055 = vadd.f32 0.0, %v3054
        %v3056 = vpop.f32.mrb[0].mxu0
        %3057 = vmatprep.mubr.f32.mxu0 0.0
        %3058 = vmatmul.mubr.f32.gmra.mrb[0].mxu0 %v621
        %v3059 = vpop.f32.mrb[0].mxu0
        %v3060 = vadd.f32 0.0, %v3059
        %v3061 = vpop.f32.mrb[0].mxu0
        %3062 = vmatprep.mubr.f32.mxu0 0.0
        %3063 = vmatmul.mubr.f32.gmra.mrb[0].mxu0 %v623
        %v3064 = vpop.f32.mrb[0].mxu0
        %v3065 = vadd.f32 0.0, %v3064
        %v3066 = vpop.f32.mrb[0].mxu0
        %3067 = vmatprep.mubr.f32.mxu0 0.0
        %3068 = vmatmul.mubr.f32.gmra.mrb[0].mxu0 %v625
        %v3069 = vpop.f32.mrb[0].mxu0
        %v3070 = vadd.f32 0.0, %v3069
        %v3071 = vpop.f32.mrb[0].mxu0
        %3072 = vmatprep.mubr.f32.mxu0 0.0
        %3073 = vmatmul.mubr.f32.gmra.mrb[0].mxu0 %v627
        %v3074 = vpop.f32.mrb[0].mxu0
        %v3075 = vadd.f32 0.0, %v3074
        %v3076 = vpop.f32.mrb[0].mxu0
        %3077 = vmatprep.mubr.f32.mxu0 0.0
        %3078 = vmatmul.mubr.f32.gmra.mrb[0].mxu0 %v629
        %v3079 = vpop.f32.mrb[0].mxu0
        %v3080 = vadd.f32 0.0, %v3079
        %v3081 = vpop.f32.mrb[0].mxu0
        %3082 = vmatprep.mubr.f32.mxu0 0.0
        %3083 = vmatmul.mubr.f32.gmra.mrb[0].mxu0 %v631
        %v3084 = vpop.f32.mrb[0].mxu0
        %v3085 = vadd.f32 0.0, %v3084
        %v3086 = vpop.f32.mrb[0].mxu0
        %3087 = vmatprep.mubr.f32.mxu0 0.0
        %3088 = vmatmul.mubr.f32.gmra.mrb[0].mxu0 %v633
        %v3089 = vpop.f32.mrb[0].mxu0
        %v3090 = vadd.f32 0.0, %v3089
        %v3091 = vpop.f32.mrb[0].mxu0
        %3092 = vmatprep.mubr.f32.mxu0 0.0
        %3093 = vmatmul.mubr.f32.gmra.mrb[0].mxu0 %v635
        %v3094 = vpop.f32.mrb[0].mxu0
        %v3095 = vadd.f32 0.0, %v3094
        %v3096 = vpop.f32.mrb[0].mxu0
        %3097 = vmatprep.mubr.f32.mxu0 0.0
        %3098 = vmatmul.mubr.f32.gmra.mrb[0].mxu0 %v637
        %v3099 = vpop.f32.mrb[0].mxu0
        %v3100 = vadd.f32 0.0, %v3099
        %v3101 = vpop.f32.mrb[0].mxu0
        %3102 = vmatprep.mubr.f32.mxu0 0.0
        %3103 = vmatmul.mubr.f32.gmra.mrb[0].mxu0 %v639
        %v3104 = vpop.f32.mrb[0].mxu0
        %v3105 = vadd.f32 0.0, %v3104
        %v3106 = vpop.f32.mrb[0].mxu0
        %3107 = vmatprep.mubr.f32.mxu0 0.0
        %3108 = vmatmul.mubr.f32.gmra.mrb[0].mxu0 %v641
        %v3109 = vpop.f32.mrb[0].mxu0
        %v3110 = vadd.f32 0.0, %v3109
        %v3111 = vpop.f32.mrb[0].mxu0
        %3112 = vmatprep.mubr.f32.mxu0 0.0
        %3113 = vmatmul.mubr.f32.gmra.mrb[0].mxu0 %v643
        %v3114 = vpop.f32.mrb[0].mxu0
        %v3115 = vadd.f32 0.0, %v3114
        %v3116 = vpop.f32.mrb[0].mxu0
        %3117 = vmatprep.mubr.f32.mxu0 0.0
        %3118 = vmatmul.mubr.f32.gmra.mrb[0].mxu0 %v645
        %v3119 = vpop.f32.mrb[0].mxu0
        %v3120 = vadd.f32 0.0, %v3119
        %v3121 = vpop.f32.mrb[0].mxu0
        %3122 = vmatprep.mubr.f32.mxu0 0.0
        %3123 = vmatmul.mubr.f32.gmra.mrb[0].mxu0 %v647
        %v3124 = vpop.f32.mrb[0].mxu0
        %v3125 = vadd.f32 0.0, %v3124
        %v3126 = vpop.f32.mrb[0].mxu0
        %3127 = vmatprep.mubr.f32.mxu0 0.0
        %3128 = vmatmul.mubr.f32.gmra.mrb[0].mxu0 %v2755
        %v3129 = vpop.f32.mrb[0].mxu0
        %v3130 = vadd.f32 0.0, %v3129
        %v3131 = vpop.f32.mrb[0].mxu0
        %3132 = vmatprep.mubr.f32.mxu0 0.0
        %3133 = vmatmul.mubr.f32.gmra.mrb[0].mxu0 %v2757
        %v3134 = vpop.f32.mrb[0].mxu0
        %v3135 = vadd.f32 0.0, %v3134
        %v3136 = vpop.f32.mrb[0].mxu0
        %3137 = vmatprep.mubr.f32.mxu0 0.0
        %3138 = vmatmul.mubr.f32.gmra.mrb[0].mxu0 %v2759
        %v3139 = vpop.f32.mrb[0].mxu0
        %v3140 = vadd.f32 0.0, %v3139
        %v3141 = vpop.f32.mrb[0].mxu0
        %3142 = vmatprep.mubr.f32.mxu0 0.0
        %3143 = vmatmul.mubr.f32.gmra.mrb[0].mxu0 %v2761
        %v3144 = vpop.f32.mrb[0].mxu0
        %v3145 = vadd.f32 0.0, %v3144
        %v3146 = vpop.f32.mrb[0].mxu0
        %3147 = vdwg.mxu0
        %v3148 = vadd.f32 %v2676, %v2830
        %v3149 = vadd.f32 %v2677, %v2835
        %v3150 = vadd.f32 %v2678, %v2840
        %v3151 = vadd.f32 %v2679, %v2845
        %v3152 = vadd.f32 %v2680, %v2850
        %v3153 = vadd.f32 %v2681, %v2855
        %v3154 = vadd.f32 %v2682, %v2860
        %v3155 = vadd.f32 %v2683, %v2865
        %v3156 = vadd.f32 %v2684, %v2870
        %v3157 = vadd.f32 %v2685, %v2875
        %v3158 = vadd.f32 %v2686, %v2880
        %v3159 = vadd.f32 %v2687, %v2885
        %v3160 = vadd.f32 %v2688, %v2890
        %v3161 = vadd.f32 %v2689, %v2895
        %v3162 = vadd.f32 %v2690, %v2900
        %v3163 = vadd.f32 %v2691, %v2905
        %v3164 = vadd.f32 %v2692, %v2910
        %v3165 = vadd.f32 %v2693, %v2915
        %v3166 = vadd.f32 %v2694, %v2920
        %v3167 = vadd.f32 %v2695, %v2925
        %v3168 = vadd.f32 %v2696, %v2930
        %v3169 = vadd.f32 %v2697, %v2935
        %v3170 = vadd.f32 %v2698, %v2940
        %v3171 = vadd.f32 %v2699, %v2945
        %v3172 = vadd.f32 %v2700, %v2950
        %v3173 = vadd.f32 %v2701, %v2955
        %v3174 = vadd.f32 %v2702, %v2960
        %v3175 = vadd.f32 %v2703, %v2965
        %v3176 = vadd.f32 %v2704, %v2970
        %v3177 = vadd.f32 %v2705, %v2975
        %v3178 = vadd.f32 %v2706, %v2980
        %v3179 = vadd.f32 %v2707, %v2985
        %v3180 = vadd.f32 %v2708, %v2990
        %v3181 = vadd.f32 %v2709, %v2995
        %v3182 = vadd.f32 %v2710, %v3000
        %v3183 = vadd.f32 %v2711, %v3005
        %v3184 = vadd.f32 %v2712, %v3010
        %v3185 = vadd.f32 %v2713, %v3015
        %v3186 = vadd.f32 %v2714, %v3020
        %v3187 = vadd.f32 %v2715, %v3025
        %v3188 = vadd.f32 %v2716, %v3030
        %v3189 = vadd.f32 %v2717, %v3035
        %v3190 = vadd.f32 %v2718, %v3040
        %v3191 = vadd.f32 %v2719, %v3045
        %v3192 = vadd.f32 %v2720, %v3050
        %v3193 = vadd.f32 %v2721, %v3055
        %v3194 = vadd.f32 %v2722, %v3060
        %v3195 = vadd.f32 %v2723, %v3065
        %v3196 = vadd.f32 %v2724, %v3070
        %v3197 = vadd.f32 %v2725, %v3075
        %v3198 = vadd.f32 %v2726, %v3080
        %v3199 = vadd.f32 %v2727, %v3085
        %v3200 = vadd.f32 %v2728, %v3090
        %v3201 = vadd.f32 %v2729, %v3095
        %v3202 = vadd.f32 %v2730, %v3100
        %v3203 = vadd.f32 %v2731, %v3105
        %v3204 = vadd.f32 %v2732, %v3110
        %v3205 = vadd.f32 %v2733, %v3115
        %v3206 = vadd.f32 %v2734, %v3120
        %v3207 = vadd.f32 %v2735, %v3125
        %v3208 = vadd.f32 %v2736, %v3130
        %v3209 = vadd.f32 %v2737, %v3135
        %v3210 = vadd.f32 %v2738, %v3140
        %v3211 = vadd.f32 %v2739, %v3145
        %v3212 = vrot.slane %v276, 2
        %v3213 = vrot.slane %v277, 2
        %v3214 = vsel %vm1547, %v3212, %v3213
        %v3215 = vrot.slane %v278, 2
        %v3216 = vsel %vm1547, %v3213, %v3215
        %v3217 = vrot.slane %v279, 2
        %v3218 = vsel %vm1547, %v3215, %v3217
        %v3219 = vrot.slane %v280, 2
        %v3220 = vsel %vm1547, %v3217, %v3219
        %s3221 = scalar_lea.vmem %s1, 160
        %v3222 = vld [vmem:[%s3221] sm:$0xff]
        %v3223 = vld [vmem:[%s3221 + $0x8] sm:$0xff]
        %v3224 = vld [vmem:[%s3221 + $0x10] sm:$0xff]
        %v3225 = vld [vmem:[%s3221 + $0x18] sm:$0xff]
        %v3226 = vsel %vm520, %v3214, 0
        %v3228 = vsel %vm520, %v3216, 0
        %v3230 = vsel %vm520, %v3218, 0
        %v3232 = vsel %vm520, %v3220, 0
        %3234 = vmatprep.subr.mxu0 0.0
        %3235 = vmatpush1.msra.mxu0 %v3222
        %3236 = vmatprep.subr.mxu0 0.0
        %3237 = vmatpush1.msra.mxu0 %v3223
        %3238 = vmatprep.subr.mxu0 0.0
        %3239 = vmatpush1.msra.mxu0 %v3224
        %3240 = vmatprep.subr.mxu0 0.0
        %3241 = vmatpush1.msra.mxu0 %v3225
        %3242 = vmatprep.subr.mxu0 0.0
        %3243 = vmatpush1.msra.mxu0 0.0
        %3244 = vmatprep.subr.mxu0 0.0
        %3245 = vmatpush1.msra.mxu0 0.0
        %3246 = vmatprep.subr.mxu0 0.0
        %3247 = vmatpush1.msra.mxu0 0.0
        %3248 = vmatprep.subr.mxu0 0.0
        %3249 = vmatpush1.msra.mxu0 0.0
        %3250 = vmatprep.subr.mxu0 0.0
        %3251 = vmatpush1.msra.mxu0 0.0
        %3252 = vmatprep.subr.mxu0 0.0
        %3253 = vmatpush1.msra.mxu0 0.0
        %3254 = vmatprep.subr.mxu0 0.0
        %3255 = vmatpush1.msra.mxu0 0.0
        %3256 = vmatprep.subr.mxu0 0.0
        %3257 = vmatpush1.msra.mxu0 0.0
        %3258 = vmatprep.subr.mxu0 0.0
        %3259 = vmatpush1.msra.mxu0 0.0
        %3260 = vmatprep.subr.mxu0 0.0
        %3261 = vmatpush1.msra.mxu0 0.0
        %3262 = vmatprep.subr.mxu0 0.0
        %3263 = vmatpush1.msra.mxu0 0.0
        %3264 = vmatprep.subr.mxu0 0.0
        %3265 = vmatpush1.msra.mxu0 0.0
        %3266 = vmatprep.subr.mxu0 0.0
        %3267 = vmatpush1.msra.mxu0 0.0
        %3268 = vmatprep.subr.mxu0 0.0
        %3269 = vmatpush1.msra.mxu0 0.0
        %3270 = vmatprep.subr.mxu0 0.0
        %3271 = vmatpush1.msra.mxu0 0.0
        %3272 = vmatprep.subr.mxu0 0.0
        %3273 = vmatpush1.msra.mxu0 0.0
        %3274 = vmatprep.subr.mxu0 0.0
        %3275 = vmatpush1.msra.mxu0 0.0
        %3276 = vmatprep.subr.mxu0 0.0
        %3277 = vmatpush1.msra.mxu0 0.0
        %3278 = vmatprep.subr.mxu0 0.0
        %3279 = vmatpush1.msra.mxu0 0.0
        %3280 = vmatprep.subr.mxu0 0.0
        %3281 = vmatpush1.msra.mxu0 0.0
        %3282 = vmatprep.subr.mxu0 0.0
        %3283 = vmatpush1.msra.mxu0 0.0
        %3284 = vmatprep.subr.mxu0 0.0
        %3285 = vmatpush1.msra.mxu0 0.0
        %3286 = vmatprep.subr.mxu0 0.0
        %3287 = vmatpush1.msra.mxu0 0.0
        %3288 = vmatprep.subr.mxu0 0.0
        %3289 = vmatpush1.msra.mxu0 0.0
        %3290 = vmatprep.subr.mxu0 0.0
        %3291 = vmatpush1.msra.mxu0 0.0
        %3292 = vmatprep.subr.mxu0 0.0
        %3293 = vmatpush1.msra.mxu0 0.0
        %3294 = vmatprep.subr.mxu0 0.0
        %3295 = vmatpush1.msra.mxu0 0.0
        %3296 = vmatprep.subr.mxu0 0.0
        %3297 = vmatpush1.msra.mxu0 0.0
        %3298 = vmatprep.mubr.f32.mxu0 0.0
        %3299 = vmatmul.mubr.f32.gmra.mrb[0].mxu0 %v1705
        %v3300 = vpop.f32.mrb[0].mxu0
        %v3301 = vadd.f32 0.0, %v3300
        %v3302 = vpop.f32.mrb[0].mxu0
        %3303 = vmatprep.mubr.f32.mxu0 0.0
        %3304 = vmatmul.mubr.f32.gmra.mrb[0].mxu0 %v1707
        %v3305 = vpop.f32.mrb[0].mxu0
        %v3306 = vadd.f32 0.0, %v3305
        %v3307 = vpop.f32.mrb[0].mxu0
        %3308 = vmatprep.mubr.f32.mxu0 0.0
        %3309 = vmatmul.mubr.f32.gmra.mrb[0].mxu0 %v1709
        %v3310 = vpop.f32.mrb[0].mxu0
        %v3311 = vadd.f32 0.0, %v3310
        %v3312 = vpop.f32.mrb[0].mxu0
        %3313 = vmatprep.mubr.f32.mxu0 0.0
        %3314 = vmatmul.mubr.f32.gmra.mrb[0].mxu0 %v1711
        %v3315 = vpop.f32.mrb[0].mxu0
        %v3316 = vadd.f32 0.0, %v3315
        %v3317 = vpop.f32.mrb[0].mxu0
        %3318 = vmatprep.mubr.f32.mxu0 0.0
        %3319 = vmatmul.mubr.f32.gmra.mrb[0].mxu0 %v1713
        %v3320 = vpop.f32.mrb[0].mxu0
        %v3321 = vadd.f32 0.0, %v3320
        %v3322 = vpop.f32.mrb[0].mxu0
        %3323 = vmatprep.mubr.f32.mxu0 0.0
        %3324 = vmatmul.mubr.f32.gmra.mrb[0].mxu0 %v1715
        %v3325 = vpop.f32.mrb[0].mxu0
        %v3326 = vadd.f32 0.0, %v3325
        %v3327 = vpop.f32.mrb[0].mxu0
        %3328 = vmatprep.mubr.f32.mxu0 0.0
        %3329 = vmatmul.mubr.f32.gmra.mrb[0].mxu0 %v1717
        %v3330 = vpop.f32.mrb[0].mxu0
        %v3331 = vadd.f32 0.0, %v3330
        %v3332 = vpop.f32.mrb[0].mxu0
        %3333 = vmatprep.mubr.f32.mxu0 0.0
        %3334 = vmatmul.mubr.f32.gmra.mrb[0].mxu0 %v1719
        %v3335 = vpop.f32.mrb[0].mxu0
        %v3336 = vadd.f32 0.0, %v3335
        %v3337 = vpop.f32.mrb[0].mxu0
        %3338 = vmatprep.mubr.f32.mxu0 0.0
        %3339 = vmatmul.mubr.f32.gmra.mrb[0].mxu0 %v1721
        %v3340 = vpop.f32.mrb[0].mxu0
        %v3341 = vadd.f32 0.0, %v3340
        %v3342 = vpop.f32.mrb[0].mxu0
        %3343 = vmatprep.mubr.f32.mxu0 0.0
        %3344 = vmatmul.mubr.f32.gmra.mrb[0].mxu0 %v1723
        %v3345 = vpop.f32.mrb[0].mxu0
        %v3346 = vadd.f32 0.0, %v3345
        %v3347 = vpop.f32.mrb[0].mxu0
        %3348 = vmatprep.mubr.f32.mxu0 0.0
        %3349 = vmatmul.mubr.f32.gmra.mrb[0].mxu0 %v1725
        %v3350 = vpop.f32.mrb[0].mxu0
        %v3351 = vadd.f32 0.0, %v3350
        %v3352 = vpop.f32.mrb[0].mxu0
        %3353 = vmatprep.mubr.f32.mxu0 0.0
        %3354 = vmatmul.mubr.f32.gmra.mrb[0].mxu0 %v1727
        %v3355 = vpop.f32.mrb[0].mxu0
        %v3356 = vadd.f32 0.0, %v3355
        %v3357 = vpop.f32.mrb[0].mxu0
        %3358 = vmatprep.mubr.f32.mxu0 0.0
        %3359 = vmatmul.mubr.f32.gmra.mrb[0].mxu0 %v1729
        %v3360 = vpop.f32.mrb[0].mxu0
        %v3361 = vadd.f32 0.0, %v3360
        %v3362 = vpop.f32.mrb[0].mxu0
        %3363 = vmatprep.mubr.f32.mxu0 0.0
        %3364 = vmatmul.mubr.f32.gmra.mrb[0].mxu0 %v1731
        %v3365 = vpop.f32.mrb[0].mxu0
        %v3366 = vadd.f32 0.0, %v3365
        %v3367 = vpop.f32.mrb[0].mxu0
        %3368 = vmatprep.mubr.f32.mxu0 0.0
        %3369 = vmatmul.mubr.f32.gmra.mrb[0].mxu0 %v1733
        %v3370 = vpop.f32.mrb[0].mxu0
        %v3371 = vadd.f32 0.0, %v3370
        %v3372 = vpop.f32.mrb[0].mxu0
        %3373 = vmatprep.mubr.f32.mxu0 0.0
        %3374 = vmatmul.mubr.f32.gmra.mrb[0].mxu0 %v1735
        %v3375 = vpop.f32.mrb[0].mxu0
        %v3376 = vadd.f32 0.0, %v3375
        %v3377 = vpop.f32.mrb[0].mxu0
        %3378 = vmatprep.mubr.f32.mxu0 0.0
        %3379 = vmatmul.mubr.f32.gmra.mrb[0].mxu0 %v1737
        %v3380 = vpop.f32.mrb[0].mxu0
        %v3381 = vadd.f32 0.0, %v3380
        %v3382 = vpop.f32.mrb[0].mxu0
        %3383 = vmatprep.mubr.f32.mxu0 0.0
        %3384 = vmatmul.mubr.f32.gmra.mrb[0].mxu0 %v1739
        %v3385 = vpop.f32.mrb[0].mxu0
        %v3386 = vadd.f32 0.0, %v3385
        %v3387 = vpop.f32.mrb[0].mxu0
        %3388 = vmatprep.mubr.f32.mxu0 0.0
        %3389 = vmatmul.mubr.f32.gmra.mrb[0].mxu0 %v1741
        %v3390 = vpop.f32.mrb[0].mxu0
        %v3391 = vadd.f32 0.0, %v3390
        %v3392 = vpop.f32.mrb[0].mxu0
        %3393 = vmatprep.mubr.f32.mxu0 0.0
        %3394 = vmatmul.mubr.f32.gmra.mrb[0].mxu0 %v1743
        %v3395 = vpop.f32.mrb[0].mxu0
        %v3396 = vadd.f32 0.0, %v3395
        %v3397 = vpop.f32.mrb[0].mxu0
        %3398 = vmatprep.mubr.f32.mxu0 0.0
        %3399 = vmatmul.mubr.f32.gmra.mrb[0].mxu0 %v1745
        %v3400 = vpop.f32.mrb[0].mxu0
        %v3401 = vadd.f32 0.0, %v3400
        %v3402 = vpop.f32.mrb[0].mxu0
        %3403 = vmatprep.mubr.f32.mxu0 0.0
        %3404 = vmatmul.mubr.f32.gmra.mrb[0].mxu0 %v1747
        %v3405 = vpop.f32.mrb[0].mxu0
        %v3406 = vadd.f32 0.0, %v3405
        %v3407 = vpop.f32.mrb[0].mxu0
        %3408 = vmatprep.mubr.f32.mxu0 0.0
        %3409 = vmatmul.mubr.f32.gmra.mrb[0].mxu0 %v1749
        %v3410 = vpop.f32.mrb[0].mxu0
        %v3411 = vadd.f32 0.0, %v3410
        %v3412 = vpop.f32.mrb[0].mxu0
        %3413 = vmatprep.mubr.f32.mxu0 0.0
        %3414 = vmatmul.mubr.f32.gmra.mrb[0].mxu0 %v1751
        %v3415 = vpop.f32.mrb[0].mxu0
        %v3416 = vadd.f32 0.0, %v3415
        %v3417 = vpop.f32.mrb[0].mxu0
        %3418 = vmatprep.mubr.f32.mxu0 0.0
        %3419 = vmatmul.mubr.f32.gmra.mrb[0].mxu0 %v1753
        %v3420 = vpop.f32.mrb[0].mxu0
        %v3421 = vadd.f32 0.0, %v3420
        %v3422 = vpop.f32.mrb[0].mxu0
        %3423 = vmatprep.mubr.f32.mxu0 0.0
        %3424 = vmatmul.mubr.f32.gmra.mrb[0].mxu0 %v1755
        %v3425 = vpop.f32.mrb[0].mxu0
        %v3426 = vadd.f32 0.0, %v3425
        %v3427 = vpop.f32.mrb[0].mxu0
        %3428 = vmatprep.mubr.f32.mxu0 0.0
        %3429 = vmatmul.mubr.f32.gmra.mrb[0].mxu0 %v1757
        %v3430 = vpop.f32.mrb[0].mxu0
        %v3431 = vadd.f32 0.0, %v3430
        %v3432 = vpop.f32.mrb[0].mxu0
        %3433 = vmatprep.mubr.f32.mxu0 0.0
        %3434 = vmatmul.mubr.f32.gmra.mrb[0].mxu0 %v1759
        %v3435 = vpop.f32.mrb[0].mxu0
        %v3436 = vadd.f32 0.0, %v3435
        %v3437 = vpop.f32.mrb[0].mxu0
        %3438 = vmatprep.mubr.f32.mxu0 0.0
        %3439 = vmatmul.mubr.f32.gmra.mrb[0].mxu0 %v1761
        %v3440 = vpop.f32.mrb[0].mxu0
        %v3441 = vadd.f32 0.0, %v3440
        %v3442 = vpop.f32.mrb[0].mxu0
        %3443 = vmatprep.mubr.f32.mxu0 0.0
        %3444 = vmatmul.mubr.f32.gmra.mrb[0].mxu0 %v1763
        %v3445 = vpop.f32.mrb[0].mxu0
        %v3446 = vadd.f32 0.0, %v3445
        %v3447 = vpop.f32.mrb[0].mxu0
        %3448 = vmatprep.mubr.f32.mxu0 0.0
        %3449 = vmatmul.mubr.f32.gmra.mrb[0].mxu0 %v1765
        %v3450 = vpop.f32.mrb[0].mxu0
        %v3451 = vadd.f32 0.0, %v3450
        %v3452 = vpop.f32.mrb[0].mxu0
        %3453 = vmatprep.mubr.f32.mxu0 0.0
        %3454 = vmatmul.mubr.f32.gmra.mrb[0].mxu0 %v1767
        %v3455 = vpop.f32.mrb[0].mxu0
        %v3456 = vadd.f32 0.0, %v3455
        %v3457 = vpop.f32.mrb[0].mxu0
        %3458 = vmatprep.mubr.f32.mxu0 0.0
        %3459 = vmatmul.mubr.f32.gmra.mrb[0].mxu0 %v1769
        %v3460 = vpop.f32.mrb[0].mxu0
        %v3461 = vadd.f32 0.0, %v3460
        %v3462 = vpop.f32.mrb[0].mxu0
        %3463 = vmatprep.mubr.f32.mxu0 0.0
        %3464 = vmatmul.mubr.f32.gmra.mrb[0].mxu0 %v1771
        %v3465 = vpop.f32.mrb[0].mxu0
        %v3466 = vadd.f32 0.0, %v3465
        %v3467 = vpop.f32.mrb[0].mxu0
        %3468 = vmatprep.mubr.f32.mxu0 0.0
        %3469 = vmatmul.mubr.f32.gmra.mrb[0].mxu0 %v1773
        %v3470 = vpop.f32.mrb[0].mxu0
        %v3471 = vadd.f32 0.0, %v3470
        %v3472 = vpop.f32.mrb[0].mxu0
        %3473 = vmatprep.mubr.f32.mxu0 0.0
        %3474 = vmatmul.mubr.f32.gmra.mrb[0].mxu0 %v1775
        %v3475 = vpop.f32.mrb[0].mxu0
        %v3476 = vadd.f32 0.0, %v3475
        %v3477 = vpop.f32.mrb[0].mxu0
        %3478 = vmatprep.mubr.f32.mxu0 0.0
        %3479 = vmatmul.mubr.f32.gmra.mrb[0].mxu0 %v1777
        %v3480 = vpop.f32.mrb[0].mxu0
        %v3481 = vadd.f32 0.0, %v3480
        %v3482 = vpop.f32.mrb[0].mxu0
        %3483 = vmatprep.mubr.f32.mxu0 0.0
        %3484 = vmatmul.mubr.f32.gmra.mrb[0].mxu0 %v1779
        %v3485 = vpop.f32.mrb[0].mxu0
        %v3486 = vadd.f32 0.0, %v3485
        %v3487 = vpop.f32.mrb[0].mxu0
        %3488 = vmatprep.mubr.f32.mxu0 0.0
        %3489 = vmatmul.mubr.f32.gmra.mrb[0].mxu0 %v1781
        %v3490 = vpop.f32.mrb[0].mxu0
        %v3491 = vadd.f32 0.0, %v3490
        %v3492 = vpop.f32.mrb[0].mxu0
        %3493 = vmatprep.mubr.f32.mxu0 0.0
        %3494 = vmatmul.mubr.f32.gmra.mrb[0].mxu0 %v1783
        %v3495 = vpop.f32.mrb[0].mxu0
        %v3496 = vadd.f32 0.0, %v3495
        %v3497 = vpop.f32.mrb[0].mxu0
        %3498 = vmatprep.mubr.f32.mxu0 0.0
        %3499 = vmatmul.mubr.f32.gmra.mrb[0].mxu0 %v1785
        %v3500 = vpop.f32.mrb[0].mxu0
        %v3501 = vadd.f32 0.0, %v3500
        %v3502 = vpop.f32.mrb[0].mxu0
        %3503 = vmatprep.mubr.f32.mxu0 0.0
        %3504 = vmatmul.mubr.f32.gmra.mrb[0].mxu0 %v1787
        %v3505 = vpop.f32.mrb[0].mxu0
        %v3506 = vadd.f32 0.0, %v3505
        %v3507 = vpop.f32.mrb[0].mxu0
        %3508 = vmatprep.mubr.f32.mxu0 0.0
        %3509 = vmatmul.mubr.f32.gmra.mrb[0].mxu0 %v1789
        %v3510 = vpop.f32.mrb[0].mxu0
        %v3511 = vadd.f32 0.0, %v3510
        %v3512 = vpop.f32.mrb[0].mxu0
        %3513 = vmatprep.mubr.f32.mxu0 0.0
        %3514 = vmatmul.mubr.f32.gmra.mrb[0].mxu0 %v1791
        %v3515 = vpop.f32.mrb[0].mxu0
        %v3516 = vadd.f32 0.0, %v3515
        %v3517 = vpop.f32.mrb[0].mxu0
        %3518 = vmatprep.mubr.f32.mxu0 0.0
        %3519 = vmatmul.mubr.f32.gmra.mrb[0].mxu0 %v1793
        %v3520 = vpop.f32.mrb[0].mxu0
        %v3521 = vadd.f32 0.0, %v3520
        %v3522 = vpop.f32.mrb[0].mxu0
        %3523 = vmatprep.mubr.f32.mxu0 0.0
        %3524 = vmatmul.mubr.f32.gmra.mrb[0].mxu0 %v1795
        %v3525 = vpop.f32.mrb[0].mxu0
        %v3526 = vadd.f32 0.0, %v3525
        %v3527 = vpop.f32.mrb[0].mxu0
        %3528 = vmatprep.mubr.f32.mxu0 0.0
        %3529 = vmatmul.mubr.f32.gmra.mrb[0].mxu0 %v1797
        %v3530 = vpop.f32.mrb[0].mxu0
        %v3531 = vadd.f32 0.0, %v3530
        %v3532 = vpop.f32.mrb[0].mxu0
        %3533 = vmatprep.mubr.f32.mxu0 0.0
        %3534 = vmatmul.mubr.f32.gmra.mrb[0].mxu0 %v1799
        %v3535 = vpop.f32.mrb[0].mxu0
        %v3536 = vadd.f32 0.0, %v3535
        %v3537 = vpop.f32.mrb[0].mxu0
        %3538 = vmatprep.mubr.f32.mxu0 0.0
        %3539 = vmatmul.mubr.f32.gmra.mrb[0].mxu0 %v1801
        %v3540 = vpop.f32.mrb[0].mxu0
        %v3541 = vadd.f32 0.0, %v3540
        %v3542 = vpop.f32.mrb[0].mxu0
        %3543 = vmatprep.mubr.f32.mxu0 0.0
        %3544 = vmatmul.mubr.f32.gmra.mrb[0].mxu0 %v1803
        %v3545 = vpop.f32.mrb[0].mxu0
        %v3546 = vadd.f32 0.0, %v3545
        %v3547 = vpop.f32.mrb[0].mxu0
        %3548 = vmatprep.mubr.f32.mxu0 0.0
        %3549 = vmatmul.mubr.f32.gmra.mrb[0].mxu0 %v1805
        %v3550 = vpop.f32.mrb[0].mxu0
        %v3551 = vadd.f32 0.0, %v3550
        %v3552 = vpop.f32.mrb[0].mxu0
        %3553 = vmatprep.mubr.f32.mxu0 0.0
        %3554 = vmatmul.mubr.f32.gmra.mrb[0].mxu0 %v1807
        %v3555 = vpop.f32.mrb[0].mxu0
        %v3556 = vadd.f32 0.0, %v3555
        %v3557 = vpop.f32.mrb[0].mxu0
        %3558 = vmatprep.mubr.f32.mxu0 0.0
        %3559 = vmatmul.mubr.f32.gmra.mrb[0].mxu0 %v1809
        %v3560 = vpop.f32.mrb[0].mxu0
        %v3561 = vadd.f32 0.0, %v3560
        %v3562 = vpop.f32.mrb[0].mxu0
        %3563 = vmatprep.mubr.f32.mxu0 0.0
        %3564 = vmatmul.mubr.f32.gmra.mrb[0].mxu0 %v1811
        %v3565 = vpop.f32.mrb[0].mxu0
        %v3566 = vadd.f32 0.0, %v3565
        %v3567 = vpop.f32.mrb[0].mxu0
        %3568 = vmatprep.mubr.f32.mxu0 0.0
        %3569 = vmatmul.mubr.f32.gmra.mrb[0].mxu0 %v1813
        %v3570 = vpop.f32.mrb[0].mxu0
        %v3571 = vadd.f32 0.0, %v3570
        %v3572 = vpop.f32.mrb[0].mxu0
        %3573 = vmatprep.mubr.f32.mxu0 0.0
        %3574 = vmatmul.mubr.f32.gmra.mrb[0].mxu0 %v1815
        %v3575 = vpop.f32.mrb[0].mxu0
        %v3576 = vadd.f32 0.0, %v3575
        %v3577 = vpop.f32.mrb[0].mxu0
        %3578 = vmatprep.mubr.f32.mxu0 0.0
        %3579 = vmatmul.mubr.f32.gmra.mrb[0].mxu0 %v1817
        %v3580 = vpop.f32.mrb[0].mxu0
        %v3581 = vadd.f32 0.0, %v3580
        %v3582 = vpop.f32.mrb[0].mxu0
        %3583 = vmatprep.mubr.f32.mxu0 0.0
        %3584 = vmatmul.mubr.f32.gmra.mrb[0].mxu0 %v1819
        %v3585 = vpop.f32.mrb[0].mxu0
        %v3586 = vadd.f32 0.0, %v3585
        %v3587 = vpop.f32.mrb[0].mxu0
        %3588 = vmatprep.mubr.f32.mxu0 0.0
        %3589 = vmatmul.mubr.f32.gmra.mrb[0].mxu0 %v1821
        %v3590 = vpop.f32.mrb[0].mxu0
        %v3591 = vadd.f32 0.0, %v3590
        %v3592 = vpop.f32.mrb[0].mxu0
        %3593 = vmatprep.mubr.f32.mxu0 0.0
        %3594 = vmatmul.mubr.f32.gmra.mrb[0].mxu0 %v1823
        %v3595 = vpop.f32.mrb[0].mxu0
        %v3596 = vadd.f32 0.0, %v3595
        %v3597 = vpop.f32.mrb[0].mxu0
        %3598 = vmatprep.mubr.f32.mxu0 0.0
        %3599 = vmatmul.mubr.f32.gmra.mrb[0].mxu0 %v3226
        %v3600 = vpop.f32.mrb[0].mxu0
        %v3601 = vadd.f32 0.0, %v3600
        %v3602 = vpop.f32.mrb[0].mxu0
        %3603 = vmatprep.mubr.f32.mxu0 0.0
        %3604 = vmatmul.mubr.f32.gmra.mrb[0].mxu0 %v3228
        %v3605 = vpop.f32.mrb[0].mxu0
        %v3606 = vadd.f32 0.0, %v3605
        %v3607 = vpop.f32.mrb[0].mxu0
        %3608 = vmatprep.mubr.f32.mxu0 0.0
        %3609 = vmatmul.mubr.f32.gmra.mrb[0].mxu0 %v3230
        %v3610 = vpop.f32.mrb[0].mxu0
        %v3611 = vadd.f32 0.0, %v3610
        %v3612 = vpop.f32.mrb[0].mxu0
        %3613 = vmatprep.mubr.f32.mxu0 0.0
        %3614 = vmatmul.mubr.f32.gmra.mrb[0].mxu0 %v3232
        %v3615 = vpop.f32.mrb[0].mxu0
        %v3616 = vadd.f32 0.0, %v3615
        %v3617 = vpop.f32.mrb[0].mxu0
        %3618 = vdwg.mxu0
        %v3619 = vadd.f32 %v3148, %v3301
        %v3620 = vadd.f32 %v3149, %v3306
        %v3621 = vadd.f32 %v3150, %v3311
        %v3622 = vadd.f32 %v3151, %v3316
        %v3623 = vadd.f32 %v3152, %v3321
        %v3624 = vadd.f32 %v3153, %v3326
        %v3625 = vadd.f32 %v3154, %v3331
        %v3626 = vadd.f32 %v3155, %v3336
        %v3627 = vadd.f32 %v3156, %v3341
        %v3628 = vadd.f32 %v3157, %v3346
        %v3629 = vadd.f32 %v3158, %v3351
        %v3630 = vadd.f32 %v3159, %v3356
        %v3631 = vadd.f32 %v3160, %v3361
        %v3632 = vadd.f32 %v3161, %v3366
        %v3633 = vadd.f32 %v3162, %v3371
        %v3634 = vadd.f32 %v3163, %v3376
        %v3635 = vadd.f32 %v3164, %v3381
        %v3636 = vadd.f32 %v3165, %v3386
        %v3637 = vadd.f32 %v3166, %v3391
        %v3638 = vadd.f32 %v3167, %v3396
        %v3639 = vadd.f32 %v3168, %v3401
        %v3640 = vadd.f32 %v3169, %v3406
        %v3641 = vadd.f32 %v3170, %v3411
        %v3642 = vadd.f32 %v3171, %v3416
        %v3643 = vadd.f32 %v3172, %v3421
        %v3644 = vadd.f32 %v3173, %v3426
        %v3645 = vadd.f32 %v3174, %v3431
        %v3646 = vadd.f32 %v3175, %v3436
        %v3647 = vadd.f32 %v3176, %v3441
        %v3648 = vadd.f32 %v3177, %v3446
        %v3649 = vadd.f32 %v3178, %v3451
        %v3650 = vadd.f32 %v3179, %v3456
        %v3651 = vadd.f32 %v3180, %v3461
        %v3652 = vadd.f32 %v3181, %v3466
        %v3653 = vadd.f32 %v3182, %v3471
        %v3654 = vadd.f32 %v3183, %v3476
        %v3655 = vadd.f32 %v3184, %v3481
        %v3656 = vadd.f32 %v3185, %v3486
        %v3657 = vadd.f32 %v3186, %v3491
        %v3658 = vadd.f32 %v3187, %v3496
        %v3659 = vadd.f32 %v3188, %v3501
        %v3660 = vadd.f32 %v3189, %v3506
        %v3661 = vadd.f32 %v3190, %v3511
        %v3662 = vadd.f32 %v3191, %v3516
        %v3663 = vadd.f32 %v3192, %v3521
        %v3664 = vadd.f32 %v3193, %v3526
        %v3665 = vadd.f32 %v3194, %v3531
        %v3666 = vadd.f32 %v3195, %v3536
        %v3667 = vadd.f32 %v3196, %v3541
        %v3668 = vadd.f32 %v3197, %v3546
        %v3669 = vadd.f32 %v3198, %v3551
        %v3670 = vadd.f32 %v3199, %v3556
        %v3671 = vadd.f32 %v3200, %v3561
        %v3672 = vadd.f32 %v3201, %v3566
        %v3673 = vadd.f32 %v3202, %v3571
        %v3674 = vadd.f32 %v3203, %v3576
        %v3675 = vadd.f32 %v3204, %v3581
        %v3676 = vadd.f32 %v3205, %v3586
        %v3677 = vadd.f32 %v3206, %v3591
        %v3678 = vadd.f32 %v3207, %v3596
        %v3679 = vadd.f32 %v3208, %v3601
        %v3680 = vadd.f32 %v3209, %v3606
        %v3681 = vadd.f32 %v3210, %v3611
        %v3682 = vadd.f32 %v3211, %v3616
        %s3683 = scalar_lea.vmem %s1, 192
        %v3684 = vld [vmem:[%s3683] sm:$0xff]
        %v3685 = vld [vmem:[%s3683 + $0x8] sm:$0xff]
        %v3686 = vld [vmem:[%s3683 + $0x10] sm:$0xff]
        %v3687 = vld [vmem:[%s3683 + $0x18] sm:$0xff]
        %v3689 = vsel %vm520, %v281, 0
        %v3692 = vsel %vm520, %v282, 0
        %v3695 = vsel %vm520, %v283, 0
        %v3698 = vsel %vm520, %v284, 0
        %3700 = vmatprep.subr.mxu0 0.0
        %3701 = vmatpush1.msra.mxu0 %v3684
        %3702 = vmatprep.subr.mxu0 0.0
        %3703 = vmatpush1.msra.mxu0 %v3685
        %3704 = vmatprep.subr.mxu0 0.0
        %3705 = vmatpush1.msra.mxu0 %v3686
        %3706 = vmatprep.subr.mxu0 0.0
        %3707 = vmatpush1.msra.mxu0 %v3687
        %3708 = vmatprep.subr.mxu0 0.0
        %3709 = vmatpush1.msra.mxu0 0.0
        %3710 = vmatprep.subr.mxu0 0.0
        %3711 = vmatpush1.msra.mxu0 0.0
        %3712 = vmatprep.subr.mxu0 0.0
        %3713 = vmatpush1.msra.mxu0 0.0
        %3714 = vmatprep.subr.mxu0 0.0
        %3715 = vmatpush1.msra.mxu0 0.0
        %3716 = vmatprep.subr.mxu0 0.0
        %3717 = vmatpush1.msra.mxu0 0.0
        %3718 = vmatprep.subr.mxu0 0.0
        %3719 = vmatpush1.msra.mxu0 0.0
        %3720 = vmatprep.subr.mxu0 0.0
        %3721 = vmatpush1.msra.mxu0 0.0
        %3722 = vmatprep.subr.mxu0 0.0
        %3723 = vmatpush1.msra.mxu0 0.0
        %3724 = vmatprep.subr.mxu0 0.0
        %3725 = vmatpush1.msra.mxu0 0.0
        %3726 = vmatprep.subr.mxu0 0.0
        %3727 = vmatpush1.msra.mxu0 0.0
        %3728 = vmatprep.subr.mxu0 0.0
        %3729 = vmatpush1.msra.mxu0 0.0
        %3730 = vmatprep.subr.mxu0 0.0
        %3731 = vmatpush1.msra.mxu0 0.0
        %3732 = vmatprep.subr.mxu0 0.0
        %3733 = vmatpush1.msra.mxu0 0.0
        %3734 = vmatprep.subr.mxu0 0.0
        %3735 = vmatpush1.msra.mxu0 0.0
        %3736 = vmatprep.subr.mxu0 0.0
        %3737 = vmatpush1.msra.mxu0 0.0
        %3738 = vmatprep.subr.mxu0 0.0
        %3739 = vmatpush1.msra.mxu0 0.0
        %3740 = vmatprep.subr.mxu0 0.0
        %3741 = vmatpush1.msra.mxu0 0.0
        %3742 = vmatprep.subr.mxu0 0.0
        %3743 = vmatpush1.msra.mxu0 0.0
        %3744 = vmatprep.subr.mxu0 0.0
        %3745 = vmatpush1.msra.mxu0 0.0
        %3746 = vmatprep.subr.mxu0 0.0
        %3747 = vmatpush1.msra.mxu0 0.0
        %3748 = vmatprep.subr.mxu0 0.0
        %3749 = vmatpush1.msra.mxu0 0.0
        %3750 = vmatprep.subr.mxu0 0.0
        %3751 = vmatpush1.msra.mxu0 0.0
        %3752 = vmatprep.subr.mxu0 0.0
        %3753 = vmatpush1.msra.mxu0 0.0
        %3754 = vmatprep.subr.mxu0 0.0
        %3755 = vmatpush1.msra.mxu0 0.0
        %3756 = vmatprep.subr.mxu0 0.0
        %3757 = vmatpush1.msra.mxu0 0.0
        %3758 = vmatprep.subr.mxu0 0.0
        %3759 = vmatpush1.msra.mxu0 0.0
        %3760 = vmatprep.subr.mxu0 0.0
        %3761 = vmatpush1.msra.mxu0 0.0
        %3762 = vmatprep.subr.mxu0 0.0
        %3763 = vmatpush1.msra.mxu0 0.0
        %3764 = vmatprep.mubr.f32.mxu0 0.0
        %3765 = vmatmul.mubr.f32.gmra.mrb[0].mxu0 %v1050
        %v3766 = vpop.f32.mrb[0].mxu0
        %v3767 = vadd.f32 0.0, %v3766
        %v3768 = vpop.f32.mrb[0].mxu0
        %3769 = vmatprep.mubr.f32.mxu0 0.0
        %3770 = vmatmul.mubr.f32.gmra.mrb[0].mxu0 %v1052
        %v3771 = vpop.f32.mrb[0].mxu0
        %v3772 = vadd.f32 0.0, %v3771
        %v3773 = vpop.f32.mrb[0].mxu0
        %3774 = vmatprep.mubr.f32.mxu0 0.0
        %3775 = vmatmul.mubr.f32.gmra.mrb[0].mxu0 %v1054
        %v3776 = vpop.f32.mrb[0].mxu0
        %v3777 = vadd.f32 0.0, %v3776
        %v3778 = vpop.f32.mrb[0].mxu0
        %3779 = vmatprep.mubr.f32.mxu0 0.0
        %3780 = vmatmul.mubr.f32.gmra.mrb[0].mxu0 %v1056
        %v3781 = vpop.f32.mrb[0].mxu0
        %v3782 = vadd.f32 0.0, %v3781
        %v3783 = vpop.f32.mrb[0].mxu0
        %3784 = vmatprep.mubr.f32.mxu0 0.0
        %3785 = vmatmul.mubr.f32.gmra.mrb[0].mxu0 %v1058
        %v3786 = vpop.f32.mrb[0].mxu0
        %v3787 = vadd.f32 0.0, %v3786
        %v3788 = vpop.f32.mrb[0].mxu0
        %3789 = vmatprep.mubr.f32.mxu0 0.0
        %3790 = vmatmul.mubr.f32.gmra.mrb[0].mxu0 %v1060
        %v3791 = vpop.f32.mrb[0].mxu0
        %v3792 = vadd.f32 0.0, %v3791
        %v3793 = vpop.f32.mrb[0].mxu0
        %3794 = vmatprep.mubr.f32.mxu0 0.0
        %3795 = vmatmul.mubr.f32.gmra.mrb[0].mxu0 %v1062
        %v3796 = vpop.f32.mrb[0].mxu0
        %v3797 = vadd.f32 0.0, %v3796
        %v3798 = vpop.f32.mrb[0].mxu0
        %3799 = vmatprep.mubr.f32.mxu0 0.0
        %3800 = vmatmul.mubr.f32.gmra.mrb[0].mxu0 %v1064
        %v3801 = vpop.f32.mrb[0].mxu0
        %v3802 = vadd.f32 0.0, %v3801
        %v3803 = vpop.f32.mrb[0].mxu0
        %3804 = vmatprep.mubr.f32.mxu0 0.0
        %3805 = vmatmul.mubr.f32.gmra.mrb[0].mxu0 %v1066
        %v3806 = vpop.f32.mrb[0].mxu0
        %v3807 = vadd.f32 0.0, %v3806
        %v3808 = vpop.f32.mrb[0].mxu0
        %3809 = vmatprep.mubr.f32.mxu0 0.0
        %3810 = vmatmul.mubr.f32.gmra.mrb[0].mxu0 %v1068
        %v3811 = vpop.f32.mrb[0].mxu0
        %v3812 = vadd.f32 0.0, %v3811
        %v3813 = vpop.f32.mrb[0].mxu0
        %3814 = vmatprep.mubr.f32.mxu0 0.0
        %3815 = vmatmul.mubr.f32.gmra.mrb[0].mxu0 %v1070
        %v3816 = vpop.f32.mrb[0].mxu0
        %v3817 = vadd.f32 0.0, %v3816
        %v3818 = vpop.f32.mrb[0].mxu0
        %3819 = vmatprep.mubr.f32.mxu0 0.0
        %3820 = vmatmul.mubr.f32.gmra.mrb[0].mxu0 %v1072
        %v3821 = vpop.f32.mrb[0].mxu0
        %v3822 = vadd.f32 0.0, %v3821
        %v3823 = vpop.f32.mrb[0].mxu0
        %3824 = vmatprep.mubr.f32.mxu0 0.0
        %3825 = vmatmul.mubr.f32.gmra.mrb[0].mxu0 %v1074
        %v3826 = vpop.f32.mrb[0].mxu0
        %v3827 = vadd.f32 0.0, %v3826
        %v3828 = vpop.f32.mrb[0].mxu0
        %3829 = vmatprep.mubr.f32.mxu0 0.0
        %3830 = vmatmul.mubr.f32.gmra.mrb[0].mxu0 %v1076
        %v3831 = vpop.f32.mrb[0].mxu0
        %v3832 = vadd.f32 0.0, %v3831
        %v3833 = vpop.f32.mrb[0].mxu0
        %3834 = vmatprep.mubr.f32.mxu0 0.0
        %3835 = vmatmul.mubr.f32.gmra.mrb[0].mxu0 %v1078
        %v3836 = vpop.f32.mrb[0].mxu0
        %v3837 = vadd.f32 0.0, %v3836
        %v3838 = vpop.f32.mrb[0].mxu0
        %3839 = vmatprep.mubr.f32.mxu0 0.0
        %3840 = vmatmul.mubr.f32.gmra.mrb[0].mxu0 %v1080
        %v3841 = vpop.f32.mrb[0].mxu0
        %v3842 = vadd.f32 0.0, %v3841
        %v3843 = vpop.f32.mrb[0].mxu0
        %3844 = vmatprep.mubr.f32.mxu0 0.0
        %3845 = vmatmul.mubr.f32.gmra.mrb[0].mxu0 %v1082
        %v3846 = vpop.f32.mrb[0].mxu0
        %v3847 = vadd.f32 0.0, %v3846
        %v3848 = vpop.f32.mrb[0].mxu0
        %3849 = vmatprep.mubr.f32.mxu0 0.0
        %3850 = vmatmul.mubr.f32.gmra.mrb[0].mxu0 %v1084
        %v3851 = vpop.f32.mrb[0].mxu0
        %v3852 = vadd.f32 0.0, %v3851
        %v3853 = vpop.f32.mrb[0].mxu0
        %3854 = vmatprep.mubr.f32.mxu0 0.0
        %3855 = vmatmul.mubr.f32.gmra.mrb[0].mxu0 %v1086
        %v3856 = vpop.f32.mrb[0].mxu0
        %v3857 = vadd.f32 0.0, %v3856
        %v3858 = vpop.f32.mrb[0].mxu0
        %3859 = vmatprep.mubr.f32.mxu0 0.0
        %3860 = vmatmul.mubr.f32.gmra.mrb[0].mxu0 %v1088
        %v3861 = vpop.f32.mrb[0].mxu0
        %v3862 = vadd.f32 0.0, %v3861
        %v3863 = vpop.f32.mrb[0].mxu0
        %3864 = vmatprep.mubr.f32.mxu0 0.0
        %3865 = vmatmul.mubr.f32.gmra.mrb[0].mxu0 %v1090
        %v3866 = vpop.f32.mrb[0].mxu0
        %v3867 = vadd.f32 0.0, %v3866
        %v3868 = vpop.f32.mrb[0].mxu0
        %3869 = vmatprep.mubr.f32.mxu0 0.0
        %3870 = vmatmul.mubr.f32.gmra.mrb[0].mxu0 %v1092
        %v3871 = vpop.f32.mrb[0].mxu0
        %v3872 = vadd.f32 0.0, %v3871
        %v3873 = vpop.f32.mrb[0].mxu0
        %3874 = vmatprep.mubr.f32.mxu0 0.0
        %3875 = vmatmul.mubr.f32.gmra.mrb[0].mxu0 %v1094
        %v3876 = vpop.f32.mrb[0].mxu0
        %v3877 = vadd.f32 0.0, %v3876
        %v3878 = vpop.f32.mrb[0].mxu0
        %3879 = vmatprep.mubr.f32.mxu0 0.0
        %3880 = vmatmul.mubr.f32.gmra.mrb[0].mxu0 %v1096
        %v3881 = vpop.f32.mrb[0].mxu0
        %v3882 = vadd.f32 0.0, %v3881
        %v3883 = vpop.f32.mrb[0].mxu0
        %3884 = vmatprep.mubr.f32.mxu0 0.0
        %3885 = vmatmul.mubr.f32.gmra.mrb[0].mxu0 %v1098
        %v3886 = vpop.f32.mrb[0].mxu0
        %v3887 = vadd.f32 0.0, %v3886
        %v3888 = vpop.f32.mrb[0].mxu0
        %3889 = vmatprep.mubr.f32.mxu0 0.0
        %3890 = vmatmul.mubr.f32.gmra.mrb[0].mxu0 %v1100
        %v3891 = vpop.f32.mrb[0].mxu0
        %v3892 = vadd.f32 0.0, %v3891
        %v3893 = vpop.f32.mrb[0].mxu0
        %3894 = vmatprep.mubr.f32.mxu0 0.0
        %3895 = vmatmul.mubr.f32.gmra.mrb[0].mxu0 %v1102
        %v3896 = vpop.f32.mrb[0].mxu0
        %v3897 = vadd.f32 0.0, %v3896
        %v3898 = vpop.f32.mrb[0].mxu0
        %3899 = vmatprep.mubr.f32.mxu0 0.0
        %3900 = vmatmul.mubr.f32.gmra.mrb[0].mxu0 %v1104
        %v3901 = vpop.f32.mrb[0].mxu0
        %v3902 = vadd.f32 0.0, %v3901
        %v3903 = vpop.f32.mrb[0].mxu0
        %3904 = vmatprep.mubr.f32.mxu0 0.0
        %3905 = vmatmul.mubr.f32.gmra.mrb[0].mxu0 %v1106
        %v3906 = vpop.f32.mrb[0].mxu0
        %v3907 = vadd.f32 0.0, %v3906
        %v3908 = vpop.f32.mrb[0].mxu0
        %3909 = vmatprep.mubr.f32.mxu0 0.0
        %3910 = vmatmul.mubr.f32.gmra.mrb[0].mxu0 %v1108
        %v3911 = vpop.f32.mrb[0].mxu0
        %v3912 = vadd.f32 0.0, %v3911
        %v3913 = vpop.f32.mrb[0].mxu0
        %3914 = vmatprep.mubr.f32.mxu0 0.0
        %3915 = vmatmul.mubr.f32.gmra.mrb[0].mxu0 %v1110
        %v3916 = vpop.f32.mrb[0].mxu0
        %v3917 = vadd.f32 0.0, %v3916
        %v3918 = vpop.f32.mrb[0].mxu0
        %3919 = vmatprep.mubr.f32.mxu0 0.0
        %3920 = vmatmul.mubr.f32.gmra.mrb[0].mxu0 %v1112
        %v3921 = vpop.f32.mrb[0].mxu0
        %v3922 = vadd.f32 0.0, %v3921
        %v3923 = vpop.f32.mrb[0].mxu0
        %3924 = vmatprep.mubr.f32.mxu0 0.0
        %3925 = vmatmul.mubr.f32.gmra.mrb[0].mxu0 %v1114
        %v3926 = vpop.f32.mrb[0].mxu0
        %v3927 = vadd.f32 0.0, %v3926
        %v3928 = vpop.f32.mrb[0].mxu0
        %3929 = vmatprep.mubr.f32.mxu0 0.0
        %3930 = vmatmul.mubr.f32.gmra.mrb[0].mxu0 %v1116
        %v3931 = vpop.f32.mrb[0].mxu0
        %v3932 = vadd.f32 0.0, %v3931
        %v3933 = vpop.f32.mrb[0].mxu0
        %3934 = vmatprep.mubr.f32.mxu0 0.0
        %3935 = vmatmul.mubr.f32.gmra.mrb[0].mxu0 %v1118
        %v3936 = vpop.f32.mrb[0].mxu0
        %v3937 = vadd.f32 0.0, %v3936
        %v3938 = vpop.f32.mrb[0].mxu0
        %3939 = vmatprep.mubr.f32.mxu0 0.0
        %3940 = vmatmul.mubr.f32.gmra.mrb[0].mxu0 %v1120
        %v3941 = vpop.f32.mrb[0].mxu0
        %v3942 = vadd.f32 0.0, %v3941
        %v3943 = vpop.f32.mrb[0].mxu0
        %3944 = vmatprep.mubr.f32.mxu0 0.0
        %3945 = vmatmul.mubr.f32.gmra.mrb[0].mxu0 %v1122
        %v3946 = vpop.f32.mrb[0].mxu0
        %v3947 = vadd.f32 0.0, %v3946
        %v3948 = vpop.f32.mrb[0].mxu0
        %3949 = vmatprep.mubr.f32.mxu0 0.0
        %3950 = vmatmul.mubr.f32.gmra.mrb[0].mxu0 %v1124
        %v3951 = vpop.f32.mrb[0].mxu0
        %v3952 = vadd.f32 0.0, %v3951
        %v3953 = vpop.f32.mrb[0].mxu0
        %3954 = vmatprep.mubr.f32.mxu0 0.0
        %3955 = vmatmul.mubr.f32.gmra.mrb[0].mxu0 %v1126
        %v3956 = vpop.f32.mrb[0].mxu0
        %v3957 = vadd.f32 0.0, %v3956
        %v3958 = vpop.f32.mrb[0].mxu0
        %3959 = vmatprep.mubr.f32.mxu0 0.0
        %3960 = vmatmul.mubr.f32.gmra.mrb[0].mxu0 %v1128
        %v3961 = vpop.f32.mrb[0].mxu0
        %v3962 = vadd.f32 0.0, %v3961
        %v3963 = vpop.f32.mrb[0].mxu0
        %3964 = vmatprep.mubr.f32.mxu0 0.0
        %3965 = vmatmul.mubr.f32.gmra.mrb[0].mxu0 %v1130
        %v3966 = vpop.f32.mrb[0].mxu0
        %v3967 = vadd.f32 0.0, %v3966
        %v3968 = vpop.f32.mrb[0].mxu0
        %3969 = vmatprep.mubr.f32.mxu0 0.0
        %3970 = vmatmul.mubr.f32.gmra.mrb[0].mxu0 %v1132
        %v3971 = vpop.f32.mrb[0].mxu0
        %v3972 = vadd.f32 0.0, %v3971
        %v3973 = vpop.f32.mrb[0].mxu0
        %3974 = vmatprep.mubr.f32.mxu0 0.0
        %3975 = vmatmul.mubr.f32.gmra.mrb[0].mxu0 %v1134
        %v3976 = vpop.f32.mrb[0].mxu0
        %v3977 = vadd.f32 0.0, %v3976
        %v3978 = vpop.f32.mrb[0].mxu0
        %3979 = vmatprep.mubr.f32.mxu0 0.0
        %3980 = vmatmul.mubr.f32.gmra.mrb[0].mxu0 %v1136
        %v3981 = vpop.f32.mrb[0].mxu0
        %v3982 = vadd.f32 0.0, %v3981
        %v3983 = vpop.f32.mrb[0].mxu0
        %3984 = vmatprep.mubr.f32.mxu0 0.0
        %3985 = vmatmul.mubr.f32.gmra.mrb[0].mxu0 %v1138
        %v3986 = vpop.f32.mrb[0].mxu0
        %v3987 = vadd.f32 0.0, %v3986
        %v3988 = vpop.f32.mrb[0].mxu0
        %3989 = vmatprep.mubr.f32.mxu0 0.0
        %3990 = vmatmul.mubr.f32.gmra.mrb[0].mxu0 %v1140
        %v3991 = vpop.f32.mrb[0].mxu0
        %v3992 = vadd.f32 0.0, %v3991
        %v3993 = vpop.f32.mrb[0].mxu0
        %3994 = vmatprep.mubr.f32.mxu0 0.0
        %3995 = vmatmul.mubr.f32.gmra.mrb[0].mxu0 %v1142
        %v3996 = vpop.f32.mrb[0].mxu0
        %v3997 = vadd.f32 0.0, %v3996
        %v3998 = vpop.f32.mrb[0].mxu0
        %3999 = vmatprep.mubr.f32.mxu0 0.0
        %4000 = vmatmul.mubr.f32.gmra.mrb[0].mxu0 %v1144
        %v4001 = vpop.f32.mrb[0].mxu0
        %v4002 = vadd.f32 0.0, %v4001
        %v4003 = vpop.f32.mrb[0].mxu0
        %4004 = vmatprep.mubr.f32.mxu0 0.0
        %4005 = vmatmul.mubr.f32.gmra.mrb[0].mxu0 %v1146
        %v4006 = vpop.f32.mrb[0].mxu0
        %v4007 = vadd.f32 0.0, %v4006
        %v4008 = vpop.f32.mrb[0].mxu0
        %4009 = vmatprep.mubr.f32.mxu0 0.0
        %4010 = vmatmul.mubr.f32.gmra.mrb[0].mxu0 %v1148
        %v4011 = vpop.f32.mrb[0].mxu0
        %v4012 = vadd.f32 0.0, %v4011
        %v4013 = vpop.f32.mrb[0].mxu0
        %4014 = vmatprep.mubr.f32.mxu0 0.0
        %4015 = vmatmul.mubr.f32.gmra.mrb[0].mxu0 %v1150
        %v4016 = vpop.f32.mrb[0].mxu0
        %v4017 = vadd.f32 0.0, %v4016
        %v4018 = vpop.f32.mrb[0].mxu0
        %4019 = vmatprep.mubr.f32.mxu0 0.0
        %4020 = vmatmul.mubr.f32.gmra.mrb[0].mxu0 %v1152
        %v4021 = vpop.f32.mrb[0].mxu0
        %v4022 = vadd.f32 0.0, %v4021
        %v4023 = vpop.f32.mrb[0].mxu0
        %4024 = vmatprep.mubr.f32.mxu0 0.0
        %4025 = vmatmul.mubr.f32.gmra.mrb[0].mxu0 %v1154
        %v4026 = vpop.f32.mrb[0].mxu0
        %v4027 = vadd.f32 0.0, %v4026
        %v4028 = vpop.f32.mrb[0].mxu0
        %4029 = vmatprep.mubr.f32.mxu0 0.0
        %4030 = vmatmul.mubr.f32.gmra.mrb[0].mxu0 %v1156
        %v4031 = vpop.f32.mrb[0].mxu0
        %v4032 = vadd.f32 0.0, %v4031
        %v4033 = vpop.f32.mrb[0].mxu0
        %4034 = vmatprep.mubr.f32.mxu0 0.0
        %4035 = vmatmul.mubr.f32.gmra.mrb[0].mxu0 %v1158
        %v4036 = vpop.f32.mrb[0].mxu0
        %v4037 = vadd.f32 0.0, %v4036
        %v4038 = vpop.f32.mrb[0].mxu0
        %4039 = vmatprep.mubr.f32.mxu0 0.0
        %4040 = vmatmul.mubr.f32.gmra.mrb[0].mxu0 %v1160
        %v4041 = vpop.f32.mrb[0].mxu0
        %v4042 = vadd.f32 0.0, %v4041
        %v4043 = vpop.f32.mrb[0].mxu0
        %4044 = vmatprep.mubr.f32.mxu0 0.0
        %4045 = vmatmul.mubr.f32.gmra.mrb[0].mxu0 %v2280
        %v4046 = vpop.f32.mrb[0].mxu0
        %v4047 = vadd.f32 0.0, %v4046
        %v4048 = vpop.f32.mrb[0].mxu0
        %4049 = vmatprep.mubr.f32.mxu0 0.0
        %4050 = vmatmul.mubr.f32.gmra.mrb[0].mxu0 %v2283
        %v4051 = vpop.f32.mrb[0].mxu0
        %v4052 = vadd.f32 0.0, %v4051
        %v4053 = vpop.f32.mrb[0].mxu0
        %4054 = vmatprep.mubr.f32.mxu0 0.0
        %4055 = vmatmul.mubr.f32.gmra.mrb[0].mxu0 %v2286
        %v4056 = vpop.f32.mrb[0].mxu0
        %v4057 = vadd.f32 0.0, %v4056
        %v4058 = vpop.f32.mrb[0].mxu0
        %4059 = vmatprep.mubr.f32.mxu0 0.0
        %4060 = vmatmul.mubr.f32.gmra.mrb[0].mxu0 %v2289
        %v4061 = vpop.f32.mrb[0].mxu0
        %v4062 = vadd.f32 0.0, %v4061
        %v4063 = vpop.f32.mrb[0].mxu0
        %4064 = vmatprep.mubr.f32.mxu0 0.0
        %4065 = vmatmul.mubr.f32.gmra.mrb[0].mxu0 %v3689
        %v4066 = vpop.f32.mrb[0].mxu0
        %v4067 = vadd.f32 0.0, %v4066
        %v4068 = vpop.f32.mrb[0].mxu0
        %4069 = vmatprep.mubr.f32.mxu0 0.0
        %4070 = vmatmul.mubr.f32.gmra.mrb[0].mxu0 %v3692
        %v4071 = vpop.f32.mrb[0].mxu0
        %v4072 = vadd.f32 0.0, %v4071
        %v4073 = vpop.f32.mrb[0].mxu0
        %4074 = vmatprep.mubr.f32.mxu0 0.0
        %4075 = vmatmul.mubr.f32.gmra.mrb[0].mxu0 %v3695
        %v4076 = vpop.f32.mrb[0].mxu0
        %v4077 = vadd.f32 0.0, %v4076
        %v4078 = vpop.f32.mrb[0].mxu0
        %4079 = vmatprep.mubr.f32.mxu0 0.0
        %4080 = vmatmul.mubr.f32.gmra.mrb[0].mxu0 %v3698
        %v4081 = vpop.f32.mrb[0].mxu0
        %v4082 = vadd.f32 0.0, %v4081
        %v4083 = vpop.f32.mrb[0].mxu0
        %4084 = vdwg.mxu0
        %v4085 = vadd.f32 %v3619, %v3767
        %v4086 = vadd.f32 %v3620, %v3772
        %v4087 = vadd.f32 %v3621, %v3777
        %v4088 = vadd.f32 %v3622, %v3782
        %v4089 = vadd.f32 %v3623, %v3787
        %v4090 = vadd.f32 %v3624, %v3792
        %v4091 = vadd.f32 %v3625, %v3797
        %v4092 = vadd.f32 %v3626, %v3802
        %v4093 = vadd.f32 %v3627, %v3807
        %v4094 = vadd.f32 %v3628, %v3812
        %v4095 = vadd.f32 %v3629, %v3817
        %v4096 = vadd.f32 %v3630, %v3822
        %v4097 = vadd.f32 %v3631, %v3827
        %v4098 = vadd.f32 %v3632, %v3832
        %v4099 = vadd.f32 %v3633, %v3837
        %v4100 = vadd.f32 %v3634, %v3842
        %v4101 = vadd.f32 %v3635, %v3847
        %v4102 = vadd.f32 %v3636, %v3852
        %v4103 = vadd.f32 %v3637, %v3857
        %v4104 = vadd.f32 %v3638, %v3862
        %v4105 = vadd.f32 %v3639, %v3867
        %v4106 = vadd.f32 %v3640, %v3872
        %v4107 = vadd.f32 %v3641, %v3877
        %v4108 = vadd.f32 %v3642, %v3882
        %v4109 = vadd.f32 %v3643, %v3887
        %v4110 = vadd.f32 %v3644, %v3892
        %v4111 = vadd.f32 %v3645, %v3897
        %v4112 = vadd.f32 %v3646, %v3902
        %v4113 = vadd.f32 %v3647, %v3907
        %v4114 = vadd.f32 %v3648, %v3912
        %v4115 = vadd.f32 %v3649, %v3917
        %v4116 = vadd.f32 %v3650, %v3922
        %v4117 = vadd.f32 %v3651, %v3927
        %v4118 = vadd.f32 %v3652, %v3932
        %v4119 = vadd.f32 %v3653, %v3937
        %v4120 = vadd.f32 %v3654, %v3942
        %v4121 = vadd.f32 %v3655, %v3947
        %v4122 = vadd.f32 %v3656, %v3952
        %v4123 = vadd.f32 %v3657, %v3957
        %v4124 = vadd.f32 %v3658, %v3962
        %v4125 = vadd.f32 %v3659, %v3967
        %v4126 = vadd.f32 %v3660, %v3972
        %v4127 = vadd.f32 %v3661, %v3977
        %v4128 = vadd.f32 %v3662, %v3982
        %v4129 = vadd.f32 %v3663, %v3987
        %v4130 = vadd.f32 %v3664, %v3992
        %v4131 = vadd.f32 %v3665, %v3997
        %v4132 = vadd.f32 %v3666, %v4002
        %v4133 = vadd.f32 %v3667, %v4007
        %v4134 = vadd.f32 %v3668, %v4012
        %v4135 = vadd.f32 %v3669, %v4017
        %v4136 = vadd.f32 %v3670, %v4022
        %v4137 = vadd.f32 %v3671, %v4027
        %v4138 = vadd.f32 %v3672, %v4032
        %v4139 = vadd.f32 %v3673, %v4037
        %v4140 = vadd.f32 %v3674, %v4042
        %v4141 = vadd.f32 %v3675, %v4047
        %v4142 = vadd.f32 %v3676, %v4052
        %v4143 = vadd.f32 %v3677, %v4057
        %v4144 = vadd.f32 %v3678, %v4062
        %v4145 = vadd.f32 %v3679, %v4067
        %v4146 = vadd.f32 %v3680, %v4072
        %v4147 = vadd.f32 %v3681, %v4077
        %v4148 = vadd.f32 %v3682, %v4082
        %v4150 = vrot.slane %v281, 1
        %v4151 = vrot.slane %v282, 1
        %v4152 = vsel %vm370, %v4150, %v4151
        %v4153 = vrot.slane %v283, 1
        %v4154 = vsel %vm370, %v4151, %v4153
        %v4155 = vrot.slane %v284, 1
        %v4156 = vsel %vm370, %v4153, %v4155
        %v4157 = vrot.slane %v285, 1
        %v4158 = vsel %vm370, %v4155, %v4157
        %s4159 = scalar_lea.vmem %s1, 224
        %v4160 = vld [vmem:[%s4159] sm:$0xff]
        %v4161 = vld [vmem:[%s4159 + $0x8] sm:$0xff]
        %v4162 = vld [vmem:[%s4159 + $0x10] sm:$0xff]
        %v4163 = vld [vmem:[%s4159 + $0x18] sm:$0xff]
        %v4164 = vsel %vm520, %v4152, 0
        %v4166 = vsel %vm520, %v4154, 0
        %v4168 = vsel %vm520, %v4156, 0
        %v4170 = vsel %vm520, %v4158, 0
        %4172 = vmatprep.subr.mxu0 0.0
        %4173 = vmatpush1.msra.mxu0 %v4160
        %4174 = vmatprep.subr.mxu0 0.0
        %4175 = vmatpush1.msra.mxu0 %v4161
        %4176 = vmatprep.subr.mxu0 0.0
        %4177 = vmatpush1.msra.mxu0 %v4162
        %4178 = vmatprep.subr.mxu0 0.0
        %4179 = vmatpush1.msra.mxu0 %v4163
        %4180 = vmatprep.subr.mxu0 0.0
        %4181 = vmatpush1.msra.mxu0 0.0
        %4182 = vmatprep.subr.mxu0 0.0
        %4183 = vmatpush1.msra.mxu0 0.0
        %4184 = vmatprep.subr.mxu0 0.0
        %4185 = vmatpush1.msra.mxu0 0.0
        %4186 = vmatprep.subr.mxu0 0.0
        %4187 = vmatpush1.msra.mxu0 0.0
        %4188 = vmatprep.subr.mxu0 0.0
        %4189 = vmatpush1.msra.mxu0 0.0
        %4190 = vmatprep.subr.mxu0 0.0
        %4191 = vmatpush1.msra.mxu0 0.0
        %4192 = vmatprep.subr.mxu0 0.0
        %4193 = vmatpush1.msra.mxu0 0.0
        %4194 = vmatprep.subr.mxu0 0.0
        %4195 = vmatpush1.msra.mxu0 0.0
        %4196 = vmatprep.subr.mxu0 0.0
        %4197 = vmatpush1.msra.mxu0 0.0
        %4198 = vmatprep.subr.mxu0 0.0
        %4199 = vmatpush1.msra.mxu0 0.0
        %4200 = vmatprep.subr.mxu0 0.0
        %4201 = vmatpush1.msra.mxu0 0.0
        %4202 = vmatprep.subr.mxu0 0.0
        %4203 = vmatpush1.msra.mxu0 0.0
        %4204 = vmatprep.subr.mxu0 0.0
        %4205 = vmatpush1.msra.mxu0 0.0
        %4206 = vmatprep.subr.mxu0 0.0
        %4207 = vmatpush1.msra.mxu0 0.0
        %4208 = vmatprep.subr.mxu0 0.0
        %4209 = vmatpush1.msra.mxu0 0.0
        %4210 = vmatprep.subr.mxu0 0.0
        %4211 = vmatpush1.msra.mxu0 0.0
        %4212 = vmatprep.subr.mxu0 0.0
        %4213 = vmatpush1.msra.mxu0 0.0
        %4214 = vmatprep.subr.mxu0 0.0
        %4215 = vmatpush1.msra.mxu0 0.0
        %4216 = vmatprep.subr.mxu0 0.0
        %4217 = vmatpush1.msra.mxu0 0.0
        %4218 = vmatprep.subr.mxu0 0.0
        %4219 = vmatpush1.msra.mxu0 0.0
        %4220 = vmatprep.subr.mxu0 0.0
        %4221 = vmatpush1.msra.mxu0 0.0
        %4222 = vmatprep.subr.mxu0 0.0
        %4223 = vmatpush1.msra.mxu0 0.0
        %4224 = vmatprep.subr.mxu0 0.0
        %4225 = vmatpush1.msra.mxu0 0.0
        %4226 = vmatprep.subr.mxu0 0.0
        %4227 = vmatpush1.msra.mxu0 0.0
        %4228 = vmatprep.subr.mxu0 0.0
        %4229 = vmatpush1.msra.mxu0 0.0
        %4230 = vmatprep.subr.mxu0 0.0
        %4231 = vmatpush1.msra.mxu0 0.0
        %4232 = vmatprep.subr.mxu0 0.0
        %4233 = vmatpush1.msra.mxu0 0.0
        %4234 = vmatprep.subr.mxu0 0.0
        %4235 = vmatpush1.msra.mxu0 0.0
        %4236 = vmatprep.mubr.f32.mxu0 0.0
        %4237 = vmatmul.mubr.f32.gmra.mrb[0].mxu0 %v537
        %v4238 = vpop.f32.mrb[0].mxu0
        %v4239 = vadd.f32 0.0, %v4238
        %v4240 = vpop.f32.mrb[0].mxu0
        %4241 = vmatprep.mubr.f32.mxu0 0.0
        %4242 = vmatmul.mubr.f32.gmra.mrb[0].mxu0 %v539
        %v4243 = vpop.f32.mrb[0].mxu0
        %v4244 = vadd.f32 0.0, %v4243
        %v4245 = vpop.f32.mrb[0].mxu0
        %4246 = vmatprep.mubr.f32.mxu0 0.0
        %4247 = vmatmul.mubr.f32.gmra.mrb[0].mxu0 %v541
        %v4248 = vpop.f32.mrb[0].mxu0
        %v4249 = vadd.f32 0.0, %v4248
        %v4250 = vpop.f32.mrb[0].mxu0
        %4251 = vmatprep.mubr.f32.mxu0 0.0
        %4252 = vmatmul.mubr.f32.gmra.mrb[0].mxu0 %v543
        %v4253 = vpop.f32.mrb[0].mxu0
        %v4254 = vadd.f32 0.0, %v4253
        %v4255 = vpop.f32.mrb[0].mxu0
        %4256 = vmatprep.mubr.f32.mxu0 0.0
        %4257 = vmatmul.mubr.f32.gmra.mrb[0].mxu0 %v545
        %v4258 = vpop.f32.mrb[0].mxu0
        %v4259 = vadd.f32 0.0, %v4258
        %v4260 = vpop.f32.mrb[0].mxu0
        %4261 = vmatprep.mubr.f32.mxu0 0.0
        %4262 = vmatmul.mubr.f32.gmra.mrb[0].mxu0 %v547
        %v4263 = vpop.f32.mrb[0].mxu0
        %v4264 = vadd.f32 0.0, %v4263
        %v4265 = vpop.f32.mrb[0].mxu0
        %4266 = vmatprep.mubr.f32.mxu0 0.0
        %4267 = vmatmul.mubr.f32.gmra.mrb[0].mxu0 %v549
        %v4268 = vpop.f32.mrb[0].mxu0
        %v4269 = vadd.f32 0.0, %v4268
        %v4270 = vpop.f32.mrb[0].mxu0
        %4271 = vmatprep.mubr.f32.mxu0 0.0
        %4272 = vmatmul.mubr.f32.gmra.mrb[0].mxu0 %v551
        %v4273 = vpop.f32.mrb[0].mxu0
        %v4274 = vadd.f32 0.0, %v4273
        %v4275 = vpop.f32.mrb[0].mxu0
        %4276 = vmatprep.mubr.f32.mxu0 0.0
        %4277 = vmatmul.mubr.f32.gmra.mrb[0].mxu0 %v553
        %v4278 = vpop.f32.mrb[0].mxu0
        %v4279 = vadd.f32 0.0, %v4278
        %v4280 = vpop.f32.mrb[0].mxu0
        %4281 = vmatprep.mubr.f32.mxu0 0.0
        %4282 = vmatmul.mubr.f32.gmra.mrb[0].mxu0 %v555
        %v4283 = vpop.f32.mrb[0].mxu0
        %v4284 = vadd.f32 0.0, %v4283
        %v4285 = vpop.f32.mrb[0].mxu0
        %4286 = vmatprep.mubr.f32.mxu0 0.0
        %4287 = vmatmul.mubr.f32.gmra.mrb[0].mxu0 %v557
        %v4288 = vpop.f32.mrb[0].mxu0
        %v4289 = vadd.f32 0.0, %v4288
        %v4290 = vpop.f32.mrb[0].mxu0
        %4291 = vmatprep.mubr.f32.mxu0 0.0
        %4292 = vmatmul.mubr.f32.gmra.mrb[0].mxu0 %v559
        %v4293 = vpop.f32.mrb[0].mxu0
        %v4294 = vadd.f32 0.0, %v4293
        %v4295 = vpop.f32.mrb[0].mxu0
        %4296 = vmatprep.mubr.f32.mxu0 0.0
        %4297 = vmatmul.mubr.f32.gmra.mrb[0].mxu0 %v561
        %v4298 = vpop.f32.mrb[0].mxu0
        %v4299 = vadd.f32 0.0, %v4298
        %v4300 = vpop.f32.mrb[0].mxu0
        %4301 = vmatprep.mubr.f32.mxu0 0.0
        %4302 = vmatmul.mubr.f32.gmra.mrb[0].mxu0 %v563
        %v4303 = vpop.f32.mrb[0].mxu0
        %v4304 = vadd.f32 0.0, %v4303
        %v4305 = vpop.f32.mrb[0].mxu0
        %4306 = vmatprep.mubr.f32.mxu0 0.0
        %4307 = vmatmul.mubr.f32.gmra.mrb[0].mxu0 %v565
        %v4308 = vpop.f32.mrb[0].mxu0
        %v4309 = vadd.f32 0.0, %v4308
        %v4310 = vpop.f32.mrb[0].mxu0
        %4311 = vmatprep.mubr.f32.mxu0 0.0
        %4312 = vmatmul.mubr.f32.gmra.mrb[0].mxu0 %v567
        %v4313 = vpop.f32.mrb[0].mxu0
        %v4314 = vadd.f32 0.0, %v4313
        %v4315 = vpop.f32.mrb[0].mxu0
        %4316 = vmatprep.mubr.f32.mxu0 0.0
        %4317 = vmatmul.mubr.f32.gmra.mrb[0].mxu0 %v569
        %v4318 = vpop.f32.mrb[0].mxu0
        %v4319 = vadd.f32 0.0, %v4318
        %v4320 = vpop.f32.mrb[0].mxu0
        %4321 = vmatprep.mubr.f32.mxu0 0.0
        %4322 = vmatmul.mubr.f32.gmra.mrb[0].mxu0 %v571
        %v4323 = vpop.f32.mrb[0].mxu0
        %v4324 = vadd.f32 0.0, %v4323
        %v4325 = vpop.f32.mrb[0].mxu0
        %4326 = vmatprep.mubr.f32.mxu0 0.0
        %4327 = vmatmul.mubr.f32.gmra.mrb[0].mxu0 %v573
        %v4328 = vpop.f32.mrb[0].mxu0
        %v4329 = vadd.f32 0.0, %v4328
        %v4330 = vpop.f32.mrb[0].mxu0
        %4331 = vmatprep.mubr.f32.mxu0 0.0
        %4332 = vmatmul.mubr.f32.gmra.mrb[0].mxu0 %v575
        %v4333 = vpop.f32.mrb[0].mxu0
        %v4334 = vadd.f32 0.0, %v4333
        %v4335 = vpop.f32.mrb[0].mxu0
        %4336 = vmatprep.mubr.f32.mxu0 0.0
        %4337 = vmatmul.mubr.f32.gmra.mrb[0].mxu0 %v577
        %v4338 = vpop.f32.mrb[0].mxu0
        %v4339 = vadd.f32 0.0, %v4338
        %v4340 = vpop.f32.mrb[0].mxu0
        %4341 = vmatprep.mubr.f32.mxu0 0.0
        %4342 = vmatmul.mubr.f32.gmra.mrb[0].mxu0 %v579
        %v4343 = vpop.f32.mrb[0].mxu0
        %v4344 = vadd.f32 0.0, %v4343
        %v4345 = vpop.f32.mrb[0].mxu0
        %4346 = vmatprep.mubr.f32.mxu0 0.0
        %4347 = vmatmul.mubr.f32.gmra.mrb[0].mxu0 %v581
        %v4348 = vpop.f32.mrb[0].mxu0
        %v4349 = vadd.f32 0.0, %v4348
        %v4350 = vpop.f32.mrb[0].mxu0
        %4351 = vmatprep.mubr.f32.mxu0 0.0
        %4352 = vmatmul.mubr.f32.gmra.mrb[0].mxu0 %v583
        %v4353 = vpop.f32.mrb[0].mxu0
        %v4354 = vadd.f32 0.0, %v4353
        %v4355 = vpop.f32.mrb[0].mxu0
        %4356 = vmatprep.mubr.f32.mxu0 0.0
        %4357 = vmatmul.mubr.f32.gmra.mrb[0].mxu0 %v585
        %v4358 = vpop.f32.mrb[0].mxu0
        %v4359 = vadd.f32 0.0, %v4358
        %v4360 = vpop.f32.mrb[0].mxu0
        %4361 = vmatprep.mubr.f32.mxu0 0.0
        %4362 = vmatmul.mubr.f32.gmra.mrb[0].mxu0 %v587
        %v4363 = vpop.f32.mrb[0].mxu0
        %v4364 = vadd.f32 0.0, %v4363
        %v4365 = vpop.f32.mrb[0].mxu0
        %4366 = vmatprep.mubr.f32.mxu0 0.0
        %4367 = vmatmul.mubr.f32.gmra.mrb[0].mxu0 %v589
        %v4368 = vpop.f32.mrb[0].mxu0
        %v4369 = vadd.f32 0.0, %v4368
        %v4370 = vpop.f32.mrb[0].mxu0
        %4371 = vmatprep.mubr.f32.mxu0 0.0
        %4372 = vmatmul.mubr.f32.gmra.mrb[0].mxu0 %v591
        %v4373 = vpop.f32.mrb[0].mxu0
        %v4374 = vadd.f32 0.0, %v4373
        %v4375 = vpop.f32.mrb[0].mxu0
        %4376 = vmatprep.mubr.f32.mxu0 0.0
        %4377 = vmatmul.mubr.f32.gmra.mrb[0].mxu0 %v593
        %v4378 = vpop.f32.mrb[0].mxu0
        %v4379 = vadd.f32 0.0, %v4378
        %v4380 = vpop.f32.mrb[0].mxu0
        %4381 = vmatprep.mubr.f32.mxu0 0.0
        %4382 = vmatmul.mubr.f32.gmra.mrb[0].mxu0 %v595
        %v4383 = vpop.f32.mrb[0].mxu0
        %v4384 = vadd.f32 0.0, %v4383
        %v4385 = vpop.f32.mrb[0].mxu0
        %4386 = vmatprep.mubr.f32.mxu0 0.0
        %4387 = vmatmul.mubr.f32.gmra.mrb[0].mxu0 %v597
        %v4388 = vpop.f32.mrb[0].mxu0
        %v4389 = vadd.f32 0.0, %v4388
        %v4390 = vpop.f32.mrb[0].mxu0
        %4391 = vmatprep.mubr.f32.mxu0 0.0
        %4392 = vmatmul.mubr.f32.gmra.mrb[0].mxu0 %v599
        %v4393 = vpop.f32.mrb[0].mxu0
        %v4394 = vadd.f32 0.0, %v4393
        %v4395 = vpop.f32.mrb[0].mxu0
        %4396 = vmatprep.mubr.f32.mxu0 0.0
        %4397 = vmatmul.mubr.f32.gmra.mrb[0].mxu0 %v601
        %v4398 = vpop.f32.mrb[0].mxu0
        %v4399 = vadd.f32 0.0, %v4398
        %v4400 = vpop.f32.mrb[0].mxu0
        %4401 = vmatprep.mubr.f32.mxu0 0.0
        %4402 = vmatmul.mubr.f32.gmra.mrb[0].mxu0 %v603
        %v4403 = vpop.f32.mrb[0].mxu0
        %v4404 = vadd.f32 0.0, %v4403
        %v4405 = vpop.f32.mrb[0].mxu0
        %4406 = vmatprep.mubr.f32.mxu0 0.0
        %4407 = vmatmul.mubr.f32.gmra.mrb[0].mxu0 %v605
        %v4408 = vpop.f32.mrb[0].mxu0
        %v4409 = vadd.f32 0.0, %v4408
        %v4410 = vpop.f32.mrb[0].mxu0
        %4411 = vmatprep.mubr.f32.mxu0 0.0
        %4412 = vmatmul.mubr.f32.gmra.mrb[0].mxu0 %v607
        %v4413 = vpop.f32.mrb[0].mxu0
        %v4414 = vadd.f32 0.0, %v4413
        %v4415 = vpop.f32.mrb[0].mxu0
        %4416 = vmatprep.mubr.f32.mxu0 0.0
        %4417 = vmatmul.mubr.f32.gmra.mrb[0].mxu0 %v609
        %v4418 = vpop.f32.mrb[0].mxu0
        %v4419 = vadd.f32 0.0, %v4418
        %v4420 = vpop.f32.mrb[0].mxu0
        %4421 = vmatprep.mubr.f32.mxu0 0.0
        %4422 = vmatmul.mubr.f32.gmra.mrb[0].mxu0 %v611
        %v4423 = vpop.f32.mrb[0].mxu0
        %v4424 = vadd.f32 0.0, %v4423
        %v4425 = vpop.f32.mrb[0].mxu0
        %4426 = vmatprep.mubr.f32.mxu0 0.0
        %4427 = vmatmul.mubr.f32.gmra.mrb[0].mxu0 %v613
        %v4428 = vpop.f32.mrb[0].mxu0
        %v4429 = vadd.f32 0.0, %v4428
        %v4430 = vpop.f32.mrb[0].mxu0
        %4431 = vmatprep.mubr.f32.mxu0 0.0
        %4432 = vmatmul.mubr.f32.gmra.mrb[0].mxu0 %v615
        %v4433 = vpop.f32.mrb[0].mxu0
        %v4434 = vadd.f32 0.0, %v4433
        %v4435 = vpop.f32.mrb[0].mxu0
        %4436 = vmatprep.mubr.f32.mxu0 0.0
        %4437 = vmatmul.mubr.f32.gmra.mrb[0].mxu0 %v617
        %v4438 = vpop.f32.mrb[0].mxu0
        %v4439 = vadd.f32 0.0, %v4438
        %v4440 = vpop.f32.mrb[0].mxu0
        %4441 = vmatprep.mubr.f32.mxu0 0.0
        %4442 = vmatmul.mubr.f32.gmra.mrb[0].mxu0 %v619
        %v4443 = vpop.f32.mrb[0].mxu0
        %v4444 = vadd.f32 0.0, %v4443
        %v4445 = vpop.f32.mrb[0].mxu0
        %4446 = vmatprep.mubr.f32.mxu0 0.0
        %4447 = vmatmul.mubr.f32.gmra.mrb[0].mxu0 %v621
        %v4448 = vpop.f32.mrb[0].mxu0
        %v4449 = vadd.f32 0.0, %v4448
        %v4450 = vpop.f32.mrb[0].mxu0
        %4451 = vmatprep.mubr.f32.mxu0 0.0
        %4452 = vmatmul.mubr.f32.gmra.mrb[0].mxu0 %v623
        %v4453 = vpop.f32.mrb[0].mxu0
        %v4454 = vadd.f32 0.0, %v4453
        %v4455 = vpop.f32.mrb[0].mxu0
        %4456 = vmatprep.mubr.f32.mxu0 0.0
        %4457 = vmatmul.mubr.f32.gmra.mrb[0].mxu0 %v625
        %v4458 = vpop.f32.mrb[0].mxu0
        %v4459 = vadd.f32 0.0, %v4458
        %v4460 = vpop.f32.mrb[0].mxu0
        %4461 = vmatprep.mubr.f32.mxu0 0.0
        %4462 = vmatmul.mubr.f32.gmra.mrb[0].mxu0 %v627
        %v4463 = vpop.f32.mrb[0].mxu0
        %v4464 = vadd.f32 0.0, %v4463
        %v4465 = vpop.f32.mrb[0].mxu0
        %4466 = vmatprep.mubr.f32.mxu0 0.0
        %4467 = vmatmul.mubr.f32.gmra.mrb[0].mxu0 %v629
        %v4468 = vpop.f32.mrb[0].mxu0
        %v4469 = vadd.f32 0.0, %v4468
        %v4470 = vpop.f32.mrb[0].mxu0
        %4471 = vmatprep.mubr.f32.mxu0 0.0
        %4472 = vmatmul.mubr.f32.gmra.mrb[0].mxu0 %v631
        %v4473 = vpop.f32.mrb[0].mxu0
        %v4474 = vadd.f32 0.0, %v4473
        %v4475 = vpop.f32.mrb[0].mxu0
        %4476 = vmatprep.mubr.f32.mxu0 0.0
        %4477 = vmatmul.mubr.f32.gmra.mrb[0].mxu0 %v633
        %v4478 = vpop.f32.mrb[0].mxu0
        %v4479 = vadd.f32 0.0, %v4478
        %v4480 = vpop.f32.mrb[0].mxu0
        %4481 = vmatprep.mubr.f32.mxu0 0.0
        %4482 = vmatmul.mubr.f32.gmra.mrb[0].mxu0 %v635
        %v4483 = vpop.f32.mrb[0].mxu0
        %v4484 = vadd.f32 0.0, %v4483
        %v4485 = vpop.f32.mrb[0].mxu0
        %4486 = vmatprep.mubr.f32.mxu0 0.0
        %4487 = vmatmul.mubr.f32.gmra.mrb[0].mxu0 %v637
        %v4488 = vpop.f32.mrb[0].mxu0
        %v4489 = vadd.f32 0.0, %v4488
        %v4490 = vpop.f32.mrb[0].mxu0
        %4491 = vmatprep.mubr.f32.mxu0 0.0
        %4492 = vmatmul.mubr.f32.gmra.mrb[0].mxu0 %v639
        %v4493 = vpop.f32.mrb[0].mxu0
        %v4494 = vadd.f32 0.0, %v4493
        %v4495 = vpop.f32.mrb[0].mxu0
        %4496 = vmatprep.mubr.f32.mxu0 0.0
        %4497 = vmatmul.mubr.f32.gmra.mrb[0].mxu0 %v641
        %v4498 = vpop.f32.mrb[0].mxu0
        %v4499 = vadd.f32 0.0, %v4498
        %v4500 = vpop.f32.mrb[0].mxu0
        %4501 = vmatprep.mubr.f32.mxu0 0.0
        %4502 = vmatmul.mubr.f32.gmra.mrb[0].mxu0 %v643
        %v4503 = vpop.f32.mrb[0].mxu0
        %v4504 = vadd.f32 0.0, %v4503
        %v4505 = vpop.f32.mrb[0].mxu0
        %4506 = vmatprep.mubr.f32.mxu0 0.0
        %4507 = vmatmul.mubr.f32.gmra.mrb[0].mxu0 %v645
        %v4508 = vpop.f32.mrb[0].mxu0
        %v4509 = vadd.f32 0.0, %v4508
        %v4510 = vpop.f32.mrb[0].mxu0
        %4511 = vmatprep.mubr.f32.mxu0 0.0
        %4512 = vmatmul.mubr.f32.gmra.mrb[0].mxu0 %v647
        %v4513 = vpop.f32.mrb[0].mxu0
        %v4514 = vadd.f32 0.0, %v4513
        %v4515 = vpop.f32.mrb[0].mxu0
        %4516 = vmatprep.mubr.f32.mxu0 0.0
        %4517 = vmatmul.mubr.f32.gmra.mrb[0].mxu0 %v2755
        %v4518 = vpop.f32.mrb[0].mxu0
        %v4519 = vadd.f32 0.0, %v4518
        %v4520 = vpop.f32.mrb[0].mxu0
        %4521 = vmatprep.mubr.f32.mxu0 0.0
        %4522 = vmatmul.mubr.f32.gmra.mrb[0].mxu0 %v2757
        %v4523 = vpop.f32.mrb[0].mxu0
        %v4524 = vadd.f32 0.0, %v4523
        %v4525 = vpop.f32.mrb[0].mxu0
        %4526 = vmatprep.mubr.f32.mxu0 0.0
        %4527 = vmatmul.mubr.f32.gmra.mrb[0].mxu0 %v2759
        %v4528 = vpop.f32.mrb[0].mxu0
        %v4529 = vadd.f32 0.0, %v4528
        %v4530 = vpop.f32.mrb[0].mxu0
        %4531 = vmatprep.mubr.f32.mxu0 0.0
        %4532 = vmatmul.mubr.f32.gmra.mrb[0].mxu0 %v2761
        %v4533 = vpop.f32.mrb[0].mxu0
        %v4534 = vadd.f32 0.0, %v4533
        %v4535 = vpop.f32.mrb[0].mxu0
        %4536 = vmatprep.mubr.f32.mxu0 0.0
        %4537 = vmatmul.mubr.f32.gmra.mrb[0].mxu0 %v4164
        %v4538 = vpop.f32.mrb[0].mxu0
        %v4539 = vadd.f32 0.0, %v4538
        %v4540 = vpop.f32.mrb[0].mxu0
        %4541 = vmatprep.mubr.f32.mxu0 0.0
        %4542 = vmatmul.mubr.f32.gmra.mrb[0].mxu0 %v4166
        %v4543 = vpop.f32.mrb[0].mxu0
        %v4544 = vadd.f32 0.0, %v4543
        %v4545 = vpop.f32.mrb[0].mxu0
        %4546 = vmatprep.mubr.f32.mxu0 0.0
        %4547 = vmatmul.mubr.f32.gmra.mrb[0].mxu0 %v4168
        %v4548 = vpop.f32.mrb[0].mxu0
        %v4549 = vadd.f32 0.0, %v4548
        %v4550 = vpop.f32.mrb[0].mxu0
        %4551 = vmatprep.mubr.f32.mxu0 0.0
        %4552 = vmatmul.mubr.f32.gmra.mrb[0].mxu0 %v4170
        %v4553 = vpop.f32.mrb[0].mxu0
        %v4554 = vadd.f32 0.0, %v4553
        %v4555 = vpop.f32.mrb[0].mxu0
        %4556 = vdwg.mxu0
        %v4557 = vadd.f32 %v4085, %v4239
        %v4558 = vadd.f32 %v4086, %v4244
        %v4559 = vadd.f32 %v4087, %v4249
        %v4560 = vadd.f32 %v4088, %v4254
        %v4561 = vadd.f32 %v4089, %v4259
        %v4562 = vadd.f32 %v4090, %v4264
        %v4563 = vadd.f32 %v4091, %v4269
        %v4564 = vadd.f32 %v4092, %v4274
        %v4565 = vadd.f32 %v4093, %v4279
        %v4566 = vadd.f32 %v4094, %v4284
        %v4567 = vadd.f32 %v4095, %v4289
        %v4568 = vadd.f32 %v4096, %v4294
        %v4569 = vadd.f32 %v4097, %v4299
        %v4570 = vadd.f32 %v4098, %v4304
        %v4571 = vadd.f32 %v4099, %v4309
        %v4572 = vadd.f32 %v4100, %v4314
        %v4573 = vadd.f32 %v4101, %v4319
        %v4574 = vadd.f32 %v4102, %v4324
        %v4575 = vadd.f32 %v4103, %v4329
        %v4576 = vadd.f32 %v4104, %v4334
        %v4577 = vadd.f32 %v4105, %v4339
        %v4578 = vadd.f32 %v4106, %v4344
        %v4579 = vadd.f32 %v4107, %v4349
        %v4580 = vadd.f32 %v4108, %v4354
        %v4581 = vadd.f32 %v4109, %v4359
        %v4582 = vadd.f32 %v4110, %v4364
        %v4583 = vadd.f32 %v4111, %v4369
        %v4584 = vadd.f32 %v4112, %v4374
        %v4585 = vadd.f32 %v4113, %v4379
        %v4586 = vadd.f32 %v4114, %v4384
        %v4587 = vadd.f32 %v4115, %v4389
        %v4588 = vadd.f32 %v4116, %v4394
        %v4589 = vadd.f32 %v4117, %v4399
        %v4590 = vadd.f32 %v4118, %v4404
        %v4591 = vadd.f32 %v4119, %v4409
        %v4592 = vadd.f32 %v4120, %v4414
        %v4593 = vadd.f32 %v4121, %v4419
        %v4594 = vadd.f32 %v4122, %v4424
        %v4595 = vadd.f32 %v4123, %v4429
        %v4596 = vadd.f32 %v4124, %v4434
        %v4597 = vadd.f32 %v4125, %v4439
        %v4598 = vadd.f32 %v4126, %v4444
        %v4599 = vadd.f32 %v4127, %v4449
        %v4600 = vadd.f32 %v4128, %v4454
        %v4601 = vadd.f32 %v4129, %v4459
        %v4602 = vadd.f32 %v4130, %v4464
        %v4603 = vadd.f32 %v4131, %v4469
        %v4604 = vadd.f32 %v4132, %v4474
        %v4605 = vadd.f32 %v4133, %v4479
        %v4606 = vadd.f32 %v4134, %v4484
        %v4607 = vadd.f32 %v4135, %v4489
        %v4608 = vadd.f32 %v4136, %v4494
        %v4609 = vadd.f32 %v4137, %v4499
        %v4610 = vadd.f32 %v4138, %v4504
        %v4611 = vadd.f32 %v4139, %v4509
        %v4612 = vadd.f32 %v4140, %v4514
        %v4613 = vadd.f32 %v4141, %v4519
        %v4614 = vadd.f32 %v4142, %v4524
        %v4615 = vadd.f32 %v4143, %v4529
        %v4616 = vadd.f32 %v4144, %v4534
        %v4617 = vadd.f32 %v4145, %v4539
        %v4618 = vadd.f32 %v4146, %v4544
        %v4619 = vadd.f32 %v4147, %v4549
        %v4620 = vadd.f32 %v4148, %v4554
        %v4621 = vrot.slane %v281, 2
        %v4622 = vrot.slane %v282, 2
        %v4623 = vsel %vm1547, %v4621, %v4622
        %v4624 = vrot.slane %v283, 2
        %v4625 = vsel %vm1547, %v4622, %v4624
        %v4626 = vrot.slane %v284, 2
        %v4627 = vsel %vm1547, %v4624, %v4626
        %v4628 = vrot.slane %v285, 2
        %v4629 = vsel %vm1547, %v4626, %v4628
        %s4630 = scalar_lea.vmem %s1, 256
        %v4631 = vld [vmem:[%s4630] sm:$0xff]
        %v4632 = vld [vmem:[%s4630 + $0x8] sm:$0xff]
        %v4633 = vld [vmem:[%s4630 + $0x10] sm:$0xff]
        %v4634 = vld [vmem:[%s4630 + $0x18] sm:$0xff]
        %v4635 = vsel %vm520, %v4623, 0
        %v4637 = vsel %vm520, %v4625, 0
        %v4639 = vsel %vm520, %v4627, 0
        %v4641 = vsel %vm520, %v4629, 0
        %4643 = vmatprep.subr.mxu0 0.0
        %4644 = vmatpush1.msra.mxu0 %v4631
        %4645 = vmatprep.subr.mxu0 0.0
        %4646 = vmatpush1.msra.mxu0 %v4632
        %4647 = vmatprep.subr.mxu0 0.0
        %4648 = vmatpush1.msra.mxu0 %v4633
        %4649 = vmatprep.subr.mxu0 0.0
        %4650 = vmatpush1.msra.mxu0 %v4634
        %4651 = vmatprep.subr.mxu0 0.0
        %4652 = vmatpush1.msra.mxu0 0.0
        %4653 = vmatprep.subr.mxu0 0.0
        %4654 = vmatpush1.msra.mxu0 0.0
        %4655 = vmatprep.subr.mxu0 0.0
        %4656 = vmatpush1.msra.mxu0 0.0
        %4657 = vmatprep.subr.mxu0 0.0
        %4658 = vmatpush1.msra.mxu0 0.0
        %4659 = vmatprep.subr.mxu0 0.0
        %4660 = vmatpush1.msra.mxu0 0.0
        %4661 = vmatprep.subr.mxu0 0.0
        %4662 = vmatpush1.msra.mxu0 0.0
        %4663 = vmatprep.subr.mxu0 0.0
        %4664 = vmatpush1.msra.mxu0 0.0
        %4665 = vmatprep.subr.mxu0 0.0
        %4666 = vmatpush1.msra.mxu0 0.0
        %4667 = vmatprep.subr.mxu0 0.0
        %4668 = vmatpush1.msra.mxu0 0.0
        %4669 = vmatprep.subr.mxu0 0.0
        %4670 = vmatpush1.msra.mxu0 0.0
        %4671 = vmatprep.subr.mxu0 0.0
        %4672 = vmatpush1.msra.mxu0 0.0
        %4673 = vmatprep.subr.mxu0 0.0
        %4674 = vmatpush1.msra.mxu0 0.0
        %4675 = vmatprep.subr.mxu0 0.0
        %4676 = vmatpush1.msra.mxu0 0.0
        %4677 = vmatprep.subr.mxu0 0.0
        %4678 = vmatpush1.msra.mxu0 0.0
        %4679 = vmatprep.subr.mxu0 0.0
        %4680 = vmatpush1.msra.mxu0 0.0
        %4681 = vmatprep.subr.mxu0 0.0
        %4682 = vmatpush1.msra.mxu0 0.0
        %4683 = vmatprep.subr.mxu0 0.0
        %4684 = vmatpush1.msra.mxu0 0.0
        %4685 = vmatprep.subr.mxu0 0.0
        %4686 = vmatpush1.msra.mxu0 0.0
        %4687 = vmatprep.subr.mxu0 0.0
        %4688 = vmatpush1.msra.mxu0 0.0
        %4689 = vmatprep.subr.mxu0 0.0
        %4690 = vmatpush1.msra.mxu0 0.0
        %4691 = vmatprep.subr.mxu0 0.0
        %4692 = vmatpush1.msra.mxu0 0.0
        %4693 = vmatprep.subr.mxu0 0.0
        %4694 = vmatpush1.msra.mxu0 0.0
        %4695 = vmatprep.subr.mxu0 0.0
        %4696 = vmatpush1.msra.mxu0 0.0
        %4697 = vmatprep.subr.mxu0 0.0
        %4698 = vmatpush1.msra.mxu0 0.0
        %4699 = vmatprep.subr.mxu0 0.0
        %4700 = vmatpush1.msra.mxu0 0.0
        %4701 = vmatprep.subr.mxu0 0.0
        %4702 = vmatpush1.msra.mxu0 0.0
        %4703 = vmatprep.subr.mxu0 0.0
        %4704 = vmatpush1.msra.mxu0 0.0
        %4705 = vmatprep.subr.mxu0 0.0
        %4706 = vmatpush1.msra.mxu0 0.0
        %4707 = vmatprep.mubr.f32.mxu0 0.0
        %4708 = vmatmul.mubr.f32.gmra.mrb[0].mxu0 %v1713
        %v4709 = vpop.f32.mrb[0].mxu0
        %v4710 = vadd.f32 0.0, %v4709
        %v4711 = vpop.f32.mrb[0].mxu0
        %4712 = vmatprep.mubr.f32.mxu0 0.0
        %4713 = vmatmul.mubr.f32.gmra.mrb[0].mxu0 %v1715
        %v4714 = vpop.f32.mrb[0].mxu0
        %v4715 = vadd.f32 0.0, %v4714
        %v4716 = vpop.f32.mrb[0].mxu0
        %4717 = vmatprep.mubr.f32.mxu0 0.0
        %4718 = vmatmul.mubr.f32.gmra.mrb[0].mxu0 %v1717
        %v4719 = vpop.f32.mrb[0].mxu0
        %v4720 = vadd.f32 0.0, %v4719
        %v4721 = vpop.f32.mrb[0].mxu0
        %4722 = vmatprep.mubr.f32.mxu0 0.0
        %4723 = vmatmul.mubr.f32.gmra.mrb[0].mxu0 %v1719
        %v4724 = vpop.f32.mrb[0].mxu0
        %v4725 = vadd.f32 0.0, %v4724
        %v4726 = vpop.f32.mrb[0].mxu0
        %4727 = vmatprep.mubr.f32.mxu0 0.0
        %4728 = vmatmul.mubr.f32.gmra.mrb[0].mxu0 %v1721
        %v4729 = vpop.f32.mrb[0].mxu0
        %v4730 = vadd.f32 0.0, %v4729
        %v4731 = vpop.f32.mrb[0].mxu0
        %4732 = vmatprep.mubr.f32.mxu0 0.0
        %4733 = vmatmul.mubr.f32.gmra.mrb[0].mxu0 %v1723
        %v4734 = vpop.f32.mrb[0].mxu0
        %v4735 = vadd.f32 0.0, %v4734
        %v4736 = vpop.f32.mrb[0].mxu0
        %4737 = vmatprep.mubr.f32.mxu0 0.0
        %4738 = vmatmul.mubr.f32.gmra.mrb[0].mxu0 %v1725
        %v4739 = vpop.f32.mrb[0].mxu0
        %v4740 = vadd.f32 0.0, %v4739
        %v4741 = vpop.f32.mrb[0].mxu0
        %4742 = vmatprep.mubr.f32.mxu0 0.0
        %4743 = vmatmul.mubr.f32.gmra.mrb[0].mxu0 %v1727
        %v4744 = vpop.f32.mrb[0].mxu0
        %v4745 = vadd.f32 0.0, %v4744
        %v4746 = vpop.f32.mrb[0].mxu0
        %4747 = vmatprep.mubr.f32.mxu0 0.0
        %4748 = vmatmul.mubr.f32.gmra.mrb[0].mxu0 %v1729
        %v4749 = vpop.f32.mrb[0].mxu0
        %v4750 = vadd.f32 0.0, %v4749
        %v4751 = vpop.f32.mrb[0].mxu0
        %4752 = vmatprep.mubr.f32.mxu0 0.0
        %4753 = vmatmul.mubr.f32.gmra.mrb[0].mxu0 %v1731
        %v4754 = vpop.f32.mrb[0].mxu0
        %v4755 = vadd.f32 0.0, %v4754
        %v4756 = vpop.f32.mrb[0].mxu0
        %4757 = vmatprep.mubr.f32.mxu0 0.0
        %4758 = vmatmul.mubr.f32.gmra.mrb[0].mxu0 %v1733
        %v4759 = vpop.f32.mrb[0].mxu0
        %v4760 = vadd.f32 0.0, %v4759
        %v4761 = vpop.f32.mrb[0].mxu0
        %4762 = vmatprep.mubr.f32.mxu0 0.0
        %4763 = vmatmul.mubr.f32.gmra.mrb[0].mxu0 %v1735
        %v4764 = vpop.f32.mrb[0].mxu0
        %v4765 = vadd.f32 0.0, %v4764
        %v4766 = vpop.f32.mrb[0].mxu0
        %4767 = vmatprep.mubr.f32.mxu0 0.0
        %4768 = vmatmul.mubr.f32.gmra.mrb[0].mxu0 %v1737
        %v4769 = vpop.f32.mrb[0].mxu0
        %v4770 = vadd.f32 0.0, %v4769
        %v4771 = vpop.f32.mrb[0].mxu0
        %4772 = vmatprep.mubr.f32.mxu0 0.0
        %4773 = vmatmul.mubr.f32.gmra.mrb[0].mxu0 %v1739
        %v4774 = vpop.f32.mrb[0].mxu0
        %v4775 = vadd.f32 0.0, %v4774
        %v4776 = vpop.f32.mrb[0].mxu0
        %4777 = vmatprep.mubr.f32.mxu0 0.0
        %4778 = vmatmul.mubr.f32.gmra.mrb[0].mxu0 %v1741
        %v4779 = vpop.f32.mrb[0].mxu0
        %v4780 = vadd.f32 0.0, %v4779
        %v4781 = vpop.f32.mrb[0].mxu0
        %4782 = vmatprep.mubr.f32.mxu0 0.0
        %4783 = vmatmul.mubr.f32.gmra.mrb[0].mxu0 %v1743
        %v4784 = vpop.f32.mrb[0].mxu0
        %v4785 = vadd.f32 0.0, %v4784
        %v4786 = vpop.f32.mrb[0].mxu0
        %4787 = vmatprep.mubr.f32.mxu0 0.0
        %4788 = vmatmul.mubr.f32.gmra.mrb[0].mxu0 %v1745
        %v4789 = vpop.f32.mrb[0].mxu0
        %v4790 = vadd.f32 0.0, %v4789
        %v4791 = vpop.f32.mrb[0].mxu0
        %4792 = vmatprep.mubr.f32.mxu0 0.0
        %4793 = vmatmul.mubr.f32.gmra.mrb[0].mxu0 %v1747
        %v4794 = vpop.f32.mrb[0].mxu0
        %v4795 = vadd.f32 0.0, %v4794
        %v4796 = vpop.f32.mrb[0].mxu0
        %4797 = vmatprep.mubr.f32.mxu0 0.0
        %4798 = vmatmul.mubr.f32.gmra.mrb[0].mxu0 %v1749
        %v4799 = vpop.f32.mrb[0].mxu0
        %v4800 = vadd.f32 0.0, %v4799
        %v4801 = vpop.f32.mrb[0].mxu0
        %4802 = vmatprep.mubr.f32.mxu0 0.0
        %4803 = vmatmul.mubr.f32.gmra.mrb[0].mxu0 %v1751
        %v4804 = vpop.f32.mrb[0].mxu0
        %v4805 = vadd.f32 0.0, %v4804
        %v4806 = vpop.f32.mrb[0].mxu0
        %4807 = vmatprep.mubr.f32.mxu0 0.0
        %4808 = vmatmul.mubr.f32.gmra.mrb[0].mxu0 %v1753
        %v4809 = vpop.f32.mrb[0].mxu0
        %v4810 = vadd.f32 0.0, %v4809
        %v4811 = vpop.f32.mrb[0].mxu0
        %4812 = vmatprep.mubr.f32.mxu0 0.0
        %4813 = vmatmul.mubr.f32.gmra.mrb[0].mxu0 %v1755
        %v4814 = vpop.f32.mrb[0].mxu0
        %v4815 = vadd.f32 0.0, %v4814
        %v4816 = vpop.f32.mrb[0].mxu0
        %4817 = vmatprep.mubr.f32.mxu0 0.0
        %4818 = vmatmul.mubr.f32.gmra.mrb[0].mxu0 %v1757
        %v4819 = vpop.f32.mrb[0].mxu0
        %v4820 = vadd.f32 0.0, %v4819
        %v4821 = vpop.f32.mrb[0].mxu0
        %4822 = vmatprep.mubr.f32.mxu0 0.0
        %4823 = vmatmul.mubr.f32.gmra.mrb[0].mxu0 %v1759
        %v4824 = vpop.f32.mrb[0].mxu0
        %v4825 = vadd.f32 0.0, %v4824
        %v4826 = vpop.f32.mrb[0].mxu0
        %4827 = vmatprep.mubr.f32.mxu0 0.0
        %4828 = vmatmul.mubr.f32.gmra.mrb[0].mxu0 %v1761
        %v4829 = vpop.f32.mrb[0].mxu0
        %v4830 = vadd.f32 0.0, %v4829
        %v4831 = vpop.f32.mrb[0].mxu0
        %4832 = vmatprep.mubr.f32.mxu0 0.0
        %4833 = vmatmul.mubr.f32.gmra.mrb[0].mxu0 %v1763
        %v4834 = vpop.f32.mrb[0].mxu0
        %v4835 = vadd.f32 0.0, %v4834
        %v4836 = vpop.f32.mrb[0].mxu0
        %4837 = vmatprep.mubr.f32.mxu0 0.0
        %4838 = vmatmul.mubr.f32.gmra.mrb[0].mxu0 %v1765
        %v4839 = vpop.f32.mrb[0].mxu0
        %v4840 = vadd.f32 0.0, %v4839
        %v4841 = vpop.f32.mrb[0].mxu0
        %4842 = vmatprep.mubr.f32.mxu0 0.0
        %4843 = vmatmul.mubr.f32.gmra.mrb[0].mxu0 %v1767
        %v4844 = vpop.f32.mrb[0].mxu0
        %v4845 = vadd.f32 0.0, %v4844
        %v4846 = vpop.f32.mrb[0].mxu0
        %4847 = vmatprep.mubr.f32.mxu0 0.0
        %4848 = vmatmul.mubr.f32.gmra.mrb[0].mxu0 %v1769
        %v4849 = vpop.f32.mrb[0].mxu0
        %v4850 = vadd.f32 0.0, %v4849
        %v4851 = vpop.f32.mrb[0].mxu0
        %4852 = vmatprep.mubr.f32.mxu0 0.0
        %4853 = vmatmul.mubr.f32.gmra.mrb[0].mxu0 %v1771
        %v4854 = vpop.f32.mrb[0].mxu0
        %v4855 = vadd.f32 0.0, %v4854
        %v4856 = vpop.f32.mrb[0].mxu0
        %4857 = vmatprep.mubr.f32.mxu0 0.0
        %4858 = vmatmul.mubr.f32.gmra.mrb[0].mxu0 %v1773
        %v4859 = vpop.f32.mrb[0].mxu0
        %v4860 = vadd.f32 0.0, %v4859
        %v4861 = vpop.f32.mrb[0].mxu0
        %4862 = vmatprep.mubr.f32.mxu0 0.0
        %4863 = vmatmul.mubr.f32.gmra.mrb[0].mxu0 %v1775
        %v4864 = vpop.f32.mrb[0].mxu0
        %v4865 = vadd.f32 0.0, %v4864
        %v4866 = vpop.f32.mrb[0].mxu0
        %4867 = vmatprep.mubr.f32.mxu0 0.0
        %4868 = vmatmul.mubr.f32.gmra.mrb[0].mxu0 %v1777
        %v4869 = vpop.f32.mrb[0].mxu0
        %v4870 = vadd.f32 0.0, %v4869
        %v4871 = vpop.f32.mrb[0].mxu0
        %4872 = vmatprep.mubr.f32.mxu0 0.0
        %4873 = vmatmul.mubr.f32.gmra.mrb[0].mxu0 %v1779
        %v4874 = vpop.f32.mrb[0].mxu0
        %v4875 = vadd.f32 0.0, %v4874
        %v4876 = vpop.f32.mrb[0].mxu0
        %4877 = vmatprep.mubr.f32.mxu0 0.0
        %4878 = vmatmul.mubr.f32.gmra.mrb[0].mxu0 %v1781
        %v4879 = vpop.f32.mrb[0].mxu0
        %v4880 = vadd.f32 0.0, %v4879
        %v4881 = vpop.f32.mrb[0].mxu0
        %4882 = vmatprep.mubr.f32.mxu0 0.0
        %4883 = vmatmul.mubr.f32.gmra.mrb[0].mxu0 %v1783
        %v4884 = vpop.f32.mrb[0].mxu0
        %v4885 = vadd.f32 0.0, %v4884
        %v4886 = vpop.f32.mrb[0].mxu0
        %4887 = vmatprep.mubr.f32.mxu0 0.0
        %4888 = vmatmul.mubr.f32.gmra.mrb[0].mxu0 %v1785
        %v4889 = vpop.f32.mrb[0].mxu0
        %v4890 = vadd.f32 0.0, %v4889
        %v4891 = vpop.f32.mrb[0].mxu0
        %4892 = vmatprep.mubr.f32.mxu0 0.0
        %4893 = vmatmul.mubr.f32.gmra.mrb[0].mxu0 %v1787
        %v4894 = vpop.f32.mrb[0].mxu0
        %v4895 = vadd.f32 0.0, %v4894
        %v4896 = vpop.f32.mrb[0].mxu0
        %4897 = vmatprep.mubr.f32.mxu0 0.0
        %4898 = vmatmul.mubr.f32.gmra.mrb[0].mxu0 %v1789
        %v4899 = vpop.f32.mrb[0].mxu0
        %v4900 = vadd.f32 0.0, %v4899
        %v4901 = vpop.f32.mrb[0].mxu0
        %4902 = vmatprep.mubr.f32.mxu0 0.0
        %4903 = vmatmul.mubr.f32.gmra.mrb[0].mxu0 %v1791
        %v4904 = vpop.f32.mrb[0].mxu0
        %v4905 = vadd.f32 0.0, %v4904
        %v4906 = vpop.f32.mrb[0].mxu0
        %4907 = vmatprep.mubr.f32.mxu0 0.0
        %4908 = vmatmul.mubr.f32.gmra.mrb[0].mxu0 %v1793
        %v4909 = vpop.f32.mrb[0].mxu0
        %v4910 = vadd.f32 0.0, %v4909
        %v4911 = vpop.f32.mrb[0].mxu0
        %4912 = vmatprep.mubr.f32.mxu0 0.0
        %4913 = vmatmul.mubr.f32.gmra.mrb[0].mxu0 %v1795
        %v4914 = vpop.f32.mrb[0].mxu0
        %v4915 = vadd.f32 0.0, %v4914
        %v4916 = vpop.f32.mrb[0].mxu0
        %4917 = vmatprep.mubr.f32.mxu0 0.0
        %4918 = vmatmul.mubr.f32.gmra.mrb[0].mxu0 %v1797
        %v4919 = vpop.f32.mrb[0].mxu0
        %v4920 = vadd.f32 0.0, %v4919
        %v4921 = vpop.f32.mrb[0].mxu0
        %4922 = vmatprep.mubr.f32.mxu0 0.0
        %4923 = vmatmul.mubr.f32.gmra.mrb[0].mxu0 %v1799
        %v4924 = vpop.f32.mrb[0].mxu0
        %v4925 = vadd.f32 0.0, %v4924
        %v4926 = vpop.f32.mrb[0].mxu0
        %4927 = vmatprep.mubr.f32.mxu0 0.0
        %4928 = vmatmul.mubr.f32.gmra.mrb[0].mxu0 %v1801
        %v4929 = vpop.f32.mrb[0].mxu0
        %v4930 = vadd.f32 0.0, %v4929
        %v4931 = vpop.f32.mrb[0].mxu0
        %4932 = vmatprep.mubr.f32.mxu0 0.0
        %4933 = vmatmul.mubr.f32.gmra.mrb[0].mxu0 %v1803
        %v4934 = vpop.f32.mrb[0].mxu0
        %v4935 = vadd.f32 0.0, %v4934
        %v4936 = vpop.f32.mrb[0].mxu0
        %4937 = vmatprep.mubr.f32.mxu0 0.0
        %4938 = vmatmul.mubr.f32.gmra.mrb[0].mxu0 %v1805
        %v4939 = vpop.f32.mrb[0].mxu0
        %v4940 = vadd.f32 0.0, %v4939
        %v4941 = vpop.f32.mrb[0].mxu0
        %4942 = vmatprep.mubr.f32.mxu0 0.0
        %4943 = vmatmul.mubr.f32.gmra.mrb[0].mxu0 %v1807
        %v4944 = vpop.f32.mrb[0].mxu0
        %v4945 = vadd.f32 0.0, %v4944
        %v4946 = vpop.f32.mrb[0].mxu0
        %4947 = vmatprep.mubr.f32.mxu0 0.0
        %4948 = vmatmul.mubr.f32.gmra.mrb[0].mxu0 %v1809
        %v4949 = vpop.f32.mrb[0].mxu0
        %v4950 = vadd.f32 0.0, %v4949
        %v4951 = vpop.f32.mrb[0].mxu0
        %4952 = vmatprep.mubr.f32.mxu0 0.0
        %4953 = vmatmul.mubr.f32.gmra.mrb[0].mxu0 %v1811
        %v4954 = vpop.f32.mrb[0].mxu0
        %v4955 = vadd.f32 0.0, %v4954
        %v4956 = vpop.f32.mrb[0].mxu0
        %4957 = vmatprep.mubr.f32.mxu0 0.0
        %4958 = vmatmul.mubr.f32.gmra.mrb[0].mxu0 %v1813
        %v4959 = vpop.f32.mrb[0].mxu0
        %v4960 = vadd.f32 0.0, %v4959
        %v4961 = vpop.f32.mrb[0].mxu0
        %4962 = vmatprep.mubr.f32.mxu0 0.0
        %4963 = vmatmul.mubr.f32.gmra.mrb[0].mxu0 %v1815
        %v4964 = vpop.f32.mrb[0].mxu0
        %v4965 = vadd.f32 0.0, %v4964
        %v4966 = vpop.f32.mrb[0].mxu0
        %4967 = vmatprep.mubr.f32.mxu0 0.0
        %4968 = vmatmul.mubr.f32.gmra.mrb[0].mxu0 %v1817
        %v4969 = vpop.f32.mrb[0].mxu0
        %v4970 = vadd.f32 0.0, %v4969
        %v4971 = vpop.f32.mrb[0].mxu0
        %4972 = vmatprep.mubr.f32.mxu0 0.0
        %4973 = vmatmul.mubr.f32.gmra.mrb[0].mxu0 %v1819
        %v4974 = vpop.f32.mrb[0].mxu0
        %v4975 = vadd.f32 0.0, %v4974
        %v4976 = vpop.f32.mrb[0].mxu0
        %4977 = vmatprep.mubr.f32.mxu0 0.0
        %4978 = vmatmul.mubr.f32.gmra.mrb[0].mxu0 %v1821
        %v4979 = vpop.f32.mrb[0].mxu0
        %v4980 = vadd.f32 0.0, %v4979
        %v4981 = vpop.f32.mrb[0].mxu0
        %4982 = vmatprep.mubr.f32.mxu0 0.0
        %4983 = vmatmul.mubr.f32.gmra.mrb[0].mxu0 %v1823
        %v4984 = vpop.f32.mrb[0].mxu0
        %v4985 = vadd.f32 0.0, %v4984
        %v4986 = vpop.f32.mrb[0].mxu0
        %4987 = vmatprep.mubr.f32.mxu0 0.0
        %4988 = vmatmul.mubr.f32.gmra.mrb[0].mxu0 %v3226
        %v4989 = vpop.f32.mrb[0].mxu0
        %v4990 = vadd.f32 0.0, %v4989
        %v4991 = vpop.f32.mrb[0].mxu0
        %4992 = vmatprep.mubr.f32.mxu0 0.0
        %4993 = vmatmul.mubr.f32.gmra.mrb[0].mxu0 %v3228
        %v4994 = vpop.f32.mrb[0].mxu0
        %v4995 = vadd.f32 0.0, %v4994
        %v4996 = vpop.f32.mrb[0].mxu0
        %4997 = vmatprep.mubr.f32.mxu0 0.0
        %4998 = vmatmul.mubr.f32.gmra.mrb[0].mxu0 %v3230
        %v4999 = vpop.f32.mrb[0].mxu0
        %v5000 = vadd.f32 0.0, %v4999
        %v5001 = vpop.f32.mrb[0].mxu0
        %5002 = vmatprep.mubr.f32.mxu0 0.0
        %5003 = vmatmul.mubr.f32.gmra.mrb[0].mxu0 %v3232
        %v5004 = vpop.f32.mrb[0].mxu0
        %v5005 = vadd.f32 0.0, %v5004
        %v5006 = vpop.f32.mrb[0].mxu0
        %5007 = vmatprep.mubr.f32.mxu0 0.0
        %5008 = vmatmul.mubr.f32.gmra.mrb[0].mxu0 %v4635
        %v5009 = vpop.f32.mrb[0].mxu0
        %v5010 = vadd.f32 0.0, %v5009
        %v5011 = vpop.f32.mrb[0].mxu0
        %5012 = vmatprep.mubr.f32.mxu0 0.0
        %5013 = vmatmul.mubr.f32.gmra.mrb[0].mxu0 %v4637
        %v5014 = vpop.f32.mrb[0].mxu0
        %v5015 = vadd.f32 0.0, %v5014
        %v5016 = vpop.f32.mrb[0].mxu0
        %5017 = vmatprep.mubr.f32.mxu0 0.0
        %5018 = vmatmul.mubr.f32.gmra.mrb[0].mxu0 %v4639
        %v5019 = vpop.f32.mrb[0].mxu0
        %v5020 = vadd.f32 0.0, %v5019
        %v5021 = vpop.f32.mrb[0].mxu0
        %5022 = vmatprep.mubr.f32.mxu0 0.0
        %5023 = vmatmul.mubr.f32.gmra.mrb[0].mxu0 %v4641
        %v5024 = vpop.f32.mrb[0].mxu0
        %v5025 = vadd.f32 0.0, %v5024
        %v5026 = vpop.f32.mrb[0].mxu0
        %5027 = vdwg.mxu0
        %v5028 = vadd.f32 %v4557, %v4710
        %v5029 = vadd.f32 %v4558, %v4715
        %v5030 = vadd.f32 %v4559, %v4720
        %v5031 = vadd.f32 %v4560, %v4725
        %v5032 = vadd.f32 %v4561, %v4730
        %v5033 = vadd.f32 %v4562, %v4735
        %v5034 = vadd.f32 %v4563, %v4740
        %v5035 = vadd.f32 %v4564, %v4745
        %v5036 = vadd.f32 %v4565, %v4750
        %v5037 = vadd.f32 %v4566, %v4755
        %v5038 = vadd.f32 %v4567, %v4760
        %v5039 = vadd.f32 %v4568, %v4765
        %v5040 = vadd.f32 %v4569, %v4770
        %v5041 = vadd.f32 %v4570, %v4775
        %v5042 = vadd.f32 %v4571, %v4780
        %v5043 = vadd.f32 %v4572, %v4785
        %v5044 = vadd.f32 %v4573, %v4790
        %v5045 = vadd.f32 %v4574, %v4795
        %v5046 = vadd.f32 %v4575, %v4800
        %v5047 = vadd.f32 %v4576, %v4805
        %v5048 = vadd.f32 %v4577, %v4810
        %v5049 = vadd.f32 %v4578, %v4815
        %v5050 = vadd.f32 %v4579, %v4820
        %v5051 = vadd.f32 %v4580, %v4825
        %v5052 = vadd.f32 %v4581, %v4830
        %v5053 = vadd.f32 %v4582, %v4835
        %v5054 = vadd.f32 %v4583, %v4840
        %v5055 = vadd.f32 %v4584, %v4845
        %v5056 = vadd.f32 %v4585, %v4850
        %v5057 = vadd.f32 %v4586, %v4855
        %v5058 = vadd.f32 %v4587, %v4860
        %v5059 = vadd.f32 %v4588, %v4865
        %v5060 = vadd.f32 %v4589, %v4870
        %v5061 = vadd.f32 %v4590, %v4875
        %v5062 = vadd.f32 %v4591, %v4880
        %v5063 = vadd.f32 %v4592, %v4885
        %v5064 = vadd.f32 %v4593, %v4890
        %v5065 = vadd.f32 %v4594, %v4895
        %v5066 = vadd.f32 %v4595, %v4900
        %v5067 = vadd.f32 %v4596, %v4905
        %v5068 = vadd.f32 %v4597, %v4910
        %v5069 = vadd.f32 %v4598, %v4915
        %v5070 = vadd.f32 %v4599, %v4920
        %v5071 = vadd.f32 %v4600, %v4925
        %v5072 = vadd.f32 %v4601, %v4930
        %v5073 = vadd.f32 %v4602, %v4935
        %v5074 = vadd.f32 %v4603, %v4940
        %v5075 = vadd.f32 %v4604, %v4945
        %v5076 = vadd.f32 %v4605, %v4950
        %v5077 = vadd.f32 %v4606, %v4955
        %v5078 = vadd.f32 %v4607, %v4960
        %v5079 = vadd.f32 %v4608, %v4965
        %v5080 = vadd.f32 %v4609, %v4970
        %v5081 = vadd.f32 %v4610, %v4975
        %v5082 = vadd.f32 %v4611, %v4980
        %v5083 = vadd.f32 %v4612, %v4985
        %v5084 = vadd.f32 %v4613, %v4990
        %v5085 = vadd.f32 %v4614, %v4995
        %v5086 = vadd.f32 %v4615, %v5000
        %v5087 = vadd.f32 %v4616, %v5005
        %v5088 = vadd.f32 %v4617, %v5010
        %v5089 = vadd.f32 %v4618, %v5015
        %v5090 = vadd.f32 %v4619, %v5020
        %v5091 = vadd.f32 %v4620, %v5025
        %v5092 = vld [vmem:[%s2] sm:$0x1]
        %v5094 = vlaneseq
        %v5095 = vshrl.u32 %v5094, 7
        %v5096 = vsub.s32 0, %v5095
        %v5097 = vrot.slane %v5092, %v5096
        %v5099 = vadd.f32 %v5028, %v5097
        %v5100 = vadd.f32 %v5029, %v5097
        %v5101 = vadd.f32 %v5030, %v5097
        %v5102 = vadd.f32 %v5031, %v5097
        %v5103 = vadd.f32 %v5032, %v5097
        %v5104 = vadd.f32 %v5033, %v5097
        %v5105 = vadd.f32 %v5034, %v5097
        %v5106 = vadd.f32 %v5035, %v5097
        %v5107 = vadd.f32 %v5036, %v5097
        %v5108 = vadd.f32 %v5037, %v5097
        %v5109 = vadd.f32 %v5038, %v5097
        %v5110 = vadd.f32 %v5039, %v5097
        %v5111 = vadd.f32 %v5040, %v5097
        %v5112 = vadd.f32 %v5041, %v5097
        %v5113 = vadd.f32 %v5042, %v5097
        %v5114 = vadd.f32 %v5043, %v5097
        %v5115 = vadd.f32 %v5044, %v5097
        %v5116 = vadd.f32 %v5045, %v5097
        %v5117 = vadd.f32 %v5046, %v5097
        %v5118 = vadd.f32 %v5047, %v5097
        %v5119 = vadd.f32 %v5048, %v5097
        %v5120 = vadd.f32 %v5049, %v5097
        %v5121 = vadd.f32 %v5050, %v5097
        %v5122 = vadd.f32 %v5051, %v5097
        %v5123 = vadd.f32 %v5052, %v5097
        %v5124 = vadd.f32 %v5053, %v5097
        %v5125 = vadd.f32 %v5054, %v5097
        %v5126 = vadd.f32 %v5055, %v5097
        %v5127 = vadd.f32 %v5056, %v5097
        %v5128 = vadd.f32 %v5057, %v5097
        %v5129 = vadd.f32 %v5058, %v5097
        %v5130 = vadd.f32 %v5059, %v5097
        %v5131 = vadd.f32 %v5060, %v5097
        %v5132 = vadd.f32 %v5061, %v5097
        %v5133 = vadd.f32 %v5062, %v5097
        %v5134 = vadd.f32 %v5063, %v5097
        %v5135 = vadd.f32 %v5064, %v5097
        %v5136 = vadd.f32 %v5065, %v5097
        %v5137 = vadd.f32 %v5066, %v5097
        %v5138 = vadd.f32 %v5067, %v5097
        %v5139 = vadd.f32 %v5068, %v5097
        %v5140 = vadd.f32 %v5069, %v5097
        %v5141 = vadd.f32 %v5070, %v5097
        %v5142 = vadd.f32 %v5071, %v5097
        %v5143 = vadd.f32 %v5072, %v5097
        %v5144 = vadd.f32 %v5073, %v5097
        %v5145 = vadd.f32 %v5074, %v5097
        %v5146 = vadd.f32 %v5075, %v5097
        %v5147 = vadd.f32 %v5076, %v5097
        %v5148 = vadd.f32 %v5077, %v5097
        %v5149 = vadd.f32 %v5078, %v5097
        %v5150 = vadd.f32 %v5079, %v5097
        %v5151 = vadd.f32 %v5080, %v5097
        %v5152 = vadd.f32 %v5081, %v5097
        %v5153 = vadd.f32 %v5082, %v5097
        %v5154 = vadd.f32 %v5083, %v5097
        %v5155 = vadd.f32 %v5084, %v5097
        %v5156 = vadd.f32 %v5085, %v5097
        %v5157 = vadd.f32 %v5086, %v5097
        %v5158 = vadd.f32 %v5087, %v5097
        %v5159 = vadd.f32 %v5088, %v5097
        %v5160 = vadd.f32 %v5089, %v5097
        %v5161 = vadd.f32 %v5090, %v5097
        %v5162 = vadd.f32 %v5091, %v5097
        %v5163 = vmax.f32 %v5099, 0.0
        %v5164 = vmax.f32 %v5100, 0.0
        %v5165 = vmax.f32 %v5101, 0.0
        %v5166 = vmax.f32 %v5102, 0.0
        %v5167 = vmax.f32 %v5103, 0.0
        %v5168 = vmax.f32 %v5104, 0.0
        %v5169 = vmax.f32 %v5105, 0.0
        %v5170 = vmax.f32 %v5106, 0.0
        %v5171 = vmax.f32 %v5107, 0.0
        %v5172 = vmax.f32 %v5108, 0.0
        %v5173 = vmax.f32 %v5109, 0.0
        %v5174 = vmax.f32 %v5110, 0.0
        %v5175 = vmax.f32 %v5111, 0.0
        %v5176 = vmax.f32 %v5112, 0.0
        %v5177 = vmax.f32 %v5113, 0.0
        %v5178 = vmax.f32 %v5114, 0.0
        %v5179 = vmax.f32 %v5115, 0.0
        %v5180 = vmax.f32 %v5116, 0.0
        %v5181 = vmax.f32 %v5117, 0.0
        %v5182 = vmax.f32 %v5118, 0.0
        %v5183 = vmax.f32 %v5119, 0.0
        %v5184 = vmax.f32 %v5120, 0.0
        %v5185 = vmax.f32 %v5121, 0.0
        %v5186 = vmax.f32 %v5122, 0.0
        %v5187 = vmax.f32 %v5123, 0.0
        %v5188 = vmax.f32 %v5124, 0.0
        %v5189 = vmax.f32 %v5125, 0.0
        %v5190 = vmax.f32 %v5126, 0.0
        %v5191 = vmax.f32 %v5127, 0.0
        %v5192 = vmax.f32 %v5128, 0.0
        %v5193 = vmax.f32 %v5129, 0.0
        %v5194 = vmax.f32 %v5130, 0.0
        %v5195 = vmax.f32 %v5131, 0.0
        %v5196 = vmax.f32 %v5132, 0.0
        %v5197 = vmax.f32 %v5133, 0.0
        %v5198 = vmax.f32 %v5134, 0.0
        %v5199 = vmax.f32 %v5135, 0.0
        %v5200 = vmax.f32 %v5136, 0.0
        %v5201 = vmax.f32 %v5137, 0.0
        %v5202 = vmax.f32 %v5138, 0.0
        %v5203 = vmax.f32 %v5139, 0.0
        %v5204 = vmax.f32 %v5140, 0.0
        %v5205 = vmax.f32 %v5141, 0.0
        %v5206 = vmax.f32 %v5142, 0.0
        %v5207 = vmax.f32 %v5143, 0.0
        %v5208 = vmax.f32 %v5144, 0.0
        %v5209 = vmax.f32 %v5145, 0.0
        %v5210 = vmax.f32 %v5146, 0.0
        %v5211 = vmax.f32 %v5147, 0.0
        %v5212 = vmax.f32 %v5148, 0.0
        %v5213 = vmax.f32 %v5149, 0.0
        %v5214 = vmax.f32 %v5150, 0.0
        %v5215 = vmax.f32 %v5151, 0.0
        %v5216 = vmax.f32 %v5152, 0.0
        %v5217 = vmax.f32 %v5153, 0.0
        %v5218 = vmax.f32 %v5154, 0.0
        %v5219 = vmax.f32 %v5155, 0.0
        %v5220 = vmax.f32 %v5156, 0.0
        %v5221 = vmax.f32 %v5157, 0.0
        %v5222 = vmax.f32 %v5158, 0.0
        %v5223 = vmax.f32 %v5159, 0.0
        %v5224 = vmax.f32 %v5160, 0.0
        %v5225 = vmax.f32 %v5161, 0.0
        %v5226 = vmax.f32 %v5162, 0.0
        %v5227 = vmax.f32 %v5163, %v5167
        %v5228 = vmax.f32 %v5164, %v5168
        %v5229 = vmax.f32 %v5165, %v5169
        %v5230 = vmax.f32 %v5166, %v5170
        %v5231 = vmax.f32 %v5171, %v5175
        %v5232 = vmax.f32 %v5172, %v5176
        %v5233 = vmax.f32 %v5173, %v5177
        %v5234 = vmax.f32 %v5174, %v5178
        %v5235 = vmax.f32 %v5179, %v5183
        %v5236 = vmax.f32 %v5180, %v5184
        %v5237 = vmax.f32 %v5181, %v5185
        %v5238 = vmax.f32 %v5182, %v5186
        %v5239 = vmax.f32 %v5187, %v5191
        %v5240 = vmax.f32 %v5188, %v5192
        %v5241 = vmax.f32 %v5189, %v5193
        %v5242 = vmax.f32 %v5190, %v5194
        %v5243 = vmax.f32 %v5195, %v5199
        %v5244 = vmax.f32 %v5196, %v5200
        %v5245 = vmax.f32 %v5197, %v5201
        %v5246 = vmax.f32 %v5198, %v5202
        %v5247 = vmax.f32 %v5203, %v5207
        %v5248 = vmax.f32 %v5204, %v5208
        %v5249 = vmax.f32 %v5205, %v5209
        %v5250 = vmax.f32 %v5206, %v5210
        %v5251 = vmax.f32 %v5211, %v5215
        %v5252 = vmax.f32 %v5212, %v5216
        %v5253 = vmax.f32 %v5213, %v5217
        %v5254 = vmax.f32 %v5214, %v5218
        %v5255 = vmax.f32 %v5219, %v5223
        %v5256 = vmax.f32 %v5220, %v5224
        %v5257 = vmax.f32 %v5221, %v5225
        %v5258 = vmax.f32 %v5222, %v5226
        %v5291 = vcombine.high %v5227, %v5227
        %v5293 = vunpack.c.l.s4 1983009808
        %v5294 = vunpack.c.0.s8 %v5293
        %v5295 = vlaneseq
        %v5296 = vshrl.u32 %v5295, 7
        %v5297 = vsub.s32 %v5294, %v5296
        %v5298 = vrot.slane %v5227, %v5297
        %v5300 = vunpack.c.l.s4 1983009808
        %v5301 = vunpack.c.0.s8 %v5300
        %v5302 = vlaneseq
        %v5303 = vshrl.u32 %v5302, 7
        %v5304 = vsub.s32 %v5301, %v5303
        %v5305 = vrot.slane %v5291, %v5304
        %v5306 = vcombine.high %v5298, %v5298
        %v5307 = vcombine.high %v5305, %v5305
        %v5308 = vcombine.high %v5228, %v5228
        %v5310 = vunpack.c.l.s4 1983009808
        %v5311 = vunpack.c.0.s8 %v5310
        %v5312 = vlaneseq
        %v5313 = vshrl.u32 %v5312, 7
        %v5314 = vsub.s32 %v5311, %v5313
        %v5315 = vrot.slane %v5228, %v5314
        %v5317 = vunpack.c.l.s4 1983009808
        %v5318 = vunpack.c.0.s8 %v5317
        %v5319 = vlaneseq
        %v5320 = vshrl.u32 %v5319, 7
        %v5321 = vsub.s32 %v5318, %v5320
        %v5322 = vrot.slane %v5308, %v5321
        %v5323 = vcombine.high %v5315, %v5315
        %v5324 = vcombine.high %v5322, %v5322
        %v5325 = vcombine.high %v5229, %v5229
        %v5327 = vunpack.c.l.s4 1983009808
        %v5328 = vunpack.c.0.s8 %v5327
        %v5329 = vlaneseq
        %v5330 = vshrl.u32 %v5329, 7
        %v5331 = vsub.s32 %v5328, %v5330
        %v5332 = vrot.slane %v5229, %v5331
        %v5334 = vunpack.c.l.s4 1983009808
        %v5335 = vunpack.c.0.s8 %v5334
        %v5336 = vlaneseq
        %v5337 = vshrl.u32 %v5336, 7
        %v5338 = vsub.s32 %v5335, %v5337
        %v5339 = vrot.slane %v5325, %v5338
        %v5340 = vcombine.high %v5332, %v5332
        %v5341 = vcombine.high %v5339, %v5339
        %v5342 = vcombine.high %v5230, %v5230
        %v5344 = vunpack.c.l.s4 1983009808
        %v5345 = vunpack.c.0.s8 %v5344
        %v5346 = vlaneseq
        %v5347 = vshrl.u32 %v5346, 7
        %v5348 = vsub.s32 %v5345, %v5347
        %v5349 = vrot.slane %v5230, %v5348
        %v5351 = vunpack.c.l.s4 1983009808
        %v5352 = vunpack.c.0.s8 %v5351
        %v5353 = vlaneseq
        %v5354 = vshrl.u32 %v5353, 7
        %v5355 = vsub.s32 %v5352, %v5354
        %v5356 = vrot.slane %v5342, %v5355
        %v5357 = vcombine.high %v5349, %v5349
        %v5358 = vcombine.high %v5356, %v5356
        %v5359 = vcombine.high %v5231, %v5231
        %v5361 = vunpack.c.l.s4 1983009808
        %v5362 = vunpack.c.0.s8 %v5361
        %v5363 = vlaneseq
        %v5364 = vshrl.u32 %v5363, 7
        %v5365 = vsub.s32 %v5362, %v5364
        %v5366 = vrot.slane %v5231, %v5365
        %v5368 = vunpack.c.l.s4 1983009808
        %v5369 = vunpack.c.0.s8 %v5368
        %v5370 = vlaneseq
        %v5371 = vshrl.u32 %v5370, 7
        %v5372 = vsub.s32 %v5369, %v5371
        %v5373 = vrot.slane %v5359, %v5372
        %v5374 = vcombine.high %v5366, %v5366
        %v5375 = vcombine.high %v5373, %v5373
        %v5376 = vcombine.high %v5232, %v5232
        %v5378 = vunpack.c.l.s4 1983009808
        %v5379 = vunpack.c.0.s8 %v5378
        %v5380 = vlaneseq
        %v5381 = vshrl.u32 %v5380, 7
        %v5382 = vsub.s32 %v5379, %v5381
        %v5383 = vrot.slane %v5232, %v5382
        %v5385 = vunpack.c.l.s4 1983009808
        %v5386 = vunpack.c.0.s8 %v5385
        %v5387 = vlaneseq
        %v5388 = vshrl.u32 %v5387, 7
        %v5389 = vsub.s32 %v5386, %v5388
        %v5390 = vrot.slane %v5376, %v5389
        %v5391 = vcombine.high %v5383, %v5383
        %v5392 = vcombine.high %v5390, %v5390
        %v5393 = vcombine.high %v5233, %v5233
        %v5395 = vunpack.c.l.s4 1983009808
        %v5396 = vunpack.c.0.s8 %v5395
        %v5397 = vlaneseq
        %v5398 = vshrl.u32 %v5397, 7
        %v5399 = vsub.s32 %v5396, %v5398
        %v5400 = vrot.slane %v5233, %v5399
        %v5402 = vunpack.c.l.s4 1983009808
        %v5403 = vunpack.c.0.s8 %v5402
        %v5404 = vlaneseq
        %v5405 = vshrl.u32 %v5404, 7
        %v5406 = vsub.s32 %v5403, %v5405
        %v5407 = vrot.slane %v5393, %v5406
        %v5408 = vcombine.high %v5400, %v5400
        %v5409 = vcombine.high %v5407, %v5407
        %v5410 = vcombine.high %v5234, %v5234
        %v5412 = vunpack.c.l.s4 1983009808
        %v5413 = vunpack.c.0.s8 %v5412
        %v5414 = vlaneseq
        %v5415 = vshrl.u32 %v5414, 7
        %v5416 = vsub.s32 %v5413, %v5415
        %v5417 = vrot.slane %v5234, %v5416
        %v5419 = vunpack.c.l.s4 1983009808
        %v5420 = vunpack.c.0.s8 %v5419
        %v5421 = vlaneseq
        %v5422 = vshrl.u32 %v5421, 7
        %v5423 = vsub.s32 %v5420, %v5422
        %v5424 = vrot.slane %v5410, %v5423
        %v5425 = vcombine.high %v5417, %v5417
        %v5426 = vcombine.high %v5424, %v5424
        %v5427 = vcombine.high %v5235, %v5235
        %v5429 = vunpack.c.l.s4 1983009808
        %v5430 = vunpack.c.0.s8 %v5429
        %v5431 = vlaneseq
        %v5432 = vshrl.u32 %v5431, 7
        %v5433 = vsub.s32 %v5430, %v5432
        %v5434 = vrot.slane %v5235, %v5433
        %v5436 = vunpack.c.l.s4 1983009808
        %v5437 = vunpack.c.0.s8 %v5436
        %v5438 = vlaneseq
        %v5439 = vshrl.u32 %v5438, 7
        %v5440 = vsub.s32 %v5437, %v5439
        %v5441 = vrot.slane %v5427, %v5440
        %v5442 = vcombine.high %v5434, %v5434
        %v5443 = vcombine.high %v5441, %v5441
        %v5444 = vcombine.high %v5236, %v5236
        %v5446 = vunpack.c.l.s4 1983009808
        %v5447 = vunpack.c.0.s8 %v5446
        %v5448 = vlaneseq
        %v5449 = vshrl.u32 %v5448, 7
        %v5450 = vsub.s32 %v5447, %v5449
        %v5451 = vrot.slane %v5236, %v5450
        %v5453 = vunpack.c.l.s4 1983009808
        %v5454 = vunpack.c.0.s8 %v5453
        %v5455 = vlaneseq
        %v5456 = vshrl.u32 %v5455, 7
        %v5457 = vsub.s32 %v5454, %v5456
        %v5458 = vrot.slane %v5444, %v5457
        %v5459 = vcombine.high %v5451, %v5451
        %v5460 = vcombine.high %v5458, %v5458
        %v5461 = vcombine.high %v5237, %v5237
        %v5463 = vunpack.c.l.s4 1983009808
        %v5464 = vunpack.c.0.s8 %v5463
        %v5465 = vlaneseq
        %v5466 = vshrl.u32 %v5465, 7
        %v5467 = vsub.s32 %v5464, %v5466
        %v5468 = vrot.slane %v5237, %v5467
        %v5470 = vunpack.c.l.s4 1983009808
        %v5471 = vunpack.c.0.s8 %v5470
        %v5472 = vlaneseq
        %v5473 = vshrl.u32 %v5472, 7
        %v5474 = vsub.s32 %v5471, %v5473
        %v5475 = vrot.slane %v5461, %v5474
        %v5476 = vcombine.high %v5468, %v5468
        %v5477 = vcombine.high %v5475, %v5475
        %v5478 = vcombine.high %v5238, %v5238
        %v5480 = vunpack.c.l.s4 1983009808
        %v5481 = vunpack.c.0.s8 %v5480
        %v5482 = vlaneseq
        %v5483 = vshrl.u32 %v5482, 7
        %v5484 = vsub.s32 %v5481, %v5483
        %v5485 = vrot.slane %v5238, %v5484
        %v5487 = vunpack.c.l.s4 1983009808
        %v5488 = vunpack.c.0.s8 %v5487
        %v5489 = vlaneseq
        %v5490 = vshrl.u32 %v5489, 7
        %v5491 = vsub.s32 %v5488, %v5490
        %v5492 = vrot.slane %v5478, %v5491
        %v5493 = vcombine.high %v5485, %v5485
        %v5494 = vcombine.high %v5492, %v5492
        %v5495 = vcombine.high %v5239, %v5239
        %v5497 = vunpack.c.l.s4 1983009808
        %v5498 = vunpack.c.0.s8 %v5497
        %v5499 = vlaneseq
        %v5500 = vshrl.u32 %v5499, 7
        %v5501 = vsub.s32 %v5498, %v5500
        %v5502 = vrot.slane %v5239, %v5501
        %v5504 = vunpack.c.l.s4 1983009808
        %v5505 = vunpack.c.0.s8 %v5504
        %v5506 = vlaneseq
        %v5507 = vshrl.u32 %v5506, 7
        %v5508 = vsub.s32 %v5505, %v5507
        %v5509 = vrot.slane %v5495, %v5508
        %v5510 = vcombine.high %v5502, %v5502
        %v5511 = vcombine.high %v5509, %v5509
        %v5512 = vcombine.high %v5240, %v5240
        %v5514 = vunpack.c.l.s4 1983009808
        %v5515 = vunpack.c.0.s8 %v5514
        %v5516 = vlaneseq
        %v5517 = vshrl.u32 %v5516, 7
        %v5518 = vsub.s32 %v5515, %v5517
        %v5519 = vrot.slane %v5240, %v5518
        %v5521 = vunpack.c.l.s4 1983009808
        %v5522 = vunpack.c.0.s8 %v5521
        %v5523 = vlaneseq
        %v5524 = vshrl.u32 %v5523, 7
        %v5525 = vsub.s32 %v5522, %v5524
        %v5526 = vrot.slane %v5512, %v5525
        %v5527 = vcombine.high %v5519, %v5519
        %v5528 = vcombine.high %v5526, %v5526
        %v5529 = vcombine.high %v5241, %v5241
        %v5531 = vunpack.c.l.s4 1983009808
        %v5532 = vunpack.c.0.s8 %v5531
        %v5533 = vlaneseq
        %v5534 = vshrl.u32 %v5533, 7
        %v5535 = vsub.s32 %v5532, %v5534
        %v5536 = vrot.slane %v5241, %v5535
        %v5538 = vunpack.c.l.s4 1983009808
        %v5539 = vunpack.c.0.s8 %v5538
        %v5540 = vlaneseq
        %v5541 = vshrl.u32 %v5540, 7
        %v5542 = vsub.s32 %v5539, %v5541
        %v5543 = vrot.slane %v5529, %v5542
        %v5544 = vcombine.high %v5536, %v5536
        %v5545 = vcombine.high %v5543, %v5543
        %v5546 = vcombine.high %v5242, %v5242
        %v5548 = vunpack.c.l.s4 1983009808
        %v5549 = vunpack.c.0.s8 %v5548
        %v5550 = vlaneseq
        %v5551 = vshrl.u32 %v5550, 7
        %v5552 = vsub.s32 %v5549, %v5551
        %v5553 = vrot.slane %v5242, %v5552
        %v5555 = vunpack.c.l.s4 1983009808
        %v5556 = vunpack.c.0.s8 %v5555
        %v5557 = vlaneseq
        %v5558 = vshrl.u32 %v5557, 7
        %v5559 = vsub.s32 %v5556, %v5558
        %v5560 = vrot.slane %v5546, %v5559
        %v5561 = vcombine.high %v5553, %v5553
        %v5562 = vcombine.high %v5560, %v5560
        %v5563 = vcombine.high %v5243, %v5243
        %v5565 = vunpack.c.l.s4 1983009808
        %v5566 = vunpack.c.0.s8 %v5565
        %v5567 = vlaneseq
        %v5568 = vshrl.u32 %v5567, 7
        %v5569 = vsub.s32 %v5566, %v5568
        %v5570 = vrot.slane %v5243, %v5569
        %v5572 = vunpack.c.l.s4 1983009808
        %v5573 = vunpack.c.0.s8 %v5572
        %v5574 = vlaneseq
        %v5575 = vshrl.u32 %v5574, 7
        %v5576 = vsub.s32 %v5573, %v5575
        %v5577 = vrot.slane %v5563, %v5576
        %v5578 = vcombine.high %v5570, %v5570
        %v5579 = vcombine.high %v5577, %v5577
        %v5580 = vcombine.high %v5244, %v5244
        %v5582 = vunpack.c.l.s4 1983009808
        %v5583 = vunpack.c.0.s8 %v5582
        %v5584 = vlaneseq
        %v5585 = vshrl.u32 %v5584, 7
        %v5586 = vsub.s32 %v5583, %v5585
        %v5587 = vrot.slane %v5244, %v5586
        %v5589 = vunpack.c.l.s4 1983009808
        %v5590 = vunpack.c.0.s8 %v5589
        %v5591 = vlaneseq
        %v5592 = vshrl.u32 %v5591, 7
        %v5593 = vsub.s32 %v5590, %v5592
        %v5594 = vrot.slane %v5580, %v5593
        %v5595 = vcombine.high %v5587, %v5587
        %v5596 = vcombine.high %v5594, %v5594
        %v5597 = vcombine.high %v5245, %v5245
        %v5599 = vunpack.c.l.s4 1983009808
        %v5600 = vunpack.c.0.s8 %v5599
        %v5601 = vlaneseq
        %v5602 = vshrl.u32 %v5601, 7
        %v5603 = vsub.s32 %v5600, %v5602
        %v5604 = vrot.slane %v5245, %v5603
        %v5606 = vunpack.c.l.s4 1983009808
        %v5607 = vunpack.c.0.s8 %v5606
        %v5608 = vlaneseq
        %v5609 = vshrl.u32 %v5608, 7
        %v5610 = vsub.s32 %v5607, %v5609
        %v5611 = vrot.slane %v5597, %v5610
        %v5612 = vcombine.high %v5604, %v5604
        %v5613 = vcombine.high %v5611, %v5611
        %v5614 = vcombine.high %v5246, %v5246
        %v5616 = vunpack.c.l.s4 1983009808
        %v5617 = vunpack.c.0.s8 %v5616
        %v5618 = vlaneseq
        %v5619 = vshrl.u32 %v5618, 7
        %v5620 = vsub.s32 %v5617, %v5619
        %v5621 = vrot.slane %v5246, %v5620
        %v5623 = vunpack.c.l.s4 1983009808
        %v5624 = vunpack.c.0.s8 %v5623
        %v5625 = vlaneseq
        %v5626 = vshrl.u32 %v5625, 7
        %v5627 = vsub.s32 %v5624, %v5626
        %v5628 = vrot.slane %v5614, %v5627
        %v5629 = vcombine.high %v5621, %v5621
        %v5630 = vcombine.high %v5628, %v5628
        %v5631 = vcombine.high %v5247, %v5247
        %v5633 = vunpack.c.l.s4 1983009808
        %v5634 = vunpack.c.0.s8 %v5633
        %v5635 = vlaneseq
        %v5636 = vshrl.u32 %v5635, 7
        %v5637 = vsub.s32 %v5634, %v5636
        %v5638 = vrot.slane %v5247, %v5637
        %v5640 = vunpack.c.l.s4 1983009808
        %v5641 = vunpack.c.0.s8 %v5640
        %v5642 = vlaneseq
        %v5643 = vshrl.u32 %v5642, 7
        %v5644 = vsub.s32 %v5641, %v5643
        %v5645 = vrot.slane %v5631, %v5644
        %v5646 = vcombine.high %v5638, %v5638
        %v5647 = vcombine.high %v5645, %v5645
        %v5648 = vcombine.high %v5248, %v5248
        %v5650 = vunpack.c.l.s4 1983009808
        %v5651 = vunpack.c.0.s8 %v5650
        %v5652 = vlaneseq
        %v5653 = vshrl.u32 %v5652, 7
        %v5654 = vsub.s32 %v5651, %v5653
        %v5655 = vrot.slane %v5248, %v5654
        %v5657 = vunpack.c.l.s4 1983009808
        %v5658 = vunpack.c.0.s8 %v5657
        %v5659 = vlaneseq
        %v5660 = vshrl.u32 %v5659, 7
        %v5661 = vsub.s32 %v5658, %v5660
        %v5662 = vrot.slane %v5648, %v5661
        %v5663 = vcombine.high %v5655, %v5655
        %v5664 = vcombine.high %v5662, %v5662
        %v5665 = vcombine.high %v5249, %v5249
        %v5667 = vunpack.c.l.s4 1983009808
        %v5668 = vunpack.c.0.s8 %v5667
        %v5669 = vlaneseq
        %v5670 = vshrl.u32 %v5669, 7
        %v5671 = vsub.s32 %v5668, %v5670
        %v5672 = vrot.slane %v5249, %v5671
        %v5674 = vunpack.c.l.s4 1983009808
        %v5675 = vunpack.c.0.s8 %v5674
        %v5676 = vlaneseq
        %v5677 = vshrl.u32 %v5676, 7
        %v5678 = vsub.s32 %v5675, %v5677
        %v5679 = vrot.slane %v5665, %v5678
        %v5680 = vcombine.high %v5672, %v5672
        %v5681 = vcombine.high %v5679, %v5679
        %v5682 = vcombine.high %v5250, %v5250
        %v5684 = vunpack.c.l.s4 1983009808
        %v5685 = vunpack.c.0.s8 %v5684
        %v5686 = vlaneseq
        %v5687 = vshrl.u32 %v5686, 7
        %v5688 = vsub.s32 %v5685, %v5687
        %v5689 = vrot.slane %v5250, %v5688
        %v5691 = vunpack.c.l.s4 1983009808
        %v5692 = vunpack.c.0.s8 %v5691
        %v5693 = vlaneseq
        %v5694 = vshrl.u32 %v5693, 7
        %v5695 = vsub.s32 %v5692, %v5694
        %v5696 = vrot.slane %v5682, %v5695
        %v5697 = vcombine.high %v5689, %v5689
        %v5698 = vcombine.high %v5696, %v5696
        %v5699 = vcombine.high %v5251, %v5251
        %v5701 = vunpack.c.l.s4 1983009808
        %v5702 = vunpack.c.0.s8 %v5701
        %v5703 = vlaneseq
        %v5704 = vshrl.u32 %v5703, 7
        %v5705 = vsub.s32 %v5702, %v5704
        %v5706 = vrot.slane %v5251, %v5705
        %v5708 = vunpack.c.l.s4 1983009808
        %v5709 = vunpack.c.0.s8 %v5708
        %v5710 = vlaneseq
        %v5711 = vshrl.u32 %v5710, 7
        %v5712 = vsub.s32 %v5709, %v5711
        %v5713 = vrot.slane %v5699, %v5712
        %v5714 = vcombine.high %v5706, %v5706
        %v5715 = vcombine.high %v5713, %v5713
        %v5716 = vcombine.high %v5252, %v5252
        %v5718 = vunpack.c.l.s4 1983009808
        %v5719 = vunpack.c.0.s8 %v5718
        %v5720 = vlaneseq
        %v5721 = vshrl.u32 %v5720, 7
        %v5722 = vsub.s32 %v5719, %v5721
        %v5723 = vrot.slane %v5252, %v5722
        %v5725 = vunpack.c.l.s4 1983009808
        %v5726 = vunpack.c.0.s8 %v5725
        %v5727 = vlaneseq
        %v5728 = vshrl.u32 %v5727, 7
        %v5729 = vsub.s32 %v5726, %v5728
        %v5730 = vrot.slane %v5716, %v5729
        %v5731 = vcombine.high %v5723, %v5723
        %v5732 = vcombine.high %v5730, %v5730
        %v5733 = vcombine.high %v5253, %v5253
        %v5735 = vunpack.c.l.s4 1983009808
        %v5736 = vunpack.c.0.s8 %v5735
        %v5737 = vlaneseq
        %v5738 = vshrl.u32 %v5737, 7
        %v5739 = vsub.s32 %v5736, %v5738
        %v5740 = vrot.slane %v5253, %v5739
        %v5742 = vunpack.c.l.s4 1983009808
        %v5743 = vunpack.c.0.s8 %v5742
        %v5744 = vlaneseq
        %v5745 = vshrl.u32 %v5744, 7
        %v5746 = vsub.s32 %v5743, %v5745
        %v5747 = vrot.slane %v5733, %v5746
        %v5748 = vcombine.high %v5740, %v5740
        %v5749 = vcombine.high %v5747, %v5747
        %v5750 = vcombine.high %v5254, %v5254
        %v5752 = vunpack.c.l.s4 1983009808
        %v5753 = vunpack.c.0.s8 %v5752
        %v5754 = vlaneseq
        %v5755 = vshrl.u32 %v5754, 7
        %v5756 = vsub.s32 %v5753, %v5755
        %v5757 = vrot.slane %v5254, %v5756
        %v5759 = vunpack.c.l.s4 1983009808
        %v5760 = vunpack.c.0.s8 %v5759
        %v5761 = vlaneseq
        %v5762 = vshrl.u32 %v5761, 7
        %v5763 = vsub.s32 %v5760, %v5762
        %v5764 = vrot.slane %v5750, %v5763
        %v5765 = vcombine.high %v5757, %v5757
        %v5766 = vcombine.high %v5764, %v5764
        %v5767 = vcombine.high %v5255, %v5255
        %v5769 = vunpack.c.l.s4 1983009808
        %v5770 = vunpack.c.0.s8 %v5769
        %v5771 = vlaneseq
        %v5772 = vshrl.u32 %v5771, 7
        %v5773 = vsub.s32 %v5770, %v5772
        %v5774 = vrot.slane %v5255, %v5773
        %v5776 = vunpack.c.l.s4 1983009808
        %v5777 = vunpack.c.0.s8 %v5776
        %v5778 = vlaneseq
        %v5779 = vshrl.u32 %v5778, 7
        %v5780 = vsub.s32 %v5777, %v5779
        %v5781 = vrot.slane %v5767, %v5780
        %v5782 = vcombine.high %v5774, %v5774
        %v5783 = vcombine.high %v5781, %v5781
        %v5784 = vcombine.high %v5256, %v5256
        %v5786 = vunpack.c.l.s4 1983009808
        %v5787 = vunpack.c.0.s8 %v5786
        %v5788 = vlaneseq
        %v5789 = vshrl.u32 %v5788, 7
        %v5790 = vsub.s32 %v5787, %v5789
        %v5791 = vrot.slane %v5256, %v5790
        %v5793 = vunpack.c.l.s4 1983009808
        %v5794 = vunpack.c.0.s8 %v5793
        %v5795 = vlaneseq
        %v5796 = vshrl.u32 %v5795, 7
        %v5797 = vsub.s32 %v5794, %v5796
        %v5798 = vrot.slane %v5784, %v5797
        %v5799 = vcombine.high %v5791, %v5791
        %v5800 = vcombine.high %v5798, %v5798
        %v5801 = vcombine.high %v5257, %v5257
        %v5803 = vunpack.c.l.s4 1983009808
        %v5804 = vunpack.c.0.s8 %v5803
        %v5805 = vlaneseq
        %v5806 = vshrl.u32 %v5805, 7
        %v5807 = vsub.s32 %v5804, %v5806
        %v5808 = vrot.slane %v5257, %v5807
        %v5810 = vunpack.c.l.s4 1983009808
        %v5811 = vunpack.c.0.s8 %v5810
        %v5812 = vlaneseq
        %v5813 = vshrl.u32 %v5812, 7
        %v5814 = vsub.s32 %v5811, %v5813
        %v5815 = vrot.slane %v5801, %v5814
        %v5816 = vcombine.high %v5808, %v5808
        %v5817 = vcombine.high %v5815, %v5815
        %v5818 = vcombine.high %v5258, %v5258
        %v5820 = vunpack.c.l.s4 1983009808
        %v5821 = vunpack.c.0.s8 %v5820
        %v5822 = vlaneseq
        %v5823 = vshrl.u32 %v5822, 7
        %v5824 = vsub.s32 %v5821, %v5823
        %v5825 = vrot.slane %v5258, %v5824
        %v5827 = vunpack.c.l.s4 1983009808
        %v5828 = vunpack.c.0.s8 %v5827
        %v5829 = vlaneseq
        %v5830 = vshrl.u32 %v5829, 7
        %v5831 = vsub.s32 %v5828, %v5830
        %v5832 = vrot.slane %v5818, %v5831
        %v5833 = vcombine.high %v5825, %v5825
        %v5834 = vcombine.high %v5832, %v5832
        %v5963 = vrot.slane %v5298, 7
        %v5964 = vrot.slane %v5963, 2
        %v5965 = vrot.slane %v5306, 7
        %v5966 = vrot.slane %v5965, 2
        %v5967 = vrot.slane %v5305, 7
        %v5968 = vrot.slane %v5967, 2
        %v5969 = vrot.slane %v5307, 7
        %v5970 = vrot.slane %v5969, 2
        %v5971 = vrot.slane %v5315, 7
        %v5972 = vrot.slane %v5971, 2
        %v5973 = vrot.slane %v5323, 7
        %v5974 = vrot.slane %v5973, 2
        %v5975 = vrot.slane %v5322, 7
        %v5976 = vrot.slane %v5975, 2
        %v5977 = vrot.slane %v5324, 7
        %v5978 = vrot.slane %v5977, 2
        %v5979 = vrot.slane %v5332, 7
        %v5980 = vrot.slane %v5979, 2
        %v5981 = vrot.slane %v5340, 7
        %v5982 = vrot.slane %v5981, 2
        %v5983 = vrot.slane %v5339, 7
        %v5984 = vrot.slane %v5983, 2
        %v5985 = vrot.slane %v5341, 7
        %v5986 = vrot.slane %v5985, 2
        %v5987 = vrot.slane %v5349, 7
        %v5988 = vrot.slane %v5987, 2
        %v5989 = vrot.slane %v5357, 7
        %v5990 = vrot.slane %v5989, 2
        %v5991 = vrot.slane %v5356, 7
        %v5992 = vrot.slane %v5991, 2
        %v5993 = vrot.slane %v5358, 7
        %v5994 = vrot.slane %v5993, 2
        %v5995 = vrot.slane %v5366, 7
        %v5996 = vrot.slane %v5995, 2
        %v5997 = vrot.slane %v5374, 7
        %v5998 = vrot.slane %v5997, 2
        %v5999 = vrot.slane %v5373, 7
        %v6000 = vrot.slane %v5999, 2
        %v6001 = vrot.slane %v5375, 7
        %v6002 = vrot.slane %v6001, 2
        %v6003 = vrot.slane %v5383, 7
        %v6004 = vrot.slane %v6003, 2
        %v6005 = vrot.slane %v5391, 7
        %v6006 = vrot.slane %v6005, 2
        %v6007 = vrot.slane %v5390, 7
        %v6008 = vrot.slane %v6007, 2
        %v6009 = vrot.slane %v5392, 7
        %v6010 = vrot.slane %v6009, 2
        %v6011 = vrot.slane %v5400, 7
        %v6012 = vrot.slane %v6011, 2
        %v6013 = vrot.slane %v5408, 7
        %v6014 = vrot.slane %v6013, 2
        %v6015 = vrot.slane %v5407, 7
        %v6016 = vrot.slane %v6015, 2
        %v6017 = vrot.slane %v5409, 7
        %v6018 = vrot.slane %v6017, 2
        %v6019 = vrot.slane %v5417, 7
        %v6020 = vrot.slane %v6019, 2
        %v6021 = vrot.slane %v5425, 7
        %v6022 = vrot.slane %v6021, 2
        %v6023 = vrot.slane %v5424, 7
        %v6024 = vrot.slane %v6023, 2
        %v6025 = vrot.slane %v5426, 7
        %v6026 = vrot.slane %v6025, 2
        %v6027 = vrot.slane %v5434, 7
        %v6028 = vrot.slane %v6027, 2
        %v6029 = vrot.slane %v5442, 7
        %v6030 = vrot.slane %v6029, 2
        %v6031 = vrot.slane %v5441, 7
        %v6032 = vrot.slane %v6031, 2
        %v6033 = vrot.slane %v5443, 7
        %v6034 = vrot.slane %v6033, 2
        %v6035 = vrot.slane %v5451, 7
        %v6036 = vrot.slane %v6035, 2
        %v6037 = vrot.slane %v5459, 7
        %v6038 = vrot.slane %v6037, 2
        %v6039 = vrot.slane %v5458, 7
        %v6040 = vrot.slane %v6039, 2
        %v6041 = vrot.slane %v5460, 7
        %v6042 = vrot.slane %v6041, 2
        %v6043 = vrot.slane %v5468, 7
        %v6044 = vrot.slane %v6043, 2
        %v6045 = vrot.slane %v5476, 7
        %v6046 = vrot.slane %v6045, 2
        %v6047 = vrot.slane %v5475, 7
        %v6048 = vrot.slane %v6047, 2
        %v6049 = vrot.slane %v5477, 7
        %v6050 = vrot.slane %v6049, 2
        %v6051 = vrot.slane %v5485, 7
        %v6052 = vrot.slane %v6051, 2
        %v6053 = vrot.slane %v5493, 7
        %v6054 = vrot.slane %v6053, 2
        %v6055 = vrot.slane %v5492, 7
        %v6056 = vrot.slane %v6055, 2
        %v6057 = vrot.slane %v5494, 7
        %v6058 = vrot.slane %v6057, 2
        %v6059 = vrot.slane %v5502, 7
        %v6060 = vrot.slane %v6059, 2
        %v6061 = vrot.slane %v5510, 7
        %v6062 = vrot.slane %v6061, 2
        %v6063 = vrot.slane %v5509, 7
        %v6064 = vrot.slane %v6063, 2
        %v6065 = vrot.slane %v5511, 7
        %v6066 = vrot.slane %v6065, 2
        %v6067 = vrot.slane %v5519, 7
        %v6068 = vrot.slane %v6067, 2
        %v6069 = vrot.slane %v5527, 7
        %v6070 = vrot.slane %v6069, 2
        %v6071 = vrot.slane %v5526, 7
        %v6072 = vrot.slane %v6071, 2
        %v6073 = vrot.slane %v5528, 7
        %v6074 = vrot.slane %v6073, 2
        %v6075 = vrot.slane %v5536, 7
        %v6076 = vrot.slane %v6075, 2
        %v6077 = vrot.slane %v5544, 7
        %v6078 = vrot.slane %v6077, 2
        %v6079 = vrot.slane %v5543, 7
        %v6080 = vrot.slane %v6079, 2
        %v6081 = vrot.slane %v5545, 7
        %v6082 = vrot.slane %v6081, 2
        %v6083 = vrot.slane %v5553, 7
        %v6084 = vrot.slane %v6083, 2
        %v6085 = vrot.slane %v5561, 7
        %v6086 = vrot.slane %v6085, 2
        %v6087 = vrot.slane %v5560, 7
        %v6088 = vrot.slane %v6087, 2
        %v6089 = vrot.slane %v5562, 7
        %v6090 = vrot.slane %v6089, 2
        %v6091 = vrot.slane %v5570, 7
        %v6092 = vrot.slane %v6091, 2
        %v6093 = vrot.slane %v5578, 7
        %v6094 = vrot.slane %v6093, 2
        %v6095 = vrot.slane %v5577, 7
        %v6096 = vrot.slane %v6095, 2
        %v6097 = vrot.slane %v5579, 7
        %v6098 = vrot.slane %v6097, 2
        %v6099 = vrot.slane %v5587, 7
        %v6100 = vrot.slane %v6099, 2
        %v6101 = vrot.slane %v5595, 7
        %v6102 = vrot.slane %v6101, 2
        %v6103 = vrot.slane %v5594, 7
        %v6104 = vrot.slane %v6103, 2
        %v6105 = vrot.slane %v5596, 7
        %v6106 = vrot.slane %v6105, 2
        %v6107 = vrot.slane %v5604, 7
        %v6108 = vrot.slane %v6107, 2
        %v6109 = vrot.slane %v5612, 7
        %v6110 = vrot.slane %v6109, 2
        %v6111 = vrot.slane %v5611, 7
        %v6112 = vrot.slane %v6111, 2
        %v6113 = vrot.slane %v5613, 7
        %v6114 = vrot.slane %v6113, 2
        %v6115 = vrot.slane %v5621, 7
        %v6116 = vrot.slane %v6115, 2
        %v6117 = vrot.slane %v5629, 7
        %v6118 = vrot.slane %v6117, 2
        %v6119 = vrot.slane %v5628, 7
        %v6120 = vrot.slane %v6119, 2
        %v6121 = vrot.slane %v5630, 7
        %v6122 = vrot.slane %v6121, 2
        %v6123 = vrot.slane %v5638, 7
        %v6124 = vrot.slane %v6123, 2
        %v6125 = vrot.slane %v5646, 7
        %v6126 = vrot.slane %v6125, 2
        %v6127 = vrot.slane %v5645, 7
        %v6128 = vrot.slane %v6127, 2
        %v6129 = vrot.slane %v5647, 7
        %v6130 = vrot.slane %v6129, 2
        %v6131 = vrot.slane %v5655, 7
        %v6132 = vrot.slane %v6131, 2
        %v6133 = vrot.slane %v5663, 7
        %v6134 = vrot.slane %v6133, 2
        %v6135 = vrot.slane %v5662, 7
        %v6136 = vrot.slane %v6135, 2
        %v6137 = vrot.slane %v5664, 7
        %v6138 = vrot.slane %v6137, 2
        %v6139 = vrot.slane %v5672, 7
        %v6140 = vrot.slane %v6139, 2
        %v6141 = vrot.slane %v5680, 7
        %v6142 = vrot.slane %v6141, 2
        %v6143 = vrot.slane %v5679, 7
        %v6144 = vrot.slane %v6143, 2
        %v6145 = vrot.slane %v5681, 7
        %v6146 = vrot.slane %v6145, 2
        %v6147 = vrot.slane %v5689, 7
        %v6148 = vrot.slane %v6147, 2
        %v6149 = vrot.slane %v5697, 7
        %v6150 = vrot.slane %v6149, 2
        %v6151 = vrot.slane %v5696, 7
        %v6152 = vrot.slane %v6151, 2
        %v6153 = vrot.slane %v5698, 7
        %v6154 = vrot.slane %v6153, 2
        %v6155 = vrot.slane %v5706, 7
        %v6156 = vrot.slane %v6155, 2
        %v6157 = vrot.slane %v5714, 7
        %v6158 = vrot.slane %v6157, 2
        %v6159 = vrot.slane %v5713, 7
        %v6160 = vrot.slane %v6159, 2
        %v6161 = vrot.slane %v5715, 7
        %v6162 = vrot.slane %v6161, 2
        %v6163 = vrot.slane %v5723, 7
        %v6164 = vrot.slane %v6163, 2
        %v6165 = vrot.slane %v5731, 7
        %v6166 = vrot.slane %v6165, 2
        %v6167 = vrot.slane %v5730, 7
        %v6168 = vrot.slane %v6167, 2
        %v6169 = vrot.slane %v5732, 7
        %v6170 = vrot.slane %v6169, 2
        %v6171 = vrot.slane %v5740, 7
        %v6172 = vrot.slane %v6171, 2
        %v6173 = vrot.slane %v5748, 7
        %v6174 = vrot.slane %v6173, 2
        %v6175 = vrot.slane %v5747, 7
        %v6176 = vrot.slane %v6175, 2
        %v6177 = vrot.slane %v5749, 7
        %v6178 = vrot.slane %v6177, 2
        %v6179 = vrot.slane %v5757, 7
        %v6180 = vrot.slane %v6179, 2
        %v6181 = vrot.slane %v5765, 7
        %v6182 = vrot.slane %v6181, 2
        %v6183 = vrot.slane %v5764, 7
        %v6184 = vrot.slane %v6183, 2
        %v6185 = vrot.slane %v5766, 7
        %v6186 = vrot.slane %v6185, 2
        %v6187 = vrot.slane %v5774, 7
        %v6188 = vrot.slane %v6187, 2
        %v6189 = vrot.slane %v5782, 7
        %v6190 = vrot.slane %v6189, 2
        %v6191 = vrot.slane %v5781, 7
        %v6192 = vrot.slane %v6191, 2
        %v6193 = vrot.slane %v5783, 7
        %v6194 = vrot.slane %v6193, 2
        %v6195 = vrot.slane %v5791, 7
        %v6196 = vrot.slane %v6195, 2
        %v6197 = vrot.slane %v5799, 7
        %v6198 = vrot.slane %v6197, 2
        %v6199 = vrot.slane %v5798, 7
        %v6200 = vrot.slane %v6199, 2
        %v6201 = vrot.slane %v5800, 7
        %v6202 = vrot.slane %v6201, 2
        %v6203 = vrot.slane %v5808, 7
        %v6204 = vrot.slane %v6203, 2
        %v6205 = vrot.slane %v5816, 7
        %v6206 = vrot.slane %v6205, 2
        %v6207 = vrot.slane %v5815, 7
        %v6208 = vrot.slane %v6207, 2
        %v6209 = vrot.slane %v5817, 7
        %v6210 = vrot.slane %v6209, 2
        %v6211 = vrot.slane %v5825, 7
        %v6212 = vrot.slane %v6211, 2
        %v6213 = vrot.slane %v5833, 7
        %v6214 = vrot.slane %v6213, 2
        %v6215 = vrot.slane %v5832, 7
        %v6216 = vrot.slane %v6215, 2
        %v6217 = vrot.slane %v5834, 7
        %v6218 = vrot.slane %v6217, 2
        %v6347 = vmax.f32 %v5298, %v5964
        %v6348 = vmax.f32 %v5306, %v5966
        %v6349 = vmax.f32 %v5305, %v5968
        %v6350 = vmax.f32 %v5307, %v5970
        %v6351 = vmax.f32 %v5315, %v5972
        %v6352 = vmax.f32 %v5323, %v5974
        %v6353 = vmax.f32 %v5322, %v5976
        %v6354 = vmax.f32 %v5324, %v5978
        %v6355 = vmax.f32 %v5332, %v5980
        %v6356 = vmax.f32 %v5340, %v5982
        %v6357 = vmax.f32 %v5339, %v5984
        %v6358 = vmax.f32 %v5341, %v5986
        %v6359 = vmax.f32 %v5349, %v5988
        %v6360 = vmax.f32 %v5357, %v5990
        %v6361 = vmax.f32 %v5356, %v5992
        %v6362 = vmax.f32 %v5358, %v5994
        %v6363 = vmax.f32 %v5366, %v5996
        %v6364 = vmax.f32 %v5374, %v5998
        %v6365 = vmax.f32 %v5373, %v6000
        %v6366 = vmax.f32 %v5375, %v6002
        %v6367 = vmax.f32 %v5383, %v6004
        %v6368 = vmax.f32 %v5391, %v6006
        %v6369 = vmax.f32 %v5390, %v6008
        %v6370 = vmax.f32 %v5392, %v6010
        %v6371 = vmax.f32 %v5400, %v6012
        %v6372 = vmax.f32 %v5408, %v6014
        %v6373 = vmax.f32 %v5407, %v6016
        %v6374 = vmax.f32 %v5409, %v6018
        %v6375 = vmax.f32 %v5417, %v6020
        %v6376 = vmax.f32 %v5425, %v6022
        %v6377 = vmax.f32 %v5424, %v6024
        %v6378 = vmax.f32 %v5426, %v6026
        %v6379 = vmax.f32 %v5434, %v6028
        %v6380 = vmax.f32 %v5442, %v6030
        %v6381 = vmax.f32 %v5441, %v6032
        %v6382 = vmax.f32 %v5443, %v6034
        %v6383 = vmax.f32 %v5451, %v6036
        %v6384 = vmax.f32 %v5459, %v6038
        %v6385 = vmax.f32 %v5458, %v6040
        %v6386 = vmax.f32 %v5460, %v6042
        %v6387 = vmax.f32 %v5468, %v6044
        %v6388 = vmax.f32 %v5476, %v6046
        %v6389 = vmax.f32 %v5475, %v6048
        %v6390 = vmax.f32 %v5477, %v6050
        %v6391 = vmax.f32 %v5485, %v6052
        %v6392 = vmax.f32 %v5493, %v6054
        %v6393 = vmax.f32 %v5492, %v6056
        %v6394 = vmax.f32 %v5494, %v6058
        %v6395 = vmax.f32 %v5502, %v6060
        %v6396 = vmax.f32 %v5510, %v6062
        %v6397 = vmax.f32 %v5509, %v6064
        %v6398 = vmax.f32 %v5511, %v6066
        %v6399 = vmax.f32 %v5519, %v6068
        %v6400 = vmax.f32 %v5527, %v6070
        %v6401 = vmax.f32 %v5526, %v6072
        %v6402 = vmax.f32 %v5528, %v6074
        %v6403 = vmax.f32 %v5536, %v6076
        %v6404 = vmax.f32 %v5544, %v6078
        %v6405 = vmax.f32 %v5543, %v6080
        %v6406 = vmax.f32 %v5545, %v6082
        %v6407 = vmax.f32 %v5553, %v6084
        %v6408 = vmax.f32 %v5561, %v6086
        %v6409 = vmax.f32 %v5560, %v6088
        %v6410 = vmax.f32 %v5562, %v6090
        %v6411 = vmax.f32 %v5570, %v6092
        %v6412 = vmax.f32 %v5578, %v6094
        %v6413 = vmax.f32 %v5577, %v6096
        %v6414 = vmax.f32 %v5579, %v6098
        %v6415 = vmax.f32 %v5587, %v6100
        %v6416 = vmax.f32 %v5595, %v6102
        %v6417 = vmax.f32 %v5594, %v6104
        %v6418 = vmax.f32 %v5596, %v6106
        %v6419 = vmax.f32 %v5604, %v6108
        %v6420 = vmax.f32 %v5612, %v6110
        %v6421 = vmax.f32 %v5611, %v6112
        %v6422 = vmax.f32 %v5613, %v6114
        %v6423 = vmax.f32 %v5621, %v6116
        %v6424 = vmax.f32 %v5629, %v6118
        %v6425 = vmax.f32 %v5628, %v6120
        %v6426 = vmax.f32 %v5630, %v6122
        %v6427 = vmax.f32 %v5638, %v6124
        %v6428 = vmax.f32 %v5646, %v6126
        %v6429 = vmax.f32 %v5645, %v6128
        %v6430 = vmax.f32 %v5647, %v6130
        %v6431 = vmax.f32 %v5655, %v6132
        %v6432 = vmax.f32 %v5663, %v6134
        %v6433 = vmax.f32 %v5662, %v6136
        %v6434 = vmax.f32 %v5664, %v6138
        %v6435 = vmax.f32 %v5672, %v6140
        %v6436 = vmax.f32 %v5680, %v6142
        %v6437 = vmax.f32 %v5679, %v6144
        %v6438 = vmax.f32 %v5681, %v6146
        %v6439 = vmax.f32 %v5689, %v6148
        %v6440 = vmax.f32 %v5697, %v6150
        %v6441 = vmax.f32 %v5696, %v6152
        %v6442 = vmax.f32 %v5698, %v6154
        %v6443 = vmax.f32 %v5706, %v6156
        %v6444 = vmax.f32 %v5714, %v6158
        %v6445 = vmax.f32 %v5713, %v6160
        %v6446 = vmax.f32 %v5715, %v6162
        %v6447 = vmax.f32 %v5723, %v6164
        %v6448 = vmax.f32 %v5731, %v6166
        %v6449 = vmax.f32 %v5730, %v6168
        %v6450 = vmax.f32 %v5732, %v6170
        %v6451 = vmax.f32 %v5740, %v6172
        %v6452 = vmax.f32 %v5748, %v6174
        %v6453 = vmax.f32 %v5747, %v6176
        %v6454 = vmax.f32 %v5749, %v6178
        %v6455 = vmax.f32 %v5757, %v6180
        %v6456 = vmax.f32 %v5765, %v6182
        %v6457 = vmax.f32 %v5764, %v6184
        %v6458 = vmax.f32 %v5766, %v6186
        %v6459 = vmax.f32 %v5774, %v6188
        %v6460 = vmax.f32 %v5782, %v6190
        %v6461 = vmax.f32 %v5781, %v6192
        %v6462 = vmax.f32 %v5783, %v6194
        %v6463 = vmax.f32 %v5791, %v6196
        %v6464 = vmax.f32 %v5799, %v6198
        %v6465 = vmax.f32 %v5798, %v6200
        %v6466 = vmax.f32 %v5800, %v6202
        %v6467 = vmax.f32 %v5808, %v6204
        %v6468 = vmax.f32 %v5816, %v6206
        %v6469 = vmax.f32 %v5815, %v6208
        %v6470 = vmax.f32 %v5817, %v6210
        %v6471 = vmax.f32 %v5825, %v6212
        %v6472 = vmax.f32 %v5833, %v6214
        %v6473 = vmax.f32 %v5832, %v6216
        %v6474 = vmax.f32 %v5834, %v6218
        %v6475 = vld [vmem:[%s3] sm:$0xff]
        %v6476 = vld [vmem:[%s3 + $0x8] sm:$0xff]
        %v6477 = vld [vmem:[%s3 + $0x10] sm:$0xff]
        %v6478 = vld [vmem:[%s3 + $0x18] sm:$0xff]
        %v6479 = vld [vmem:[%s3 + $0x20] sm:$0xff]
        %v6480 = vld [vmem:[%s3 + $0x28] sm:$0xff]
        %v6481 = vld [vmem:[%s3 + $0x30] sm:$0xff]
        %v6482 = vld [vmem:[%s3 + $0x38] sm:$0xff]
        %v6483 = vld [vmem:[%s3 + $0x40] sm:$0xff]
        %v6484 = vld [vmem:[%s3 + $0x48] sm:$0xff]
        %v6485 = vld [vmem:[%s3 + $0x50] sm:$0xff]
        %v6486 = vld [vmem:[%s3 + $0x58] sm:$0xff]
        %v6487 = vld [vmem:[%s3 + $0x60] sm:$0xff]
        %v6488 = vld [vmem:[%s3 + $0x68] sm:$0xff]
        %v6489 = vld [vmem:[%s3 + $0x70] sm:$0xff]
        %v6490 = vld [vmem:[%s3 + $0x78] sm:$0xff]
        %v6507 = vcombine.high %v6475, %v6475
        %v6509 = vunpack.c.l.s4 1983009808
        %v6510 = vunpack.c.0.s8 %v6509
        %v6511 = vlaneseq
        %v6512 = vshrl.u32 %v6511, 7
        %v6513 = vsub.s32 %v6510, %v6512
        %v6514 = vrot.slane %v6475, %v6513
        %v6516 = vunpack.c.l.s4 1983009808
        %v6517 = vunpack.c.0.s8 %v6516
        %v6518 = vlaneseq
        %v6519 = vshrl.u32 %v6518, 7
        %v6520 = vsub.s32 %v6517, %v6519
        %v6521 = vrot.slane %v6507, %v6520
        %v6522 = vcombine.high %v6514, %v6514
        %v6523 = vcombine.high %v6521, %v6521
        %v6524 = vcombine.high %v6476, %v6476
        %v6526 = vunpack.c.l.s4 1983009808
        %v6527 = vunpack.c.0.s8 %v6526
        %v6528 = vlaneseq
        %v6529 = vshrl.u32 %v6528, 7
        %v6530 = vsub.s32 %v6527, %v6529
        %v6531 = vrot.slane %v6476, %v6530
        %v6533 = vunpack.c.l.s4 1983009808
        %v6534 = vunpack.c.0.s8 %v6533
        %v6535 = vlaneseq
        %v6536 = vshrl.u32 %v6535, 7
        %v6537 = vsub.s32 %v6534, %v6536
        %v6538 = vrot.slane %v6524, %v6537
        %v6539 = vcombine.high %v6531, %v6531
        %v6540 = vcombine.high %v6538, %v6538
        %v6541 = vcombine.high %v6477, %v6477
        %v6543 = vunpack.c.l.s4 1983009808
        %v6544 = vunpack.c.0.s8 %v6543
        %v6545 = vlaneseq
        %v6546 = vshrl.u32 %v6545, 7
        %v6547 = vsub.s32 %v6544, %v6546
        %v6548 = vrot.slane %v6477, %v6547
        %v6550 = vunpack.c.l.s4 1983009808
        %v6551 = vunpack.c.0.s8 %v6550
        %v6552 = vlaneseq
        %v6553 = vshrl.u32 %v6552, 7
        %v6554 = vsub.s32 %v6551, %v6553
        %v6555 = vrot.slane %v6541, %v6554
        %v6556 = vcombine.high %v6548, %v6548
        %v6557 = vcombine.high %v6555, %v6555
        %v6558 = vcombine.high %v6478, %v6478
        %v6560 = vunpack.c.l.s4 1983009808
        %v6561 = vunpack.c.0.s8 %v6560
        %v6562 = vlaneseq
        %v6563 = vshrl.u32 %v6562, 7
        %v6564 = vsub.s32 %v6561, %v6563
        %v6565 = vrot.slane %v6478, %v6564
        %v6567 = vunpack.c.l.s4 1983009808
        %v6568 = vunpack.c.0.s8 %v6567
        %v6569 = vlaneseq
        %v6570 = vshrl.u32 %v6569, 7
        %v6571 = vsub.s32 %v6568, %v6570
        %v6572 = vrot.slane %v6558, %v6571
        %v6573 = vcombine.high %v6565, %v6565
        %v6574 = vcombine.high %v6572, %v6572
        %v6575 = vcombine.high %v6479, %v6479
        %v6577 = vunpack.c.l.s4 1983009808
        %v6578 = vunpack.c.0.s8 %v6577
        %v6579 = vlaneseq
        %v6580 = vshrl.u32 %v6579, 7
        %v6581 = vsub.s32 %v6578, %v6580
        %v6582 = vrot.slane %v6479, %v6581
        %v6584 = vunpack.c.l.s4 1983009808
        %v6585 = vunpack.c.0.s8 %v6584
        %v6586 = vlaneseq
        %v6587 = vshrl.u32 %v6586, 7
        %v6588 = vsub.s32 %v6585, %v6587
        %v6589 = vrot.slane %v6575, %v6588
        %v6590 = vcombine.high %v6582, %v6582
        %v6591 = vcombine.high %v6589, %v6589
        %v6592 = vcombine.high %v6480, %v6480
        %v6594 = vunpack.c.l.s4 1983009808
        %v6595 = vunpack.c.0.s8 %v6594
        %v6596 = vlaneseq
        %v6597 = vshrl.u32 %v6596, 7
        %v6598 = vsub.s32 %v6595, %v6597
        %v6599 = vrot.slane %v6480, %v6598
        %v6601 = vunpack.c.l.s4 1983009808
        %v6602 = vunpack.c.0.s8 %v6601
        %v6603 = vlaneseq
        %v6604 = vshrl.u32 %v6603, 7
        %v6605 = vsub.s32 %v6602, %v6604
        %v6606 = vrot.slane %v6592, %v6605
        %v6607 = vcombine.high %v6599, %v6599
        %v6608 = vcombine.high %v6606, %v6606
        %v6609 = vcombine.high %v6481, %v6481
        %v6611 = vunpack.c.l.s4 1983009808
        %v6612 = vunpack.c.0.s8 %v6611
        %v6613 = vlaneseq
        %v6614 = vshrl.u32 %v6613, 7
        %v6615 = vsub.s32 %v6612, %v6614
        %v6616 = vrot.slane %v6481, %v6615
        %v6618 = vunpack.c.l.s4 1983009808
        %v6619 = vunpack.c.0.s8 %v6618
        %v6620 = vlaneseq
        %v6621 = vshrl.u32 %v6620, 7
        %v6622 = vsub.s32 %v6619, %v6621
        %v6623 = vrot.slane %v6609, %v6622
        %v6624 = vcombine.high %v6616, %v6616
        %v6625 = vcombine.high %v6623, %v6623
        %v6626 = vcombine.high %v6482, %v6482
        %v6628 = vunpack.c.l.s4 1983009808
        %v6629 = vunpack.c.0.s8 %v6628
        %v6630 = vlaneseq
        %v6631 = vshrl.u32 %v6630, 7
        %v6632 = vsub.s32 %v6629, %v6631
        %v6633 = vrot.slane %v6482, %v6632
        %v6635 = vunpack.c.l.s4 1983009808
        %v6636 = vunpack.c.0.s8 %v6635
        %v6637 = vlaneseq
        %v6638 = vshrl.u32 %v6637, 7
        %v6639 = vsub.s32 %v6636, %v6638
        %v6640 = vrot.slane %v6626, %v6639
        %v6641 = vcombine.high %v6633, %v6633
        %v6642 = vcombine.high %v6640, %v6640
        %v6643 = vcombine.high %v6483, %v6483
        %v6645 = vunpack.c.l.s4 1983009808
        %v6646 = vunpack.c.0.s8 %v6645
        %v6647 = vlaneseq
        %v6648 = vshrl.u32 %v6647, 7
        %v6649 = vsub.s32 %v6646, %v6648
        %v6650 = vrot.slane %v6483, %v6649
        %v6652 = vunpack.c.l.s4 1983009808
        %v6653 = vunpack.c.0.s8 %v6652
        %v6654 = vlaneseq
        %v6655 = vshrl.u32 %v6654, 7
        %v6656 = vsub.s32 %v6653, %v6655
        %v6657 = vrot.slane %v6643, %v6656
        %v6658 = vcombine.high %v6650, %v6650
        %v6659 = vcombine.high %v6657, %v6657
        %v6660 = vcombine.high %v6484, %v6484
        %v6662 = vunpack.c.l.s4 1983009808
        %v6663 = vunpack.c.0.s8 %v6662
        %v6664 = vlaneseq
        %v6665 = vshrl.u32 %v6664, 7
        %v6666 = vsub.s32 %v6663, %v6665
        %v6667 = vrot.slane %v6484, %v6666
        %v6669 = vunpack.c.l.s4 1983009808
        %v6670 = vunpack.c.0.s8 %v6669
        %v6671 = vlaneseq
        %v6672 = vshrl.u32 %v6671, 7
        %v6673 = vsub.s32 %v6670, %v6672
        %v6674 = vrot.slane %v6660, %v6673
        %v6675 = vcombine.high %v6667, %v6667
        %v6676 = vcombine.high %v6674, %v6674
        %v6677 = vcombine.high %v6485, %v6485
        %v6679 = vunpack.c.l.s4 1983009808
        %v6680 = vunpack.c.0.s8 %v6679
        %v6681 = vlaneseq
        %v6682 = vshrl.u32 %v6681, 7
        %v6683 = vsub.s32 %v6680, %v6682
        %v6684 = vrot.slane %v6485, %v6683
        %v6686 = vunpack.c.l.s4 1983009808
        %v6687 = vunpack.c.0.s8 %v6686
        %v6688 = vlaneseq
        %v6689 = vshrl.u32 %v6688, 7
        %v6690 = vsub.s32 %v6687, %v6689
        %v6691 = vrot.slane %v6677, %v6690
        %v6692 = vcombine.high %v6684, %v6684
        %v6693 = vcombine.high %v6691, %v6691
        %v6694 = vcombine.high %v6486, %v6486
        %v6696 = vunpack.c.l.s4 1983009808
        %v6697 = vunpack.c.0.s8 %v6696
        %v6698 = vlaneseq
        %v6699 = vshrl.u32 %v6698, 7
        %v6700 = vsub.s32 %v6697, %v6699
        %v6701 = vrot.slane %v6486, %v6700
        %v6703 = vunpack.c.l.s4 1983009808
        %v6704 = vunpack.c.0.s8 %v6703
        %v6705 = vlaneseq
        %v6706 = vshrl.u32 %v6705, 7
        %v6707 = vsub.s32 %v6704, %v6706
        %v6708 = vrot.slane %v6694, %v6707
        %v6709 = vcombine.high %v6701, %v6701
        %v6710 = vcombine.high %v6708, %v6708
        %v6711 = vcombine.high %v6487, %v6487
        %v6713 = vunpack.c.l.s4 1983009808
        %v6714 = vunpack.c.0.s8 %v6713
        %v6715 = vlaneseq
        %v6716 = vshrl.u32 %v6715, 7
        %v6717 = vsub.s32 %v6714, %v6716
        %v6718 = vrot.slane %v6487, %v6717
        %v6720 = vunpack.c.l.s4 1983009808
        %v6721 = vunpack.c.0.s8 %v6720
        %v6722 = vlaneseq
        %v6723 = vshrl.u32 %v6722, 7
        %v6724 = vsub.s32 %v6721, %v6723
        %v6725 = vrot.slane %v6711, %v6724
        %v6726 = vcombine.high %v6718, %v6718
        %v6727 = vcombine.high %v6725, %v6725
        %v6728 = vcombine.high %v6488, %v6488
        %v6730 = vunpack.c.l.s4 1983009808
        %v6731 = vunpack.c.0.s8 %v6730
        %v6732 = vlaneseq
        %v6733 = vshrl.u32 %v6732, 7
        %v6734 = vsub.s32 %v6731, %v6733
        %v6735 = vrot.slane %v6488, %v6734
        %v6737 = vunpack.c.l.s4 1983009808
        %v6738 = vunpack.c.0.s8 %v6737
        %v6739 = vlaneseq
        %v6740 = vshrl.u32 %v6739, 7
        %v6741 = vsub.s32 %v6738, %v6740
        %v6742 = vrot.slane %v6728, %v6741
        %v6743 = vcombine.high %v6735, %v6735
        %v6744 = vcombine.high %v6742, %v6742
        %v6745 = vcombine.high %v6489, %v6489
        %v6747 = vunpack.c.l.s4 1983009808
        %v6748 = vunpack.c.0.s8 %v6747
        %v6749 = vlaneseq
        %v6750 = vshrl.u32 %v6749, 7
        %v6751 = vsub.s32 %v6748, %v6750
        %v6752 = vrot.slane %v6489, %v6751
        %v6754 = vunpack.c.l.s4 1983009808
        %v6755 = vunpack.c.0.s8 %v6754
        %v6756 = vlaneseq
        %v6757 = vshrl.u32 %v6756, 7
        %v6758 = vsub.s32 %v6755, %v6757
        %v6759 = vrot.slane %v6745, %v6758
        %v6760 = vcombine.high %v6752, %v6752
        %v6761 = vcombine.high %v6759, %v6759
        %v6762 = vcombine.high %v6490, %v6490
        %v6764 = vunpack.c.l.s4 1983009808
        %v6765 = vunpack.c.0.s8 %v6764
        %v6766 = vlaneseq
        %v6767 = vshrl.u32 %v6766, 7
        %v6768 = vsub.s32 %v6765, %v6767
        %v6769 = vrot.slane %v6490, %v6768
        %v6771 = vunpack.c.l.s4 1983009808
        %v6772 = vunpack.c.0.s8 %v6771
        %v6773 = vlaneseq
        %v6774 = vshrl.u32 %v6773, 7
        %v6775 = vsub.s32 %v6772, %v6774
        %v6776 = vrot.slane %v6762, %v6775
        %v6777 = vcombine.high %v6769, %v6769
        %v6778 = vcombine.high %v6776, %v6776
        %v6779 = vrot.slane %v6514, 1
        %v6780 = vrot.slane %v6522, 1
        %v6781 = vrot.slane %v6521, 1
        %v6782 = vrot.slane %v6523, 1
        %v6783 = vrot.slane %v6531, 1
        %v6784 = vrot.slane %v6539, 1
        %v6785 = vrot.slane %v6538, 1
        %v6786 = vrot.slane %v6540, 1
        %v6787 = vrot.slane %v6548, 1
        %v6788 = vrot.slane %v6556, 1
        %v6789 = vrot.slane %v6555, 1
        %v6790 = vrot.slane %v6557, 1
        %v6791 = vrot.slane %v6565, 1
        %v6792 = vrot.slane %v6573, 1
        %v6793 = vrot.slane %v6572, 1
        %v6794 = vrot.slane %v6574, 1
        %v6795 = vrot.slane %v6582, 1
        %v6796 = vrot.slane %v6590, 1
        %v6797 = vrot.slane %v6589, 1
        %v6798 = vrot.slane %v6591, 1
        %v6799 = vrot.slane %v6599, 1
        %v6800 = vrot.slane %v6607, 1
        %v6801 = vrot.slane %v6606, 1
        %v6802 = vrot.slane %v6608, 1
        %v6803 = vrot.slane %v6616, 1
        %v6804 = vrot.slane %v6624, 1
        %v6805 = vrot.slane %v6623, 1
        %v6806 = vrot.slane %v6625, 1
        %v6807 = vrot.slane %v6633, 1
        %v6808 = vrot.slane %v6641, 1
        %v6809 = vrot.slane %v6640, 1
        %v6810 = vrot.slane %v6642, 1
        %v6811 = vrot.slane %v6650, 1
        %v6812 = vrot.slane %v6658, 1
        %v6813 = vrot.slane %v6657, 1
        %v6814 = vrot.slane %v6659, 1
        %v6815 = vrot.slane %v6667, 1
        %v6816 = vrot.slane %v6675, 1
        %v6817 = vrot.slane %v6674, 1
        %v6818 = vrot.slane %v6676, 1
        %v6819 = vrot.slane %v6684, 1
        %v6820 = vrot.slane %v6692, 1
        %v6821 = vrot.slane %v6691, 1
        %v6822 = vrot.slane %v6693, 1
        %v6823 = vrot.slane %v6701, 1
        %v6824 = vrot.slane %v6709, 1
        %v6825 = vrot.slane %v6708, 1
        %v6826 = vrot.slane %v6710, 1
        %v6827 = vrot.slane %v6718, 1
        %v6828 = vrot.slane %v6726, 1
        %v6829 = vrot.slane %v6725, 1
        %v6830 = vrot.slane %v6727, 1
        %v6831 = vrot.slane %v6735, 1
        %v6832 = vrot.slane %v6743, 1
        %v6833 = vrot.slane %v6742, 1
        %v6834 = vrot.slane %v6744, 1
        %v6835 = vrot.slane %v6752, 1
        %v6836 = vrot.slane %v6760, 1
        %v6837 = vrot.slane %v6759, 1
        %v6838 = vrot.slane %v6761, 1
        %v6839 = vrot.slane %v6769, 1
        %v6840 = vrot.slane %v6777, 1
        %v6841 = vrot.slane %v6776, 1
        %v6842 = vrot.slane %v6778, 1
        %v6971 = vadd.f32 %v6347, %v6514
        %v6972 = vadd.f32 %v6348, %v6779
        %v6973 = vadd.f32 %v6349, %v6522
        %v6974 = vadd.f32 %v6350, %v6780
        %v6975 = vadd.f32 %v6351, %v6521
        %v6976 = vadd.f32 %v6352, %v6781
        %v6977 = vadd.f32 %v6353, %v6523
        %v6978 = vadd.f32 %v6354, %v6782
        %v6979 = vadd.f32 %v6355, %v6531
        %v6980 = vadd.f32 %v6356, %v6783
        %v6981 = vadd.f32 %v6357, %v6539
        %v6982 = vadd.f32 %v6358, %v6784
        %v6983 = vadd.f32 %v6359, %v6538
        %v6984 = vadd.f32 %v6360, %v6785
        %v6985 = vadd.f32 %v6361, %v6540
        %v6986 = vadd.f32 %v6362, %v6786
        %v6987 = vadd.f32 %v6363, %v6548
        %v6988 = vadd.f32 %v6364, %v6787
        %v6989 = vadd.f32 %v6365, %v6556
        %v6990 = vadd.f32 %v6366, %v6788
        %v6991 = vadd.f32 %v6367, %v6555
        %v6992 = vadd.f32 %v6368, %v6789
        %v6993 = vadd.f32 %v6369, %v6557
        %v6994 = vadd.f32 %v6370, %v6790
        %v6995 = vadd.f32 %v6371, %v6565
        %v6996 = vadd.f32 %v6372, %v6791
        %v6997 = vadd.f32 %v6373, %v6573
        %v6998 = vadd.f32 %v6374, %v6792
        %v6999 = vadd.f32 %v6375, %v6572
        %v7000 = vadd.f32 %v6376, %v6793
        %v7001 = vadd.f32 %v6377, %v6574
        %v7002 = vadd.f32 %v6378, %v6794
        %v7003 = vadd.f32 %v6379, %v6582
        %v7004 = vadd.f32 %v6380, %v6795
        %v7005 = vadd.f32 %v6381, %v6590
        %v7006 = vadd.f32 %v6382, %v6796
        %v7007 = vadd.f32 %v6383, %v6589
        %v7008 = vadd.f32 %v6384, %v6797
        %v7009 = vadd.f32 %v6385, %v6591
        %v7010 = vadd.f32 %v6386, %v6798
        %v7011 = vadd.f32 %v6387, %v6599
        %v7012 = vadd.f32 %v6388, %v6799
        %v7013 = vadd.f32 %v6389, %v6607
        %v7014 = vadd.f32 %v6390, %v6800
        %v7015 = vadd.f32 %v6391, %v6606
        %v7016 = vadd.f32 %v6392, %v6801
        %v7017 = vadd.f32 %v6393, %v6608
        %v7018 = vadd.f32 %v6394, %v6802
        %v7019 = vadd.f32 %v6395, %v6616
        %v7020 = vadd.f32 %v6396, %v6803
        %v7021 = vadd.f32 %v6397, %v6624
        %v7022 = vadd.f32 %v6398, %v6804
        %v7023 = vadd.f32 %v6399, %v6623
        %v7024 = vadd.f32 %v6400, %v6805
        %v7025 = vadd.f32 %v6401, %v6625
        %v7026 = vadd.f32 %v6402, %v6806
        %v7027 = vadd.f32 %v6403, %v6633
        %v7028 = vadd.f32 %v6404, %v6807
        %v7029 = vadd.f32 %v6405, %v6641
        %v7030 = vadd.f32 %v6406, %v6808
        %v7031 = vadd.f32 %v6407, %v6640
        %v7032 = vadd.f32 %v6408, %v6809
        %v7033 = vadd.f32 %v6409, %v6642
        %v7034 = vadd.f32 %v6410, %v6810
        %v7035 = vadd.f32 %v6411, %v6650
        %v7036 = vadd.f32 %v6412, %v6811
        %v7037 = vadd.f32 %v6413, %v6658
        %v7038 = vadd.f32 %v6414, %v6812
        %v7039 = vadd.f32 %v6415, %v6657
        %v7040 = vadd.f32 %v6416, %v6813
        %v7041 = vadd.f32 %v6417, %v6659
        %v7042 = vadd.f32 %v6418, %v6814
        %v7043 = vadd.f32 %v6419, %v6667
        %v7044 = vadd.f32 %v6420, %v6815
        %v7045 = vadd.f32 %v6421, %v6675
        %v7046 = vadd.f32 %v6422, %v6816
        %v7047 = vadd.f32 %v6423, %v6674
        %v7048 = vadd.f32 %v6424, %v6817
        %v7049 = vadd.f32 %v6425, %v6676
        %v7050 = vadd.f32 %v6426, %v6818
        %v7051 = vadd.f32 %v6427, %v6684
        %v7052 = vadd.f32 %v6428, %v6819
        %v7053 = vadd.f32 %v6429, %v6692
        %v7054 = vadd.f32 %v6430, %v6820
        %v7055 = vadd.f32 %v6431, %v6691
        %v7056 = vadd.f32 %v6432, %v6821
        %v7057 = vadd.f32 %v6433, %v6693
        %v7058 = vadd.f32 %v6434, %v6822
        %v7059 = vadd.f32 %v6435, %v6701
        %v7060 = vadd.f32 %v6436, %v6823
        %v7061 = vadd.f32 %v6437, %v6709
        %v7062 = vadd.f32 %v6438, %v6824
        %v7063 = vadd.f32 %v6439, %v6708
        %v7064 = vadd.f32 %v6440, %v6825
        %v7065 = vadd.f32 %v6441, %v6710
        %v7066 = vadd.f32 %v6442, %v6826
        %v7067 = vadd.f32 %v6443, %v6718
        %v7068 = vadd.f32 %v6444, %v6827
        %v7069 = vadd.f32 %v6445, %v6726
        %v7070 = vadd.f32 %v6446, %v6828
        %v7071 = vadd.f32 %v6447, %v6725
        %v7072 = vadd.f32 %v6448, %v6829
        %v7073 = vadd.f32 %v6449, %v6727
        %v7074 = vadd.f32 %v6450, %v6830
        %v7075 = vadd.f32 %v6451, %v6735
        %v7076 = vadd.f32 %v6452, %v6831
        %v7077 = vadd.f32 %v6453, %v6743
        %v7078 = vadd.f32 %v6454, %v6832
        %v7079 = vadd.f32 %v6455, %v6742
        %v7080 = vadd.f32 %v6456, %v6833
        %v7081 = vadd.f32 %v6457, %v6744
        %v7082 = vadd.f32 %v6458, %v6834
        %v7083 = vadd.f32 %v6459, %v6752
        %v7084 = vadd.f32 %v6460, %v6835
        %v7085 = vadd.f32 %v6461, %v6760
        %v7086 = vadd.f32 %v6462, %v6836
        %v7087 = vadd.f32 %v6463, %v6759
        %v7088 = vadd.f32 %v6464, %v6837
        %v7089 = vadd.f32 %v6465, %v6761
        %v7090 = vadd.f32 %v6466, %v6838
        %v7091 = vadd.f32 %v6467, %v6769
        %v7092 = vadd.f32 %v6468, %v6839
        %v7093 = vadd.f32 %v6469, %v6777
        %v7094 = vadd.f32 %v6470, %v6840
        %v7095 = vadd.f32 %v6471, %v6776
        %v7096 = vadd.f32 %v6472, %v6841
        %v7097 = vadd.f32 %v6473, %v6778
        %v7098 = vadd.f32 %v6474, %v6842
        %v7227 = vlaneseq
        %v7228 = vshrl.u32 %v7227, 7
        %v7229 = vsub.s32 0, %v7228
        %v7230 = vrot.slane %v6971, %v7229
        %v7231 = vlaneseq
        %v7232 = vshrl.u32 %v7231, 7
        %v7233 = vsub.s32 0, %v7232
        %v7234 = vrot.slane %v6972, %v7233
        %v7235 = vlaneseq
        %v7236 = vshrl.u32 %v7235, 7
        %v7237 = vsub.s32 0, %v7236
        %v7238 = vrot.slane %v6973, %v7237
        %v7239 = vlaneseq
        %v7240 = vshrl.u32 %v7239, 7
        %v7241 = vsub.s32 0, %v7240
        %v7242 = vrot.slane %v6974, %v7241
        %v7243 = vlaneseq
        %v7244 = vshrl.u32 %v7243, 7
        %v7245 = vsub.s32 0, %v7244
        %v7246 = vrot.slane %v6975, %v7245
        %v7247 = vlaneseq
        %v7248 = vshrl.u32 %v7247, 7
        %v7249 = vsub.s32 0, %v7248
        %v7250 = vrot.slane %v6976, %v7249
        %v7251 = vlaneseq
        %v7252 = vshrl.u32 %v7251, 7
        %v7253 = vsub.s32 0, %v7252
        %v7254 = vrot.slane %v6977, %v7253
        %v7255 = vlaneseq
        %v7256 = vshrl.u32 %v7255, 7
        %v7257 = vsub.s32 0, %v7256
        %v7258 = vrot.slane %v6978, %v7257
        %v7259 = vlaneseq
        %v7260 = vshrl.u32 %v7259, 7
        %v7261 = vsub.s32 0, %v7260
        %v7262 = vrot.slane %v6979, %v7261
        %v7263 = vlaneseq
        %v7264 = vshrl.u32 %v7263, 7
        %v7265 = vsub.s32 0, %v7264
        %v7266 = vrot.slane %v6980, %v7265
        %v7267 = vlaneseq
        %v7268 = vshrl.u32 %v7267, 7
        %v7269 = vsub.s32 0, %v7268
        %v7270 = vrot.slane %v6981, %v7269
        %v7271 = vlaneseq
        %v7272 = vshrl.u32 %v7271, 7
        %v7273 = vsub.s32 0, %v7272
        %v7274 = vrot.slane %v6982, %v7273
        %v7275 = vlaneseq
        %v7276 = vshrl.u32 %v7275, 7
        %v7277 = vsub.s32 0, %v7276
        %v7278 = vrot.slane %v6983, %v7277
        %v7279 = vlaneseq
        %v7280 = vshrl.u32 %v7279, 7
        %v7281 = vsub.s32 0, %v7280
        %v7282 = vrot.slane %v6984, %v7281
        %v7283 = vlaneseq
        %v7284 = vshrl.u32 %v7283, 7
        %v7285 = vsub.s32 0, %v7284
        %v7286 = vrot.slane %v6985, %v7285
        %v7287 = vlaneseq
        %v7288 = vshrl.u32 %v7287, 7
        %v7289 = vsub.s32 0, %v7288
        %v7290 = vrot.slane %v6986, %v7289
        %v7291 = vlaneseq
        %v7292 = vshrl.u32 %v7291, 7
        %v7293 = vsub.s32 0, %v7292
        %v7294 = vrot.slane %v6987, %v7293
        %v7295 = vlaneseq
        %v7296 = vshrl.u32 %v7295, 7
        %v7297 = vsub.s32 0, %v7296
        %v7298 = vrot.slane %v6988, %v7297
        %v7299 = vlaneseq
        %v7300 = vshrl.u32 %v7299, 7
        %v7301 = vsub.s32 0, %v7300
        %v7302 = vrot.slane %v6989, %v7301
        %v7303 = vlaneseq
        %v7304 = vshrl.u32 %v7303, 7
        %v7305 = vsub.s32 0, %v7304
        %v7306 = vrot.slane %v6990, %v7305
        %v7307 = vlaneseq
        %v7308 = vshrl.u32 %v7307, 7
        %v7309 = vsub.s32 0, %v7308
        %v7310 = vrot.slane %v6991, %v7309
        %v7311 = vlaneseq
        %v7312 = vshrl.u32 %v7311, 7
        %v7313 = vsub.s32 0, %v7312
        %v7314 = vrot.slane %v6992, %v7313
        %v7315 = vlaneseq
        %v7316 = vshrl.u32 %v7315, 7
        %v7317 = vsub.s32 0, %v7316
        %v7318 = vrot.slane %v6993, %v7317
        %v7319 = vlaneseq
        %v7320 = vshrl.u32 %v7319, 7
        %v7321 = vsub.s32 0, %v7320
        %v7322 = vrot.slane %v6994, %v7321
        %v7323 = vlaneseq
        %v7324 = vshrl.u32 %v7323, 7
        %v7325 = vsub.s32 0, %v7324
        %v7326 = vrot.slane %v6995, %v7325
        %v7327 = vlaneseq
        %v7328 = vshrl.u32 %v7327, 7
        %v7329 = vsub.s32 0, %v7328
        %v7330 = vrot.slane %v6996, %v7329
        %v7331 = vlaneseq
        %v7332 = vshrl.u32 %v7331, 7
        %v7333 = vsub.s32 0, %v7332
        %v7334 = vrot.slane %v6997, %v7333
        %v7335 = vlaneseq
        %v7336 = vshrl.u32 %v7335, 7
        %v7337 = vsub.s32 0, %v7336
        %v7338 = vrot.slane %v6998, %v7337
        %v7339 = vlaneseq
        %v7340 = vshrl.u32 %v7339, 7
        %v7341 = vsub.s32 0, %v7340
        %v7342 = vrot.slane %v6999, %v7341
        %v7343 = vlaneseq
        %v7344 = vshrl.u32 %v7343, 7
        %v7345 = vsub.s32 0, %v7344
        %v7346 = vrot.slane %v7000, %v7345
        %v7347 = vlaneseq
        %v7348 = vshrl.u32 %v7347, 7
        %v7349 = vsub.s32 0, %v7348
        %v7350 = vrot.slane %v7001, %v7349
        %v7351 = vlaneseq
        %v7352 = vshrl.u32 %v7351, 7
        %v7353 = vsub.s32 0, %v7352
        %v7354 = vrot.slane %v7002, %v7353
        %v7355 = vlaneseq
        %v7356 = vshrl.u32 %v7355, 7
        %v7357 = vsub.s32 0, %v7356
        %v7358 = vrot.slane %v7003, %v7357
        %v7359 = vlaneseq
        %v7360 = vshrl.u32 %v7359, 7
        %v7361 = vsub.s32 0, %v7360
        %v7362 = vrot.slane %v7004, %v7361
        %v7363 = vlaneseq
        %v7364 = vshrl.u32 %v7363, 7
        %v7365 = vsub.s32 0, %v7364
        %v7366 = vrot.slane %v7005, %v7365
        %v7367 = vlaneseq
        %v7368 = vshrl.u32 %v7367, 7
        %v7369 = vsub.s32 0, %v7368
        %v7370 = vrot.slane %v7006, %v7369
        %v7371 = vlaneseq
        %v7372 = vshrl.u32 %v7371, 7
        %v7373 = vsub.s32 0, %v7372
        %v7374 = vrot.slane %v7007, %v7373
        %v7375 = vlaneseq
        %v7376 = vshrl.u32 %v7375, 7
        %v7377 = vsub.s32 0, %v7376
        %v7378 = vrot.slane %v7008, %v7377
        %v7379 = vlaneseq
        %v7380 = vshrl.u32 %v7379, 7
        %v7381 = vsub.s32 0, %v7380
        %v7382 = vrot.slane %v7009, %v7381
        %v7383 = vlaneseq
        %v7384 = vshrl.u32 %v7383, 7
        %v7385 = vsub.s32 0, %v7384
        %v7386 = vrot.slane %v7010, %v7385
        %v7387 = vlaneseq
        %v7388 = vshrl.u32 %v7387, 7
        %v7389 = vsub.s32 0, %v7388
        %v7390 = vrot.slane %v7011, %v7389
        %v7391 = vlaneseq
        %v7392 = vshrl.u32 %v7391, 7
        %v7393 = vsub.s32 0, %v7392
        %v7394 = vrot.slane %v7012, %v7393
        %v7395 = vlaneseq
        %v7396 = vshrl.u32 %v7395, 7
        %v7397 = vsub.s32 0, %v7396
        %v7398 = vrot.slane %v7013, %v7397
        %v7399 = vlaneseq
        %v7400 = vshrl.u32 %v7399, 7
        %v7401 = vsub.s32 0, %v7400
        %v7402 = vrot.slane %v7014, %v7401
        %v7403 = vlaneseq
        %v7404 = vshrl.u32 %v7403, 7
        %v7405 = vsub.s32 0, %v7404
        %v7406 = vrot.slane %v7015, %v7405
        %v7407 = vlaneseq
        %v7408 = vshrl.u32 %v7407, 7
        %v7409 = vsub.s32 0, %v7408
        %v7410 = vrot.slane %v7016, %v7409
        %v7411 = vlaneseq
        %v7412 = vshrl.u32 %v7411, 7
        %v7413 = vsub.s32 0, %v7412
        %v7414 = vrot.slane %v7017, %v7413
        %v7415 = vlaneseq
        %v7416 = vshrl.u32 %v7415, 7
        %v7417 = vsub.s32 0, %v7416
        %v7418 = vrot.slane %v7018, %v7417
        %v7419 = vlaneseq
        %v7420 = vshrl.u32 %v7419, 7
        %v7421 = vsub.s32 0, %v7420
        %v7422 = vrot.slane %v7019, %v7421
        %v7423 = vlaneseq
        %v7424 = vshrl.u32 %v7423, 7
        %v7425 = vsub.s32 0, %v7424
        %v7426 = vrot.slane %v7020, %v7425
        %v7427 = vlaneseq
        %v7428 = vshrl.u32 %v7427, 7
        %v7429 = vsub.s32 0, %v7428
        %v7430 = vrot.slane %v7021, %v7429
        %v7431 = vlaneseq
        %v7432 = vshrl.u32 %v7431, 7
        %v7433 = vsub.s32 0, %v7432
        %v7434 = vrot.slane %v7022, %v7433
        %v7435 = vlaneseq
        %v7436 = vshrl.u32 %v7435, 7
        %v7437 = vsub.s32 0, %v7436
        %v7438 = vrot.slane %v7023, %v7437
        %v7439 = vlaneseq
        %v7440 = vshrl.u32 %v7439, 7
        %v7441 = vsub.s32 0, %v7440
        %v7442 = vrot.slane %v7024, %v7441
        %v7443 = vlaneseq
        %v7444 = vshrl.u32 %v7443, 7
        %v7445 = vsub.s32 0, %v7444
        %v7446 = vrot.slane %v7025, %v7445
        %v7447 = vlaneseq
        %v7448 = vshrl.u32 %v7447, 7
        %v7449 = vsub.s32 0, %v7448
        %v7450 = vrot.slane %v7026, %v7449
        %v7451 = vlaneseq
        %v7452 = vshrl.u32 %v7451, 7
        %v7453 = vsub.s32 0, %v7452
        %v7454 = vrot.slane %v7027, %v7453
        %v7455 = vlaneseq
        %v7456 = vshrl.u32 %v7455, 7
        %v7457 = vsub.s32 0, %v7456
        %v7458 = vrot.slane %v7028, %v7457
        %v7459 = vlaneseq
        %v7460 = vshrl.u32 %v7459, 7
        %v7461 = vsub.s32 0, %v7460
        %v7462 = vrot.slane %v7029, %v7461
        %v7463 = vlaneseq
        %v7464 = vshrl.u32 %v7463, 7
        %v7465 = vsub.s32 0, %v7464
        %v7466 = vrot.slane %v7030, %v7465
        %v7467 = vlaneseq
        %v7468 = vshrl.u32 %v7467, 7
        %v7469 = vsub.s32 0, %v7468
        %v7470 = vrot.slane %v7031, %v7469
        %v7471 = vlaneseq
        %v7472 = vshrl.u32 %v7471, 7
        %v7473 = vsub.s32 0, %v7472
        %v7474 = vrot.slane %v7032, %v7473
        %v7475 = vlaneseq
        %v7476 = vshrl.u32 %v7475, 7
        %v7477 = vsub.s32 0, %v7476
        %v7478 = vrot.slane %v7033, %v7477
        %v7479 = vlaneseq
        %v7480 = vshrl.u32 %v7479, 7
        %v7481 = vsub.s32 0, %v7480
        %v7482 = vrot.slane %v7034, %v7481
        %v7483 = vlaneseq
        %v7484 = vshrl.u32 %v7483, 7
        %v7485 = vsub.s32 0, %v7484
        %v7486 = vrot.slane %v7035, %v7485
        %v7487 = vlaneseq
        %v7488 = vshrl.u32 %v7487, 7
        %v7489 = vsub.s32 0, %v7488
        %v7490 = vrot.slane %v7036, %v7489
        %v7491 = vlaneseq
        %v7492 = vshrl.u32 %v7491, 7
        %v7493 = vsub.s32 0, %v7492
        %v7494 = vrot.slane %v7037, %v7493
        %v7495 = vlaneseq
        %v7496 = vshrl.u32 %v7495, 7
        %v7497 = vsub.s32 0, %v7496
        %v7498 = vrot.slane %v7038, %v7497
        %v7499 = vlaneseq
        %v7500 = vshrl.u32 %v7499, 7
        %v7501 = vsub.s32 0, %v7500
        %v7502 = vrot.slane %v7039, %v7501
        %v7503 = vlaneseq
        %v7504 = vshrl.u32 %v7503, 7
        %v7505 = vsub.s32 0, %v7504
        %v7506 = vrot.slane %v7040, %v7505
        %v7507 = vlaneseq
        %v7508 = vshrl.u32 %v7507, 7
        %v7509 = vsub.s32 0, %v7508
        %v7510 = vrot.slane %v7041, %v7509
        %v7511 = vlaneseq
        %v7512 = vshrl.u32 %v7511, 7
        %v7513 = vsub.s32 0, %v7512
        %v7514 = vrot.slane %v7042, %v7513
        %v7515 = vlaneseq
        %v7516 = vshrl.u32 %v7515, 7
        %v7517 = vsub.s32 0, %v7516
        %v7518 = vrot.slane %v7043, %v7517
        %v7519 = vlaneseq
        %v7520 = vshrl.u32 %v7519, 7
        %v7521 = vsub.s32 0, %v7520
        %v7522 = vrot.slane %v7044, %v7521
        %v7523 = vlaneseq
        %v7524 = vshrl.u32 %v7523, 7
        %v7525 = vsub.s32 0, %v7524
        %v7526 = vrot.slane %v7045, %v7525
        %v7527 = vlaneseq
        %v7528 = vshrl.u32 %v7527, 7
        %v7529 = vsub.s32 0, %v7528
        %v7530 = vrot.slane %v7046, %v7529
        %v7531 = vlaneseq
        %v7532 = vshrl.u32 %v7531, 7
        %v7533 = vsub.s32 0, %v7532
        %v7534 = vrot.slane %v7047, %v7533
        %v7535 = vlaneseq
        %v7536 = vshrl.u32 %v7535, 7
        %v7537 = vsub.s32 0, %v7536
        %v7538 = vrot.slane %v7048, %v7537
        %v7539 = vlaneseq
        %v7540 = vshrl.u32 %v7539, 7
        %v7541 = vsub.s32 0, %v7540
        %v7542 = vrot.slane %v7049, %v7541
        %v7543 = vlaneseq
        %v7544 = vshrl.u32 %v7543, 7
        %v7545 = vsub.s32 0, %v7544
        %v7546 = vrot.slane %v7050, %v7545
        %v7547 = vlaneseq
        %v7548 = vshrl.u32 %v7547, 7
        %v7549 = vsub.s32 0, %v7548
        %v7550 = vrot.slane %v7051, %v7549
        %v7551 = vlaneseq
        %v7552 = vshrl.u32 %v7551, 7
        %v7553 = vsub.s32 0, %v7552
        %v7554 = vrot.slane %v7052, %v7553
        %v7555 = vlaneseq
        %v7556 = vshrl.u32 %v7555, 7
        %v7557 = vsub.s32 0, %v7556
        %v7558 = vrot.slane %v7053, %v7557
        %v7559 = vlaneseq
        %v7560 = vshrl.u32 %v7559, 7
        %v7561 = vsub.s32 0, %v7560
        %v7562 = vrot.slane %v7054, %v7561
        %v7563 = vlaneseq
        %v7564 = vshrl.u32 %v7563, 7
        %v7565 = vsub.s32 0, %v7564
        %v7566 = vrot.slane %v7055, %v7565
        %v7567 = vlaneseq
        %v7568 = vshrl.u32 %v7567, 7
        %v7569 = vsub.s32 0, %v7568
        %v7570 = vrot.slane %v7056, %v7569
        %v7571 = vlaneseq
        %v7572 = vshrl.u32 %v7571, 7
        %v7573 = vsub.s32 0, %v7572
        %v7574 = vrot.slane %v7057, %v7573
        %v7575 = vlaneseq
        %v7576 = vshrl.u32 %v7575, 7
        %v7577 = vsub.s32 0, %v7576
        %v7578 = vrot.slane %v7058, %v7577
        %v7579 = vlaneseq
        %v7580 = vshrl.u32 %v7579, 7
        %v7581 = vsub.s32 0, %v7580
        %v7582 = vrot.slane %v7059, %v7581
        %v7583 = vlaneseq
        %v7584 = vshrl.u32 %v7583, 7
        %v7585 = vsub.s32 0, %v7584
        %v7586 = vrot.slane %v7060, %v7585
        %v7587 = vlaneseq
        %v7588 = vshrl.u32 %v7587, 7
        %v7589 = vsub.s32 0, %v7588
        %v7590 = vrot.slane %v7061, %v7589
        %v7591 = vlaneseq
        %v7592 = vshrl.u32 %v7591, 7
        %v7593 = vsub.s32 0, %v7592
        %v7594 = vrot.slane %v7062, %v7593
        %v7595 = vlaneseq
        %v7596 = vshrl.u32 %v7595, 7
        %v7597 = vsub.s32 0, %v7596
        %v7598 = vrot.slane %v7063, %v7597
        %v7599 = vlaneseq
        %v7600 = vshrl.u32 %v7599, 7
        %v7601 = vsub.s32 0, %v7600
        %v7602 = vrot.slane %v7064, %v7601
        %v7603 = vlaneseq
        %v7604 = vshrl.u32 %v7603, 7
        %v7605 = vsub.s32 0, %v7604
        %v7606 = vrot.slane %v7065, %v7605
        %v7607 = vlaneseq
        %v7608 = vshrl.u32 %v7607, 7
        %v7609 = vsub.s32 0, %v7608
        %v7610 = vrot.slane %v7066, %v7609
        %v7611 = vlaneseq
        %v7612 = vshrl.u32 %v7611, 7
        %v7613 = vsub.s32 0, %v7612
        %v7614 = vrot.slane %v7067, %v7613
        %v7615 = vlaneseq
        %v7616 = vshrl.u32 %v7615, 7
        %v7617 = vsub.s32 0, %v7616
        %v7618 = vrot.slane %v7068, %v7617
        %v7619 = vlaneseq
        %v7620 = vshrl.u32 %v7619, 7
        %v7621 = vsub.s32 0, %v7620
        %v7622 = vrot.slane %v7069, %v7621
        %v7623 = vlaneseq
        %v7624 = vshrl.u32 %v7623, 7
        %v7625 = vsub.s32 0, %v7624
        %v7626 = vrot.slane %v7070, %v7625
        %v7627 = vlaneseq
        %v7628 = vshrl.u32 %v7627, 7
        %v7629 = vsub.s32 0, %v7628
        %v7630 = vrot.slane %v7071, %v7629
        %v7631 = vlaneseq
        %v7632 = vshrl.u32 %v7631, 7
        %v7633 = vsub.s32 0, %v7632
        %v7634 = vrot.slane %v7072, %v7633
        %v7635 = vlaneseq
        %v7636 = vshrl.u32 %v7635, 7
        %v7637 = vsub.s32 0, %v7636
        %v7638 = vrot.slane %v7073, %v7637
        %v7639 = vlaneseq
        %v7640 = vshrl.u32 %v7639, 7
        %v7641 = vsub.s32 0, %v7640
        %v7642 = vrot.slane %v7074, %v7641
        %v7643 = vlaneseq
        %v7644 = vshrl.u32 %v7643, 7
        %v7645 = vsub.s32 0, %v7644
        %v7646 = vrot.slane %v7075, %v7645
        %v7647 = vlaneseq
        %v7648 = vshrl.u32 %v7647, 7
        %v7649 = vsub.s32 0, %v7648
        %v7650 = vrot.slane %v7076, %v7649
        %v7651 = vlaneseq
        %v7652 = vshrl.u32 %v7651, 7
        %v7653 = vsub.s32 0, %v7652
        %v7654 = vrot.slane %v7077, %v7653
        %v7655 = vlaneseq
        %v7656 = vshrl.u32 %v7655, 7
        %v7657 = vsub.s32 0, %v7656
        %v7658 = vrot.slane %v7078, %v7657
        %v7659 = vlaneseq
        %v7660 = vshrl.u32 %v7659, 7
        %v7661 = vsub.s32 0, %v7660
        %v7662 = vrot.slane %v7079, %v7661
        %v7663 = vlaneseq
        %v7664 = vshrl.u32 %v7663, 7
        %v7665 = vsub.s32 0, %v7664
        %v7666 = vrot.slane %v7080, %v7665
        %v7667 = vlaneseq
        %v7668 = vshrl.u32 %v7667, 7
        %v7669 = vsub.s32 0, %v7668
        %v7670 = vrot.slane %v7081, %v7669
        %v7671 = vlaneseq
        %v7672 = vshrl.u32 %v7671, 7
        %v7673 = vsub.s32 0, %v7672
        %v7674 = vrot.slane %v7082, %v7673
        %v7675 = vlaneseq
        %v7676 = vshrl.u32 %v7675, 7
        %v7677 = vsub.s32 0, %v7676
        %v7678 = vrot.slane %v7083, %v7677
        %v7679 = vlaneseq
        %v7680 = vshrl.u32 %v7679, 7
        %v7681 = vsub.s32 0, %v7680
        %v7682 = vrot.slane %v7084, %v7681
        %v7683 = vlaneseq
        %v7684 = vshrl.u32 %v7683, 7
        %v7685 = vsub.s32 0, %v7684
        %v7686 = vrot.slane %v7085, %v7685
        %v7687 = vlaneseq
        %v7688 = vshrl.u32 %v7687, 7
        %v7689 = vsub.s32 0, %v7688
        %v7690 = vrot.slane %v7086, %v7689
        %v7691 = vlaneseq
        %v7692 = vshrl.u32 %v7691, 7
        %v7693 = vsub.s32 0, %v7692
        %v7694 = vrot.slane %v7087, %v7693
        %v7695 = vlaneseq
        %v7696 = vshrl.u32 %v7695, 7
        %v7697 = vsub.s32 0, %v7696
        %v7698 = vrot.slane %v7088, %v7697
        %v7699 = vlaneseq
        %v7700 = vshrl.u32 %v7699, 7
        %v7701 = vsub.s32 0, %v7700
        %v7702 = vrot.slane %v7089, %v7701
        %v7703 = vlaneseq
        %v7704 = vshrl.u32 %v7703, 7
        %v7705 = vsub.s32 0, %v7704
        %v7706 = vrot.slane %v7090, %v7705
        %v7707 = vlaneseq
        %v7708 = vshrl.u32 %v7707, 7
        %v7709 = vsub.s32 0, %v7708
        %v7710 = vrot.slane %v7091, %v7709
        %v7711 = vlaneseq
        %v7712 = vshrl.u32 %v7711, 7
        %v7713 = vsub.s32 0, %v7712
        %v7714 = vrot.slane %v7092, %v7713
        %v7715 = vlaneseq
        %v7716 = vshrl.u32 %v7715, 7
        %v7717 = vsub.s32 0, %v7716
        %v7718 = vrot.slane %v7093, %v7717
        %v7719 = vlaneseq
        %v7720 = vshrl.u32 %v7719, 7
        %v7721 = vsub.s32 0, %v7720
        %v7722 = vrot.slane %v7094, %v7721
        %v7723 = vlaneseq
        %v7724 = vshrl.u32 %v7723, 7
        %v7725 = vsub.s32 0, %v7724
        %v7726 = vrot.slane %v7095, %v7725
        %v7727 = vlaneseq
        %v7728 = vshrl.u32 %v7727, 7
        %v7729 = vsub.s32 0, %v7728
        %v7730 = vrot.slane %v7096, %v7729
        %v7731 = vlaneseq
        %v7732 = vshrl.u32 %v7731, 7
        %v7733 = vsub.s32 0, %v7732
        %v7734 = vrot.slane %v7097, %v7733
        %v7735 = vlaneseq
        %v7736 = vshrl.u32 %v7735, 7
        %v7737 = vsub.s32 0, %v7736
        %v7738 = vrot.slane %v7098, %v7737
        %vm7739 = vcmask 1041409
        %v7740 = vsel %vm7739, %v7234, %v7230
        %vm7741 = vcmask 1042434
        %v7742 = vsel %vm7741, %v7238, %v7740
        %vm7743 = vcmask 1043459
        %v7744 = vsel %vm7743, %v7242, %v7742
        %vm7745 = vcmask 1044484
        %v7746 = vsel %vm7745, %v7246, %v7744
        %vm7747 = vcmask 1045509
        %v7748 = vsel %vm7747, %v7250, %v7746
        %vm7749 = vcmask 1046534
        %v7750 = vsel %vm7749, %v7254, %v7748
        %vm7751 = vcmask 1047559
        %v7752 = vsel %vm7751, %v7258, %v7750
        %v7753 = vsel %vm7739, %v7266, %v7262
        %v7754 = vsel %vm7741, %v7270, %v7753
        %v7755 = vsel %vm7743, %v7274, %v7754
        %v7756 = vsel %vm7745, %v7278, %v7755
        %v7757 = vsel %vm7747, %v7282, %v7756
        %v7758 = vsel %vm7749, %v7286, %v7757
        %v7759 = vsel %vm7751, %v7290, %v7758
        %v7760 = vsel %vm7739, %v7298, %v7294
        %v7761 = vsel %vm7741, %v7302, %v7760
        %v7762 = vsel %vm7743, %v7306, %v7761
        %v7763 = vsel %vm7745, %v7310, %v7762
        %v7764 = vsel %vm7747, %v7314, %v7763
        %v7765 = vsel %vm7749, %v7318, %v7764
        %v7766 = vsel %vm7751, %v7322, %v7765
        %v7767 = vsel %vm7739, %v7330, %v7326
        %v7768 = vsel %vm7741, %v7334, %v7767
        %v7769 = vsel %vm7743, %v7338, %v7768
        %v7770 = vsel %vm7745, %v7342, %v7769
        %v7771 = vsel %vm7747, %v7346, %v7770
        %v7772 = vsel %vm7749, %v7350, %v7771
        %v7773 = vsel %vm7751, %v7354, %v7772
        %v7774 = vsel %vm7739, %v7362, %v7358
        %v7775 = vsel %vm7741, %v7366, %v7774
        %v7776 = vsel %vm7743, %v7370, %v7775
        %v7777 = vsel %vm7745, %v7374, %v7776
        %v7778 = vsel %vm7747, %v7378, %v7777
        %v7779 = vsel %vm7749, %v7382, %v7778
        %v7780 = vsel %vm7751, %v7386, %v7779
        %v7781 = vsel %vm7739, %v7394, %v7390
        %v7782 = vsel %vm7741, %v7398, %v7781
        %v7783 = vsel %vm7743, %v7402, %v7782
        %v7784 = vsel %vm7745, %v7406, %v7783
        %v7785 = vsel %vm7747, %v7410, %v7784
        %v7786 = vsel %vm7749, %v7414, %v7785
        %v7787 = vsel %vm7751, %v7418, %v7786
        %v7788 = vsel %vm7739, %v7426, %v7422
        %v7789 = vsel %vm7741, %v7430, %v7788
        %v7790 = vsel %vm7743, %v7434, %v7789
        %v7791 = vsel %vm7745, %v7438, %v7790
        %v7792 = vsel %vm7747, %v7442, %v7791
        %v7793 = vsel %vm7749, %v7446, %v7792
        %v7794 = vsel %vm7751, %v7450, %v7793
        %v7795 = vsel %vm7739, %v7458, %v7454
        %v7796 = vsel %vm7741, %v7462, %v7795
        %v7797 = vsel %vm7743, %v7466, %v7796
        %v7798 = vsel %vm7745, %v7470, %v7797
        %v7799 = vsel %vm7747, %v7474, %v7798
        %v7800 = vsel %vm7749, %v7478, %v7799
        %v7801 = vsel %vm7751, %v7482, %v7800
        %v7802 = vsel %vm7739, %v7490, %v7486
        %v7803 = vsel %vm7741, %v7494, %v7802
        %v7804 = vsel %vm7743, %v7498, %v7803
        %v7805 = vsel %vm7745, %v7502, %v7804
        %v7806 = vsel %vm7747, %v7506, %v7805
        %v7807 = vsel %vm7749, %v7510, %v7806
        %v7808 = vsel %vm7751, %v7514, %v7807
        %v7809 = vsel %vm7739, %v7522, %v7518
        %v7810 = vsel %vm7741, %v7526, %v7809
        %v7811 = vsel %vm7743, %v7530, %v7810
        %v7812 = vsel %vm7745, %v7534, %v7811
        %v7813 = vsel %vm7747, %v7538, %v7812
        %v7814 = vsel %vm7749, %v7542, %v7813
        %v7815 = vsel %vm7751, %v7546, %v7814
        %v7816 = vsel %vm7739, %v7554, %v7550
        %v7817 = vsel %vm7741, %v7558, %v7816
        %v7818 = vsel %vm7743, %v7562, %v7817
        %v7819 = vsel %vm7745, %v7566, %v7818
        %v7820 = vsel %vm7747, %v7570, %v7819
        %v7821 = vsel %vm7749, %v7574, %v7820
        %v7822 = vsel %vm7751, %v7578, %v7821
        %v7823 = vsel %vm7739, %v7586, %v7582
        %v7824 = vsel %vm7741, %v7590, %v7823
        %v7825 = vsel %vm7743, %v7594, %v7824
        %v7826 = vsel %vm7745, %v7598, %v7825
        %v7827 = vsel %vm7747, %v7602, %v7826
        %v7828 = vsel %vm7749, %v7606, %v7827
        %v7829 = vsel %vm7751, %v7610, %v7828
        %v7830 = vsel %vm7739, %v7618, %v7614
        %v7831 = vsel %vm7741, %v7622, %v7830
        %v7832 = vsel %vm7743, %v7626, %v7831
        %v7833 = vsel %vm7745, %v7630, %v7832
        %v7834 = vsel %vm7747, %v7634, %v7833
        %v7835 = vsel %vm7749, %v7638, %v7834
        %v7836 = vsel %vm7751, %v7642, %v7835
        %v7837 = vsel %vm7739, %v7650, %v7646
        %v7838 = vsel %vm7741, %v7654, %v7837
        %v7839 = vsel %vm7743, %v7658, %v7838
        %v7840 = vsel %vm7745, %v7662, %v7839
        %v7841 = vsel %vm7747, %v7666, %v7840
        %v7842 = vsel %vm7749, %v7670, %v7841
        %v7843 = vsel %vm7751, %v7674, %v7842
        %v7844 = vsel %vm7739, %v7682, %v7678
        %v7845 = vsel %vm7741, %v7686, %v7844
        %v7846 = vsel %vm7743, %v7690, %v7845
        %v7847 = vsel %vm7745, %v7694, %v7846
        %v7848 = vsel %vm7747, %v7698, %v7847
        %v7849 = vsel %vm7749, %v7702, %v7848
        %v7850 = vsel %vm7751, %v7706, %v7849
        %v7851 = vsel %vm7739, %v7714, %v7710
        %v7852 = vsel %vm7741, %v7718, %v7851
        %v7853 = vsel %vm7743, %v7722, %v7852
        %v7854 = vsel %vm7745, %v7726, %v7853
        %v7855 = vsel %vm7747, %v7730, %v7854
        %v7856 = vsel %vm7749, %v7734, %v7855
        %v7857 = vsel %vm7751, %v7738, %v7856
        %7874 = vst [vmem:[%s190] sm:$0xff] %v7752
        %7875 = vst [vmem:[%s190 + $0x8] sm:$0xff] %v7759
        %7876 = vst [vmem:[%s190 + $0x10] sm:$0xff] %v7766
        %7877 = vst [vmem:[%s190 + $0x18] sm:$0xff] %v7773
        %7878 = vst [vmem:[%s190 + $0x20] sm:$0xff] %v7780
        %7879 = vst [vmem:[%s190 + $0x28] sm:$0xff] %v7787
        %7880 = vst [vmem:[%s190 + $0x30] sm:$0xff] %v7794
        %7881 = vst [vmem:[%s190 + $0x38] sm:$0xff] %v7801
        %7882 = vst [vmem:[%s190 + $0x40] sm:$0xff] %v7808
        %7883 = vst [vmem:[%s190 + $0x48] sm:$0xff] %v7815
        %7884 = vst [vmem:[%s190 + $0x50] sm:$0xff] %v7822
        %7885 = vst [vmem:[%s190 + $0x58] sm:$0xff] %v7829
        %7886 = vst [vmem:[%s190 + $0x60] sm:$0xff] %v7836
        %7887 = vst [vmem:[%s190 + $0x68] sm:$0xff] %v7843
        %7888 = vst [vmem:[%s190 + $0x70] sm:$0xff] %v7850
        %7889 = vst [vmem:[%s190 + $0x78] sm:$0xff] %v7857
        %s7890 = sand.u32 %s115, 1
        %s7891 = scalar_lea.sflag [#allocation3], %s7890
        %s7892 = sand.u32 %s115, 1
        %s7893 = smul.addr %s7892, 128
        %s7894 = scalar_lea.vmem [#allocation2], %s7893
        // Predicated region
        $region37: #{tpu_custom_call.1} parent=35 // pred_check
          %p7895 = pneg %p125
        $region38: #{tpu_custom_call.1} parent=35 // pred_check_branch
          %7897 = sbr.rel (%p7895) target = $region40
        $region39: #{tpu_custom_call.1} parent=35 // pred_region
          %s7899 = ssub.s32 2048, 2048
          %7900 = vsyncadd %s7891, %s7899
          %s7901 = smul.addr %s18, 16
          %s7902 = smul.addr %s7901, 128
          %s7903 = scalar_lea.hbm %s4, %s7902
          %s7904 = sshll.u32 %s7894, 4
          %s7905 = int_to_ptr.vmem [resolvable:$true] %s7904
          %7910 = dma.vmem_to_hbm [thread:$0]  %s7905, 2048, %s7903, %s7891, 128, 128, 8
        $region40: #{tpu_custom_call.1} parent=35 // pred_fallthru
          _
      $region36: #{tpu_custom_call.1} parent=5 // pred_fallthru
        _
      %p7911 = scmp.le.s32.totalorder 2, %s13
      // Predicated region
      $region41: #{tpu_custom_call.1} parent=5 // pred_check
        %p7912 = pneg %p7911
      $region42: #{tpu_custom_call.1} parent=5 // pred_check_branch
        %7914 = sbr.rel (%p7912) target = $region44
      $region43: #{tpu_custom_call.1} parent=5 // pred_region
        %s7915 = ssub.s32 %s13, 2
        // Predicated region
        $region45: #{tpu_custom_call.1} parent=43 // pred_check
          %p7916 = pneg %p131
        $region46: #{tpu_custom_call.1} parent=43 // pred_check_branch
          %7918 = sbr.rel (%p7916) target = $region48
        $region47: #{tpu_custom_call.1} parent=43 // pred_region
          %s7919 = sand.u32 %s116, 1
          %s7920 = scalar_lea.sflag [#allocation3], %s7919
          %s7921 = sand.u32 %s116, 1
          %s7922 = smul.addr %s7921, 128
          %s7923 = scalar_lea.vmem [#allocation2], %s7922
          %7924 = dma.done %s7920, 2048
        $region48: #{tpu_custom_call.1} parent=43 // pred_fallthru
          _
      $region44: #{tpu_custom_call.1} parent=5 // pred_fallthru
        _
    $region6: #{tpu_custom_call.1} parent=1 // loop_footer
      %s17 = sadd.s32 1, %s13
    $region7: #{tpu_custom_call.1} parent=1 // loop_footer_branch
      %12 = sbr.rel target = $region3
    $region8: #{tpu_custom_call.1} parent=1 // loop_exit
      _
    %7925 = vsyncpa [#allocation3], 1
    %s7926 = scalar_lea.sflag [#allocation3], 1
    %7927 = vsyncpa %s7926, 1

</llo_original>
